<compile_context>
chip_gen: v5e
topology: v5e:2x2
jax: 0.10.0
libtpu: 0.0.40
codegen_flags: <defaults>
</compile_context>

<pallas_src>
import functools

import jax
import jax.numpy as jnp
from jax import lax
from jax.experimental import pallas as pl
from jax.experimental.pallas import tpu as pltpu

# ----------------------------- model geometry --------------------------------
K = 5                      # conv kernel size
H0 = W0 = 32               # input spatial size (fixed by the 16*5*5 flatten)
C0 = 3                     # input channels
C1 = 6                     # conv1 output channels
H1 = W1 = H0 - K + 1       # 28
HP1 = WP1 = H1 // 2        # 14
C1G = 2 * C1               # 12: column group width of the sparse pooled-1 layout
C2 = 16                    # conv2 output channels
H2 = W2 = HP1 - K + 1      # 10
HP2 = WP2 = H2 // 2        # 5
C2G = 2 * C2               # 32: column group width of the sparse pooled-2 layout
FC1_OUT = 100
EMB_PAD = 128              # fc1 output padded to a full lane width
NC_PAD = 128               # fc2 logits padded to a full lane width

XW = W0 * C0               # 96   input row width
A1W = W1 * C1              # 168  conv1 activation row width
A2W = W2 * C2              # 160  conv2 activation row width
P1VW = (W1 - 1) * C1       # 162  pooled-1 (sparse) row width actually consumed
P2VW = (W2 - 1) * C2       # 144  pooled-2 (sparse) row width actually consumed

TILE_B = 16                # images per grid step (multiple of 8; 16 keeps every
                           # bf16 row offset aligned to the (16,128) bf16 tile)

VMEM_SPEC = pl.BlockSpec(memory_space=pltpu.MemorySpace.VMEM)


# ----------------------------- Pallas kernels --------------------------------

def _tower_kernel(x_ref, w1_ref, b1_ref, w2_ref, b2_ref, wf_ref, bf_ref,
                  emb_ref, p1_s, *, tile_b):
    """TILE_B images: conv1->relu->pool->conv2->relu->pool->fc1->relu in VMEM.

    Stacked activation layout: row = image_row * tile_b + image (image-minor),
    column = width * channels (channel-minor).  Each 5x5 VALID conv is 5
    accumulated "banded" tap matmuls (one per row offset di; the column offset
    dj is folded into the weight matrix), so the operand of every dot is just a
    tile-aligned row slice of the previous activation.  2x2 max-pooling is one
    pair-split row max plus one shifted-slice column max; the column-sparse
    pooled layout is consumed through zero rows in the next banded weights.
    """
    f32, bf16 = jnp.float32, jnp.bfloat16
    tb = tile_b

    # ---------------- conv1: 5 banded tap dots, M = 28*tb ---------------------
    acc = jnp.zeros((W1 * tb, A1W), f32)
    for di in range(K):
        slab = x_ref[di * tb:(di + W1) * tb, :]                  # (28*tb, 96) bf16
        acc = acc + jnp.dot(slab, w1_ref[di], preferred_element_type=f32)

    # -------- fused 2x2 max pool + bias + relu -> p1_s (14*tb, 162) bf16 ------
    a3 = acc.reshape(HP1, 2 * tb, A1W)
    rp = jnp.maximum(a3[:, :tb, :], a3[:, tb:, :])               # row pairs
    cp = jnp.maximum(rp[..., :P1VW], rp[..., C1:C1 + P1VW])      # column pairs
    p1 = jnp.maximum(cp + b1_ref[...], 0.0)                      # bias + relu (f32)
    p1_s[...] = p1.reshape(HP1 * tb, P1VW).astype(bf16)          # one full store

    # ---------------- conv2: 5 banded tap dots, M = 10*tb ---------------------
    acc = jnp.zeros((W2 * tb, A2W), f32)
    for di in range(K):
        slab = p1_s[di * tb:(di + W2) * tb, :]                   # (10*tb, 162) bf16
        acc = acc + jnp.dot(slab, w2_ref[di], preferred_element_type=f32)

    # -------- fused 2x2 max pool + bias + relu -> p2 (5, tb, 144) f32 ---------
    a3 = acc.reshape(HP2, 2 * tb, A2W)
    rp = jnp.maximum(a3[:, :tb, :], a3[:, tb:, :])
    cp = jnp.maximum(rp[..., :P2VW], rp[..., C2:C2 + P2VW])
    p2 = jnp.maximum(cp + b2_ref[...], 0.0)

    # ---------------- fc1 + bias + relu -> emb (tb, 128) ----------------------
    accf = jnp.zeros((tb, EMB_PAD), f32)
    for i in range(HP2):                      # 5 x (tb, 144) @ (144, 128)
        accf = accf + jnp.dot(p2[i].astype(bf16), wf_ref[i],
                              preferred_element_type=f32)
    emb_ref[...] = jnp.maximum(accf + bf_ref[...], 0.0)          # lane-dense store


def _head_kernel(emb_ref, wa_ref, wb_ref, b_ref, logit_ref, prob_ref, *, n_valid):
    """Fused fc2 on concat(e1, e2) (expressed as two dots) + masked softmax.

    Classes are padded to 128 lanes (lane-dense stores); padded logits are
    exactly 0 (zero weight columns) and are masked out of the softmax.
    """
    nb = logit_ref.shape[0]
    logits = (jnp.dot(emb_ref[0:nb, :], wa_ref[...],
                      preferred_element_type=jnp.float32)
              + jnp.dot(emb_ref[nb:2 * nb, :], wb_ref[...],
                        preferred_element_type=jnp.float32)
              + b_ref[...])
    logit_ref[...] = logits
    col = lax.broadcasted_iota(jnp.int32, logits.shape, 1)
    masked = jnp.where(col < n_valid, logits, -jnp.inf)
    m = jnp.max(masked, axis=-1, keepdims=True)
    ex = jnp.exp(masked - m)
    prob_ref[...] = ex * pl.reciprocal(jnp.sum(ex, axis=-1, keepdims=True),
                                       approx=True)


# ----------------------------- parameter prep --------------------------------

def init_params(key, n_classes=10):
    """Raw parameters in torch layout (Conv2d OIHW, Linear (out, in))."""
    def uniform(k, shape, fan_in):
        bound = 1.0 / jnp.sqrt(float(fan_in))
        return jax.random.uniform(k, shape, jnp.float32, -bound, bound)

    ks = jax.random.split(key, 8)
    return {
        "conv1_w": uniform(ks[0], (C1, C0, K, K), C0 * K * K),
        "conv1_b": uniform(ks[1], (C1,), C0 * K * K),
        "conv2_w": uniform(ks[2], (C2, C1, K, K), C1 * K * K),
        "conv2_b": uniform(ks[3], (C2,), C1 * K * K),
        "fc1_w": uniform(ks[4], (FC1_OUT, C2 * HP2 * WP2), C2 * HP2 * WP2),
        "fc1_b": uniform(ks[5], (FC1_OUT,), C2 * HP2 * WP2),
        "fc2_w": uniform(ks[6], (n_classes, 2 * FC1_OUT), 2 * FC1_OUT),
        "fc2_b": uniform(ks[7], (n_classes,), 2 * FC1_OUT),
    }


def prepare_params(p):
    """One-time re-layout of torch-style weights into kernel-ready form."""
    f32, bf16 = jnp.float32, jnp.bfloat16

    def banded_taps(w, in_cols, c_group, out_cols):
        # (OC, IC, K, K) conv weight -> (K, in_cols*c_group, out_cols*OC)
        # per-row-offset (di) "banded" matrices: entry
        #   [di, (j+dj)*c_group + ic, j*OC + oc] = w[oc, ic, di, dj],
        # with IC zero-padded to c_group so stale (sparse) input columns hit
        # zero rows.
        oc_n, ic_n = w.shape[0], w.shape[1]
        dj = jnp.arange(K)[:, None, None]
        pp = jnp.arange(in_cols)[None, :, None]
        jj = jnp.arange(out_cols)[None, None, :]
        sel = (pp == jj + dj).astype(f32)                 # (K, in_cols, out_cols)
        banded = jnp.einsum("oide,epj->dpijo", w.astype(f32), sel)
        banded = jnp.pad(banded, ((0, 0), (0, 0), (0, c_group - ic_n),
                                  (0, 0), (0, 0)))
        return banded.reshape(K, in_cols * c_group, out_cols * oc_n)

    # fc1: torch flattens (C, H, W); rearrange to [row=H][col = 32*W + C] with
    # C zero-padded 16 -> 32 (sparse pooled-2 layout), outputs padded to 128,
    # and the K dim truncated to the 144 columns the kernel actually stores.
    wf = p["fc1_w"].reshape(FC1_OUT, C2, HP2, WP2)
    wf = jnp.transpose(wf, (2, 3, 1, 0))                          # [i, j, c, n]
    wf = jnp.pad(wf, ((0, 0), (0, 0), (0, C2G - C2), (0, EMB_PAD - FC1_OUT)))
    wf = wf.reshape(HP2, WP2 * C2G, EMB_PAD)[:, :P2VW, :]

    fc2 = p["fc2_w"]
    nc = fc2.shape[0]
    return {
        "w1blk": banded_taps(p["conv1_w"], W0, C0, W1).astype(bf16),   # (5, 96, 168)
        "b1row": jnp.tile(p["conv1_b"], P1VW // C1)[None, :].astype(f32),
        "w2blk": banded_taps(p["conv2_w"], WP1, C1G, W2)[:, :P1VW, :]
                 .astype(bf16),                                        # (5, 162, 160)
        "b2row": jnp.tile(p["conv2_b"], P2VW // C2)[None, :].astype(f32),
        "wfc1": wf.astype(bf16),                                       # (5, 144, 128)
        "bfc1": jnp.pad(p["fc1_b"], (0, EMB_PAD - FC1_OUT))[None, :].astype(f32),
        "fc2_wa": jnp.pad(fc2[:, :FC1_OUT].T,
                          ((0, EMB_PAD - FC1_OUT), (0, NC_PAD - nc))).astype(f32),
        "fc2_wb": jnp.pad(fc2[:, FC1_OUT:].T,
                          ((0, EMB_PAD - FC1_OUT), (0, NC_PAD - nc))).astype(f32),
        "fc2_b": jnp.pad(p["fc2_b"], (0, NC_PAD - nc))[None, :].astype(f32),
    }


# -------------------------------- forward ------------------------------------

def dual_model_cnn_forward(prep, x_1, x_2, *, n_classes=10, tile_b=TILE_B):
    nb = x_1.shape[0]
    x = jnp.concatenate([x_1, x_2], axis=0)          # both towers in one pass
    nt = x.shape[0]
    n_steps = -(-nt // tile_b)
    ntp = n_steps * tile_b

    # NCHW -> per-image (rows=H, cols=W*C), zero-pad the batch to tile_b, then
    # stack image-minor per grid step: row = step*H0*tile_b + i*tile_b + b.
    x2d = jnp.transpose(x, (0, 2, 3, 1)).reshape(nt, H0, XW)
    if ntp != nt:
        x2d = jnp.pad(x2d, ((0, ntp - nt), (0, 0), (0, 0)))
    xs = (x2d.reshape(n_steps, tile_b, H0, XW)
              .transpose(0, 2, 1, 3)
              .reshape(n_steps * H0 * tile_b, XW)
              .astype(jnp.bfloat16))                 # cast once, halves input DMA

    emb = pl.pallas_call(
        functools.partial(_tower_kernel, tile_b=tile_b),
        out_shape=jax.ShapeDtypeStruct((ntp, EMB_PAD), jnp.float32),
        grid_spec=pltpu.PrefetchScalarGridSpec(
            num_scalar_prefetch=0,
            grid=(n_steps,),
            in_specs=[
                pl.BlockSpec((H0 * tile_b, XW), lambda s: (s, 0)),
                # Weights: constant-index full blocks, resident in VMEM
                # (double-buffered copy ~1 MiB: negligible even on v7x 64 MiB).
                pl.BlockSpec((K, XW, A1W), lambda s: (0, 0, 0)),
                pl.BlockSpec((1, P1VW), lambda s: (0, 0)),
                pl.BlockSpec((K, P1VW, A2W), lambda s: (0, 0, 0)),
                pl.BlockSpec((1, P2VW), lambda s: (0, 0)),
                pl.BlockSpec((HP2, P2VW, EMB_PAD), lambda s: (0, 0, 0)),
                pl.BlockSpec((1, EMB_PAD), lambda s: (0, 0)),
            ],
            out_specs=pl.BlockSpec((tile_b, EMB_PAD), lambda s: (s, 0)),
            scratch_shapes=[
                pltpu.VMEM((HP1 * tile_b, P1VW), jnp.bfloat16),  # pooled-1 (sparse)
            ],
        ),
        compiler_params=pltpu.CompilerParams(
            # Real batches give n_steps >= 2 so v7x's two TensorCores both work;
            # the tiny demo batch fits in one step.
            dimension_semantics=("parallel",),
            vmem_limit_bytes=32 * 1024 * 1024),
    )(xs, prep["w1blk"], prep["b1row"], prep["w2blk"], prep["b2row"],
      prep["wfc1"], prep["bfc1"])

    logits_p, probs_p = pl.pallas_call(
        functools.partial(_head_kernel, n_valid=n_classes),
        out_shape=(jax.ShapeDtypeStruct((nb, NC_PAD), jnp.float32),
                   jax.ShapeDtypeStruct((nb, NC_PAD), jnp.float32)),
        in_specs=[VMEM_SPEC] * 4,
        out_specs=(VMEM_SPEC, VMEM_SPEC),
    )(emb, prep["fc2_wa"], prep["fc2_wb"], prep["fc2_b"])
    return logits_p[:, :n_classes], probs_p[:, :n_classes]


# ----------------------------- plain-JAX reference ---------------------------

def reference_forward(p, x_1, x_2):
    """f32 reference with exact torch semantics (validation only)."""
    def pool(y):
        return jnp.maximum(jnp.maximum(y[:, :, 0::2, 0::2], y[:, :, 0::2, 1::2]),
                           jnp.maximum(y[:, :, 1::2, 0::2], y[:, :, 1::2, 1::2]))

    def emb(x):
        dn = ("NCHW", "OIHW", "NCHW")
        y = lax.conv_general_dilated(x, p["conv1_w"], (1, 1), "VALID",
                                     dimension_numbers=dn)
        y = pool(jnp.maximum(y + p["conv1_b"][None, :, None, None], 0.0))
        y = lax.conv_general_dilated(y, p["conv2_w"], (1, 1), "VALID",
                                     dimension_numbers=dn)
        y = pool(jnp.maximum(y + p["conv2_b"][None, :, None, None], 0.0))
        y = y.reshape(y.shape[0], -1)               # (C, H, W) flatten, as torch
        return jnp.maximum(y @ p["fc1_w"].T + p["fc1_b"], 0.0)

    e = jnp.concatenate([emb(x_1), emb(x_2)], axis=1)
    logits = e @ p["fc2_w"].T + p["fc2_b"]
    return logits, jax.nn.softmax(logits, axis=-1)


# ----------------------------------- main -------------------------------------

if __name__ == "__main__":
    key = jax.random.PRNGKey(0)
    k_param, k_x1, k_x2 = jax.random.split(key, 3)

    params = init_params(k_param, n_classes=10)
    prep = prepare_params(params)          # one-time weight re-layout (not jitted)

    # Input spatial size is fixed by the architecture (32x32 -> 16*5*5 flatten).
    x_1 = jax.random.normal(k_x1, (2, 3, 32, 32), jnp.float32)
    x_2 = jax.random.normal(k_x2, (2, 3, 32, 32), jnp.float32)

    fwd = jax.jit(dual_model_cnn_forward)
    logits, probs = fwd(prep, x_1, x_2)
    jax.block_until_ready((logits, probs))

    assert logits.shape == (2, 10) and probs.shape == (2, 10)
    # approx=True reciprocal leaves probs summing to 1 to ~1e-3.
    assert bool(jnp.allclose(jnp.sum(probs, axis=-1), 1.0, atol=5e-3))

    # Validate against the f32 reference (bf16 MXU operands -> loose tolerance).
    ref_logits, ref_probs = reference_forward(params, x_1, x_2)
    assert bool(jnp.allclose(logits, ref_logits, atol=5e-2))
    assert bool(jnp.allclose(probs, ref_probs, atol=3e-2))

    print("KERNEL_OK")
</pallas_src>

<mosaic_0001>
module attributes {stable_mosaic.version = 11 : i64} {
  func.func @_tower_kernel(%arg0: i32, %arg1: memref<512x96xbf16, #tpu.memory_space<vmem>>, %arg2: memref<5x96x168xbf16, #tpu.memory_space<vmem>>, %arg3: memref<1x162xf32, #tpu.memory_space<vmem>>, %arg4: memref<5x162x160xbf16, #tpu.memory_space<vmem>>, %arg5: memref<1x144xf32, #tpu.memory_space<vmem>>, %arg6: memref<5x144x128xbf16, #tpu.memory_space<vmem>>, %arg7: memref<1x128xf32, #tpu.memory_space<vmem>>, %arg8: memref<16x128xf32, #tpu.memory_space<vmem>>, %arg9: memref<224x162xbf16, #tpu.memory_space<vmem>>) attributes {dimension_semantics = [#tpu.dimension_semantics<parallel>], iteration_bounds = array<i64: 1>, scalar_prefetch = 0 : i64, scratch_operands = 1 : i64, tpu.core_type = #tpu.core_type<tc>, window_params = [{transform_indices = @transform_0, window_bounds = array<i64: 512, 96>}, {pipeline_mode = #tpu.pipeline_mode<synchronous>, transform_indices = @transform_1, window_bounds = array<i64: 5, 96, 168>}, {pipeline_mode = #tpu.pipeline_mode<synchronous>, transform_indices = @transform_2, window_bounds = array<i64: 1, 162>}, {pipeline_mode = #tpu.pipeline_mode<synchronous>, transform_indices = @transform_3, window_bounds = array<i64: 5, 162, 160>}, {pipeline_mode = #tpu.pipeline_mode<synchronous>, transform_indices = @transform_4, window_bounds = array<i64: 1, 144>}, {pipeline_mode = #tpu.pipeline_mode<synchronous>, transform_indices = @transform_5, window_bounds = array<i64: 5, 144, 128>}, {pipeline_mode = #tpu.pipeline_mode<synchronous>, transform_indices = @transform_6, window_bounds = array<i64: 1, 128>}, {transform_indices = @transform_7, window_bounds = array<i64: 16, 128>}]} {
    %cst = arith.constant 0.000000e+00 : f32
    %0 = vector.broadcast %cst : f32 to vector<448x168xf32>
    %c0 = arith.constant 0 : index
    %c0_0 = arith.constant 0 : index
    %1 = vector.load %arg1[%c0, %c0_0] : memref<512x96xbf16, #tpu.memory_space<vmem>>, vector<448x96xbf16>
    %c0_1 = arith.constant 0 : index
    %c0_2 = arith.constant 0 : index
    %c0_3 = arith.constant 0 : index
    %2 = vector.load %arg2[%c0_1, %c0_2, %c0_3] : memref<5x96x168xbf16, #tpu.memory_space<vmem>>, vector<1x96x168xbf16>
    %3 = vector.shape_cast %2 : vector<1x96x168xbf16> to vector<96x168xbf16>
    %cst_4 = arith.constant dense<0.000000e+00> : vector<448x168xf32>
    %4 = tpu.matmul %1, %3, %cst_4 {dimension_numbers = #tpu.dot_dimension_numbers<[1], [0], [0], [1], [0, 0, 1, 1], [], []>} : vector<448x96xbf16>, vector<96x168xbf16>, vector<448x168xf32> -> vector<448x168xf32>
    %5 = arith.addf %0, %4 : vector<448x168xf32>
    %c16 = arith.constant 16 : index
    %c0_5 = arith.constant 0 : index
    %6 = vector.load %arg1[%c16, %c0_5] : memref<512x96xbf16, #tpu.memory_space<vmem>>, vector<448x96xbf16>
    %c1 = arith.constant 1 : index
    %c0_6 = arith.constant 0 : index
    %c0_7 = arith.constant 0 : index
    %7 = vector.load %arg2[%c1, %c0_6, %c0_7] : memref<5x96x168xbf16, #tpu.memory_space<vmem>>, vector<1x96x168xbf16>
    %8 = vector.shape_cast %7 : vector<1x96x168xbf16> to vector<96x168xbf16>
    %cst_8 = arith.constant dense<0.000000e+00> : vector<448x168xf32>
    %9 = tpu.matmul %6, %8, %cst_8 {dimension_numbers = #tpu.dot_dimension_numbers<[1], [0], [0], [1], [0, 0, 1, 1], [], []>} : vector<448x96xbf16>, vector<96x168xbf16>, vector<448x168xf32> -> vector<448x168xf32>
    %10 = arith.addf %5, %9 : vector<448x168xf32>
    %c32 = arith.constant 32 : index
    %c0_9 = arith.constant 0 : index
    %11 = vector.load %arg1[%c32, %c0_9] : memref<512x96xbf16, #tpu.memory_space<vmem>>, vector<448x96xbf16>
    %c2 = arith.constant 2 : index
    %c0_10 = arith.constant 0 : index
    %c0_11 = arith.constant 0 : index
    %12 = vector.load %arg2[%c2, %c0_10, %c0_11] : memref<5x96x168xbf16, #tpu.memory_space<vmem>>, vector<1x96x168xbf16>
    %13 = vector.shape_cast %12 : vector<1x96x168xbf16> to vector<96x168xbf16>
    %cst_12 = arith.constant dense<0.000000e+00> : vector<448x168xf32>
    %14 = tpu.matmul %11, %13, %cst_12 {dimension_numbers = #tpu.dot_dimension_numbers<[1], [0], [0], [1], [0, 0, 1, 1], [], []>} : vector<448x96xbf16>, vector<96x168xbf16>, vector<448x168xf32> -> vector<448x168xf32>
    %15 = arith.addf %10, %14 : vector<448x168xf32>
    %c48 = arith.constant 48 : index
    %c0_13 = arith.constant 0 : index
    %16 = vector.load %arg1[%c48, %c0_13] : memref<512x96xbf16, #tpu.memory_space<vmem>>, vector<448x96xbf16>
    %c3 = arith.constant 3 : index
    %c0_14 = arith.constant 0 : index
    %c0_15 = arith.constant 0 : index
    %17 = vector.load %arg2[%c3, %c0_14, %c0_15] : memref<5x96x168xbf16, #tpu.memory_space<vmem>>, vector<1x96x168xbf16>
    %18 = vector.shape_cast %17 : vector<1x96x168xbf16> to vector<96x168xbf16>
    %cst_16 = arith.constant dense<0.000000e+00> : vector<448x168xf32>
    %19 = tpu.matmul %16, %18, %cst_16 {dimension_numbers = #tpu.dot_dimension_numbers<[1], [0], [0], [1], [0, 0, 1, 1], [], []>} : vector<448x96xbf16>, vector<96x168xbf16>, vector<448x168xf32> -> vector<448x168xf32>
    %20 = arith.addf %15, %19 : vector<448x168xf32>
    %c64 = arith.constant 64 : index
    %c0_17 = arith.constant 0 : index
    %21 = vector.load %arg1[%c64, %c0_17] : memref<512x96xbf16, #tpu.memory_space<vmem>>, vector<448x96xbf16>
    %c4 = arith.constant 4 : index
    %c0_18 = arith.constant 0 : index
    %c0_19 = arith.constant 0 : index
    %22 = vector.load %arg2[%c4, %c0_18, %c0_19] : memref<5x96x168xbf16, #tpu.memory_space<vmem>>, vector<1x96x168xbf16>
    %23 = vector.shape_cast %22 : vector<1x96x168xbf16> to vector<96x168xbf16>
    %cst_20 = arith.constant dense<0.000000e+00> : vector<448x168xf32>
    %24 = tpu.matmul %21, %23, %cst_20 {dimension_numbers = #tpu.dot_dimension_numbers<[1], [0], [0], [1], [0, 0, 1, 1], [], []>} : vector<448x96xbf16>, vector<96x168xbf16>, vector<448x168xf32> -> vector<448x168xf32>
    %25 = arith.addf %20, %24 : vector<448x168xf32>
    %26 = vector.shape_cast %25 : vector<448x168xf32> to vector<14x32x168xf32>
    %27 = vector.extract_strided_slice %26 {offsets = [0, 0, 0], sizes = [14, 16, 168], strides = [1, 1, 1]} : vector<14x32x168xf32> to vector<14x16x168xf32>
    %28 = vector.extract_strided_slice %26 {offsets = [0, 16, 0], sizes = [14, 16, 168], strides = [1, 1, 1]} : vector<14x32x168xf32> to vector<14x16x168xf32>
    %29 = arith.maximumf %27, %28 : vector<14x16x168xf32>
    %30 = vector.extract_strided_slice %29 {offsets = [0, 0, 0], sizes = [14, 16, 162], strides = [1, 1, 1]} : vector<14x16x168xf32> to vector<14x16x162xf32>
    %31 = vector.extract_strided_slice %29 {offsets = [0, 0, 6], sizes = [14, 16, 162], strides = [1, 1, 1]} : vector<14x16x168xf32> to vector<14x16x162xf32>
    %32 = arith.maximumf %30, %31 : vector<14x16x162xf32>
    %c0_21 = arith.constant 0 : index
    %c0_22 = arith.constant 0 : index
    %33 = vector.load %arg3[%c0_21, %c0_22] : memref<1x162xf32, #tpu.memory_space<vmem>>, vector<1x162xf32>
    %34 = vector.shape_cast %33 : vector<1x162xf32> to vector<1x1x162xf32>
    %35 = vector.broadcast %34 : vector<1x1x162xf32> to vector<14x16x162xf32>
    %36 = arith.addf %32, %35 : vector<14x16x162xf32>
    %cst_23 = arith.constant 0.000000e+00 : f32
    %37 = vector.broadcast %cst_23 : f32 to vector<14x16x162xf32>
    %38 = arith.maximumf %36, %37 : vector<14x16x162xf32>
    %39 = vector.shape_cast %38 : vector<14x16x162xf32> to vector<224x162xf32>
    %40 = arith.truncf %39 : vector<224x162xf32> to vector<224x162xbf16>
    %c0_24 = arith.constant 0 : index
    %c0_25 = arith.constant 0 : index
    %41 = vector.load %arg9[%c0_24, %c0_25] : memref<224x162xbf16, #tpu.memory_space<vmem>>, vector<224x162xbf16>
    tpu.vector_store %arg9[%c0_24, %c0_25], %40 {strides = array<i32>} : memref<224x162xbf16, #tpu.memory_space<vmem>>, vector<224x162xbf16>,
    %cst_26 = arith.constant 0.000000e+00 : f32
    %42 = vector.broadcast %cst_26 : f32 to vector<160x160xf32>
    %c0_27 = arith.constant 0 : index
    %c0_28 = arith.constant 0 : index
    %43 = vector.load %arg9[%c0_27, %c0_28] : memref<224x162xbf16, #tpu.memory_space<vmem>>, vector<160x162xbf16>
    %c0_29 = arith.constant 0 : index
    %c0_30 = arith.constant 0 : index
    %c0_31 = arith.constant 0 : index
    %44 = vector.load %arg4[%c0_29, %c0_30, %c0_31] : memref<5x162x160xbf16, #tpu.memory_space<vmem>>, vector<1x162x160xbf16>
    %45 = vector.shape_cast %44 : vector<1x162x160xbf16> to vector<162x160xbf16>
    %cst_32 = arith.constant dense<0.000000e+00> : vector<160x160xf32>
    %46 = tpu.matmul %43, %45, %cst_32 {dimension_numbers = #tpu.dot_dimension_numbers<[1], [0], [0], [1], [0, 0, 1, 1], [], []>} : vector<160x162xbf16>, vector<162x160xbf16>, vector<160x160xf32> -> vector<160x160xf32>
    %47 = arith.addf %42, %46 : vector<160x160xf32>
    %c16_33 = arith.constant 16 : index
    %c0_34 = arith.constant 0 : index
    %48 = vector.load %arg9[%c16_33, %c0_34] : memref<224x162xbf16, #tpu.memory_space<vmem>>, vector<160x162xbf16>
    %c1_35 = arith.constant 1 : index
    %c0_36 = arith.constant 0 : index
    %c0_37 = arith.constant 0 : index
    %49 = vector.load %arg4[%c1_35, %c0_36, %c0_37] : memref<5x162x160xbf16, #tpu.memory_space<vmem>>, vector<1x162x160xbf16>
    %50 = vector.shape_cast %49 : vector<1x162x160xbf16> to vector<162x160xbf16>
    %cst_38 = arith.constant dense<0.000000e+00> : vector<160x160xf32>
    %51 = tpu.matmul %48, %50, %cst_38 {dimension_numbers = #tpu.dot_dimension_numbers<[1], [0], [0], [1], [0, 0, 1, 1], [], []>} : vector<160x162xbf16>, vector<162x160xbf16>, vector<160x160xf32> -> vector<160x160xf32>
    %52 = arith.addf %47, %51 : vector<160x160xf32>
    %c32_39 = arith.constant 32 : index
    %c0_40 = arith.constant 0 : index
    %53 = vector.load %arg9[%c32_39, %c0_40] : memref<224x162xbf16, #tpu.memory_space<vmem>>, vector<160x162xbf16>
    %c2_41 = arith.constant 2 : index
    %c0_42 = arith.constant 0 : index
    %c0_43 = arith.constant 0 : index
    %54 = vector.load %arg4[%c2_41, %c0_42, %c0_43] : memref<5x162x160xbf16, #tpu.memory_space<vmem>>, vector<1x162x160xbf16>
    %55 = vector.shape_cast %54 : vector<1x162x160xbf16> to vector<162x160xbf16>
    %cst_44 = arith.constant dense<0.000000e+00> : vector<160x160xf32>
    %56 = tpu.matmul %53, %55, %cst_44 {dimension_numbers = #tpu.dot_dimension_numbers<[1], [0], [0], [1], [0, 0, 1, 1], [], []>} : vector<160x162xbf16>, vector<162x160xbf16>, vector<160x160xf32> -> vector<160x160xf32>
    %57 = arith.addf %52, %56 : vector<160x160xf32>
    %c48_45 = arith.constant 48 : index
    %c0_46 = arith.constant 0 : index
    %58 = vector.load %arg9[%c48_45, %c0_46] : memref<224x162xbf16, #tpu.memory_space<vmem>>, vector<160x162xbf16>
    %c3_47 = arith.constant 3 : index
    %c0_48 = arith.constant 0 : index
    %c0_49 = arith.constant 0 : index
    %59 = vector.load %arg4[%c3_47, %c0_48, %c0_49] : memref<5x162x160xbf16, #tpu.memory_space<vmem>>, vector<1x162x160xbf16>
    %60 = vector.shape_cast %59 : vector<1x162x160xbf16> to vector<162x160xbf16>
    %cst_50 = arith.constant dense<0.000000e+00> : vector<160x160xf32>
    %61 = tpu.matmul %58, %60, %cst_50 {dimension_numbers = #tpu.dot_dimension_numbers<[1], [0], [0], [1], [0, 0, 1, 1], [], []>} : vector<160x162xbf16>, vector<162x160xbf16>, vector<160x160xf32> -> vector<160x160xf32>
    %62 = arith.addf %57, %61 : vector<160x160xf32>
    %c64_51 = arith.constant 64 : index
    %c0_52 = arith.constant 0 : index
    %63 = vector.load %arg9[%c64_51, %c0_52] : memref<224x162xbf16, #tpu.memory_space<vmem>>, vector<160x162xbf16>
    %c4_53 = arith.constant 4 : index
    %c0_54 = arith.constant 0 : index
    %c0_55 = arith.constant 0 : index
    %64 = vector.load %arg4[%c4_53, %c0_54, %c0_55] : memref<5x162x160xbf16, #tpu.memory_space<vmem>>, vector<1x162x160xbf16>
    %65 = vector.shape_cast %64 : vector<1x162x160xbf16> to vector<162x160xbf16>
    %cst_56 = arith.constant dense<0.000000e+00> : vector<160x160xf32>
    %66 = tpu.matmul %63, %65, %cst_56 {dimension_numbers = #tpu.dot_dimension_numbers<[1], [0], [0], [1], [0, 0, 1, 1], [], []>} : vector<160x162xbf16>, vector<162x160xbf16>, vector<160x160xf32> -> vector<160x160xf32>
    %67 = arith.addf %62, %66 : vector<160x160xf32>
    %68 = vector.shape_cast %67 : vector<160x160xf32> to vector<5x32x160xf32>
    %69 = vector.extract_strided_slice %68 {offsets = [0, 0, 0], sizes = [5, 16, 160], strides = [1, 1, 1]} : vector<5x32x160xf32> to vector<5x16x160xf32>
    %70 = vector.extract_strided_slice %68 {offsets = [0, 16, 0], sizes = [5, 16, 160], strides = [1, 1, 1]} : vector<5x32x160xf32> to vector<5x16x160xf32>
    %71 = arith.maximumf %69, %70 : vector<5x16x160xf32>
    %72 = vector.extract_strided_slice %71 {offsets = [0, 0, 0], sizes = [5, 16, 144], strides = [1, 1, 1]} : vector<5x16x160xf32> to vector<5x16x144xf32>
    %73 = vector.extract_strided_slice %71 {offsets = [0, 0, 16], sizes = [5, 16, 144], strides = [1, 1, 1]} : vector<5x16x160xf32> to vector<5x16x144xf32>
    %74 = arith.maximumf %72, %73 : vector<5x16x144xf32>
    %c0_57 = arith.constant 0 : index
    %c0_58 = arith.constant 0 : index
    %75 = vector.load %arg5[%c0_57, %c0_58] : memref<1x144xf32, #tpu.memory_space<vmem>>, vector<1x144xf32>
    %76 = vector.shape_cast %75 : vector<1x144xf32> to vector<1x1x144xf32>
    %77 = vector.broadcast %76 : vector<1x1x144xf32> to vector<5x16x144xf32>
    %78 = arith.addf %74, %77 : vector<5x16x144xf32>
    %cst_59 = arith.constant 0.000000e+00 : f32
    %79 = vector.broadcast %cst_59 : f32 to vector<5x16x144xf32>
    %80 = arith.maximumf %78, %79 : vector<5x16x144xf32>
    %cst_60 = arith.constant 0.000000e+00 : f32
    %81 = vector.broadcast %cst_60 : f32 to vector<16x128xf32>
    %82 = vector.extract_strided_slice %80 {offsets = [0, 0, 0], sizes = [1, 16, 144], strides = [1, 1, 1]} : vector<5x16x144xf32> to vector<1x16x144xf32>
    %83 = vector.shape_cast %82 : vector<1x16x144xf32> to vector<16x144xf32>
    %84 = arith.truncf %83 : vector<16x144xf32> to vector<16x144xbf16>
    %c0_61 = arith.constant 0 : index
    %c0_62 = arith.constant 0 : index
    %c0_63 = arith.constant 0 : index
    %85 = vector.load %arg6[%c0_61, %c0_62, %c0_63] : memref<5x144x128xbf16, #tpu.memory_space<vmem>>, vector<1x144x128xbf16>
    %86 = vector.shape_cast %85 : vector<1x144x128xbf16> to vector<144x128xbf16>
    %cst_64 = arith.constant dense<0.000000e+00> : vector<16x128xf32>
    %87 = tpu.matmul %84, %86, %cst_64 {dimension_numbers = #tpu.dot_dimension_numbers<[1], [0], [0], [1], [0, 0, 1, 1], [], []>} : vector<16x144xbf16>, vector<144x128xbf16>, vector<16x128xf32> -> vector<16x128xf32>
    %88 = arith.addf %81, %87 : vector<16x128xf32>
    %89 = vector.extract_strided_slice %80 {offsets = [1, 0, 0], sizes = [1, 16, 144], strides = [1, 1, 1]} : vector<5x16x144xf32> to vector<1x16x144xf32>
    %90 = vector.shape_cast %89 : vector<1x16x144xf32> to vector<16x144xf32>
    %91 = arith.truncf %90 : vector<16x144xf32> to vector<16x144xbf16>
    %c1_65 = arith.constant 1 : index
    %c0_66 = arith.constant 0 : index
    %c0_67 = arith.constant 0 : index
    %92 = vector.load %arg6[%c1_65, %c0_66, %c0_67] : memref<5x144x128xbf16, #tpu.memory_space<vmem>>, vector<1x144x128xbf16>
    %93 = vector.shape_cast %92 : vector<1x144x128xbf16> to vector<144x128xbf16>
    %cst_68 = arith.constant dense<0.000000e+00> : vector<16x128xf32>
    %94 = tpu.matmul %91, %93, %cst_68 {dimension_numbers = #tpu.dot_dimension_numbers<[1], [0], [0], [1], [0, 0, 1, 1], [], []>} : vector<16x144xbf16>, vector<144x128xbf16>, vector<16x128xf32> -> vector<16x128xf32>
    %95 = arith.addf %88, %94 : vector<16x128xf32>
    %96 = vector.extract_strided_slice %80 {offsets = [2, 0, 0], sizes = [1, 16, 144], strides = [1, 1, 1]} : vector<5x16x144xf32> to vector<1x16x144xf32>
    %97 = vector.shape_cast %96 : vector<1x16x144xf32> to vector<16x144xf32>
    %98 = arith.truncf %97 : vector<16x144xf32> to vector<16x144xbf16>
    %c2_69 = arith.constant 2 : index
    %c0_70 = arith.constant 0 : index
    %c0_71 = arith.constant 0 : index
    %99 = vector.load %arg6[%c2_69, %c0_70, %c0_71] : memref<5x144x128xbf16, #tpu.memory_space<vmem>>, vector<1x144x128xbf16>
    %100 = vector.shape_cast %99 : vector<1x144x128xbf16> to vector<144x128xbf16>
    %cst_72 = arith.constant dense<0.000000e+00> : vector<16x128xf32>
    %101 = tpu.matmul %98, %100, %cst_72 {dimension_numbers = #tpu.dot_dimension_numbers<[1], [0], [0], [1], [0, 0, 1, 1], [], []>} : vector<16x144xbf16>, vector<144x128xbf16>, vector<16x128xf32> -> vector<16x128xf32>
    %102 = arith.addf %95, %101 : vector<16x128xf32>
    %103 = vector.extract_strided_slice %80 {offsets = [3, 0, 0], sizes = [1, 16, 144], strides = [1, 1, 1]} : vector<5x16x144xf32> to vector<1x16x144xf32>
    %104 = vector.shape_cast %103 : vector<1x16x144xf32> to vector<16x144xf32>
    %105 = arith.truncf %104 : vector<16x144xf32> to vector<16x144xbf16>
    %c3_73 = arith.constant 3 : index
    %c0_74 = arith.constant 0 : index
    %c0_75 = arith.constant 0 : index
    %106 = vector.load %arg6[%c3_73, %c0_74, %c0_75] : memref<5x144x128xbf16, #tpu.memory_space<vmem>>, vector<1x144x128xbf16>
    %107 = vector.shape_cast %106 : vector<1x144x128xbf16> to vector<144x128xbf16>
    %cst_76 = arith.constant dense<0.000000e+00> : vector<16x128xf32>
    %108 = tpu.matmul %105, %107, %cst_76 {dimension_numbers = #tpu.dot_dimension_numbers<[1], [0], [0], [1], [0, 0, 1, 1], [], []>} : vector<16x144xbf16>, vector<144x128xbf16>, vector<16x128xf32> -> vector<16x128xf32>
    %109 = arith.addf %102, %108 : vector<16x128xf32>
    %110 = vector.extract_strided_slice %80 {offsets = [4, 0, 0], sizes = [1, 16, 144], strides = [1, 1, 1]} : vector<5x16x144xf32> to vector<1x16x144xf32>
    %111 = vector.shape_cast %110 : vector<1x16x144xf32> to vector<16x144xf32>
    %112 = arith.truncf %111 : vector<16x144xf32> to vector<16x144xbf16>
    %c4_77 = arith.constant 4 : index
    %c0_78 = arith.constant 0 : index
    %c0_79 = arith.constant 0 : index
    %113 = vector.load %arg6[%c4_77, %c0_78, %c0_79] : memref<5x144x128xbf16, #tpu.memory_space<vmem>>, vector<1x144x128xbf16>
    %114 = vector.shape_cast %113 : vector<1x144x128xbf16> to vector<144x128xbf16>
    %cst_80 = arith.constant dense<0.000000e+00> : vector<16x128xf32>
    %115 = tpu.matmul %112, %114, %cst_80 {dimension_numbers = #tpu.dot_dimension_numbers<[1], [0], [0], [1], [0, 0, 1, 1], [], []>} : vector<16x144xbf16>, vector<144x128xbf16>, vector<16x128xf32> -> vector<16x128xf32>
    %116 = arith.addf %109, %115 : vector<16x128xf32>
    %c0_81 = arith.constant 0 : index
    %c0_82 = arith.constant 0 : index
    %117 = vector.load %arg7[%c0_81, %c0_82] : memref<1x128xf32, #tpu.memory_space<vmem>>, vector<1x128xf32>
    %118 = vector.broadcast %117 : vector<1x128xf32> to vector<16x128xf32>
    %119 = arith.addf %116, %118 : vector<16x128xf32>
    %cst_83 = arith.constant 0.000000e+00 : f32
    %120 = vector.broadcast %cst_83 : f32 to vector<16x128xf32>
    %121 = arith.maximumf %119, %120 : vector<16x128xf32>
    %c0_84 = arith.constant 0 : index
    %c0_85 = arith.constant 0 : index
    %122 = vector.load %arg8[%c0_84, %c0_85] : memref<16x128xf32, #tpu.memory_space<vmem>>, vector<16x128xf32>
    tpu.vector_store %arg8[%c0_84, %c0_85], %121 {strides = array<i32>} : memref<16x128xf32, #tpu.memory_space<vmem>>, vector<16x128xf32>,
    return
  }
  func.func @transform_0(%arg0: i32) -> (i32, i32) {
    %c0_i32 = arith.constant 0 : i32
    %c0_i32_0 = arith.constant 0 : i32
    return %arg0, %c0_i32 : i32, i32
  }
  func.func @transform_1(%arg0: i32) -> (i32, i32, i32) {
    %c0_i32 = arith.constant 0 : i32
    %c0_i32_0 = arith.constant 0 : i32
    %c0_i32_1 = arith.constant 0 : i32
    %c0_i32_2 = arith.constant 0 : i32
    return %c0_i32, %c0_i32_0, %c0_i32_1 : i32, i32, i32
  }
  func.func @transform_2(%arg0: i32) -> (i32, i32) {
    %c0_i32 = arith.constant 0 : i32
    %c0_i32_0 = arith.constant 0 : i32
    %c0_i32_1 = arith.constant 0 : i32
    return %c0_i32, %c0_i32_0 : i32, i32
  }
  func.func @transform_3(%arg0: i32) -> (i32, i32, i32) {
    %c0_i32 = arith.constant 0 : i32
    %c0_i32_0 = arith.constant 0 : i32
    %c0_i32_1 = arith.constant 0 : i32
    %c0_i32_2 = arith.constant 0 : i32
    return %c0_i32, %c0_i32_0, %c0_i32_1 : i32, i32, i32
  }
  func.func @transform_4(%arg0: i32) -> (i32, i32) {
    %c0_i32 = arith.constant 0 : i32
    %c0_i32_0 = arith.constant 0 : i32
    %c0_i32_1 = arith.constant 0 : i32
    return %c0_i32, %c0_i32_0 : i32, i32
  }
  func.func @transform_5(%arg0: i32) -> (i32, i32, i32) {
    %c0_i32 = arith.constant 0 : i32
    %c0_i32_0 = arith.constant 0 : i32
    %c0_i32_1 = arith.constant 0 : i32
    %c0_i32_2 = arith.constant 0 : i32
    return %c0_i32, %c0_i32_0, %c0_i32_1 : i32, i32, i32
  }
  func.func @transform_6(%arg0: i32) -> (i32, i32) {
    %c0_i32 = arith.constant 0 : i32
    %c0_i32_0 = arith.constant 0 : i32
    %c0_i32_1 = arith.constant 0 : i32
    return %c0_i32, %c0_i32_0 : i32, i32
  }
  func.func @transform_7(%arg0: i32) -> (i32, i32) {
    %c0_i32 = arith.constant 0 : i32
    %c0_i32_0 = arith.constant 0 : i32
    return %arg0, %c0_i32 : i32, i32
  }
}

module attributes {stable_mosaic.version = 11 : i64} {
  func.func @_head_kernel(%arg0: memref<16x128xf32, #tpu.memory_space<vmem>>, %arg1: memref<128x128xf32, #tpu.memory_space<vmem>>, %arg2: memref<128x128xf32, #tpu.memory_space<vmem>>, %arg3: memref<1x128xf32, #tpu.memory_space<vmem>>, %arg4: memref<2x128xf32, #tpu.memory_space<vmem>>, %arg5: memref<2x128xf32, #tpu.memory_space<vmem>>) attributes {dimension_semantics = [], scalar_prefetch = 0 : i64, scratch_operands = 0 : i64, tpu.core_type = #tpu.core_type<tc>} {
    %c0 = arith.constant 0 : index
    %c0_0 = arith.constant 0 : index
    %0 = vector.load %arg0[%c0, %c0_0] : memref<16x128xf32, #tpu.memory_space<vmem>>, vector<2x128xf32>
    %c0_1 = arith.constant 0 : index
    %c0_2 = arith.constant 0 : index
    %1 = vector.load %arg1[%c0_1, %c0_2] : memref<128x128xf32, #tpu.memory_space<vmem>>, vector<128x128xf32>
    %cst = arith.constant dense<0.000000e+00> : vector<2x128xf32>
    %2 = tpu.matmul %0, %1, %cst {dimension_numbers = #tpu.dot_dimension_numbers<[1], [0], [0], [1], [0, 0, 1, 1], [], []>} : vector<2x128xf32>, vector<128x128xf32>, vector<2x128xf32> -> vector<2x128xf32>
    %c2 = arith.constant 2 : index
    %c0_3 = arith.constant 0 : index
    %3 = vector.load %arg0[%c2, %c0_3] : memref<16x128xf32, #tpu.memory_space<vmem>>, vector<2x128xf32>
    %c0_4 = arith.constant 0 : index
    %c0_5 = arith.constant 0 : index
    %4 = vector.load %arg2[%c0_4, %c0_5] : memref<128x128xf32, #tpu.memory_space<vmem>>, vector<128x128xf32>
    %cst_6 = arith.constant dense<0.000000e+00> : vector<2x128xf32>
    %5 = tpu.matmul %3, %4, %cst_6 {dimension_numbers = #tpu.dot_dimension_numbers<[1], [0], [0], [1], [0, 0, 1, 1], [], []>} : vector<2x128xf32>, vector<128x128xf32>, vector<2x128xf32> -> vector<2x128xf32>
    %6 = arith.addf %2, %5 : vector<2x128xf32>
    %c0_7 = arith.constant 0 : index
    %c0_8 = arith.constant 0 : index
    %7 = vector.load %arg3[%c0_7, %c0_8] : memref<1x128xf32, #tpu.memory_space<vmem>>, vector<1x128xf32>
    %8 = vector.broadcast %7 : vector<1x128xf32> to vector<2x128xf32>
    %9 = arith.addf %6, %8 : vector<2x128xf32>
    %c0_9 = arith.constant 0 : index
    %c0_10 = arith.constant 0 : index
    %10 = vector.load %arg4[%c0_9, %c0_10] : memref<2x128xf32, #tpu.memory_space<vmem>>, vector<2x128xf32>
    tpu.vector_store %arg4[%c0_9, %c0_10], %9 {strides = array<i32>} : memref<2x128xf32, #tpu.memory_space<vmem>>, vector<2x128xf32>,
    %11 = tpu.iota {dimensions = array<i32: 1>} : vector<2x128xi32>
    %c10_i32 = arith.constant 10 : i32
    %12 = vector.broadcast %c10_i32 : i32 to vector<2x128xi32>
    %13 = arith.cmpi slt, %11, %12 : vector<2x128xi32>
    %cst_11 = arith.constant 0xFF800000 : f32
    %14 = vector.broadcast %cst_11 : f32 to vector<2x128xf32>
    %15 = arith.select %13, %9, %14 : vector<2x128xi1>, vector<2x128xf32>
    %cst_12 = arith.constant dense<0xFF800000> : vector<2xf32>
    %16 = vector.multi_reduction <maximumf>, %15, %cst_12 [1] : vector<2x128xf32> to vector<2xf32>
    %17 = vector.shape_cast %16 : vector<2xf32> to vector<2x1xf32>
    %18 = vector.broadcast %17 : vector<2x1xf32> to vector<2x128xf32>
    %19 = arith.subf %15, %18 : vector<2x128xf32>
    %20 = math.exp %19 : vector<2x128xf32>
    %cst_13 = arith.constant dense<0.000000e+00> : vector<2xf32>
    %21 = vector.multi_reduction <add>, %20, %cst_13 [1] : vector<2x128xf32> to vector<2xf32>
    %22 = vector.shape_cast %21 : vector<2xf32> to vector<2x1xf32>
    %23 = tpu.reciprocal %22 {approx = true} : vector<2x1xf32> -> vector<2x1xf32>
    %24 = vector.broadcast %23 : vector<2x1xf32> to vector<2x128xf32>
    %25 = arith.mulf %20, %24 : vector<2x128xf32>
    %c0_14 = arith.constant 0 : index
    %c0_15 = arith.constant 0 : index
    %26 = vector.load %arg5[%c0_14, %c0_15] : memref<2x128xf32, #tpu.memory_space<vmem>>, vector<2x128xf32>
    tpu.vector_store %arg5[%c0_14, %c0_15], %25 {strides = array<i32>} : memref<2x128xf32, #tpu.memory_space<vmem>>, vector<2x128xf32>,
    return
  }
}

</mosaic_0001>

<llo_original>
// kernel: dual_model_cnn_forward.3
$region0: #{dual_model_cnn_forward.3}
  #allocation0 [shape = 'u32[]', space=smem, size = 0x4, offset = 0x4, fixed_abs, tag = 'smem constant byte address 0x4 - core index']
  #allocation1 [shape = 'u32[72,128]{1,0:T(1,128)}', space=vmem, size = 0x9000, scoped, tag = 'internal scratch']
  %s0 = inlined_call_operand.vmem [shape: f32[16,128], index: 0, kind: input, shape index: {}]
  %s1 = inlined_call_operand.vmem [shape: f32[128,128], index: 1, kind: input, shape index: {}]
  %s2 = inlined_call_operand.vmem [shape: f32[128,128], index: 2, kind: input, shape index: {}]
  %s3 = inlined_call_operand.vmem [shape: f32[1,128], index: 3, kind: input, shape index: {}]
  %s4 = inlined_call_operand.hbm [shape: f32[2,128], index: 4, kind: output, shape index: {0}]
  %s5 = inlined_call_operand.hbm [shape: f32[2,128], index: 5, kind: output, shape index: {1}]
  %6 = xla_tuple %s4, %s5
  %s7 = sld [smem:[#allocation0]]
  $region34: #{dual_model_cnn_forward.3} parent=0
    _
  %s9 = ssub.s32 1, %s7
  %s10 = scalar_select 0, %s9, %s7
  $region1: #{dual_model_cnn_forward.3} parent=0
    #allocation2 [shape = 'u8[1024]{0}', space=vmem, size = 0x400, scoped, tag = 'output window, operand 0, single buffered']
    #allocation3 [shape = 's32[1]{0}', space=sflag, size = 0x4, scoped, tag = 'scoped memory for dual_model_cnn_forward.3']
    #allocation4 [shape = 'u8[1024]{0}', space=vmem, size = 0x400, scoped, tag = 'output window, operand 1, single buffered']
    #allocation5 [shape = 's32[1]{0}', space=sflag, size = 0x4, scoped, tag = 'scoped memory for dual_model_cnn_forward.3']
    %11 = vsyncpa [#allocation3], 0
    %12 = vsyncpa [#allocation5], 0
    // Predicated region
    $region2: #{dual_model_cnn_forward.3} parent=1 // pred_check
      _
    $region3: #{dual_model_cnn_forward.3} parent=1 // pred_check_branch
      %14 = sbr.rel (0) target = $region5
    $region4: #{dual_model_cnn_forward.3} parent=1 // pred_region
      _
    $region5: #{dual_model_cnn_forward.3} parent=1 // pred_fallthru
      _
    // Predicated region
    $region6: #{dual_model_cnn_forward.3} parent=1 // pred_check
      _
    $region7: #{dual_model_cnn_forward.3} parent=1 // pred_check_branch
      %16 = sbr.rel (0) target = $region9
    $region8: #{dual_model_cnn_forward.3} parent=1 // pred_region
      _
    $region9: #{dual_model_cnn_forward.3} parent=1 // pred_fallthru
      _
    // Predicated region
    $region10: #{dual_model_cnn_forward.3} parent=1 // pred_check
      _
    $region11: #{dual_model_cnn_forward.3} parent=1 // pred_check_branch
      %18 = sbr.rel (0) target = $region13
    $region12: #{dual_model_cnn_forward.3} parent=1 // pred_region
      _
    $region13: #{dual_model_cnn_forward.3} parent=1 // pred_fallthru
      _
    // Predicated region
    $region14: #{dual_model_cnn_forward.3} parent=1 // pred_check
      _
    $region15: #{dual_model_cnn_forward.3} parent=1 // pred_check_branch
      %20 = sbr.rel (0) target = $region17
    $region16: #{dual_model_cnn_forward.3} parent=1 // pred_region
      _
    $region17: #{dual_model_cnn_forward.3} parent=1 // pred_fallthru
      _
    %v21 = vld [vmem:[%s0] sm:$0x3]
    %v22 = vld [vmem:[%s1] sm:$0xff]
    %v23 = vld [vmem:[%s1 + $0x8] sm:$0xff]
    %v24 = vld [vmem:[%s1 + $0x10] sm:$0xff]
    %v25 = vld [vmem:[%s1 + $0x18] sm:$0xff]
    %v26 = vld [vmem:[%s1 + $0x20] sm:$0xff]
    %v27 = vld [vmem:[%s1 + $0x28] sm:$0xff]
    %v28 = vld [vmem:[%s1 + $0x30] sm:$0xff]
    %v29 = vld [vmem:[%s1 + $0x38] sm:$0xff]
    %v30 = vld [vmem:[%s1 + $0x40] sm:$0xff]
    %v31 = vld [vmem:[%s1 + $0x48] sm:$0xff]
    %v32 = vld [vmem:[%s1 + $0x50] sm:$0xff]
    %v33 = vld [vmem:[%s1 + $0x58] sm:$0xff]
    %v34 = vld [vmem:[%s1 + $0x60] sm:$0xff]
    %v35 = vld [vmem:[%s1 + $0x68] sm:$0xff]
    %v36 = vld [vmem:[%s1 + $0x70] sm:$0xff]
    %v37 = vld [vmem:[%s1 + $0x78] sm:$0xff]
    %v38 = vld [vmem:[%s0 + $0x2] sm:$0x3]
    %v39 = vld [vmem:[%s2] sm:$0xff]
    %v40 = vld [vmem:[%s2 + $0x8] sm:$0xff]
    %v41 = vld [vmem:[%s2 + $0x10] sm:$0xff]
    %v42 = vld [vmem:[%s2 + $0x18] sm:$0xff]
    %v43 = vld [vmem:[%s2 + $0x20] sm:$0xff]
    %v44 = vld [vmem:[%s2 + $0x28] sm:$0xff]
    %v45 = vld [vmem:[%s2 + $0x30] sm:$0xff]
    %v46 = vld [vmem:[%s2 + $0x38] sm:$0xff]
    %v47 = vld [vmem:[%s2 + $0x40] sm:$0xff]
    %v48 = vld [vmem:[%s2 + $0x48] sm:$0xff]
    %v49 = vld [vmem:[%s2 + $0x50] sm:$0xff]
    %v50 = vld [vmem:[%s2 + $0x58] sm:$0xff]
    %v51 = vld [vmem:[%s2 + $0x60] sm:$0xff]
    %v52 = vld [vmem:[%s2 + $0x68] sm:$0xff]
    %v53 = vld [vmem:[%s2 + $0x70] sm:$0xff]
    %v54 = vld [vmem:[%s2 + $0x78] sm:$0xff]
    %55 = vmatpush.msra.mxu0 %v54
    %56 = vmatpush.msra.mxu0 %v53
    %57 = vmatpush.msra.mxu0 %v52
    %58 = vmatpush.msra.mxu0 %v51
    %59 = vmatpush.msra.mxu0 %v50
    %60 = vmatpush.msra.mxu0 %v49
    %61 = vmatpush.msra.mxu0 %v48
    %62 = vmatpush.msra.mxu0 %v47
    %63 = vmatpush.msra.mxu0 %v46
    %64 = vmatpush.msra.mxu0 %v45
    %65 = vmatpush.msra.mxu0 %v44
    %66 = vmatpush.msra.mxu0 %v43
    %67 = vmatpush.msra.mxu0 %v42
    %68 = vmatpush.msra.mxu0 %v41
    %69 = vmatpush.msra.mxu0 %v40
    %70 = vmatpush.msra.mxu0 %v39
    %71 = vmatmul.f32.gmra.mxu0 %v38
    %v72 = vpop.f32.mrf.mxu0
    %v73 = vadd.f32 0.0, %v72
    %74 = vdwg.mxu0
    %75 = vmatpush.msra.mxu0 %v37
    %76 = vmatpush.msra.mxu0 %v36
    %77 = vmatpush.msra.mxu0 %v35
    %78 = vmatpush.msra.mxu0 %v34
    %79 = vmatpush.msra.mxu0 %v33
    %80 = vmatpush.msra.mxu0 %v32
    %81 = vmatpush.msra.mxu0 %v31
    %82 = vmatpush.msra.mxu0 %v30
    %83 = vmatpush.msra.mxu0 %v29
    %84 = vmatpush.msra.mxu0 %v28
    %85 = vmatpush.msra.mxu0 %v27
    %86 = vmatpush.msra.mxu0 %v26
    %87 = vmatpush.msra.mxu0 %v25
    %88 = vmatpush.msra.mxu0 %v24
    %89 = vmatpush.msra.mxu0 %v23
    %90 = vmatpush.msra.mxu0 %v22
    %91 = vmatmul.f32.gmra.mxu0 %v21
    %v92 = vpop.f32.mrf.mxu0
    %v93 = vadd.f32 %v73, %v92
    %94 = vdwg.mxu0
    %v95 = vld [vmem:[%s3] sm:$0x1]
    %v97 = vperm.slane %v95, 0
    %v99 = vadd.f32 %v93, %v97
    %100 = vst [vmem:[#allocation2] sm:$0x3] %v99
    %v101 = vlaneseq
    %v102 = vand.u32 %v101, 127
    %vm103 = vcmp.lt.s32.totalorder %v102, 10
    %v104 = vsel %vm103, %v99, -inf
    %vm105 = vcmask 1041408
    %v106 = vsel %vm105, %v104, -inf
    %107 = vmax.xlane.f32.xlu0 %v106
    %v108 = vpop.xlane.xlu0 %107
    %v109 = vsub.f32 %v104, %v108
    %v110 = vmul.f32 %v109, 1.442695
    %v111 = vpow.pop %v110
    %v112 = vsel %vm105, %v111, 0.0
    %113 = vadd.xlane.f32.xlu0 %v112
    %v114 = vpop.xlane.xlu0 %113
    %v115 = vrcp.pop %v114
    %v116 = vmul.f32 %v111, %v115
    %117 = vst [vmem:[#allocation4] sm:$0x3] %v116
    // Predicated region
    $region18: #{dual_model_cnn_forward.3} parent=1 // pred_check
      _
    $region19: #{dual_model_cnn_forward.3} parent=1 // pred_check_branch
      %119 = sbr.rel (0) target = $region21
    $region20: #{dual_model_cnn_forward.3} parent=1 // pred_region
      %121 = vsyncadd [#allocation3], 0
      %s123 = sshll.u32 [#allocation2], 4
      %s124 = int_to_ptr.vmem [resolvable:$true] %s123
      %s125 = sshll.u32 %s4, 4
      %s126 = int_to_ptr.hbm [resolvable:$true] %s125
      %128 = dma.vmem_to_hbm [thread:$0]  %s124, 32, %s126, [#allocation3]
    $region21: #{dual_model_cnn_forward.3} parent=1 // pred_fallthru
      _
    // Predicated region
    $region22: #{dual_model_cnn_forward.3} parent=1 // pred_check
      _
    $region23: #{dual_model_cnn_forward.3} parent=1 // pred_check_branch
      %130 = sbr.rel (0) target = $region25
    $region24: #{dual_model_cnn_forward.3} parent=1 // pred_region
      %132 = vsyncadd [#allocation5], 0
      %s134 = sshll.u32 [#allocation4], 4
      %s135 = int_to_ptr.vmem [resolvable:$true] %s134
      %s136 = sshll.u32 %s5, 4
      %s137 = int_to_ptr.hbm [resolvable:$true] %s136
      %139 = dma.vmem_to_hbm [thread:$0]  %s135, 32, %s137, [#allocation5]
    $region25: #{dual_model_cnn_forward.3} parent=1 // pred_fallthru
      _
    // Predicated region
    $region26: #{dual_model_cnn_forward.3} parent=1 // pred_check
      _
    $region27: #{dual_model_cnn_forward.3} parent=1 // pred_check_branch
      %141 = sbr.rel (0) target = $region29
    $region28: #{dual_model_cnn_forward.3} parent=1 // pred_region
      %143 = dma.done [#allocation3], 32
    $region29: #{dual_model_cnn_forward.3} parent=1 // pred_fallthru
      _
    // Predicated region
    $region30: #{dual_model_cnn_forward.3} parent=1 // pred_check
      _
    $region31: #{dual_model_cnn_forward.3} parent=1 // pred_check_branch
      %145 = sbr.rel (0) target = $region33
    $region32: #{dual_model_cnn_forward.3} parent=1 // pred_region
      %147 = dma.done [#allocation5], 32
    $region33: #{dual_model_cnn_forward.3} parent=1 // pred_fallthru
      _
    %148 = vsyncpa [#allocation3], 1
    %149 = vsyncpa [#allocation5], 1

// kernel: dual_model_cnn_forward.2
$region0: #{dual_model_cnn_forward.2}
  #allocation0 [shape = 'u32[]', space=smem, size = 0x4, offset = 0x4, fixed_abs, tag = 'smem constant byte address 0x4 - core index']
  #allocation1 [shape = 'u32[72,128]{1,0:T(1,128)}', space=vmem, size = 0x9000, scoped, tag = 'internal scratch']
  #allocation2 [shape = 'bf16[224,162]{1,0:T(8,128)(2,1)}', space=vmem, size = 0x1c000, scoped, tag = 'scratch operand']
  %s0 = inlined_call_operand.vmem [shape: bf16[512,96], index: 0, kind: input, shape index: {}]
  %s1 = inlined_call_operand.vmem [shape: bf16[5,96,168], index: 1, kind: input, shape index: {}]
  %s2 = inlined_call_operand.vmem [shape: f32[1,162], index: 2, kind: input, shape index: {}]
  %s3 = inlined_call_operand.vmem [shape: bf16[5,162,160], index: 3, kind: input, shape index: {}]
  %s4 = inlined_call_operand.vmem [shape: f32[1,144], index: 4, kind: input, shape index: {}]
  %s5 = inlined_call_operand.vmem [shape: bf16[5,144,128], index: 5, kind: input, shape index: {}]
  %s6 = inlined_call_operand.vmem [shape: f32[1,128], index: 6, kind: input, shape index: {}]
  %s7 = inlined_call_operand.vmem [shape: f32[16,128], index: 7, kind: output, shape index: {}]
  %s8 = sld [smem:[#allocation0]]
  $region38: #{dual_model_cnn_forward.2} parent=0
    _
  %s10 = ssub.s32 1, %s8
  %s11 = scalar_select 0, %s10, %s8
  // Predicated region
  $region2: #{dual_model_cnn_forward.2} parent=0 // pred_check
    _
  $region3: #{dual_model_cnn_forward.2} parent=0 // pred_check_branch
    %13 = sbr.rel (0) target = $region5
  $region4: #{dual_model_cnn_forward.2} parent=0 // pred_region
    _
  $region5: #{dual_model_cnn_forward.2} parent=0 // pred_fallthru
    _
  // Predicated region
  $region6: #{dual_model_cnn_forward.2} parent=0 // pred_check
    _
  $region7: #{dual_model_cnn_forward.2} parent=0 // pred_check_branch
    %15 = sbr.rel (0) target = $region9
  $region8: #{dual_model_cnn_forward.2} parent=0 // pred_region
    _
  $region9: #{dual_model_cnn_forward.2} parent=0 // pred_fallthru
    _
  // Predicated region
  $region10: #{dual_model_cnn_forward.2} parent=0 // pred_check
    _
  $region11: #{dual_model_cnn_forward.2} parent=0 // pred_check_branch
    %17 = sbr.rel (0) target = $region13
  $region12: #{dual_model_cnn_forward.2} parent=0 // pred_region
    _
  $region13: #{dual_model_cnn_forward.2} parent=0 // pred_fallthru
    _
  // Predicated region
  $region14: #{dual_model_cnn_forward.2} parent=0 // pred_check
    _
  $region15: #{dual_model_cnn_forward.2} parent=0 // pred_check_branch
    %19 = sbr.rel (0) target = $region17
  $region16: #{dual_model_cnn_forward.2} parent=0 // pred_region
    _
  $region17: #{dual_model_cnn_forward.2} parent=0 // pred_fallthru
    _
  // Predicated region
  $region18: #{dual_model_cnn_forward.2} parent=0 // pred_check
    _
  $region19: #{dual_model_cnn_forward.2} parent=0 // pred_check_branch
    %21 = sbr.rel (0) target = $region21
  $region20: #{dual_model_cnn_forward.2} parent=0 // pred_region
    _
  $region21: #{dual_model_cnn_forward.2} parent=0 // pred_fallthru
    _
  // Predicated region
  $region22: #{dual_model_cnn_forward.2} parent=0 // pred_check
    _
  $region23: #{dual_model_cnn_forward.2} parent=0 // pred_check_branch
    %23 = sbr.rel (0) target = $region25
  $region24: #{dual_model_cnn_forward.2} parent=0 // pred_region
    _
  $region25: #{dual_model_cnn_forward.2} parent=0 // pred_fallthru
    _
  // Predicated region
  $region26: #{dual_model_cnn_forward.2} parent=0 // pred_check
    _
  $region27: #{dual_model_cnn_forward.2} parent=0 // pred_check_branch
    %25 = sbr.rel (0) target = $region29
  $region28: #{dual_model_cnn_forward.2} parent=0 // pred_region
    _
  $region29: #{dual_model_cnn_forward.2} parent=0 // pred_fallthru
    _
  %v27 = vld [vmem:[%s0] sm:$0xf]
  %v28 = vld [vmem:[%s0 + $0x4] sm:$0xf]
  %v29 = vld [vmem:[%s0 + $0x8] sm:$0xf]
  %v30 = vld [vmem:[%s0 + $0xc] sm:$0xf]
  %v31 = vld [vmem:[%s0 + $0x10] sm:$0xf]
  %v32 = vld [vmem:[%s0 + $0x14] sm:$0xf]
  %v33 = vld [vmem:[%s0 + $0x18] sm:$0xf]
  %v34 = vld [vmem:[%s0 + $0x1c] sm:$0xf]
  %v35 = vld [vmem:[%s0 + $0x20] sm:$0xf]
  %v36 = vld [vmem:[%s0 + $0x24] sm:$0xf]
  %v37 = vld [vmem:[%s0 + $0x28] sm:$0xf]
  %v38 = vld [vmem:[%s0 + $0x2c] sm:$0xf]
  %v39 = vld [vmem:[%s0 + $0x30] sm:$0xf]
  %v40 = vld [vmem:[%s0 + $0x34] sm:$0xf]
  %v41 = vld [vmem:[%s0 + $0x38] sm:$0xf]
  %v42 = vld [vmem:[%s0 + $0x3c] sm:$0xf]
  %v43 = vld [vmem:[%s0 + $0x40] sm:$0xf]
  %v44 = vld [vmem:[%s0 + $0x44] sm:$0xf]
  %v45 = vld [vmem:[%s0 + $0x48] sm:$0xf]
  %v46 = vld [vmem:[%s0 + $0x4c] sm:$0xf]
  %v47 = vld [vmem:[%s0 + $0x50] sm:$0xf]
  %v48 = vld [vmem:[%s0 + $0x54] sm:$0xf]
  %v49 = vld [vmem:[%s0 + $0x58] sm:$0xf]
  %v50 = vld [vmem:[%s0 + $0x5c] sm:$0xf]
  %v51 = vld [vmem:[%s0 + $0x60] sm:$0xf]
  %v52 = vld [vmem:[%s0 + $0x64] sm:$0xf]
  %v53 = vld [vmem:[%s0 + $0x68] sm:$0xf]
  %v54 = vld [vmem:[%s0 + $0x6c] sm:$0xf]
  %v55 = vld [vmem:[%s0 + $0x70] sm:$0xf]
  %v56 = vld [vmem:[%s0 + $0x74] sm:$0xf]
  %v57 = vld [vmem:[%s0 + $0x78] sm:$0xf]
  %v58 = vld [vmem:[%s0 + $0x7c] sm:$0xf]
  %v59 = vld [vmem:[%s0 + $0x80] sm:$0xf]
  %v60 = vld [vmem:[%s0 + $0x84] sm:$0xf]
  %v61 = vld [vmem:[%s0 + $0x88] sm:$0xf]
  %v62 = vld [vmem:[%s0 + $0x8c] sm:$0xf]
  %v63 = vld [vmem:[%s0 + $0x90] sm:$0xf]
  %v64 = vld [vmem:[%s0 + $0x94] sm:$0xf]
  %v65 = vld [vmem:[%s0 + $0x98] sm:$0xf]
  %v66 = vld [vmem:[%s0 + $0x9c] sm:$0xf]
  %v67 = vld [vmem:[%s0 + $0xa0] sm:$0xf]
  %v68 = vld [vmem:[%s0 + $0xa4] sm:$0xf]
  %v69 = vld [vmem:[%s0 + $0xa8] sm:$0xf]
  %v70 = vld [vmem:[%s0 + $0xac] sm:$0xf]
  %v71 = vld [vmem:[%s0 + $0xb0] sm:$0xf]
  %v72 = vld [vmem:[%s0 + $0xb4] sm:$0xf]
  %v73 = vld [vmem:[%s0 + $0xb8] sm:$0xf]
  %v74 = vld [vmem:[%s0 + $0xbc] sm:$0xf]
  %v75 = vld [vmem:[%s0 + $0xc0] sm:$0xf]
  %v76 = vld [vmem:[%s0 + $0xc4] sm:$0xf]
  %v77 = vld [vmem:[%s0 + $0xc8] sm:$0xf]
  %v78 = vld [vmem:[%s0 + $0xcc] sm:$0xf]
  %v79 = vld [vmem:[%s0 + $0xd0] sm:$0xf]
  %v80 = vld [vmem:[%s0 + $0xd4] sm:$0xf]
  %v81 = vld [vmem:[%s0 + $0xd8] sm:$0xf]
  %v82 = vld [vmem:[%s0 + $0xdc] sm:$0xf]
  %v83 = vld [vmem:[%s1] sm:$0xff]
  %v84 = vld [vmem:[%s1 + $0x8] sm:$0xff]
  %v85 = vld [vmem:[%s1 + $0x10] sm:$0xff]
  %v86 = vld [vmem:[%s1 + $0x18] sm:$0xff]
  %v87 = vld [vmem:[%s1 + $0x20] sm:$0xff]
  %v88 = vld [vmem:[%s1 + $0x28] sm:$0xff]
  %v89 = vld [vmem:[%s1 + $0x30] sm:$0xff]
  %v90 = vld [vmem:[%s1 + $0x38] sm:$0xff]
  %v91 = vld [vmem:[%s1 + $0x40] sm:$0xff]
  %v92 = vld [vmem:[%s1 + $0x48] sm:$0xff]
  %v93 = vld [vmem:[%s1 + $0x50] sm:$0xff]
  %v94 = vld [vmem:[%s1 + $0x58] sm:$0xff]
  %v95 = vld [vmem:[%s0 + $0xe0] sm:$0xf]
  %v96 = vld [vmem:[%s0 + $0xe4] sm:$0xf]
  %s97 = scalar_lea.vmem %s1, 96
  %v98 = vld [vmem:[%s97] sm:$0xff]
  %v99 = vld [vmem:[%s97 + $0x8] sm:$0xff]
  %v100 = vld [vmem:[%s97 + $0x10] sm:$0xff]
  %v101 = vld [vmem:[%s97 + $0x18] sm:$0xff]
  %v102 = vld [vmem:[%s97 + $0x20] sm:$0xff]
  %v103 = vld [vmem:[%s97 + $0x28] sm:$0xff]
  %v104 = vld [vmem:[%s97 + $0x30] sm:$0xff]
  %v105 = vld [vmem:[%s97 + $0x38] sm:$0xff]
  %v106 = vld [vmem:[%s97 + $0x40] sm:$0xff]
  %v107 = vld [vmem:[%s97 + $0x48] sm:$0xff]
  %v108 = vld [vmem:[%s97 + $0x50] sm:$0xff]
  %v109 = vld [vmem:[%s97 + $0x58] sm:$0xff]
  %v166 = vunpack.c.l.b16 %v29
  %v167 = vunpack.c.l.b16 %v30
  %v168 = vunpack.c.l.b16 %v31
  %v169 = vunpack.c.l.b16 %v32
  %v170 = vunpack.c.l.b16 %v33
  %v171 = vunpack.c.l.b16 %v34
  %v172 = vunpack.c.l.b16 %v35
  %v173 = vunpack.c.l.b16 %v36
  %v174 = vunpack.c.l.b16 %v37
  %v175 = vunpack.c.l.b16 %v38
  %v176 = vunpack.c.l.b16 %v39
  %v177 = vunpack.c.l.b16 %v40
  %v178 = vunpack.c.l.b16 %v41
  %v179 = vunpack.c.l.b16 %v42
  %v180 = vunpack.c.l.b16 %v43
  %v181 = vunpack.c.l.b16 %v44
  %v182 = vunpack.c.l.b16 %v45
  %v183 = vunpack.c.l.b16 %v46
  %v184 = vunpack.c.l.b16 %v47
  %v185 = vunpack.c.l.b16 %v48
  %v186 = vunpack.c.l.b16 %v49
  %v187 = vunpack.c.l.b16 %v50
  %v188 = vunpack.c.l.b16 %v51
  %v189 = vunpack.c.l.b16 %v52
  %v190 = vunpack.c.l.b16 %v53
  %v191 = vunpack.c.l.b16 %v54
  %v192 = vunpack.c.l.b16 %v55
  %v193 = vunpack.c.l.b16 %v56
  %v194 = vunpack.c.l.b16 %v57
  %v195 = vunpack.c.l.b16 %v58
  %v196 = vunpack.c.l.b16 %v59
  %v197 = vunpack.c.l.b16 %v60
  %v198 = vunpack.c.l.b16 %v61
  %v199 = vunpack.c.l.b16 %v62
  %v200 = vunpack.c.l.b16 %v63
  %v201 = vunpack.c.l.b16 %v64
  %v202 = vunpack.c.l.b16 %v65
  %v203 = vunpack.c.l.b16 %v66
  %v204 = vunpack.c.l.b16 %v67
  %v205 = vunpack.c.l.b16 %v68
  %v206 = vunpack.c.l.b16 %v69
  %v207 = vunpack.c.l.b16 %v70
  %v208 = vunpack.c.l.b16 %v71
  %v209 = vunpack.c.l.b16 %v72
  %v210 = vunpack.c.l.b16 %v73
  %v211 = vunpack.c.l.b16 %v74
  %v212 = vunpack.c.l.b16 %v75
  %v213 = vunpack.c.l.b16 %v76
  %v214 = vunpack.c.l.b16 %v77
  %v215 = vunpack.c.l.b16 %v78
  %v216 = vunpack.c.l.b16 %v79
  %v217 = vunpack.c.l.b16 %v80
  %v218 = vunpack.c.l.b16 %v81
  %v219 = vunpack.c.l.b16 %v82
  %v220 = vunpack.c.l.b16 %v95
  %v221 = vunpack.c.l.b16 %v96
  %v222 = vpack.c.b16 %v167, %v166
  %v223 = vpack.c.b16 %v169, %v168
  %v224 = vpack.c.b16 %v171, %v170
  %v225 = vpack.c.b16 %v173, %v172
  %v226 = vpack.c.b16 %v175, %v174
  %v227 = vpack.c.b16 %v177, %v176
  %v228 = vpack.c.b16 %v179, %v178
  %v229 = vpack.c.b16 %v181, %v180
  %v230 = vpack.c.b16 %v183, %v182
  %v231 = vpack.c.b16 %v185, %v184
  %v232 = vpack.c.b16 %v187, %v186
  %v233 = vpack.c.b16 %v189, %v188
  %v234 = vpack.c.b16 %v191, %v190
  %v235 = vpack.c.b16 %v193, %v192
  %v236 = vpack.c.b16 %v195, %v194
  %v237 = vpack.c.b16 %v197, %v196
  %v238 = vpack.c.b16 %v199, %v198
  %v239 = vpack.c.b16 %v201, %v200
  %v240 = vpack.c.b16 %v203, %v202
  %v241 = vpack.c.b16 %v205, %v204
  %v242 = vpack.c.b16 %v207, %v206
  %v243 = vpack.c.b16 %v209, %v208
  %v244 = vpack.c.b16 %v211, %v210
  %v245 = vpack.c.b16 %v213, %v212
  %v246 = vpack.c.b16 %v215, %v214
  %v247 = vpack.c.b16 %v217, %v216
  %v248 = vpack.c.b16 %v219, %v218
  %v249 = vpack.c.b16 %v221, %v220
  %v262 = vunpack.c.l.b16 %v98
  %v263 = vunpack.c.h.b16 %v98
  %v264 = vunpack.c.l.b16 %v99
  %v265 = vunpack.c.h.b16 %v99
  %v266 = vunpack.c.l.b16 %v100
  %v267 = vunpack.c.h.b16 %v100
  %v268 = vunpack.c.l.b16 %v101
  %v269 = vunpack.c.h.b16 %v101
  %v270 = vunpack.c.l.b16 %v102
  %v271 = vunpack.c.h.b16 %v102
  %v272 = vunpack.c.l.b16 %v103
  %v273 = vunpack.c.h.b16 %v103
  %v274 = vunpack.c.l.b16 %v104
  %v275 = vunpack.c.h.b16 %v104
  %v276 = vunpack.c.l.b16 %v105
  %v277 = vunpack.c.h.b16 %v105
  %v278 = vunpack.c.l.b16 %v106
  %v279 = vunpack.c.h.b16 %v106
  %v280 = vunpack.c.l.b16 %v107
  %v281 = vunpack.c.h.b16 %v107
  %v282 = vunpack.c.l.b16 %v108
  %v283 = vunpack.c.h.b16 %v108
  %v284 = vunpack.c.l.b16 %v109
  %v285 = vunpack.c.h.b16 %v109
  %v286 = vpack.c.b16 %v264, %v262
  %v287 = vpack.c.b16 %v265, %v263
  %v288 = vpack.c.b16 %v268, %v266
  %v289 = vpack.c.b16 %v269, %v267
  %v290 = vpack.c.b16 %v272, %v270
  %v291 = vpack.c.b16 %v273, %v271
  %v292 = vpack.c.b16 %v276, %v274
  %v293 = vpack.c.b16 %v277, %v275
  %v294 = vpack.c.b16 %v280, %v278
  %v295 = vpack.c.b16 %v281, %v279
  %v296 = vpack.c.b16 %v284, %v282
  %v297 = vpack.c.b16 %v285, %v283
  %vm310 = vcmask 785408
  %v312 = vsel %vm310, %v222, 0
  %v315 = vsel %vm310, %v223, 0
  %v318 = vsel %vm310, %v224, 0
  %v321 = vsel %vm310, %v225, 0
  %v324 = vsel %vm310, %v226, 0
  %v327 = vsel %vm310, %v227, 0
  %v330 = vsel %vm310, %v228, 0
  %v333 = vsel %vm310, %v229, 0
  %v336 = vsel %vm310, %v230, 0
  %v339 = vsel %vm310, %v231, 0
  %v342 = vsel %vm310, %v232, 0
  %v345 = vsel %vm310, %v233, 0
  %v348 = vsel %vm310, %v234, 0
  %v351 = vsel %vm310, %v235, 0
  %v354 = vsel %vm310, %v236, 0
  %v357 = vsel %vm310, %v237, 0
  %v360 = vsel %vm310, %v238, 0
  %v363 = vsel %vm310, %v239, 0
  %v366 = vsel %vm310, %v240, 0
  %v369 = vsel %vm310, %v241, 0
  %v372 = vsel %vm310, %v242, 0
  %v375 = vsel %vm310, %v243, 0
  %v378 = vsel %vm310, %v244, 0
  %v381 = vsel %vm310, %v245, 0
  %v384 = vsel %vm310, %v246, 0
  %v387 = vsel %vm310, %v247, 0
  %v390 = vsel %vm310, %v248, 0
  %v393 = vsel %vm310, %v249, 0
  %395 = vmatpush.bf16.msra.mxu0 0
  %396 = vmatpush.bf16.msra.mxu0 0
  %397 = vmatpush.bf16.msra.mxu0 %v296
  %398 = vmatpush.bf16.msra.mxu0 %v294
  %399 = vmatpush.bf16.msra.mxu0 %v292
  %400 = vmatpush.bf16.msra.mxu0 %v290
  %401 = vmatpush.bf16.msra.mxu0 %v288
  %402 = vmatpush.bf16.msra.mxu0 %v286
  %403 = vmatmul.bf16.gmra.mxu0 %v312
  %v404 = vpop.f32.mrf.mxu0
  %v405 = vadd.f32 0.0, %v404
  %v406 = vpop.f32.mrf.mxu0
  %v407 = vadd.f32 0.0, %v406
  %408 = vmatmul.bf16.gmra.mxu0 %v315
  %v409 = vpop.f32.mrf.mxu0
  %v410 = vadd.f32 0.0, %v409
  %v411 = vpop.f32.mrf.mxu0
  %v412 = vadd.f32 0.0, %v411
  %413 = vmatmul.bf16.gmra.mxu0 %v318
  %v414 = vpop.f32.mrf.mxu0
  %v415 = vadd.f32 0.0, %v414
  %v416 = vpop.f32.mrf.mxu0
  %v417 = vadd.f32 0.0, %v416
  %418 = vmatmul.bf16.gmra.mxu0 %v321
  %v419 = vpop.f32.mrf.mxu0
  %v420 = vadd.f32 0.0, %v419
  %v421 = vpop.f32.mrf.mxu0
  %v422 = vadd.f32 0.0, %v421
  %423 = vmatmul.bf16.gmra.mxu0 %v324
  %v424 = vpop.f32.mrf.mxu0
  %v425 = vadd.f32 0.0, %v424
  %v426 = vpop.f32.mrf.mxu0
  %v427 = vadd.f32 0.0, %v426
  %428 = vmatmul.bf16.gmra.mxu0 %v327
  %v429 = vpop.f32.mrf.mxu0
  %v430 = vadd.f32 0.0, %v429
  %v431 = vpop.f32.mrf.mxu0
  %v432 = vadd.f32 0.0, %v431
  %433 = vmatmul.bf16.gmra.mxu0 %v330
  %v434 = vpop.f32.mrf.mxu0
  %v435 = vadd.f32 0.0, %v434
  %v436 = vpop.f32.mrf.mxu0
  %v437 = vadd.f32 0.0, %v436
  %438 = vmatmul.bf16.gmra.mxu0 %v333
  %v439 = vpop.f32.mrf.mxu0
  %v440 = vadd.f32 0.0, %v439
  %v441 = vpop.f32.mrf.mxu0
  %v442 = vadd.f32 0.0, %v441
  %443 = vmatmul.bf16.gmra.mxu0 %v336
  %v444 = vpop.f32.mrf.mxu0
  %v445 = vadd.f32 0.0, %v444
  %v446 = vpop.f32.mrf.mxu0
  %v447 = vadd.f32 0.0, %v446
  %448 = vmatmul.bf16.gmra.mxu0 %v339
  %v449 = vpop.f32.mrf.mxu0
  %v450 = vadd.f32 0.0, %v449
  %v451 = vpop.f32.mrf.mxu0
  %v452 = vadd.f32 0.0, %v451
  %453 = vmatmul.bf16.gmra.mxu0 %v342
  %v454 = vpop.f32.mrf.mxu0
  %v455 = vadd.f32 0.0, %v454
  %v456 = vpop.f32.mrf.mxu0
  %v457 = vadd.f32 0.0, %v456
  %458 = vmatmul.bf16.gmra.mxu0 %v345
  %v459 = vpop.f32.mrf.mxu0
  %v460 = vadd.f32 0.0, %v459
  %v461 = vpop.f32.mrf.mxu0
  %v462 = vadd.f32 0.0, %v461
  %463 = vmatmul.bf16.gmra.mxu0 %v348
  %v464 = vpop.f32.mrf.mxu0
  %v465 = vadd.f32 0.0, %v464
  %v466 = vpop.f32.mrf.mxu0
  %v467 = vadd.f32 0.0, %v466
  %468 = vmatmul.bf16.gmra.mxu0 %v351
  %v469 = vpop.f32.mrf.mxu0
  %v470 = vadd.f32 0.0, %v469
  %v471 = vpop.f32.mrf.mxu0
  %v472 = vadd.f32 0.0, %v471
  %473 = vmatmul.bf16.gmra.mxu0 %v354
  %v474 = vpop.f32.mrf.mxu0
  %v475 = vadd.f32 0.0, %v474
  %v476 = vpop.f32.mrf.mxu0
  %v477 = vadd.f32 0.0, %v476
  %478 = vmatmul.bf16.gmra.mxu0 %v357
  %v479 = vpop.f32.mrf.mxu0
  %v480 = vadd.f32 0.0, %v479
  %v481 = vpop.f32.mrf.mxu0
  %v482 = vadd.f32 0.0, %v481
  %483 = vmatmul.bf16.gmra.mxu0 %v360
  %v484 = vpop.f32.mrf.mxu0
  %v485 = vadd.f32 0.0, %v484
  %v486 = vpop.f32.mrf.mxu0
  %v487 = vadd.f32 0.0, %v486
  %488 = vmatmul.bf16.gmra.mxu0 %v363
  %v489 = vpop.f32.mrf.mxu0
  %v490 = vadd.f32 0.0, %v489
  %v491 = vpop.f32.mrf.mxu0
  %v492 = vadd.f32 0.0, %v491
  %493 = vmatmul.bf16.gmra.mxu0 %v366
  %v494 = vpop.f32.mrf.mxu0
  %v495 = vadd.f32 0.0, %v494
  %v496 = vpop.f32.mrf.mxu0
  %v497 = vadd.f32 0.0, %v496
  %498 = vmatmul.bf16.gmra.mxu0 %v369
  %v499 = vpop.f32.mrf.mxu0
  %v500 = vadd.f32 0.0, %v499
  %v501 = vpop.f32.mrf.mxu0
  %v502 = vadd.f32 0.0, %v501
  %503 = vmatmul.bf16.gmra.mxu0 %v372
  %v504 = vpop.f32.mrf.mxu0
  %v505 = vadd.f32 0.0, %v504
  %v506 = vpop.f32.mrf.mxu0
  %v507 = vadd.f32 0.0, %v506
  %508 = vmatmul.bf16.gmra.mxu0 %v375
  %v509 = vpop.f32.mrf.mxu0
  %v510 = vadd.f32 0.0, %v509
  %v511 = vpop.f32.mrf.mxu0
  %v512 = vadd.f32 0.0, %v511
  %513 = vmatmul.bf16.gmra.mxu0 %v378
  %v514 = vpop.f32.mrf.mxu0
  %v515 = vadd.f32 0.0, %v514
  %v516 = vpop.f32.mrf.mxu0
  %v517 = vadd.f32 0.0, %v516
  %518 = vmatmul.bf16.gmra.mxu0 %v381
  %v519 = vpop.f32.mrf.mxu0
  %v520 = vadd.f32 0.0, %v519
  %v521 = vpop.f32.mrf.mxu0
  %v522 = vadd.f32 0.0, %v521
  %523 = vmatmul.bf16.gmra.mxu0 %v384
  %v524 = vpop.f32.mrf.mxu0
  %v525 = vadd.f32 0.0, %v524
  %v526 = vpop.f32.mrf.mxu0
  %v527 = vadd.f32 0.0, %v526
  %528 = vmatmul.bf16.gmra.mxu0 %v387
  %v529 = vpop.f32.mrf.mxu0
  %v530 = vadd.f32 0.0, %v529
  %v531 = vpop.f32.mrf.mxu0
  %v532 = vadd.f32 0.0, %v531
  %533 = vmatmul.bf16.gmra.mxu0 %v390
  %v534 = vpop.f32.mrf.mxu0
  %v535 = vadd.f32 0.0, %v534
  %v536 = vpop.f32.mrf.mxu0
  %v537 = vadd.f32 0.0, %v536
  %538 = vmatmul.bf16.gmra.mxu0 %v393
  %v539 = vpop.f32.mrf.mxu0
  %v540 = vadd.f32 0.0, %v539
  %v541 = vpop.f32.mrf.mxu0
  %v542 = vadd.f32 0.0, %v541
  %543 = vdwg.mxu0
  %544 = vmatpush.bf16.msra.mxu0 0
  %545 = vmatpush.bf16.msra.mxu0 0
  %546 = vmatpush.bf16.msra.mxu0 %v297
  %547 = vmatpush.bf16.msra.mxu0 %v295
  %548 = vmatpush.bf16.msra.mxu0 %v293
  %549 = vmatpush.bf16.msra.mxu0 %v291
  %550 = vmatpush.bf16.msra.mxu0 %v289
  %551 = vmatpush.bf16.msra.mxu0 %v287
  %552 = vmatmul.bf16.gmra.mxu0 %v312
  %v553 = vpop.f32.mrf.mxu0
  %v554 = vadd.f32 0.0, %v553
  %v555 = vpop.f32.mrf.mxu0
  %v556 = vadd.f32 0.0, %v555
  %557 = vmatmul.bf16.gmra.mxu0 %v315
  %v558 = vpop.f32.mrf.mxu0
  %v559 = vadd.f32 0.0, %v558
  %v560 = vpop.f32.mrf.mxu0
  %v561 = vadd.f32 0.0, %v560
  %562 = vmatmul.bf16.gmra.mxu0 %v318
  %v563 = vpop.f32.mrf.mxu0
  %v564 = vadd.f32 0.0, %v563
  %v565 = vpop.f32.mrf.mxu0
  %v566 = vadd.f32 0.0, %v565
  %567 = vmatmul.bf16.gmra.mxu0 %v321
  %v568 = vpop.f32.mrf.mxu0
  %v569 = vadd.f32 0.0, %v568
  %v570 = vpop.f32.mrf.mxu0
  %v571 = vadd.f32 0.0, %v570
  %572 = vmatmul.bf16.gmra.mxu0 %v324
  %v573 = vpop.f32.mrf.mxu0
  %v574 = vadd.f32 0.0, %v573
  %v575 = vpop.f32.mrf.mxu0
  %v576 = vadd.f32 0.0, %v575
  %577 = vmatmul.bf16.gmra.mxu0 %v327
  %v578 = vpop.f32.mrf.mxu0
  %v579 = vadd.f32 0.0, %v578
  %v580 = vpop.f32.mrf.mxu0
  %v581 = vadd.f32 0.0, %v580
  %582 = vmatmul.bf16.gmra.mxu0 %v330
  %v583 = vpop.f32.mrf.mxu0
  %v584 = vadd.f32 0.0, %v583
  %v585 = vpop.f32.mrf.mxu0
  %v586 = vadd.f32 0.0, %v585
  %587 = vmatmul.bf16.gmra.mxu0 %v333
  %v588 = vpop.f32.mrf.mxu0
  %v589 = vadd.f32 0.0, %v588
  %v590 = vpop.f32.mrf.mxu0
  %v591 = vadd.f32 0.0, %v590
  %592 = vmatmul.bf16.gmra.mxu0 %v336
  %v593 = vpop.f32.mrf.mxu0
  %v594 = vadd.f32 0.0, %v593
  %v595 = vpop.f32.mrf.mxu0
  %v596 = vadd.f32 0.0, %v595
  %597 = vmatmul.bf16.gmra.mxu0 %v339
  %v598 = vpop.f32.mrf.mxu0
  %v599 = vadd.f32 0.0, %v598
  %v600 = vpop.f32.mrf.mxu0
  %v601 = vadd.f32 0.0, %v600
  %602 = vmatmul.bf16.gmra.mxu0 %v342
  %v603 = vpop.f32.mrf.mxu0
  %v604 = vadd.f32 0.0, %v603
  %v605 = vpop.f32.mrf.mxu0
  %v606 = vadd.f32 0.0, %v605
  %607 = vmatmul.bf16.gmra.mxu0 %v345
  %v608 = vpop.f32.mrf.mxu0
  %v609 = vadd.f32 0.0, %v608
  %v610 = vpop.f32.mrf.mxu0
  %v611 = vadd.f32 0.0, %v610
  %612 = vmatmul.bf16.gmra.mxu0 %v348
  %v613 = vpop.f32.mrf.mxu0
  %v614 = vadd.f32 0.0, %v613
  %v615 = vpop.f32.mrf.mxu0
  %v616 = vadd.f32 0.0, %v615
  %617 = vmatmul.bf16.gmra.mxu0 %v351
  %v618 = vpop.f32.mrf.mxu0
  %v619 = vadd.f32 0.0, %v618
  %v620 = vpop.f32.mrf.mxu0
  %v621 = vadd.f32 0.0, %v620
  %622 = vmatmul.bf16.gmra.mxu0 %v354
  %v623 = vpop.f32.mrf.mxu0
  %v624 = vadd.f32 0.0, %v623
  %v625 = vpop.f32.mrf.mxu0
  %v626 = vadd.f32 0.0, %v625
  %627 = vmatmul.bf16.gmra.mxu0 %v357
  %v628 = vpop.f32.mrf.mxu0
  %v629 = vadd.f32 0.0, %v628
  %v630 = vpop.f32.mrf.mxu0
  %v631 = vadd.f32 0.0, %v630
  %632 = vmatmul.bf16.gmra.mxu0 %v360
  %v633 = vpop.f32.mrf.mxu0
  %v634 = vadd.f32 0.0, %v633
  %v635 = vpop.f32.mrf.mxu0
  %v636 = vadd.f32 0.0, %v635
  %637 = vmatmul.bf16.gmra.mxu0 %v363
  %v638 = vpop.f32.mrf.mxu0
  %v639 = vadd.f32 0.0, %v638
  %v640 = vpop.f32.mrf.mxu0
  %v641 = vadd.f32 0.0, %v640
  %642 = vmatmul.bf16.gmra.mxu0 %v366
  %v643 = vpop.f32.mrf.mxu0
  %v644 = vadd.f32 0.0, %v643
  %v645 = vpop.f32.mrf.mxu0
  %v646 = vadd.f32 0.0, %v645
  %647 = vmatmul.bf16.gmra.mxu0 %v369
  %v648 = vpop.f32.mrf.mxu0
  %v649 = vadd.f32 0.0, %v648
  %v650 = vpop.f32.mrf.mxu0
  %v651 = vadd.f32 0.0, %v650
  %652 = vmatmul.bf16.gmra.mxu0 %v372
  %v653 = vpop.f32.mrf.mxu0
  %v654 = vadd.f32 0.0, %v653
  %v655 = vpop.f32.mrf.mxu0
  %v656 = vadd.f32 0.0, %v655
  %657 = vmatmul.bf16.gmra.mxu0 %v375
  %v658 = vpop.f32.mrf.mxu0
  %v659 = vadd.f32 0.0, %v658
  %v660 = vpop.f32.mrf.mxu0
  %v661 = vadd.f32 0.0, %v660
  %662 = vmatmul.bf16.gmra.mxu0 %v378
  %v663 = vpop.f32.mrf.mxu0
  %v664 = vadd.f32 0.0, %v663
  %v665 = vpop.f32.mrf.mxu0
  %v666 = vadd.f32 0.0, %v665
  %667 = vmatmul.bf16.gmra.mxu0 %v381
  %v668 = vpop.f32.mrf.mxu0
  %v669 = vadd.f32 0.0, %v668
  %v670 = vpop.f32.mrf.mxu0
  %v671 = vadd.f32 0.0, %v670
  %672 = vmatmul.bf16.gmra.mxu0 %v384
  %v673 = vpop.f32.mrf.mxu0
  %v674 = vadd.f32 0.0, %v673
  %v675 = vpop.f32.mrf.mxu0
  %v676 = vadd.f32 0.0, %v675
  %677 = vmatmul.bf16.gmra.mxu0 %v387
  %v678 = vpop.f32.mrf.mxu0
  %v679 = vadd.f32 0.0, %v678
  %v680 = vpop.f32.mrf.mxu0
  %v681 = vadd.f32 0.0, %v680
  %682 = vmatmul.bf16.gmra.mxu0 %v390
  %v683 = vpop.f32.mrf.mxu0
  %v684 = vadd.f32 0.0, %v683
  %v685 = vpop.f32.mrf.mxu0
  %v686 = vadd.f32 0.0, %v685
  %687 = vmatmul.bf16.gmra.mxu0 %v393
  %v688 = vpop.f32.mrf.mxu0
  %v689 = vadd.f32 0.0, %v688
  %v690 = vpop.f32.mrf.mxu0
  %v691 = vadd.f32 0.0, %v690
  %692 = vdwg.mxu0
  %v695 = vunpack.c.l.b16 %v27
  %v696 = vunpack.c.l.b16 %v28
  %v697 = vpack.c.b16 %v696, %v695
  %v710 = vunpack.c.l.b16 %v83
  %v711 = vunpack.c.h.b16 %v83
  %v712 = vunpack.c.l.b16 %v84
  %v713 = vunpack.c.h.b16 %v84
  %v714 = vunpack.c.l.b16 %v85
  %v715 = vunpack.c.h.b16 %v85
  %v716 = vunpack.c.l.b16 %v86
  %v717 = vunpack.c.h.b16 %v86
  %v718 = vunpack.c.l.b16 %v87
  %v719 = vunpack.c.h.b16 %v87
  %v720 = vunpack.c.l.b16 %v88
  %v721 = vunpack.c.h.b16 %v88
  %v722 = vunpack.c.l.b16 %v89
  %v723 = vunpack.c.h.b16 %v89
  %v724 = vunpack.c.l.b16 %v90
  %v725 = vunpack.c.h.b16 %v90
  %v726 = vunpack.c.l.b16 %v91
  %v727 = vunpack.c.h.b16 %v91
  %v728 = vunpack.c.l.b16 %v92
  %v729 = vunpack.c.h.b16 %v92
  %v730 = vunpack.c.l.b16 %v93
  %v731 = vunpack.c.h.b16 %v93
  %v732 = vunpack.c.l.b16 %v94
  %v733 = vunpack.c.h.b16 %v94
  %v734 = vpack.c.b16 %v712, %v710
  %v735 = vpack.c.b16 %v713, %v711
  %v736 = vpack.c.b16 %v716, %v714
  %v737 = vpack.c.b16 %v717, %v715
  %v738 = vpack.c.b16 %v720, %v718
  %v739 = vpack.c.b16 %v721, %v719
  %v740 = vpack.c.b16 %v724, %v722
  %v741 = vpack.c.b16 %v725, %v723
  %v742 = vpack.c.b16 %v728, %v726
  %v743 = vpack.c.b16 %v729, %v727
  %v744 = vpack.c.b16 %v732, %v730
  %v745 = vpack.c.b16 %v733, %v731
  %v759 = vsel %vm310, %v697, 0
  %761 = vmatpush.bf16.msra.mxu0 0
  %762 = vmatpush.bf16.msra.mxu0 0
  %763 = vmatpush.bf16.msra.mxu0 %v744
  %764 = vmatpush.bf16.msra.mxu0 %v742
  %765 = vmatpush.bf16.msra.mxu0 %v740
  %766 = vmatpush.bf16.msra.mxu0 %v738
  %767 = vmatpush.bf16.msra.mxu0 %v736
  %768 = vmatpush.bf16.msra.mxu0 %v734
  %769 = vmatmul.bf16.gmra.mxu0 %v759
  %v770 = vpop.f32.mrf.mxu0
  %v771 = vadd.f32 %v405, %v770
  %v772 = vpop.f32.mrf.mxu0
  %v773 = vadd.f32 %v407, %v772
  %774 = vmatmul.bf16.gmra.mxu0 %v312
  %v775 = vpop.f32.mrf.mxu0
  %v776 = vadd.f32 %v410, %v775
  %v777 = vpop.f32.mrf.mxu0
  %v778 = vadd.f32 %v412, %v777
  %779 = vmatmul.bf16.gmra.mxu0 %v315
  %v780 = vpop.f32.mrf.mxu0
  %v781 = vadd.f32 %v415, %v780
  %v782 = vpop.f32.mrf.mxu0
  %v783 = vadd.f32 %v417, %v782
  %784 = vmatmul.bf16.gmra.mxu0 %v318
  %v785 = vpop.f32.mrf.mxu0
  %v786 = vadd.f32 %v420, %v785
  %v787 = vpop.f32.mrf.mxu0
  %v788 = vadd.f32 %v422, %v787
  %789 = vmatmul.bf16.gmra.mxu0 %v321
  %v790 = vpop.f32.mrf.mxu0
  %v791 = vadd.f32 %v425, %v790
  %v792 = vpop.f32.mrf.mxu0
  %v793 = vadd.f32 %v427, %v792
  %794 = vmatmul.bf16.gmra.mxu0 %v324
  %v795 = vpop.f32.mrf.mxu0
  %v796 = vadd.f32 %v430, %v795
  %v797 = vpop.f32.mrf.mxu0
  %v798 = vadd.f32 %v432, %v797
  %799 = vmatmul.bf16.gmra.mxu0 %v327
  %v800 = vpop.f32.mrf.mxu0
  %v801 = vadd.f32 %v435, %v800
  %v802 = vpop.f32.mrf.mxu0
  %v803 = vadd.f32 %v437, %v802
  %804 = vmatmul.bf16.gmra.mxu0 %v330
  %v805 = vpop.f32.mrf.mxu0
  %v806 = vadd.f32 %v440, %v805
  %v807 = vpop.f32.mrf.mxu0
  %v808 = vadd.f32 %v442, %v807
  %809 = vmatmul.bf16.gmra.mxu0 %v333
  %v810 = vpop.f32.mrf.mxu0
  %v811 = vadd.f32 %v445, %v810
  %v812 = vpop.f32.mrf.mxu0
  %v813 = vadd.f32 %v447, %v812
  %814 = vmatmul.bf16.gmra.mxu0 %v336
  %v815 = vpop.f32.mrf.mxu0
  %v816 = vadd.f32 %v450, %v815
  %v817 = vpop.f32.mrf.mxu0
  %v818 = vadd.f32 %v452, %v817
  %819 = vmatmul.bf16.gmra.mxu0 %v339
  %v820 = vpop.f32.mrf.mxu0
  %v821 = vadd.f32 %v455, %v820
  %v822 = vpop.f32.mrf.mxu0
  %v823 = vadd.f32 %v457, %v822
  %824 = vmatmul.bf16.gmra.mxu0 %v342
  %v825 = vpop.f32.mrf.mxu0
  %v826 = vadd.f32 %v460, %v825
  %v827 = vpop.f32.mrf.mxu0
  %v828 = vadd.f32 %v462, %v827
  %829 = vmatmul.bf16.gmra.mxu0 %v345
  %v830 = vpop.f32.mrf.mxu0
  %v831 = vadd.f32 %v465, %v830
  %v832 = vpop.f32.mrf.mxu0
  %v833 = vadd.f32 %v467, %v832
  %834 = vmatmul.bf16.gmra.mxu0 %v348
  %v835 = vpop.f32.mrf.mxu0
  %v836 = vadd.f32 %v470, %v835
  %v837 = vpop.f32.mrf.mxu0
  %v838 = vadd.f32 %v472, %v837
  %839 = vmatmul.bf16.gmra.mxu0 %v351
  %v840 = vpop.f32.mrf.mxu0
  %v841 = vadd.f32 %v475, %v840
  %v842 = vpop.f32.mrf.mxu0
  %v843 = vadd.f32 %v477, %v842
  %844 = vmatmul.bf16.gmra.mxu0 %v354
  %v845 = vpop.f32.mrf.mxu0
  %v846 = vadd.f32 %v480, %v845
  %v847 = vpop.f32.mrf.mxu0
  %v848 = vadd.f32 %v482, %v847
  %849 = vmatmul.bf16.gmra.mxu0 %v357
  %v850 = vpop.f32.mrf.mxu0
  %v851 = vadd.f32 %v485, %v850
  %v852 = vpop.f32.mrf.mxu0
  %v853 = vadd.f32 %v487, %v852
  %854 = vmatmul.bf16.gmra.mxu0 %v360
  %v855 = vpop.f32.mrf.mxu0
  %v856 = vadd.f32 %v490, %v855
  %v857 = vpop.f32.mrf.mxu0
  %v858 = vadd.f32 %v492, %v857
  %859 = vmatmul.bf16.gmra.mxu0 %v363
  %v860 = vpop.f32.mrf.mxu0
  %v861 = vadd.f32 %v495, %v860
  %v862 = vpop.f32.mrf.mxu0
  %v863 = vadd.f32 %v497, %v862
  %864 = vmatmul.bf16.gmra.mxu0 %v366
  %v865 = vpop.f32.mrf.mxu0
  %v866 = vadd.f32 %v500, %v865
  %v867 = vpop.f32.mrf.mxu0
  %v868 = vadd.f32 %v502, %v867
  %869 = vmatmul.bf16.gmra.mxu0 %v369
  %v870 = vpop.f32.mrf.mxu0
  %v871 = vadd.f32 %v505, %v870
  %v872 = vpop.f32.mrf.mxu0
  %v873 = vadd.f32 %v507, %v872
  %874 = vmatmul.bf16.gmra.mxu0 %v372
  %v875 = vpop.f32.mrf.mxu0
  %v876 = vadd.f32 %v510, %v875
  %v877 = vpop.f32.mrf.mxu0
  %v878 = vadd.f32 %v512, %v877
  %879 = vmatmul.bf16.gmra.mxu0 %v375
  %v880 = vpop.f32.mrf.mxu0
  %v881 = vadd.f32 %v515, %v880
  %v882 = vpop.f32.mrf.mxu0
  %v883 = vadd.f32 %v517, %v882
  %884 = vmatmul.bf16.gmra.mxu0 %v378
  %v885 = vpop.f32.mrf.mxu0
  %v886 = vadd.f32 %v520, %v885
  %v887 = vpop.f32.mrf.mxu0
  %v888 = vadd.f32 %v522, %v887
  %889 = vmatmul.bf16.gmra.mxu0 %v381
  %v890 = vpop.f32.mrf.mxu0
  %v891 = vadd.f32 %v525, %v890
  %v892 = vpop.f32.mrf.mxu0
  %v893 = vadd.f32 %v527, %v892
  %894 = vmatmul.bf16.gmra.mxu0 %v384
  %v895 = vpop.f32.mrf.mxu0
  %v896 = vadd.f32 %v530, %v895
  %v897 = vpop.f32.mrf.mxu0
  %v898 = vadd.f32 %v532, %v897
  %899 = vmatmul.bf16.gmra.mxu0 %v387
  %v900 = vpop.f32.mrf.mxu0
  %v901 = vadd.f32 %v535, %v900
  %v902 = vpop.f32.mrf.mxu0
  %v903 = vadd.f32 %v537, %v902
  %904 = vmatmul.bf16.gmra.mxu0 %v390
  %v905 = vpop.f32.mrf.mxu0
  %v906 = vadd.f32 %v540, %v905
  %v907 = vpop.f32.mrf.mxu0
  %v908 = vadd.f32 %v542, %v907
  %909 = vdwg.mxu0
  %910 = vmatpush.bf16.msra.mxu0 0
  %911 = vmatpush.bf16.msra.mxu0 0
  %912 = vmatpush.bf16.msra.mxu0 %v745
  %913 = vmatpush.bf16.msra.mxu0 %v743
  %914 = vmatpush.bf16.msra.mxu0 %v741
  %915 = vmatpush.bf16.msra.mxu0 %v739
  %916 = vmatpush.bf16.msra.mxu0 %v737
  %917 = vmatpush.bf16.msra.mxu0 %v735
  %918 = vmatmul.bf16.gmra.mxu0 %v759
  %v919 = vpop.f32.mrf.mxu0
  %v920 = vadd.f32 %v554, %v919
  %v921 = vpop.f32.mrf.mxu0
  %v922 = vadd.f32 %v556, %v921
  %923 = vmatmul.bf16.gmra.mxu0 %v312
  %v924 = vpop.f32.mrf.mxu0
  %v925 = vadd.f32 %v559, %v924
  %v926 = vpop.f32.mrf.mxu0
  %v927 = vadd.f32 %v561, %v926
  %928 = vmatmul.bf16.gmra.mxu0 %v315
  %v929 = vpop.f32.mrf.mxu0
  %v930 = vadd.f32 %v564, %v929
  %v931 = vpop.f32.mrf.mxu0
  %v932 = vadd.f32 %v566, %v931
  %933 = vmatmul.bf16.gmra.mxu0 %v318
  %v934 = vpop.f32.mrf.mxu0
  %v935 = vadd.f32 %v569, %v934
  %v936 = vpop.f32.mrf.mxu0
  %v937 = vadd.f32 %v571, %v936
  %938 = vmatmul.bf16.gmra.mxu0 %v321
  %v939 = vpop.f32.mrf.mxu0
  %v940 = vadd.f32 %v574, %v939
  %v941 = vpop.f32.mrf.mxu0
  %v942 = vadd.f32 %v576, %v941
  %943 = vmatmul.bf16.gmra.mxu0 %v324
  %v944 = vpop.f32.mrf.mxu0
  %v945 = vadd.f32 %v579, %v944
  %v946 = vpop.f32.mrf.mxu0
  %v947 = vadd.f32 %v581, %v946
  %948 = vmatmul.bf16.gmra.mxu0 %v327
  %v949 = vpop.f32.mrf.mxu0
  %v950 = vadd.f32 %v584, %v949
  %v951 = vpop.f32.mrf.mxu0
  %v952 = vadd.f32 %v586, %v951
  %953 = vmatmul.bf16.gmra.mxu0 %v330
  %v954 = vpop.f32.mrf.mxu0
  %v955 = vadd.f32 %v589, %v954
  %v956 = vpop.f32.mrf.mxu0
  %v957 = vadd.f32 %v591, %v956
  %958 = vmatmul.bf16.gmra.mxu0 %v333
  %v959 = vpop.f32.mrf.mxu0
  %v960 = vadd.f32 %v594, %v959
  %v961 = vpop.f32.mrf.mxu0
  %v962 = vadd.f32 %v596, %v961
  %963 = vmatmul.bf16.gmra.mxu0 %v336
  %v964 = vpop.f32.mrf.mxu0
  %v965 = vadd.f32 %v599, %v964
  %v966 = vpop.f32.mrf.mxu0
  %v967 = vadd.f32 %v601, %v966
  %968 = vmatmul.bf16.gmra.mxu0 %v339
  %v969 = vpop.f32.mrf.mxu0
  %v970 = vadd.f32 %v604, %v969
  %v971 = vpop.f32.mrf.mxu0
  %v972 = vadd.f32 %v606, %v971
  %973 = vmatmul.bf16.gmra.mxu0 %v342
  %v974 = vpop.f32.mrf.mxu0
  %v975 = vadd.f32 %v609, %v974
  %v976 = vpop.f32.mrf.mxu0
  %v977 = vadd.f32 %v611, %v976
  %978 = vmatmul.bf16.gmra.mxu0 %v345
  %v979 = vpop.f32.mrf.mxu0
  %v980 = vadd.f32 %v614, %v979
  %v981 = vpop.f32.mrf.mxu0
  %v982 = vadd.f32 %v616, %v981
  %983 = vmatmul.bf16.gmra.mxu0 %v348
  %v984 = vpop.f32.mrf.mxu0
  %v985 = vadd.f32 %v619, %v984
  %v986 = vpop.f32.mrf.mxu0
  %v987 = vadd.f32 %v621, %v986
  %988 = vmatmul.bf16.gmra.mxu0 %v351
  %v989 = vpop.f32.mrf.mxu0
  %v990 = vadd.f32 %v624, %v989
  %v991 = vpop.f32.mrf.mxu0
  %v992 = vadd.f32 %v626, %v991
  %993 = vmatmul.bf16.gmra.mxu0 %v354
  %v994 = vpop.f32.mrf.mxu0
  %v995 = vadd.f32 %v629, %v994
  %v996 = vpop.f32.mrf.mxu0
  %v997 = vadd.f32 %v631, %v996
  %998 = vmatmul.bf16.gmra.mxu0 %v357
  %v999 = vpop.f32.mrf.mxu0
  %v1000 = vadd.f32 %v634, %v999
  %v1001 = vpop.f32.mrf.mxu0
  %v1002 = vadd.f32 %v636, %v1001
  %1003 = vmatmul.bf16.gmra.mxu0 %v360
  %v1004 = vpop.f32.mrf.mxu0
  %v1005 = vadd.f32 %v639, %v1004
  %v1006 = vpop.f32.mrf.mxu0
  %v1007 = vadd.f32 %v641, %v1006
  %1008 = vmatmul.bf16.gmra.mxu0 %v363
  %v1009 = vpop.f32.mrf.mxu0
  %v1010 = vadd.f32 %v644, %v1009
  %v1011 = vpop.f32.mrf.mxu0
  %v1012 = vadd.f32 %v646, %v1011
  %1013 = vmatmul.bf16.gmra.mxu0 %v366
  %v1014 = vpop.f32.mrf.mxu0
  %v1015 = vadd.f32 %v649, %v1014
  %v1016 = vpop.f32.mrf.mxu0
  %v1017 = vadd.f32 %v651, %v1016
  %1018 = vmatmul.bf16.gmra.mxu0 %v369
  %v1019 = vpop.f32.mrf.mxu0
  %v1020 = vadd.f32 %v654, %v1019
  %v1021 = vpop.f32.mrf.mxu0
  %v1022 = vadd.f32 %v656, %v1021
  %1023 = vmatmul.bf16.gmra.mxu0 %v372
  %v1024 = vpop.f32.mrf.mxu0
  %v1025 = vadd.f32 %v659, %v1024
  %v1026 = vpop.f32.mrf.mxu0
  %v1027 = vadd.f32 %v661, %v1026
  %1028 = vmatmul.bf16.gmra.mxu0 %v375
  %v1029 = vpop.f32.mrf.mxu0
  %v1030 = vadd.f32 %v664, %v1029
  %v1031 = vpop.f32.mrf.mxu0
  %v1032 = vadd.f32 %v666, %v1031
  %1033 = vmatmul.bf16.gmra.mxu0 %v378
  %v1034 = vpop.f32.mrf.mxu0
  %v1035 = vadd.f32 %v669, %v1034
  %v1036 = vpop.f32.mrf.mxu0
  %v1037 = vadd.f32 %v671, %v1036
  %1038 = vmatmul.bf16.gmra.mxu0 %v381
  %v1039 = vpop.f32.mrf.mxu0
  %v1040 = vadd.f32 %v674, %v1039
  %v1041 = vpop.f32.mrf.mxu0
  %v1042 = vadd.f32 %v676, %v1041
  %1043 = vmatmul.bf16.gmra.mxu0 %v384
  %v1044 = vpop.f32.mrf.mxu0
  %v1045 = vadd.f32 %v679, %v1044
  %v1046 = vpop.f32.mrf.mxu0
  %v1047 = vadd.f32 %v681, %v1046
  %1048 = vmatmul.bf16.gmra.mxu0 %v387
  %v1049 = vpop.f32.mrf.mxu0
  %v1050 = vadd.f32 %v684, %v1049
  %v1051 = vpop.f32.mrf.mxu0
  %v1052 = vadd.f32 %v686, %v1051
  %1053 = vmatmul.bf16.gmra.mxu0 %v390
  %v1054 = vpop.f32.mrf.mxu0
  %v1055 = vadd.f32 %v689, %v1054
  %v1056 = vpop.f32.mrf.mxu0
  %v1057 = vadd.f32 %v691, %v1056
  %1058 = vdwg.mxu0
  %v1059 = vld [vmem:[%s0 + $0x10] sm:$0xf]
  %v1060 = vld [vmem:[%s0 + $0x14] sm:$0xf]
  %v1061 = vld [vmem:[%s0 + $0x18] sm:$0xf]
  %v1062 = vld [vmem:[%s0 + $0x1c] sm:$0xf]
  %v1063 = vld [vmem:[%s0 + $0x20] sm:$0xf]
  %v1064 = vld [vmem:[%s0 + $0x24] sm:$0xf]
  %v1065 = vld [vmem:[%s0 + $0x28] sm:$0xf]
  %v1066 = vld [vmem:[%s0 + $0x2c] sm:$0xf]
  %v1067 = vld [vmem:[%s0 + $0x30] sm:$0xf]
  %v1068 = vld [vmem:[%s0 + $0x34] sm:$0xf]
  %v1069 = vld [vmem:[%s0 + $0x38] sm:$0xf]
  %v1070 = vld [vmem:[%s0 + $0x3c] sm:$0xf]
  %v1071 = vld [vmem:[%s0 + $0x40] sm:$0xf]
  %v1072 = vld [vmem:[%s0 + $0x44] sm:$0xf]
  %v1073 = vld [vmem:[%s0 + $0x48] sm:$0xf]
  %v1074 = vld [vmem:[%s0 + $0x4c] sm:$0xf]
  %v1075 = vld [vmem:[%s0 + $0x50] sm:$0xf]
  %v1076 = vld [vmem:[%s0 + $0x54] sm:$0xf]
  %v1077 = vld [vmem:[%s0 + $0x58] sm:$0xf]
  %v1078 = vld [vmem:[%s0 + $0x5c] sm:$0xf]
  %v1079 = vld [vmem:[%s0 + $0x60] sm:$0xf]
  %v1080 = vld [vmem:[%s0 + $0x64] sm:$0xf]
  %v1081 = vld [vmem:[%s0 + $0x68] sm:$0xf]
  %v1082 = vld [vmem:[%s0 + $0x6c] sm:$0xf]
  %v1083 = vld [vmem:[%s0 + $0x70] sm:$0xf]
  %v1084 = vld [vmem:[%s0 + $0x74] sm:$0xf]
  %v1085 = vld [vmem:[%s0 + $0x78] sm:$0xf]
  %v1086 = vld [vmem:[%s0 + $0x7c] sm:$0xf]
  %v1087 = vld [vmem:[%s0 + $0x80] sm:$0xf]
  %v1088 = vld [vmem:[%s0 + $0x84] sm:$0xf]
  %v1089 = vld [vmem:[%s0 + $0x88] sm:$0xf]
  %v1090 = vld [vmem:[%s0 + $0x8c] sm:$0xf]
  %v1091 = vld [vmem:[%s0 + $0x90] sm:$0xf]
  %v1092 = vld [vmem:[%s0 + $0x94] sm:$0xf]
  %v1093 = vld [vmem:[%s0 + $0x98] sm:$0xf]
  %v1094 = vld [vmem:[%s0 + $0x9c] sm:$0xf]
  %v1095 = vld [vmem:[%s0 + $0xa0] sm:$0xf]
  %v1096 = vld [vmem:[%s0 + $0xa4] sm:$0xf]
  %v1097 = vld [vmem:[%s0 + $0xa8] sm:$0xf]
  %v1098 = vld [vmem:[%s0 + $0xac] sm:$0xf]
  %v1099 = vld [vmem:[%s0 + $0xb0] sm:$0xf]
  %v1100 = vld [vmem:[%s0 + $0xb4] sm:$0xf]
  %v1101 = vld [vmem:[%s0 + $0xb8] sm:$0xf]
  %v1102 = vld [vmem:[%s0 + $0xbc] sm:$0xf]
  %v1103 = vld [vmem:[%s0 + $0xc0] sm:$0xf]
  %v1104 = vld [vmem:[%s0 + $0xc4] sm:$0xf]
  %v1105 = vld [vmem:[%s0 + $0xc8] sm:$0xf]
  %v1106 = vld [vmem:[%s0 + $0xcc] sm:$0xf]
  %v1107 = vld [vmem:[%s0 + $0xd0] sm:$0xf]
  %v1108 = vld [vmem:[%s0 + $0xd4] sm:$0xf]
  %v1109 = vld [vmem:[%s0 + $0xd8] sm:$0xf]
  %v1110 = vld [vmem:[%s0 + $0xdc] sm:$0xf]
  %v1111 = vld [vmem:[%s0 + $0xe0] sm:$0xf]
  %v1112 = vld [vmem:[%s0 + $0xe4] sm:$0xf]
  %v1113 = vld [vmem:[%s0 + $0xe8] sm:$0xf]
  %v1114 = vld [vmem:[%s0 + $0xec] sm:$0xf]
  %s1115 = scalar_lea.vmem %s1, 192
  %v1116 = vld [vmem:[%s1115] sm:$0xff]
  %v1117 = vld [vmem:[%s1115 + $0x8] sm:$0xff]
  %v1118 = vld [vmem:[%s1115 + $0x10] sm:$0xff]
  %v1119 = vld [vmem:[%s1115 + $0x18] sm:$0xff]
  %v1120 = vld [vmem:[%s1115 + $0x20] sm:$0xff]
  %v1121 = vld [vmem:[%s1115 + $0x28] sm:$0xff]
  %v1122 = vld [vmem:[%s1115 + $0x30] sm:$0xff]
  %v1123 = vld [vmem:[%s1115 + $0x38] sm:$0xff]
  %v1124 = vld [vmem:[%s1115 + $0x40] sm:$0xff]
  %v1125 = vld [vmem:[%s1115 + $0x48] sm:$0xff]
  %v1126 = vld [vmem:[%s1115 + $0x50] sm:$0xff]
  %v1127 = vld [vmem:[%s1115 + $0x58] sm:$0xff]
  %v1184 = vunpack.c.l.b16 %v1059
  %v1185 = vunpack.c.l.b16 %v1060
  %v1186 = vunpack.c.l.b16 %v1061
  %v1187 = vunpack.c.l.b16 %v1062
  %v1188 = vunpack.c.l.b16 %v1063
  %v1189 = vunpack.c.l.b16 %v1064
  %v1190 = vunpack.c.l.b16 %v1065
  %v1191 = vunpack.c.l.b16 %v1066
  %v1192 = vunpack.c.l.b16 %v1067
  %v1193 = vunpack.c.l.b16 %v1068
  %v1194 = vunpack.c.l.b16 %v1069
  %v1195 = vunpack.c.l.b16 %v1070
  %v1196 = vunpack.c.l.b16 %v1071
  %v1197 = vunpack.c.l.b16 %v1072
  %v1198 = vunpack.c.l.b16 %v1073
  %v1199 = vunpack.c.l.b16 %v1074
  %v1200 = vunpack.c.l.b16 %v1075
  %v1201 = vunpack.c.l.b16 %v1076
  %v1202 = vunpack.c.l.b16 %v1077
  %v1203 = vunpack.c.l.b16 %v1078
  %v1204 = vunpack.c.l.b16 %v1079
  %v1205 = vunpack.c.l.b16 %v1080
  %v1206 = vunpack.c.l.b16 %v1081
  %v1207 = vunpack.c.l.b16 %v1082
  %v1208 = vunpack.c.l.b16 %v1083
  %v1209 = vunpack.c.l.b16 %v1084
  %v1210 = vunpack.c.l.b16 %v1085
  %v1211 = vunpack.c.l.b16 %v1086
  %v1212 = vunpack.c.l.b16 %v1087
  %v1213 = vunpack.c.l.b16 %v1088
  %v1214 = vunpack.c.l.b16 %v1089
  %v1215 = vunpack.c.l.b16 %v1090
  %v1216 = vunpack.c.l.b16 %v1091
  %v1217 = vunpack.c.l.b16 %v1092
  %v1218 = vunpack.c.l.b16 %v1093
  %v1219 = vunpack.c.l.b16 %v1094
  %v1220 = vunpack.c.l.b16 %v1095
  %v1221 = vunpack.c.l.b16 %v1096
  %v1222 = vunpack.c.l.b16 %v1097
  %v1223 = vunpack.c.l.b16 %v1098
  %v1224 = vunpack.c.l.b16 %v1099
  %v1225 = vunpack.c.l.b16 %v1100
  %v1226 = vunpack.c.l.b16 %v1101
  %v1227 = vunpack.c.l.b16 %v1102
  %v1228 = vunpack.c.l.b16 %v1103
  %v1229 = vunpack.c.l.b16 %v1104
  %v1230 = vunpack.c.l.b16 %v1105
  %v1231 = vunpack.c.l.b16 %v1106
  %v1232 = vunpack.c.l.b16 %v1107
  %v1233 = vunpack.c.l.b16 %v1108
  %v1234 = vunpack.c.l.b16 %v1109
  %v1235 = vunpack.c.l.b16 %v1110
  %v1236 = vunpack.c.l.b16 %v1111
  %v1237 = vunpack.c.l.b16 %v1112
  %v1238 = vunpack.c.l.b16 %v1113
  %v1239 = vunpack.c.l.b16 %v1114
  %v1240 = vpack.c.b16 %v1185, %v1184
  %v1241 = vpack.c.b16 %v1187, %v1186
  %v1242 = vpack.c.b16 %v1189, %v1188
  %v1243 = vpack.c.b16 %v1191, %v1190
  %v1244 = vpack.c.b16 %v1193, %v1192
  %v1245 = vpack.c.b16 %v1195, %v1194
  %v1246 = vpack.c.b16 %v1197, %v1196
  %v1247 = vpack.c.b16 %v1199, %v1198
  %v1248 = vpack.c.b16 %v1201, %v1200
  %v1249 = vpack.c.b16 %v1203, %v1202
  %v1250 = vpack.c.b16 %v1205, %v1204
  %v1251 = vpack.c.b16 %v1207, %v1206
  %v1252 = vpack.c.b16 %v1209, %v1208
  %v1253 = vpack.c.b16 %v1211, %v1210
  %v1254 = vpack.c.b16 %v1213, %v1212
  %v1255 = vpack.c.b16 %v1215, %v1214
  %v1256 = vpack.c.b16 %v1217, %v1216
  %v1257 = vpack.c.b16 %v1219, %v1218
  %v1258 = vpack.c.b16 %v1221, %v1220
  %v1259 = vpack.c.b16 %v1223, %v1222
  %v1260 = vpack.c.b16 %v1225, %v1224
  %v1261 = vpack.c.b16 %v1227, %v1226
  %v1262 = vpack.c.b16 %v1229, %v1228
  %v1263 = vpack.c.b16 %v1231, %v1230
  %v1264 = vpack.c.b16 %v1233, %v1232
  %v1265 = vpack.c.b16 %v1235, %v1234
  %v1266 = vpack.c.b16 %v1237, %v1236
  %v1267 = vpack.c.b16 %v1239, %v1238
  %v1280 = vunpack.c.l.b16 %v1116
  %v1281 = vunpack.c.h.b16 %v1116
  %v1282 = vunpack.c.l.b16 %v1117
  %v1283 = vunpack.c.h.b16 %v1117
  %v1284 = vunpack.c.l.b16 %v1118
  %v1285 = vunpack.c.h.b16 %v1118
  %v1286 = vunpack.c.l.b16 %v1119
  %v1287 = vunpack.c.h.b16 %v1119
  %v1288 = vunpack.c.l.b16 %v1120
  %v1289 = vunpack.c.h.b16 %v1120
  %v1290 = vunpack.c.l.b16 %v1121
  %v1291 = vunpack.c.h.b16 %v1121
  %v1292 = vunpack.c.l.b16 %v1122
  %v1293 = vunpack.c.h.b16 %v1122
  %v1294 = vunpack.c.l.b16 %v1123
  %v1295 = vunpack.c.h.b16 %v1123
  %v1296 = vunpack.c.l.b16 %v1124
  %v1297 = vunpack.c.h.b16 %v1124
  %v1298 = vunpack.c.l.b16 %v1125
  %v1299 = vunpack.c.h.b16 %v1125
  %v1300 = vunpack.c.l.b16 %v1126
  %v1301 = vunpack.c.h.b16 %v1126
  %v1302 = vunpack.c.l.b16 %v1127
  %v1303 = vunpack.c.h.b16 %v1127
  %v1304 = vpack.c.b16 %v1282, %v1280
  %v1305 = vpack.c.b16 %v1283, %v1281
  %v1306 = vpack.c.b16 %v1286, %v1284
  %v1307 = vpack.c.b16 %v1287, %v1285
  %v1308 = vpack.c.b16 %v1290, %v1288
  %v1309 = vpack.c.b16 %v1291, %v1289
  %v1310 = vpack.c.b16 %v1294, %v1292
  %v1311 = vpack.c.b16 %v1295, %v1293
  %v1312 = vpack.c.b16 %v1298, %v1296
  %v1313 = vpack.c.b16 %v1299, %v1297
  %v1314 = vpack.c.b16 %v1302, %v1300
  %v1315 = vpack.c.b16 %v1303, %v1301
  %v1329 = vsel %vm310, %v1240, 0
  %v1332 = vsel %vm310, %v1241, 0
  %v1335 = vsel %vm310, %v1242, 0
  %v1338 = vsel %vm310, %v1243, 0
  %v1341 = vsel %vm310, %v1244, 0
  %v1344 = vsel %vm310, %v1245, 0
  %v1347 = vsel %vm310, %v1246, 0
  %v1350 = vsel %vm310, %v1247, 0
  %v1353 = vsel %vm310, %v1248, 0
  %v1356 = vsel %vm310, %v1249, 0
  %v1359 = vsel %vm310, %v1250, 0
  %v1362 = vsel %vm310, %v1251, 0
  %v1365 = vsel %vm310, %v1252, 0
  %v1368 = vsel %vm310, %v1253, 0
  %v1371 = vsel %vm310, %v1254, 0
  %v1374 = vsel %vm310, %v1255, 0
  %v1377 = vsel %vm310, %v1256, 0
  %v1380 = vsel %vm310, %v1257, 0
  %v1383 = vsel %vm310, %v1258, 0
  %v1386 = vsel %vm310, %v1259, 0
  %v1389 = vsel %vm310, %v1260, 0
  %v1392 = vsel %vm310, %v1261, 0
  %v1395 = vsel %vm310, %v1262, 0
  %v1398 = vsel %vm310, %v1263, 0
  %v1401 = vsel %vm310, %v1264, 0
  %v1404 = vsel %vm310, %v1265, 0
  %v1407 = vsel %vm310, %v1266, 0
  %v1410 = vsel %vm310, %v1267, 0
  %1412 = vmatpush.bf16.msra.mxu0 0
  %1413 = vmatpush.bf16.msra.mxu0 0
  %1414 = vmatpush.bf16.msra.mxu0 %v1314
  %1415 = vmatpush.bf16.msra.mxu0 %v1312
  %1416 = vmatpush.bf16.msra.mxu0 %v1310
  %1417 = vmatpush.bf16.msra.mxu0 %v1308
  %1418 = vmatpush.bf16.msra.mxu0 %v1306
  %1419 = vmatpush.bf16.msra.mxu0 %v1304
  %1420 = vmatmul.bf16.gmra.mxu0 %v1329
  %v1421 = vpop.f32.mrf.mxu0
  %v1422 = vadd.f32 0.0, %v1421
  %v1423 = vpop.f32.mrf.mxu0
  %v1424 = vadd.f32 0.0, %v1423
  %1425 = vmatmul.bf16.gmra.mxu0 %v1332
  %v1426 = vpop.f32.mrf.mxu0
  %v1427 = vadd.f32 0.0, %v1426
  %v1428 = vpop.f32.mrf.mxu0
  %v1429 = vadd.f32 0.0, %v1428
  %1430 = vmatmul.bf16.gmra.mxu0 %v1335
  %v1431 = vpop.f32.mrf.mxu0
  %v1432 = vadd.f32 0.0, %v1431
  %v1433 = vpop.f32.mrf.mxu0
  %v1434 = vadd.f32 0.0, %v1433
  %1435 = vmatmul.bf16.gmra.mxu0 %v1338
  %v1436 = vpop.f32.mrf.mxu0
  %v1437 = vadd.f32 0.0, %v1436
  %v1438 = vpop.f32.mrf.mxu0
  %v1439 = vadd.f32 0.0, %v1438
  %1440 = vmatmul.bf16.gmra.mxu0 %v1341
  %v1441 = vpop.f32.mrf.mxu0
  %v1442 = vadd.f32 0.0, %v1441
  %v1443 = vpop.f32.mrf.mxu0
  %v1444 = vadd.f32 0.0, %v1443
  %1445 = vmatmul.bf16.gmra.mxu0 %v1344
  %v1446 = vpop.f32.mrf.mxu0
  %v1447 = vadd.f32 0.0, %v1446
  %v1448 = vpop.f32.mrf.mxu0
  %v1449 = vadd.f32 0.0, %v1448
  %1450 = vmatmul.bf16.gmra.mxu0 %v1347
  %v1451 = vpop.f32.mrf.mxu0
  %v1452 = vadd.f32 0.0, %v1451
  %v1453 = vpop.f32.mrf.mxu0
  %v1454 = vadd.f32 0.0, %v1453
  %1455 = vmatmul.bf16.gmra.mxu0 %v1350
  %v1456 = vpop.f32.mrf.mxu0
  %v1457 = vadd.f32 0.0, %v1456
  %v1458 = vpop.f32.mrf.mxu0
  %v1459 = vadd.f32 0.0, %v1458
  %1460 = vmatmul.bf16.gmra.mxu0 %v1353
  %v1461 = vpop.f32.mrf.mxu0
  %v1462 = vadd.f32 0.0, %v1461
  %v1463 = vpop.f32.mrf.mxu0
  %v1464 = vadd.f32 0.0, %v1463
  %1465 = vmatmul.bf16.gmra.mxu0 %v1356
  %v1466 = vpop.f32.mrf.mxu0
  %v1467 = vadd.f32 0.0, %v1466
  %v1468 = vpop.f32.mrf.mxu0
  %v1469 = vadd.f32 0.0, %v1468
  %1470 = vmatmul.bf16.gmra.mxu0 %v1359
  %v1471 = vpop.f32.mrf.mxu0
  %v1472 = vadd.f32 0.0, %v1471
  %v1473 = vpop.f32.mrf.mxu0
  %v1474 = vadd.f32 0.0, %v1473
  %1475 = vmatmul.bf16.gmra.mxu0 %v1362
  %v1476 = vpop.f32.mrf.mxu0
  %v1477 = vadd.f32 0.0, %v1476
  %v1478 = vpop.f32.mrf.mxu0
  %v1479 = vadd.f32 0.0, %v1478
  %1480 = vmatmul.bf16.gmra.mxu0 %v1365
  %v1481 = vpop.f32.mrf.mxu0
  %v1482 = vadd.f32 0.0, %v1481
  %v1483 = vpop.f32.mrf.mxu0
  %v1484 = vadd.f32 0.0, %v1483
  %1485 = vmatmul.bf16.gmra.mxu0 %v1368
  %v1486 = vpop.f32.mrf.mxu0
  %v1487 = vadd.f32 0.0, %v1486
  %v1488 = vpop.f32.mrf.mxu0
  %v1489 = vadd.f32 0.0, %v1488
  %1490 = vmatmul.bf16.gmra.mxu0 %v1371
  %v1491 = vpop.f32.mrf.mxu0
  %v1492 = vadd.f32 0.0, %v1491
  %v1493 = vpop.f32.mrf.mxu0
  %v1494 = vadd.f32 0.0, %v1493
  %1495 = vmatmul.bf16.gmra.mxu0 %v1374
  %v1496 = vpop.f32.mrf.mxu0
  %v1497 = vadd.f32 0.0, %v1496
  %v1498 = vpop.f32.mrf.mxu0
  %v1499 = vadd.f32 0.0, %v1498
  %1500 = vmatmul.bf16.gmra.mxu0 %v1377
  %v1501 = vpop.f32.mrf.mxu0
  %v1502 = vadd.f32 0.0, %v1501
  %v1503 = vpop.f32.mrf.mxu0
  %v1504 = vadd.f32 0.0, %v1503
  %1505 = vmatmul.bf16.gmra.mxu0 %v1380
  %v1506 = vpop.f32.mrf.mxu0
  %v1507 = vadd.f32 0.0, %v1506
  %v1508 = vpop.f32.mrf.mxu0
  %v1509 = vadd.f32 0.0, %v1508
  %1510 = vmatmul.bf16.gmra.mxu0 %v1383
  %v1511 = vpop.f32.mrf.mxu0
  %v1512 = vadd.f32 0.0, %v1511
  %v1513 = vpop.f32.mrf.mxu0
  %v1514 = vadd.f32 0.0, %v1513
  %1515 = vmatmul.bf16.gmra.mxu0 %v1386
  %v1516 = vpop.f32.mrf.mxu0
  %v1517 = vadd.f32 0.0, %v1516
  %v1518 = vpop.f32.mrf.mxu0
  %v1519 = vadd.f32 0.0, %v1518
  %1520 = vmatmul.bf16.gmra.mxu0 %v1389
  %v1521 = vpop.f32.mrf.mxu0
  %v1522 = vadd.f32 0.0, %v1521
  %v1523 = vpop.f32.mrf.mxu0
  %v1524 = vadd.f32 0.0, %v1523
  %1525 = vmatmul.bf16.gmra.mxu0 %v1392
  %v1526 = vpop.f32.mrf.mxu0
  %v1527 = vadd.f32 0.0, %v1526
  %v1528 = vpop.f32.mrf.mxu0
  %v1529 = vadd.f32 0.0, %v1528
  %1530 = vmatmul.bf16.gmra.mxu0 %v1395
  %v1531 = vpop.f32.mrf.mxu0
  %v1532 = vadd.f32 0.0, %v1531
  %v1533 = vpop.f32.mrf.mxu0
  %v1534 = vadd.f32 0.0, %v1533
  %1535 = vmatmul.bf16.gmra.mxu0 %v1398
  %v1536 = vpop.f32.mrf.mxu0
  %v1537 = vadd.f32 0.0, %v1536
  %v1538 = vpop.f32.mrf.mxu0
  %v1539 = vadd.f32 0.0, %v1538
  %1540 = vmatmul.bf16.gmra.mxu0 %v1401
  %v1541 = vpop.f32.mrf.mxu0
  %v1542 = vadd.f32 0.0, %v1541
  %v1543 = vpop.f32.mrf.mxu0
  %v1544 = vadd.f32 0.0, %v1543
  %1545 = vmatmul.bf16.gmra.mxu0 %v1404
  %v1546 = vpop.f32.mrf.mxu0
  %v1547 = vadd.f32 0.0, %v1546
  %v1548 = vpop.f32.mrf.mxu0
  %v1549 = vadd.f32 0.0, %v1548
  %1550 = vmatmul.bf16.gmra.mxu0 %v1407
  %v1551 = vpop.f32.mrf.mxu0
  %v1552 = vadd.f32 0.0, %v1551
  %v1553 = vpop.f32.mrf.mxu0
  %v1554 = vadd.f32 0.0, %v1553
  %1555 = vmatmul.bf16.gmra.mxu0 %v1410
  %v1556 = vpop.f32.mrf.mxu0
  %v1557 = vadd.f32 0.0, %v1556
  %v1558 = vpop.f32.mrf.mxu0
  %v1559 = vadd.f32 0.0, %v1558
  %1560 = vdwg.mxu0
  %1561 = vmatpush.bf16.msra.mxu0 0
  %1562 = vmatpush.bf16.msra.mxu0 0
  %1563 = vmatpush.bf16.msra.mxu0 %v1315
  %1564 = vmatpush.bf16.msra.mxu0 %v1313
  %1565 = vmatpush.bf16.msra.mxu0 %v1311
  %1566 = vmatpush.bf16.msra.mxu0 %v1309
  %1567 = vmatpush.bf16.msra.mxu0 %v1307
  %1568 = vmatpush.bf16.msra.mxu0 %v1305
  %1569 = vmatmul.bf16.gmra.mxu0 %v1329
  %v1570 = vpop.f32.mrf.mxu0
  %v1571 = vadd.f32 0.0, %v1570
  %v1572 = vpop.f32.mrf.mxu0
  %v1573 = vadd.f32 0.0, %v1572
  %1574 = vmatmul.bf16.gmra.mxu0 %v1332
  %v1575 = vpop.f32.mrf.mxu0
  %v1576 = vadd.f32 0.0, %v1575
  %v1577 = vpop.f32.mrf.mxu0
  %v1578 = vadd.f32 0.0, %v1577
  %1579 = vmatmul.bf16.gmra.mxu0 %v1335
  %v1580 = vpop.f32.mrf.mxu0
  %v1581 = vadd.f32 0.0, %v1580
  %v1582 = vpop.f32.mrf.mxu0
  %v1583 = vadd.f32 0.0, %v1582
  %1584 = vmatmul.bf16.gmra.mxu0 %v1338
  %v1585 = vpop.f32.mrf.mxu0
  %v1586 = vadd.f32 0.0, %v1585
  %v1587 = vpop.f32.mrf.mxu0
  %v1588 = vadd.f32 0.0, %v1587
  %1589 = vmatmul.bf16.gmra.mxu0 %v1341
  %v1590 = vpop.f32.mrf.mxu0
  %v1591 = vadd.f32 0.0, %v1590
  %v1592 = vpop.f32.mrf.mxu0
  %v1593 = vadd.f32 0.0, %v1592
  %1594 = vmatmul.bf16.gmra.mxu0 %v1344
  %v1595 = vpop.f32.mrf.mxu0
  %v1596 = vadd.f32 0.0, %v1595
  %v1597 = vpop.f32.mrf.mxu0
  %v1598 = vadd.f32 0.0, %v1597
  %1599 = vmatmul.bf16.gmra.mxu0 %v1347
  %v1600 = vpop.f32.mrf.mxu0
  %v1601 = vadd.f32 0.0, %v1600
  %v1602 = vpop.f32.mrf.mxu0
  %v1603 = vadd.f32 0.0, %v1602
  %1604 = vmatmul.bf16.gmra.mxu0 %v1350
  %v1605 = vpop.f32.mrf.mxu0
  %v1606 = vadd.f32 0.0, %v1605
  %v1607 = vpop.f32.mrf.mxu0
  %v1608 = vadd.f32 0.0, %v1607
  %1609 = vmatmul.bf16.gmra.mxu0 %v1353
  %v1610 = vpop.f32.mrf.mxu0
  %v1611 = vadd.f32 0.0, %v1610
  %v1612 = vpop.f32.mrf.mxu0
  %v1613 = vadd.f32 0.0, %v1612
  %1614 = vmatmul.bf16.gmra.mxu0 %v1356
  %v1615 = vpop.f32.mrf.mxu0
  %v1616 = vadd.f32 0.0, %v1615
  %v1617 = vpop.f32.mrf.mxu0
  %v1618 = vadd.f32 0.0, %v1617
  %1619 = vmatmul.bf16.gmra.mxu0 %v1359
  %v1620 = vpop.f32.mrf.mxu0
  %v1621 = vadd.f32 0.0, %v1620
  %v1622 = vpop.f32.mrf.mxu0
  %v1623 = vadd.f32 0.0, %v1622
  %1624 = vmatmul.bf16.gmra.mxu0 %v1362
  %v1625 = vpop.f32.mrf.mxu0
  %v1626 = vadd.f32 0.0, %v1625
  %v1627 = vpop.f32.mrf.mxu0
  %v1628 = vadd.f32 0.0, %v1627
  %1629 = vmatmul.bf16.gmra.mxu0 %v1365
  %v1630 = vpop.f32.mrf.mxu0
  %v1631 = vadd.f32 0.0, %v1630
  %v1632 = vpop.f32.mrf.mxu0
  %v1633 = vadd.f32 0.0, %v1632
  %1634 = vmatmul.bf16.gmra.mxu0 %v1368
  %v1635 = vpop.f32.mrf.mxu0
  %v1636 = vadd.f32 0.0, %v1635
  %v1637 = vpop.f32.mrf.mxu0
  %v1638 = vadd.f32 0.0, %v1637
  %1639 = vmatmul.bf16.gmra.mxu0 %v1371
  %v1640 = vpop.f32.mrf.mxu0
  %v1641 = vadd.f32 0.0, %v1640
  %v1642 = vpop.f32.mrf.mxu0
  %v1643 = vadd.f32 0.0, %v1642
  %1644 = vmatmul.bf16.gmra.mxu0 %v1374
  %v1645 = vpop.f32.mrf.mxu0
  %v1646 = vadd.f32 0.0, %v1645
  %v1647 = vpop.f32.mrf.mxu0
  %v1648 = vadd.f32 0.0, %v1647
  %1649 = vmatmul.bf16.gmra.mxu0 %v1377
  %v1650 = vpop.f32.mrf.mxu0
  %v1651 = vadd.f32 0.0, %v1650
  %v1652 = vpop.f32.mrf.mxu0
  %v1653 = vadd.f32 0.0, %v1652
  %1654 = vmatmul.bf16.gmra.mxu0 %v1380
  %v1655 = vpop.f32.mrf.mxu0
  %v1656 = vadd.f32 0.0, %v1655
  %v1657 = vpop.f32.mrf.mxu0
  %v1658 = vadd.f32 0.0, %v1657
  %1659 = vmatmul.bf16.gmra.mxu0 %v1383
  %v1660 = vpop.f32.mrf.mxu0
  %v1661 = vadd.f32 0.0, %v1660
  %v1662 = vpop.f32.mrf.mxu0
  %v1663 = vadd.f32 0.0, %v1662
  %1664 = vmatmul.bf16.gmra.mxu0 %v1386
  %v1665 = vpop.f32.mrf.mxu0
  %v1666 = vadd.f32 0.0, %v1665
  %v1667 = vpop.f32.mrf.mxu0
  %v1668 = vadd.f32 0.0, %v1667
  %1669 = vmatmul.bf16.gmra.mxu0 %v1389
  %v1670 = vpop.f32.mrf.mxu0
  %v1671 = vadd.f32 0.0, %v1670
  %v1672 = vpop.f32.mrf.mxu0
  %v1673 = vadd.f32 0.0, %v1672
  %1674 = vmatmul.bf16.gmra.mxu0 %v1392
  %v1675 = vpop.f32.mrf.mxu0
  %v1676 = vadd.f32 0.0, %v1675
  %v1677 = vpop.f32.mrf.mxu0
  %v1678 = vadd.f32 0.0, %v1677
  %1679 = vmatmul.bf16.gmra.mxu0 %v1395
  %v1680 = vpop.f32.mrf.mxu0
  %v1681 = vadd.f32 0.0, %v1680
  %v1682 = vpop.f32.mrf.mxu0
  %v1683 = vadd.f32 0.0, %v1682
  %1684 = vmatmul.bf16.gmra.mxu0 %v1398
  %v1685 = vpop.f32.mrf.mxu0
  %v1686 = vadd.f32 0.0, %v1685
  %v1687 = vpop.f32.mrf.mxu0
  %v1688 = vadd.f32 0.0, %v1687
  %1689 = vmatmul.bf16.gmra.mxu0 %v1401
  %v1690 = vpop.f32.mrf.mxu0
  %v1691 = vadd.f32 0.0, %v1690
  %v1692 = vpop.f32.mrf.mxu0
  %v1693 = vadd.f32 0.0, %v1692
  %1694 = vmatmul.bf16.gmra.mxu0 %v1404
  %v1695 = vpop.f32.mrf.mxu0
  %v1696 = vadd.f32 0.0, %v1695
  %v1697 = vpop.f32.mrf.mxu0
  %v1698 = vadd.f32 0.0, %v1697
  %1699 = vmatmul.bf16.gmra.mxu0 %v1407
  %v1700 = vpop.f32.mrf.mxu0
  %v1701 = vadd.f32 0.0, %v1700
  %v1702 = vpop.f32.mrf.mxu0
  %v1703 = vadd.f32 0.0, %v1702
  %1704 = vmatmul.bf16.gmra.mxu0 %v1410
  %v1705 = vpop.f32.mrf.mxu0
  %v1706 = vadd.f32 0.0, %v1705
  %v1707 = vpop.f32.mrf.mxu0
  %v1708 = vadd.f32 0.0, %v1707
  %1709 = vdwg.mxu0
  %v1710 = vadd.f32 %v771, %v1422
  %v1711 = vadd.f32 %v920, %v1571
  %v1712 = vadd.f32 %v773, %v1424
  %v1713 = vadd.f32 %v922, %v1573
  %v1714 = vadd.f32 %v776, %v1427
  %v1715 = vadd.f32 %v925, %v1576
  %v1716 = vadd.f32 %v778, %v1429
  %v1717 = vadd.f32 %v927, %v1578
  %v1718 = vadd.f32 %v781, %v1432
  %v1719 = vadd.f32 %v930, %v1581
  %v1720 = vadd.f32 %v783, %v1434
  %v1721 = vadd.f32 %v932, %v1583
  %v1722 = vadd.f32 %v786, %v1437
  %v1723 = vadd.f32 %v935, %v1586
  %v1724 = vadd.f32 %v788, %v1439
  %v1725 = vadd.f32 %v937, %v1588
  %v1726 = vadd.f32 %v791, %v1442
  %v1727 = vadd.f32 %v940, %v1591
  %v1728 = vadd.f32 %v793, %v1444
  %v1729 = vadd.f32 %v942, %v1593
  %v1730 = vadd.f32 %v796, %v1447
  %v1731 = vadd.f32 %v945, %v1596
  %v1732 = vadd.f32 %v798, %v1449
  %v1733 = vadd.f32 %v947, %v1598
  %v1734 = vadd.f32 %v801, %v1452
  %v1735 = vadd.f32 %v950, %v1601
  %v1736 = vadd.f32 %v803, %v1454
  %v1737 = vadd.f32 %v952, %v1603
  %v1738 = vadd.f32 %v806, %v1457
  %v1739 = vadd.f32 %v955, %v1606
  %v1740 = vadd.f32 %v808, %v1459
  %v1741 = vadd.f32 %v957, %v1608
  %v1742 = vadd.f32 %v811, %v1462
  %v1743 = vadd.f32 %v960, %v1611
  %v1744 = vadd.f32 %v813, %v1464
  %v1745 = vadd.f32 %v962, %v1613
  %v1746 = vadd.f32 %v816, %v1467
  %v1747 = vadd.f32 %v965, %v1616
  %v1748 = vadd.f32 %v818, %v1469
  %v1749 = vadd.f32 %v967, %v1618
  %v1750 = vadd.f32 %v821, %v1472
  %v1751 = vadd.f32 %v970, %v1621
  %v1752 = vadd.f32 %v823, %v1474
  %v1753 = vadd.f32 %v972, %v1623
  %v1754 = vadd.f32 %v826, %v1477
  %v1755 = vadd.f32 %v975, %v1626
  %v1756 = vadd.f32 %v828, %v1479
  %v1757 = vadd.f32 %v977, %v1628
  %v1758 = vadd.f32 %v831, %v1482
  %v1759 = vadd.f32 %v980, %v1631
  %v1760 = vadd.f32 %v833, %v1484
  %v1761 = vadd.f32 %v982, %v1633
  %v1762 = vadd.f32 %v836, %v1487
  %v1763 = vadd.f32 %v985, %v1636
  %v1764 = vadd.f32 %v838, %v1489
  %v1765 = vadd.f32 %v987, %v1638
  %v1766 = vadd.f32 %v841, %v1492
  %v1767 = vadd.f32 %v990, %v1641
  %v1768 = vadd.f32 %v843, %v1494
  %v1769 = vadd.f32 %v992, %v1643
  %v1770 = vadd.f32 %v846, %v1497
  %v1771 = vadd.f32 %v995, %v1646
  %v1772 = vadd.f32 %v848, %v1499
  %v1773 = vadd.f32 %v997, %v1648
  %v1774 = vadd.f32 %v851, %v1502
  %v1775 = vadd.f32 %v1000, %v1651
  %v1776 = vadd.f32 %v853, %v1504
  %v1777 = vadd.f32 %v1002, %v1653
  %v1778 = vadd.f32 %v856, %v1507
  %v1779 = vadd.f32 %v1005, %v1656
  %v1780 = vadd.f32 %v858, %v1509
  %v1781 = vadd.f32 %v1007, %v1658
  %v1782 = vadd.f32 %v861, %v1512
  %v1783 = vadd.f32 %v1010, %v1661
  %v1784 = vadd.f32 %v863, %v1514
  %v1785 = vadd.f32 %v1012, %v1663
  %v1786 = vadd.f32 %v866, %v1517
  %v1787 = vadd.f32 %v1015, %v1666
  %v1788 = vadd.f32 %v868, %v1519
  %v1789 = vadd.f32 %v1017, %v1668
  %v1790 = vadd.f32 %v871, %v1522
  %v1791 = vadd.f32 %v1020, %v1671
  %v1792 = vadd.f32 %v873, %v1524
  %v1793 = vadd.f32 %v1022, %v1673
  %v1794 = vadd.f32 %v876, %v1527
  %v1795 = vadd.f32 %v1025, %v1676
  %v1796 = vadd.f32 %v878, %v1529
  %v1797 = vadd.f32 %v1027, %v1678
  %v1798 = vadd.f32 %v881, %v1532
  %v1799 = vadd.f32 %v1030, %v1681
  %v1800 = vadd.f32 %v883, %v1534
  %v1801 = vadd.f32 %v1032, %v1683
  %v1802 = vadd.f32 %v886, %v1537
  %v1803 = vadd.f32 %v1035, %v1686
  %v1804 = vadd.f32 %v888, %v1539
  %v1805 = vadd.f32 %v1037, %v1688
  %v1806 = vadd.f32 %v891, %v1542
  %v1807 = vadd.f32 %v1040, %v1691
  %v1808 = vadd.f32 %v893, %v1544
  %v1809 = vadd.f32 %v1042, %v1693
  %v1810 = vadd.f32 %v896, %v1547
  %v1811 = vadd.f32 %v1045, %v1696
  %v1812 = vadd.f32 %v898, %v1549
  %v1813 = vadd.f32 %v1047, %v1698
  %v1814 = vadd.f32 %v901, %v1552
  %v1815 = vadd.f32 %v1050, %v1701
  %v1816 = vadd.f32 %v903, %v1554
  %v1817 = vadd.f32 %v1052, %v1703
  %v1818 = vadd.f32 %v906, %v1557
  %v1819 = vadd.f32 %v1055, %v1706
  %v1820 = vadd.f32 %v908, %v1559
  %v1821 = vadd.f32 %v1057, %v1708
  %v1822 = vld [vmem:[%s0 + $0x18] sm:$0xf]
  %v1823 = vld [vmem:[%s0 + $0x1c] sm:$0xf]
  %v1824 = vld [vmem:[%s0 + $0x20] sm:$0xf]
  %v1825 = vld [vmem:[%s0 + $0x24] sm:$0xf]
  %v1826 = vld [vmem:[%s0 + $0x28] sm:$0xf]
  %v1827 = vld [vmem:[%s0 + $0x2c] sm:$0xf]
  %v1828 = vld [vmem:[%s0 + $0x30] sm:$0xf]
  %v1829 = vld [vmem:[%s0 + $0x34] sm:$0xf]
  %v1830 = vld [vmem:[%s0 + $0x38] sm:$0xf]
  %v1831 = vld [vmem:[%s0 + $0x3c] sm:$0xf]
  %v1832 = vld [vmem:[%s0 + $0x40] sm:$0xf]
  %v1833 = vld [vmem:[%s0 + $0x44] sm:$0xf]
  %v1834 = vld [vmem:[%s0 + $0x48] sm:$0xf]
  %v1835 = vld [vmem:[%s0 + $0x4c] sm:$0xf]
  %v1836 = vld [vmem:[%s0 + $0x50] sm:$0xf]
  %v1837 = vld [vmem:[%s0 + $0x54] sm:$0xf]
  %v1838 = vld [vmem:[%s0 + $0x58] sm:$0xf]
  %v1839 = vld [vmem:[%s0 + $0x5c] sm:$0xf]
  %v1840 = vld [vmem:[%s0 + $0x60] sm:$0xf]
  %v1841 = vld [vmem:[%s0 + $0x64] sm:$0xf]
  %v1842 = vld [vmem:[%s0 + $0x68] sm:$0xf]
  %v1843 = vld [vmem:[%s0 + $0x6c] sm:$0xf]
  %v1844 = vld [vmem:[%s0 + $0x70] sm:$0xf]
  %v1845 = vld [vmem:[%s0 + $0x74] sm:$0xf]
  %v1846 = vld [vmem:[%s0 + $0x78] sm:$0xf]
  %v1847 = vld [vmem:[%s0 + $0x7c] sm:$0xf]
  %v1848 = vld [vmem:[%s0 + $0x80] sm:$0xf]
  %v1849 = vld [vmem:[%s0 + $0x84] sm:$0xf]
  %v1850 = vld [vmem:[%s0 + $0x88] sm:$0xf]
  %v1851 = vld [vmem:[%s0 + $0x8c] sm:$0xf]
  %v1852 = vld [vmem:[%s0 + $0x90] sm:$0xf]
  %v1853 = vld [vmem:[%s0 + $0x94] sm:$0xf]
  %v1854 = vld [vmem:[%s0 + $0x98] sm:$0xf]
  %v1855 = vld [vmem:[%s0 + $0x9c] sm:$0xf]
  %v1856 = vld [vmem:[%s0 + $0xa0] sm:$0xf]
  %v1857 = vld [vmem:[%s0 + $0xa4] sm:$0xf]
  %v1858 = vld [vmem:[%s0 + $0xa8] sm:$0xf]
  %v1859 = vld [vmem:[%s0 + $0xac] sm:$0xf]
  %v1860 = vld [vmem:[%s0 + $0xb0] sm:$0xf]
  %v1861 = vld [vmem:[%s0 + $0xb4] sm:$0xf]
  %v1862 = vld [vmem:[%s0 + $0xb8] sm:$0xf]
  %v1863 = vld [vmem:[%s0 + $0xbc] sm:$0xf]
  %v1864 = vld [vmem:[%s0 + $0xc0] sm:$0xf]
  %v1865 = vld [vmem:[%s0 + $0xc4] sm:$0xf]
  %v1866 = vld [vmem:[%s0 + $0xc8] sm:$0xf]
  %v1867 = vld [vmem:[%s0 + $0xcc] sm:$0xf]
  %v1868 = vld [vmem:[%s0 + $0xd0] sm:$0xf]
  %v1869 = vld [vmem:[%s0 + $0xd4] sm:$0xf]
  %v1870 = vld [vmem:[%s0 + $0xd8] sm:$0xf]
  %v1871 = vld [vmem:[%s0 + $0xdc] sm:$0xf]
  %v1872 = vld [vmem:[%s0 + $0xe0] sm:$0xf]
  %v1873 = vld [vmem:[%s0 + $0xe4] sm:$0xf]
  %v1874 = vld [vmem:[%s0 + $0xe8] sm:$0xf]
  %v1875 = vld [vmem:[%s0 + $0xec] sm:$0xf]
  %v1876 = vld [vmem:[%s0 + $0xf0] sm:$0xf]
  %v1877 = vld [vmem:[%s0 + $0xf4] sm:$0xf]
  %s1878 = scalar_lea.vmem %s1, 288
  %v1879 = vld [vmem:[%s1878] sm:$0xff]
  %v1880 = vld [vmem:[%s1878 + $0x8] sm:$0xff]
  %v1881 = vld [vmem:[%s1878 + $0x10] sm:$0xff]
  %v1882 = vld [vmem:[%s1878 + $0x18] sm:$0xff]
  %v1883 = vld [vmem:[%s1878 + $0x20] sm:$0xff]
  %v1884 = vld [vmem:[%s1878 + $0x28] sm:$0xff]
  %v1885 = vld [vmem:[%s1878 + $0x30] sm:$0xff]
  %v1886 = vld [vmem:[%s1878 + $0x38] sm:$0xff]
  %v1887 = vld [vmem:[%s1878 + $0x40] sm:$0xff]
  %v1888 = vld [vmem:[%s1878 + $0x48] sm:$0xff]
  %v1889 = vld [vmem:[%s1878 + $0x50] sm:$0xff]
  %v1890 = vld [vmem:[%s1878 + $0x58] sm:$0xff]
  %v1947 = vunpack.c.l.b16 %v1822
  %v1948 = vunpack.c.l.b16 %v1823
  %v1949 = vunpack.c.l.b16 %v1824
  %v1950 = vunpack.c.l.b16 %v1825
  %v1951 = vunpack.c.l.b16 %v1826
  %v1952 = vunpack.c.l.b16 %v1827
  %v1953 = vunpack.c.l.b16 %v1828
  %v1954 = vunpack.c.l.b16 %v1829
  %v1955 = vunpack.c.l.b16 %v1830
  %v1956 = vunpack.c.l.b16 %v1831
  %v1957 = vunpack.c.l.b16 %v1832
  %v1958 = vunpack.c.l.b16 %v1833
  %v1959 = vunpack.c.l.b16 %v1834
  %v1960 = vunpack.c.l.b16 %v1835
  %v1961 = vunpack.c.l.b16 %v1836
  %v1962 = vunpack.c.l.b16 %v1837
  %v1963 = vunpack.c.l.b16 %v1838
  %v1964 = vunpack.c.l.b16 %v1839
  %v1965 = vunpack.c.l.b16 %v1840
  %v1966 = vunpack.c.l.b16 %v1841
  %v1967 = vunpack.c.l.b16 %v1842
  %v1968 = vunpack.c.l.b16 %v1843
  %v1969 = vunpack.c.l.b16 %v1844
  %v1970 = vunpack.c.l.b16 %v1845
  %v1971 = vunpack.c.l.b16 %v1846
  %v1972 = vunpack.c.l.b16 %v1847
  %v1973 = vunpack.c.l.b16 %v1848
  %v1974 = vunpack.c.l.b16 %v1849
  %v1975 = vunpack.c.l.b16 %v1850
  %v1976 = vunpack.c.l.b16 %v1851
  %v1977 = vunpack.c.l.b16 %v1852
  %v1978 = vunpack.c.l.b16 %v1853
  %v1979 = vunpack.c.l.b16 %v1854
  %v1980 = vunpack.c.l.b16 %v1855
  %v1981 = vunpack.c.l.b16 %v1856
  %v1982 = vunpack.c.l.b16 %v1857
  %v1983 = vunpack.c.l.b16 %v1858
  %v1984 = vunpack.c.l.b16 %v1859
  %v1985 = vunpack.c.l.b16 %v1860
  %v1986 = vunpack.c.l.b16 %v1861
  %v1987 = vunpack.c.l.b16 %v1862
  %v1988 = vunpack.c.l.b16 %v1863
  %v1989 = vunpack.c.l.b16 %v1864
  %v1990 = vunpack.c.l.b16 %v1865
  %v1991 = vunpack.c.l.b16 %v1866
  %v1992 = vunpack.c.l.b16 %v1867
  %v1993 = vunpack.c.l.b16 %v1868
  %v1994 = vunpack.c.l.b16 %v1869
  %v1995 = vunpack.c.l.b16 %v1870
  %v1996 = vunpack.c.l.b16 %v1871
  %v1997 = vunpack.c.l.b16 %v1872
  %v1998 = vunpack.c.l.b16 %v1873
  %v1999 = vunpack.c.l.b16 %v1874
  %v2000 = vunpack.c.l.b16 %v1875
  %v2001 = vunpack.c.l.b16 %v1876
  %v2002 = vunpack.c.l.b16 %v1877
  %v2003 = vpack.c.b16 %v1948, %v1947
  %v2004 = vpack.c.b16 %v1950, %v1949
  %v2005 = vpack.c.b16 %v1952, %v1951
  %v2006 = vpack.c.b16 %v1954, %v1953
  %v2007 = vpack.c.b16 %v1956, %v1955
  %v2008 = vpack.c.b16 %v1958, %v1957
  %v2009 = vpack.c.b16 %v1960, %v1959
  %v2010 = vpack.c.b16 %v1962, %v1961
  %v2011 = vpack.c.b16 %v1964, %v1963
  %v2012 = vpack.c.b16 %v1966, %v1965
  %v2013 = vpack.c.b16 %v1968, %v1967
  %v2014 = vpack.c.b16 %v1970, %v1969
  %v2015 = vpack.c.b16 %v1972, %v1971
  %v2016 = vpack.c.b16 %v1974, %v1973
  %v2017 = vpack.c.b16 %v1976, %v1975
  %v2018 = vpack.c.b16 %v1978, %v1977
  %v2019 = vpack.c.b16 %v1980, %v1979
  %v2020 = vpack.c.b16 %v1982, %v1981
  %v2021 = vpack.c.b16 %v1984, %v1983
  %v2022 = vpack.c.b16 %v1986, %v1985
  %v2023 = vpack.c.b16 %v1988, %v1987
  %v2024 = vpack.c.b16 %v1990, %v1989
  %v2025 = vpack.c.b16 %v1992, %v1991
  %v2026 = vpack.c.b16 %v1994, %v1993
  %v2027 = vpack.c.b16 %v1996, %v1995
  %v2028 = vpack.c.b16 %v1998, %v1997
  %v2029 = vpack.c.b16 %v2000, %v1999
  %v2030 = vpack.c.b16 %v2002, %v2001
  %v2043 = vunpack.c.l.b16 %v1879
  %v2044 = vunpack.c.h.b16 %v1879
  %v2045 = vunpack.c.l.b16 %v1880
  %v2046 = vunpack.c.h.b16 %v1880
  %v2047 = vunpack.c.l.b16 %v1881
  %v2048 = vunpack.c.h.b16 %v1881
  %v2049 = vunpack.c.l.b16 %v1882
  %v2050 = vunpack.c.h.b16 %v1882
  %v2051 = vunpack.c.l.b16 %v1883
  %v2052 = vunpack.c.h.b16 %v1883
  %v2053 = vunpack.c.l.b16 %v1884
  %v2054 = vunpack.c.h.b16 %v1884
  %v2055 = vunpack.c.l.b16 %v1885
  %v2056 = vunpack.c.h.b16 %v1885
  %v2057 = vunpack.c.l.b16 %v1886
  %v2058 = vunpack.c.h.b16 %v1886
  %v2059 = vunpack.c.l.b16 %v1887
  %v2060 = vunpack.c.h.b16 %v1887
  %v2061 = vunpack.c.l.b16 %v1888
  %v2062 = vunpack.c.h.b16 %v1888
  %v2063 = vunpack.c.l.b16 %v1889
  %v2064 = vunpack.c.h.b16 %v1889
  %v2065 = vunpack.c.l.b16 %v1890
  %v2066 = vunpack.c.h.b16 %v1890
  %v2067 = vpack.c.b16 %v2045, %v2043
  %v2068 = vpack.c.b16 %v2046, %v2044
  %v2069 = vpack.c.b16 %v2049, %v2047
  %v2070 = vpack.c.b16 %v2050, %v2048
  %v2071 = vpack.c.b16 %v2053, %v2051
  %v2072 = vpack.c.b16 %v2054, %v2052
  %v2073 = vpack.c.b16 %v2057, %v2055
  %v2074 = vpack.c.b16 %v2058, %v2056
  %v2075 = vpack.c.b16 %v2061, %v2059
  %v2076 = vpack.c.b16 %v2062, %v2060
  %v2077 = vpack.c.b16 %v2065, %v2063
  %v2078 = vpack.c.b16 %v2066, %v2064
  %v2092 = vsel %vm310, %v2003, 0
  %v2095 = vsel %vm310, %v2004, 0
  %v2098 = vsel %vm310, %v2005, 0
  %v2101 = vsel %vm310, %v2006, 0
  %v2104 = vsel %vm310, %v2007, 0
  %v2107 = vsel %vm310, %v2008, 0
  %v2110 = vsel %vm310, %v2009, 0
  %v2113 = vsel %vm310, %v2010, 0
  %v2116 = vsel %vm310, %v2011, 0
  %v2119 = vsel %vm310, %v2012, 0
  %v2122 = vsel %vm310, %v2013, 0
  %v2125 = vsel %vm310, %v2014, 0
  %v2128 = vsel %vm310, %v2015, 0
  %v2131 = vsel %vm310, %v2016, 0
  %v2134 = vsel %vm310, %v2017, 0
  %v2137 = vsel %vm310, %v2018, 0
  %v2140 = vsel %vm310, %v2019, 0
  %v2143 = vsel %vm310, %v2020, 0
  %v2146 = vsel %vm310, %v2021, 0
  %v2149 = vsel %vm310, %v2022, 0
  %v2152 = vsel %vm310, %v2023, 0
  %v2155 = vsel %vm310, %v2024, 0
  %v2158 = vsel %vm310, %v2025, 0
  %v2161 = vsel %vm310, %v2026, 0
  %v2164 = vsel %vm310, %v2027, 0
  %v2167 = vsel %vm310, %v2028, 0
  %v2170 = vsel %vm310, %v2029, 0
  %v2173 = vsel %vm310, %v2030, 0
  %2175 = vmatpush.bf16.msra.mxu0 0
  %2176 = vmatpush.bf16.msra.mxu0 0
  %2177 = vmatpush.bf16.msra.mxu0 %v2077
  %2178 = vmatpush.bf16.msra.mxu0 %v2075
  %2179 = vmatpush.bf16.msra.mxu0 %v2073
  %2180 = vmatpush.bf16.msra.mxu0 %v2071
  %2181 = vmatpush.bf16.msra.mxu0 %v2069
  %2182 = vmatpush.bf16.msra.mxu0 %v2067
  %2183 = vmatmul.bf16.gmra.mxu0 %v2092
  %v2184 = vpop.f32.mrf.mxu0
  %v2185 = vadd.f32 0.0, %v2184
  %v2186 = vpop.f32.mrf.mxu0
  %v2187 = vadd.f32 0.0, %v2186
  %2188 = vmatmul.bf16.gmra.mxu0 %v2095
  %v2189 = vpop.f32.mrf.mxu0
  %v2190 = vadd.f32 0.0, %v2189
  %v2191 = vpop.f32.mrf.mxu0
  %v2192 = vadd.f32 0.0, %v2191
  %2193 = vmatmul.bf16.gmra.mxu0 %v2098
  %v2194 = vpop.f32.mrf.mxu0
  %v2195 = vadd.f32 0.0, %v2194
  %v2196 = vpop.f32.mrf.mxu0
  %v2197 = vadd.f32 0.0, %v2196
  %2198 = vmatmul.bf16.gmra.mxu0 %v2101
  %v2199 = vpop.f32.mrf.mxu0
  %v2200 = vadd.f32 0.0, %v2199
  %v2201 = vpop.f32.mrf.mxu0
  %v2202 = vadd.f32 0.0, %v2201
  %2203 = vmatmul.bf16.gmra.mxu0 %v2104
  %v2204 = vpop.f32.mrf.mxu0
  %v2205 = vadd.f32 0.0, %v2204
  %v2206 = vpop.f32.mrf.mxu0
  %v2207 = vadd.f32 0.0, %v2206
  %2208 = vmatmul.bf16.gmra.mxu0 %v2107
  %v2209 = vpop.f32.mrf.mxu0
  %v2210 = vadd.f32 0.0, %v2209
  %v2211 = vpop.f32.mrf.mxu0
  %v2212 = vadd.f32 0.0, %v2211
  %2213 = vmatmul.bf16.gmra.mxu0 %v2110
  %v2214 = vpop.f32.mrf.mxu0
  %v2215 = vadd.f32 0.0, %v2214
  %v2216 = vpop.f32.mrf.mxu0
  %v2217 = vadd.f32 0.0, %v2216
  %2218 = vmatmul.bf16.gmra.mxu0 %v2113
  %v2219 = vpop.f32.mrf.mxu0
  %v2220 = vadd.f32 0.0, %v2219
  %v2221 = vpop.f32.mrf.mxu0
  %v2222 = vadd.f32 0.0, %v2221
  %2223 = vmatmul.bf16.gmra.mxu0 %v2116
  %v2224 = vpop.f32.mrf.mxu0
  %v2225 = vadd.f32 0.0, %v2224
  %v2226 = vpop.f32.mrf.mxu0
  %v2227 = vadd.f32 0.0, %v2226
  %2228 = vmatmul.bf16.gmra.mxu0 %v2119
  %v2229 = vpop.f32.mrf.mxu0
  %v2230 = vadd.f32 0.0, %v2229
  %v2231 = vpop.f32.mrf.mxu0
  %v2232 = vadd.f32 0.0, %v2231
  %2233 = vmatmul.bf16.gmra.mxu0 %v2122
  %v2234 = vpop.f32.mrf.mxu0
  %v2235 = vadd.f32 0.0, %v2234
  %v2236 = vpop.f32.mrf.mxu0
  %v2237 = vadd.f32 0.0, %v2236
  %2238 = vmatmul.bf16.gmra.mxu0 %v2125
  %v2239 = vpop.f32.mrf.mxu0
  %v2240 = vadd.f32 0.0, %v2239
  %v2241 = vpop.f32.mrf.mxu0
  %v2242 = vadd.f32 0.0, %v2241
  %2243 = vmatmul.bf16.gmra.mxu0 %v2128
  %v2244 = vpop.f32.mrf.mxu0
  %v2245 = vadd.f32 0.0, %v2244
  %v2246 = vpop.f32.mrf.mxu0
  %v2247 = vadd.f32 0.0, %v2246
  %2248 = vmatmul.bf16.gmra.mxu0 %v2131
  %v2249 = vpop.f32.mrf.mxu0
  %v2250 = vadd.f32 0.0, %v2249
  %v2251 = vpop.f32.mrf.mxu0
  %v2252 = vadd.f32 0.0, %v2251
  %2253 = vmatmul.bf16.gmra.mxu0 %v2134
  %v2254 = vpop.f32.mrf.mxu0
  %v2255 = vadd.f32 0.0, %v2254
  %v2256 = vpop.f32.mrf.mxu0
  %v2257 = vadd.f32 0.0, %v2256
  %2258 = vmatmul.bf16.gmra.mxu0 %v2137
  %v2259 = vpop.f32.mrf.mxu0
  %v2260 = vadd.f32 0.0, %v2259
  %v2261 = vpop.f32.mrf.mxu0
  %v2262 = vadd.f32 0.0, %v2261
  %2263 = vmatmul.bf16.gmra.mxu0 %v2140
  %v2264 = vpop.f32.mrf.mxu0
  %v2265 = vadd.f32 0.0, %v2264
  %v2266 = vpop.f32.mrf.mxu0
  %v2267 = vadd.f32 0.0, %v2266
  %2268 = vmatmul.bf16.gmra.mxu0 %v2143
  %v2269 = vpop.f32.mrf.mxu0
  %v2270 = vadd.f32 0.0, %v2269
  %v2271 = vpop.f32.mrf.mxu0
  %v2272 = vadd.f32 0.0, %v2271
  %2273 = vmatmul.bf16.gmra.mxu0 %v2146
  %v2274 = vpop.f32.mrf.mxu0
  %v2275 = vadd.f32 0.0, %v2274
  %v2276 = vpop.f32.mrf.mxu0
  %v2277 = vadd.f32 0.0, %v2276
  %2278 = vmatmul.bf16.gmra.mxu0 %v2149
  %v2279 = vpop.f32.mrf.mxu0
  %v2280 = vadd.f32 0.0, %v2279
  %v2281 = vpop.f32.mrf.mxu0
  %v2282 = vadd.f32 0.0, %v2281
  %2283 = vmatmul.bf16.gmra.mxu0 %v2152
  %v2284 = vpop.f32.mrf.mxu0
  %v2285 = vadd.f32 0.0, %v2284
  %v2286 = vpop.f32.mrf.mxu0
  %v2287 = vadd.f32 0.0, %v2286
  %2288 = vmatmul.bf16.gmra.mxu0 %v2155
  %v2289 = vpop.f32.mrf.mxu0
  %v2290 = vadd.f32 0.0, %v2289
  %v2291 = vpop.f32.mrf.mxu0
  %v2292 = vadd.f32 0.0, %v2291
  %2293 = vmatmul.bf16.gmra.mxu0 %v2158
  %v2294 = vpop.f32.mrf.mxu0
  %v2295 = vadd.f32 0.0, %v2294
  %v2296 = vpop.f32.mrf.mxu0
  %v2297 = vadd.f32 0.0, %v2296
  %2298 = vmatmul.bf16.gmra.mxu0 %v2161
  %v2299 = vpop.f32.mrf.mxu0
  %v2300 = vadd.f32 0.0, %v2299
  %v2301 = vpop.f32.mrf.mxu0
  %v2302 = vadd.f32 0.0, %v2301
  %2303 = vmatmul.bf16.gmra.mxu0 %v2164
  %v2304 = vpop.f32.mrf.mxu0
  %v2305 = vadd.f32 0.0, %v2304
  %v2306 = vpop.f32.mrf.mxu0
  %v2307 = vadd.f32 0.0, %v2306
  %2308 = vmatmul.bf16.gmra.mxu0 %v2167
  %v2309 = vpop.f32.mrf.mxu0
  %v2310 = vadd.f32 0.0, %v2309
  %v2311 = vpop.f32.mrf.mxu0
  %v2312 = vadd.f32 0.0, %v2311
  %2313 = vmatmul.bf16.gmra.mxu0 %v2170
  %v2314 = vpop.f32.mrf.mxu0
  %v2315 = vadd.f32 0.0, %v2314
  %v2316 = vpop.f32.mrf.mxu0
  %v2317 = vadd.f32 0.0, %v2316
  %2318 = vmatmul.bf16.gmra.mxu0 %v2173
  %v2319 = vpop.f32.mrf.mxu0
  %v2320 = vadd.f32 0.0, %v2319
  %v2321 = vpop.f32.mrf.mxu0
  %v2322 = vadd.f32 0.0, %v2321
  %2323 = vdwg.mxu0
  %2324 = vmatpush.bf16.msra.mxu0 0
  %2325 = vmatpush.bf16.msra.mxu0 0
  %2326 = vmatpush.bf16.msra.mxu0 %v2078
  %2327 = vmatpush.bf16.msra.mxu0 %v2076
  %2328 = vmatpush.bf16.msra.mxu0 %v2074
  %2329 = vmatpush.bf16.msra.mxu0 %v2072
  %2330 = vmatpush.bf16.msra.mxu0 %v2070
  %2331 = vmatpush.bf16.msra.mxu0 %v2068
  %2332 = vmatmul.bf16.gmra.mxu0 %v2092
  %v2333 = vpop.f32.mrf.mxu0
  %v2334 = vadd.f32 0.0, %v2333
  %v2335 = vpop.f32.mrf.mxu0
  %v2336 = vadd.f32 0.0, %v2335
  %2337 = vmatmul.bf16.gmra.mxu0 %v2095
  %v2338 = vpop.f32.mrf.mxu0
  %v2339 = vadd.f32 0.0, %v2338
  %v2340 = vpop.f32.mrf.mxu0
  %v2341 = vadd.f32 0.0, %v2340
  %2342 = vmatmul.bf16.gmra.mxu0 %v2098
  %v2343 = vpop.f32.mrf.mxu0
  %v2344 = vadd.f32 0.0, %v2343
  %v2345 = vpop.f32.mrf.mxu0
  %v2346 = vadd.f32 0.0, %v2345
  %2347 = vmatmul.bf16.gmra.mxu0 %v2101
  %v2348 = vpop.f32.mrf.mxu0
  %v2349 = vadd.f32 0.0, %v2348
  %v2350 = vpop.f32.mrf.mxu0
  %v2351 = vadd.f32 0.0, %v2350
  %2352 = vmatmul.bf16.gmra.mxu0 %v2104
  %v2353 = vpop.f32.mrf.mxu0
  %v2354 = vadd.f32 0.0, %v2353
  %v2355 = vpop.f32.mrf.mxu0
  %v2356 = vadd.f32 0.0, %v2355
  %2357 = vmatmul.bf16.gmra.mxu0 %v2107
  %v2358 = vpop.f32.mrf.mxu0
  %v2359 = vadd.f32 0.0, %v2358
  %v2360 = vpop.f32.mrf.mxu0
  %v2361 = vadd.f32 0.0, %v2360
  %2362 = vmatmul.bf16.gmra.mxu0 %v2110
  %v2363 = vpop.f32.mrf.mxu0
  %v2364 = vadd.f32 0.0, %v2363
  %v2365 = vpop.f32.mrf.mxu0
  %v2366 = vadd.f32 0.0, %v2365
  %2367 = vmatmul.bf16.gmra.mxu0 %v2113
  %v2368 = vpop.f32.mrf.mxu0
  %v2369 = vadd.f32 0.0, %v2368
  %v2370 = vpop.f32.mrf.mxu0
  %v2371 = vadd.f32 0.0, %v2370
  %2372 = vmatmul.bf16.gmra.mxu0 %v2116
  %v2373 = vpop.f32.mrf.mxu0
  %v2374 = vadd.f32 0.0, %v2373
  %v2375 = vpop.f32.mrf.mxu0
  %v2376 = vadd.f32 0.0, %v2375
  %2377 = vmatmul.bf16.gmra.mxu0 %v2119
  %v2378 = vpop.f32.mrf.mxu0
  %v2379 = vadd.f32 0.0, %v2378
  %v2380 = vpop.f32.mrf.mxu0
  %v2381 = vadd.f32 0.0, %v2380
  %2382 = vmatmul.bf16.gmra.mxu0 %v2122
  %v2383 = vpop.f32.mrf.mxu0
  %v2384 = vadd.f32 0.0, %v2383
  %v2385 = vpop.f32.mrf.mxu0
  %v2386 = vadd.f32 0.0, %v2385
  %2387 = vmatmul.bf16.gmra.mxu0 %v2125
  %v2388 = vpop.f32.mrf.mxu0
  %v2389 = vadd.f32 0.0, %v2388
  %v2390 = vpop.f32.mrf.mxu0
  %v2391 = vadd.f32 0.0, %v2390
  %2392 = vmatmul.bf16.gmra.mxu0 %v2128
  %v2393 = vpop.f32.mrf.mxu0
  %v2394 = vadd.f32 0.0, %v2393
  %v2395 = vpop.f32.mrf.mxu0
  %v2396 = vadd.f32 0.0, %v2395
  %2397 = vmatmul.bf16.gmra.mxu0 %v2131
  %v2398 = vpop.f32.mrf.mxu0
  %v2399 = vadd.f32 0.0, %v2398
  %v2400 = vpop.f32.mrf.mxu0
  %v2401 = vadd.f32 0.0, %v2400
  %2402 = vmatmul.bf16.gmra.mxu0 %v2134
  %v2403 = vpop.f32.mrf.mxu0
  %v2404 = vadd.f32 0.0, %v2403
  %v2405 = vpop.f32.mrf.mxu0
  %v2406 = vadd.f32 0.0, %v2405
  %2407 = vmatmul.bf16.gmra.mxu0 %v2137
  %v2408 = vpop.f32.mrf.mxu0
  %v2409 = vadd.f32 0.0, %v2408
  %v2410 = vpop.f32.mrf.mxu0
  %v2411 = vadd.f32 0.0, %v2410
  %2412 = vmatmul.bf16.gmra.mxu0 %v2140
  %v2413 = vpop.f32.mrf.mxu0
  %v2414 = vadd.f32 0.0, %v2413
  %v2415 = vpop.f32.mrf.mxu0
  %v2416 = vadd.f32 0.0, %v2415
  %2417 = vmatmul.bf16.gmra.mxu0 %v2143
  %v2418 = vpop.f32.mrf.mxu0
  %v2419 = vadd.f32 0.0, %v2418
  %v2420 = vpop.f32.mrf.mxu0
  %v2421 = vadd.f32 0.0, %v2420
  %2422 = vmatmul.bf16.gmra.mxu0 %v2146
  %v2423 = vpop.f32.mrf.mxu0
  %v2424 = vadd.f32 0.0, %v2423
  %v2425 = vpop.f32.mrf.mxu0
  %v2426 = vadd.f32 0.0, %v2425
  %2427 = vmatmul.bf16.gmra.mxu0 %v2149
  %v2428 = vpop.f32.mrf.mxu0
  %v2429 = vadd.f32 0.0, %v2428
  %v2430 = vpop.f32.mrf.mxu0
  %v2431 = vadd.f32 0.0, %v2430
  %2432 = vmatmul.bf16.gmra.mxu0 %v2152
  %v2433 = vpop.f32.mrf.mxu0
  %v2434 = vadd.f32 0.0, %v2433
  %v2435 = vpop.f32.mrf.mxu0
  %v2436 = vadd.f32 0.0, %v2435
  %2437 = vmatmul.bf16.gmra.mxu0 %v2155
  %v2438 = vpop.f32.mrf.mxu0
  %v2439 = vadd.f32 0.0, %v2438
  %v2440 = vpop.f32.mrf.mxu0
  %v2441 = vadd.f32 0.0, %v2440
  %2442 = vmatmul.bf16.gmra.mxu0 %v2158
  %v2443 = vpop.f32.mrf.mxu0
  %v2444 = vadd.f32 0.0, %v2443
  %v2445 = vpop.f32.mrf.mxu0
  %v2446 = vadd.f32 0.0, %v2445
  %2447 = vmatmul.bf16.gmra.mxu0 %v2161
  %v2448 = vpop.f32.mrf.mxu0
  %v2449 = vadd.f32 0.0, %v2448
  %v2450 = vpop.f32.mrf.mxu0
  %v2451 = vadd.f32 0.0, %v2450
  %2452 = vmatmul.bf16.gmra.mxu0 %v2164
  %v2453 = vpop.f32.mrf.mxu0
  %v2454 = vadd.f32 0.0, %v2453
  %v2455 = vpop.f32.mrf.mxu0
  %v2456 = vadd.f32 0.0, %v2455
  %2457 = vmatmul.bf16.gmra.mxu0 %v2167
  %v2458 = vpop.f32.mrf.mxu0
  %v2459 = vadd.f32 0.0, %v2458
  %v2460 = vpop.f32.mrf.mxu0
  %v2461 = vadd.f32 0.0, %v2460
  %2462 = vmatmul.bf16.gmra.mxu0 %v2170
  %v2463 = vpop.f32.mrf.mxu0
  %v2464 = vadd.f32 0.0, %v2463
  %v2465 = vpop.f32.mrf.mxu0
  %v2466 = vadd.f32 0.0, %v2465
  %2467 = vmatmul.bf16.gmra.mxu0 %v2173
  %v2468 = vpop.f32.mrf.mxu0
  %v2469 = vadd.f32 0.0, %v2468
  %v2470 = vpop.f32.mrf.mxu0
  %v2471 = vadd.f32 0.0, %v2470
  %2472 = vdwg.mxu0
  %v2473 = vadd.f32 %v1710, %v2185
  %v2474 = vadd.f32 %v1711, %v2334
  %v2475 = vadd.f32 %v1712, %v2187
  %v2476 = vadd.f32 %v1713, %v2336
  %v2477 = vadd.f32 %v1714, %v2190
  %v2478 = vadd.f32 %v1715, %v2339
  %v2479 = vadd.f32 %v1716, %v2192
  %v2480 = vadd.f32 %v1717, %v2341
  %v2481 = vadd.f32 %v1718, %v2195
  %v2482 = vadd.f32 %v1719, %v2344
  %v2483 = vadd.f32 %v1720, %v2197
  %v2484 = vadd.f32 %v1721, %v2346
  %v2485 = vadd.f32 %v1722, %v2200
  %v2486 = vadd.f32 %v1723, %v2349
  %v2487 = vadd.f32 %v1724, %v2202
  %v2488 = vadd.f32 %v1725, %v2351
  %v2489 = vadd.f32 %v1726, %v2205
  %v2490 = vadd.f32 %v1727, %v2354
  %v2491 = vadd.f32 %v1728, %v2207
  %v2492 = vadd.f32 %v1729, %v2356
  %v2493 = vadd.f32 %v1730, %v2210
  %v2494 = vadd.f32 %v1731, %v2359
  %v2495 = vadd.f32 %v1732, %v2212
  %v2496 = vadd.f32 %v1733, %v2361
  %v2497 = vadd.f32 %v1734, %v2215
  %v2498 = vadd.f32 %v1735, %v2364
  %v2499 = vadd.f32 %v1736, %v2217
  %v2500 = vadd.f32 %v1737, %v2366
  %v2501 = vadd.f32 %v1738, %v2220
  %v2502 = vadd.f32 %v1739, %v2369
  %v2503 = vadd.f32 %v1740, %v2222
  %v2504 = vadd.f32 %v1741, %v2371
  %v2505 = vadd.f32 %v1742, %v2225
  %v2506 = vadd.f32 %v1743, %v2374
  %v2507 = vadd.f32 %v1744, %v2227
  %v2508 = vadd.f32 %v1745, %v2376
  %v2509 = vadd.f32 %v1746, %v2230
  %v2510 = vadd.f32 %v1747, %v2379
  %v2511 = vadd.f32 %v1748, %v2232
  %v2512 = vadd.f32 %v1749, %v2381
  %v2513 = vadd.f32 %v1750, %v2235
  %v2514 = vadd.f32 %v1751, %v2384
  %v2515 = vadd.f32 %v1752, %v2237
  %v2516 = vadd.f32 %v1753, %v2386
  %v2517 = vadd.f32 %v1754, %v2240
  %v2518 = vadd.f32 %v1755, %v2389
  %v2519 = vadd.f32 %v1756, %v2242
  %v2520 = vadd.f32 %v1757, %v2391
  %v2521 = vadd.f32 %v1758, %v2245
  %v2522 = vadd.f32 %v1759, %v2394
  %v2523 = vadd.f32 %v1760, %v2247
  %v2524 = vadd.f32 %v1761, %v2396
  %v2525 = vadd.f32 %v1762, %v2250
  %v2526 = vadd.f32 %v1763, %v2399
  %v2527 = vadd.f32 %v1764, %v2252
  %v2528 = vadd.f32 %v1765, %v2401
  %v2529 = vadd.f32 %v1766, %v2255
  %v2530 = vadd.f32 %v1767, %v2404
  %v2531 = vadd.f32 %v1768, %v2257
  %v2532 = vadd.f32 %v1769, %v2406
  %v2533 = vadd.f32 %v1770, %v2260
  %v2534 = vadd.f32 %v1771, %v2409
  %v2535 = vadd.f32 %v1772, %v2262
  %v2536 = vadd.f32 %v1773, %v2411
  %v2537 = vadd.f32 %v1774, %v2265
  %v2538 = vadd.f32 %v1775, %v2414
  %v2539 = vadd.f32 %v1776, %v2267
  %v2540 = vadd.f32 %v1777, %v2416
  %v2541 = vadd.f32 %v1778, %v2270
  %v2542 = vadd.f32 %v1779, %v2419
  %v2543 = vadd.f32 %v1780, %v2272
  %v2544 = vadd.f32 %v1781, %v2421
  %v2545 = vadd.f32 %v1782, %v2275
  %v2546 = vadd.f32 %v1783, %v2424
  %v2547 = vadd.f32 %v1784, %v2277
  %v2548 = vadd.f32 %v1785, %v2426
  %v2549 = vadd.f32 %v1786, %v2280
  %v2550 = vadd.f32 %v1787, %v2429
  %v2551 = vadd.f32 %v1788, %v2282
  %v2552 = vadd.f32 %v1789, %v2431
  %v2553 = vadd.f32 %v1790, %v2285
  %v2554 = vadd.f32 %v1791, %v2434
  %v2555 = vadd.f32 %v1792, %v2287
  %v2556 = vadd.f32 %v1793, %v2436
  %v2557 = vadd.f32 %v1794, %v2290
  %v2558 = vadd.f32 %v1795, %v2439
  %v2559 = vadd.f32 %v1796, %v2292
  %v2560 = vadd.f32 %v1797, %v2441
  %v2561 = vadd.f32 %v1798, %v2295
  %v2562 = vadd.f32 %v1799, %v2444
  %v2563 = vadd.f32 %v1800, %v2297
  %v2564 = vadd.f32 %v1801, %v2446
  %v2565 = vadd.f32 %v1802, %v2300
  %v2566 = vadd.f32 %v1803, %v2449
  %v2567 = vadd.f32 %v1804, %v2302
  %v2568 = vadd.f32 %v1805, %v2451
  %v2569 = vadd.f32 %v1806, %v2305
  %v2570 = vadd.f32 %v1807, %v2454
  %v2571 = vadd.f32 %v1808, %v2307
  %v2572 = vadd.f32 %v1809, %v2456
  %v2573 = vadd.f32 %v1810, %v2310
  %v2574 = vadd.f32 %v1811, %v2459
  %v2575 = vadd.f32 %v1812, %v2312
  %v2576 = vadd.f32 %v1813, %v2461
  %v2577 = vadd.f32 %v1814, %v2315
  %v2578 = vadd.f32 %v1815, %v2464
  %v2579 = vadd.f32 %v1816, %v2317
  %v2580 = vadd.f32 %v1817, %v2466
  %v2581 = vadd.f32 %v1818, %v2320
  %v2582 = vadd.f32 %v1819, %v2469
  %v2583 = vadd.f32 %v1820, %v2322
  %v2584 = vadd.f32 %v1821, %v2471
  %v2585 = vld [vmem:[%s0 + $0x20] sm:$0xf]
  %v2586 = vld [vmem:[%s0 + $0x24] sm:$0xf]
  %v2587 = vld [vmem:[%s0 + $0x28] sm:$0xf]
  %v2588 = vld [vmem:[%s0 + $0x2c] sm:$0xf]
  %v2589 = vld [vmem:[%s0 + $0x30] sm:$0xf]
  %v2590 = vld [vmem:[%s0 + $0x34] sm:$0xf]
  %v2591 = vld [vmem:[%s0 + $0x38] sm:$0xf]
  %v2592 = vld [vmem:[%s0 + $0x3c] sm:$0xf]
  %v2593 = vld [vmem:[%s0 + $0x40] sm:$0xf]
  %v2594 = vld [vmem:[%s0 + $0x44] sm:$0xf]
  %v2595 = vld [vmem:[%s0 + $0x48] sm:$0xf]
  %v2596 = vld [vmem:[%s0 + $0x4c] sm:$0xf]
  %v2597 = vld [vmem:[%s0 + $0x50] sm:$0xf]
  %v2598 = vld [vmem:[%s0 + $0x54] sm:$0xf]
  %v2599 = vld [vmem:[%s0 + $0x58] sm:$0xf]
  %v2600 = vld [vmem:[%s0 + $0x5c] sm:$0xf]
  %v2601 = vld [vmem:[%s0 + $0x60] sm:$0xf]
  %v2602 = vld [vmem:[%s0 + $0x64] sm:$0xf]
  %v2603 = vld [vmem:[%s0 + $0x68] sm:$0xf]
  %v2604 = vld [vmem:[%s0 + $0x6c] sm:$0xf]
  %v2605 = vld [vmem:[%s0 + $0x70] sm:$0xf]
  %v2606 = vld [vmem:[%s0 + $0x74] sm:$0xf]
  %v2607 = vld [vmem:[%s0 + $0x78] sm:$0xf]
  %v2608 = vld [vmem:[%s0 + $0x7c] sm:$0xf]
  %v2609 = vld [vmem:[%s0 + $0x80] sm:$0xf]
  %v2610 = vld [vmem:[%s0 + $0x84] sm:$0xf]
  %v2611 = vld [vmem:[%s0 + $0x88] sm:$0xf]
  %v2612 = vld [vmem:[%s0 + $0x8c] sm:$0xf]
  %v2613 = vld [vmem:[%s0 + $0x90] sm:$0xf]
  %v2614 = vld [vmem:[%s0 + $0x94] sm:$0xf]
  %v2615 = vld [vmem:[%s0 + $0x98] sm:$0xf]
  %v2616 = vld [vmem:[%s0 + $0x9c] sm:$0xf]
  %v2617 = vld [vmem:[%s0 + $0xa0] sm:$0xf]
  %v2618 = vld [vmem:[%s0 + $0xa4] sm:$0xf]
  %v2619 = vld [vmem:[%s0 + $0xa8] sm:$0xf]
  %v2620 = vld [vmem:[%s0 + $0xac] sm:$0xf]
  %v2621 = vld [vmem:[%s0 + $0xb0] sm:$0xf]
  %v2622 = vld [vmem:[%s0 + $0xb4] sm:$0xf]
  %v2623 = vld [vmem:[%s0 + $0xb8] sm:$0xf]
  %v2624 = vld [vmem:[%s0 + $0xbc] sm:$0xf]
  %v2625 = vld [vmem:[%s0 + $0xc0] sm:$0xf]
  %v2626 = vld [vmem:[%s0 + $0xc4] sm:$0xf]
  %v2627 = vld [vmem:[%s0 + $0xc8] sm:$0xf]
  %v2628 = vld [vmem:[%s0 + $0xcc] sm:$0xf]
  %v2629 = vld [vmem:[%s0 + $0xd0] sm:$0xf]
  %v2630 = vld [vmem:[%s0 + $0xd4] sm:$0xf]
  %v2631 = vld [vmem:[%s0 + $0xd8] sm:$0xf]
  %v2632 = vld [vmem:[%s0 + $0xdc] sm:$0xf]
  %v2633 = vld [vmem:[%s0 + $0xe0] sm:$0xf]
  %v2634 = vld [vmem:[%s0 + $0xe4] sm:$0xf]
  %v2635 = vld [vmem:[%s0 + $0xe8] sm:$0xf]
  %v2636 = vld [vmem:[%s0 + $0xec] sm:$0xf]
  %v2637 = vld [vmem:[%s0 + $0xf0] sm:$0xf]
  %v2638 = vld [vmem:[%s0 + $0xf4] sm:$0xf]
  %v2639 = vld [vmem:[%s0 + $0xf8] sm:$0xf]
  %v2640 = vld [vmem:[%s0 + $0xfc] sm:$0xf]
  %s2641 = scalar_lea.vmem %s1, 384
  %v2642 = vld [vmem:[%s2641] sm:$0xff]
  %v2643 = vld [vmem:[%s2641 + $0x8] sm:$0xff]
  %v2644 = vld [vmem:[%s2641 + $0x10] sm:$0xff]
  %v2645 = vld [vmem:[%s2641 + $0x18] sm:$0xff]
  %v2646 = vld [vmem:[%s2641 + $0x20] sm:$0xff]
  %v2647 = vld [vmem:[%s2641 + $0x28] sm:$0xff]
  %v2648 = vld [vmem:[%s2641 + $0x30] sm:$0xff]
  %v2649 = vld [vmem:[%s2641 + $0x38] sm:$0xff]
  %v2650 = vld [vmem:[%s2641 + $0x40] sm:$0xff]
  %v2651 = vld [vmem:[%s2641 + $0x48] sm:$0xff]
  %v2652 = vld [vmem:[%s2641 + $0x50] sm:$0xff]
  %v2653 = vld [vmem:[%s2641 + $0x58] sm:$0xff]
  %v2710 = vunpack.c.l.b16 %v2585
  %v2711 = vunpack.c.l.b16 %v2586
  %v2712 = vunpack.c.l.b16 %v2587
  %v2713 = vunpack.c.l.b16 %v2588
  %v2714 = vunpack.c.l.b16 %v2589
  %v2715 = vunpack.c.l.b16 %v2590
  %v2716 = vunpack.c.l.b16 %v2591
  %v2717 = vunpack.c.l.b16 %v2592
  %v2718 = vunpack.c.l.b16 %v2593
  %v2719 = vunpack.c.l.b16 %v2594
  %v2720 = vunpack.c.l.b16 %v2595
  %v2721 = vunpack.c.l.b16 %v2596
  %v2722 = vunpack.c.l.b16 %v2597
  %v2723 = vunpack.c.l.b16 %v2598
  %v2724 = vunpack.c.l.b16 %v2599
  %v2725 = vunpack.c.l.b16 %v2600
  %v2726 = vunpack.c.l.b16 %v2601
  %v2727 = vunpack.c.l.b16 %v2602
  %v2728 = vunpack.c.l.b16 %v2603
  %v2729 = vunpack.c.l.b16 %v2604
  %v2730 = vunpack.c.l.b16 %v2605
  %v2731 = vunpack.c.l.b16 %v2606
  %v2732 = vunpack.c.l.b16 %v2607
  %v2733 = vunpack.c.l.b16 %v2608
  %v2734 = vunpack.c.l.b16 %v2609
  %v2735 = vunpack.c.l.b16 %v2610
  %v2736 = vunpack.c.l.b16 %v2611
  %v2737 = vunpack.c.l.b16 %v2612
  %v2738 = vunpack.c.l.b16 %v2613
  %v2739 = vunpack.c.l.b16 %v2614
  %v2740 = vunpack.c.l.b16 %v2615
  %v2741 = vunpack.c.l.b16 %v2616
  %v2742 = vunpack.c.l.b16 %v2617
  %v2743 = vunpack.c.l.b16 %v2618
  %v2744 = vunpack.c.l.b16 %v2619
  %v2745 = vunpack.c.l.b16 %v2620
  %v2746 = vunpack.c.l.b16 %v2621
  %v2747 = vunpack.c.l.b16 %v2622
  %v2748 = vunpack.c.l.b16 %v2623
  %v2749 = vunpack.c.l.b16 %v2624
  %v2750 = vunpack.c.l.b16 %v2625
  %v2751 = vunpack.c.l.b16 %v2626
  %v2752 = vunpack.c.l.b16 %v2627
  %v2753 = vunpack.c.l.b16 %v2628
  %v2754 = vunpack.c.l.b16 %v2629
  %v2755 = vunpack.c.l.b16 %v2630
  %v2756 = vunpack.c.l.b16 %v2631
  %v2757 = vunpack.c.l.b16 %v2632
  %v2758 = vunpack.c.l.b16 %v2633
  %v2759 = vunpack.c.l.b16 %v2634
  %v2760 = vunpack.c.l.b16 %v2635
  %v2761 = vunpack.c.l.b16 %v2636
  %v2762 = vunpack.c.l.b16 %v2637
  %v2763 = vunpack.c.l.b16 %v2638
  %v2764 = vunpack.c.l.b16 %v2639
  %v2765 = vunpack.c.l.b16 %v2640
  %v2766 = vpack.c.b16 %v2711, %v2710
  %v2767 = vpack.c.b16 %v2713, %v2712
  %v2768 = vpack.c.b16 %v2715, %v2714
  %v2769 = vpack.c.b16 %v2717, %v2716
  %v2770 = vpack.c.b16 %v2719, %v2718
  %v2771 = vpack.c.b16 %v2721, %v2720
  %v2772 = vpack.c.b16 %v2723, %v2722
  %v2773 = vpack.c.b16 %v2725, %v2724
  %v2774 = vpack.c.b16 %v2727, %v2726
  %v2775 = vpack.c.b16 %v2729, %v2728
  %v2776 = vpack.c.b16 %v2731, %v2730
  %v2777 = vpack.c.b16 %v2733, %v2732
  %v2778 = vpack.c.b16 %v2735, %v2734
  %v2779 = vpack.c.b16 %v2737, %v2736
  %v2780 = vpack.c.b16 %v2739, %v2738
  %v2781 = vpack.c.b16 %v2741, %v2740
  %v2782 = vpack.c.b16 %v2743, %v2742
  %v2783 = vpack.c.b16 %v2745, %v2744
  %v2784 = vpack.c.b16 %v2747, %v2746
  %v2785 = vpack.c.b16 %v2749, %v2748
  %v2786 = vpack.c.b16 %v2751, %v2750
  %v2787 = vpack.c.b16 %v2753, %v2752
  %v2788 = vpack.c.b16 %v2755, %v2754
  %v2789 = vpack.c.b16 %v2757, %v2756
  %v2790 = vpack.c.b16 %v2759, %v2758
  %v2791 = vpack.c.b16 %v2761, %v2760
  %v2792 = vpack.c.b16 %v2763, %v2762
  %v2793 = vpack.c.b16 %v2765, %v2764
  %v2806 = vunpack.c.l.b16 %v2642
  %v2807 = vunpack.c.h.b16 %v2642
  %v2808 = vunpack.c.l.b16 %v2643
  %v2809 = vunpack.c.h.b16 %v2643
  %v2810 = vunpack.c.l.b16 %v2644
  %v2811 = vunpack.c.h.b16 %v2644
  %v2812 = vunpack.c.l.b16 %v2645
  %v2813 = vunpack.c.h.b16 %v2645
  %v2814 = vunpack.c.l.b16 %v2646
  %v2815 = vunpack.c.h.b16 %v2646
  %v2816 = vunpack.c.l.b16 %v2647
  %v2817 = vunpack.c.h.b16 %v2647
  %v2818 = vunpack.c.l.b16 %v2648
  %v2819 = vunpack.c.h.b16 %v2648
  %v2820 = vunpack.c.l.b16 %v2649
  %v2821 = vunpack.c.h.b16 %v2649
  %v2822 = vunpack.c.l.b16 %v2650
  %v2823 = vunpack.c.h.b16 %v2650
  %v2824 = vunpack.c.l.b16 %v2651
  %v2825 = vunpack.c.h.b16 %v2651
  %v2826 = vunpack.c.l.b16 %v2652
  %v2827 = vunpack.c.h.b16 %v2652
  %v2828 = vunpack.c.l.b16 %v2653
  %v2829 = vunpack.c.h.b16 %v2653
  %v2830 = vpack.c.b16 %v2808, %v2806
  %v2831 = vpack.c.b16 %v2809, %v2807
  %v2832 = vpack.c.b16 %v2812, %v2810
  %v2833 = vpack.c.b16 %v2813, %v2811
  %v2834 = vpack.c.b16 %v2816, %v2814
  %v2835 = vpack.c.b16 %v2817, %v2815
  %v2836 = vpack.c.b16 %v2820, %v2818
  %v2837 = vpack.c.b16 %v2821, %v2819
  %v2838 = vpack.c.b16 %v2824, %v2822
  %v2839 = vpack.c.b16 %v2825, %v2823
  %v2840 = vpack.c.b16 %v2828, %v2826
  %v2841 = vpack.c.b16 %v2829, %v2827
  %v2855 = vsel %vm310, %v2766, 0
  %v2858 = vsel %vm310, %v2767, 0
  %v2861 = vsel %vm310, %v2768, 0
  %v2864 = vsel %vm310, %v2769, 0
  %v2867 = vsel %vm310, %v2770, 0
  %v2870 = vsel %vm310, %v2771, 0
  %v2873 = vsel %vm310, %v2772, 0
  %v2876 = vsel %vm310, %v2773, 0
  %v2879 = vsel %vm310, %v2774, 0
  %v2882 = vsel %vm310, %v2775, 0
  %v2885 = vsel %vm310, %v2776, 0
  %v2888 = vsel %vm310, %v2777, 0
  %v2891 = vsel %vm310, %v2778, 0
  %v2894 = vsel %vm310, %v2779, 0
  %v2897 = vsel %vm310, %v2780, 0
  %v2900 = vsel %vm310, %v2781, 0
  %v2903 = vsel %vm310, %v2782, 0
  %v2906 = vsel %vm310, %v2783, 0
  %v2909 = vsel %vm310, %v2784, 0
  %v2912 = vsel %vm310, %v2785, 0
  %v2915 = vsel %vm310, %v2786, 0
  %v2918 = vsel %vm310, %v2787, 0
  %v2921 = vsel %vm310, %v2788, 0
  %v2924 = vsel %vm310, %v2789, 0
  %v2927 = vsel %vm310, %v2790, 0
  %v2930 = vsel %vm310, %v2791, 0
  %v2933 = vsel %vm310, %v2792, 0
  %v2936 = vsel %vm310, %v2793, 0
  %2938 = vmatpush.bf16.msra.mxu0 0
  %2939 = vmatpush.bf16.msra.mxu0 0
  %2940 = vmatpush.bf16.msra.mxu0 %v2840
  %2941 = vmatpush.bf16.msra.mxu0 %v2838
  %2942 = vmatpush.bf16.msra.mxu0 %v2836
  %2943 = vmatpush.bf16.msra.mxu0 %v2834
  %2944 = vmatpush.bf16.msra.mxu0 %v2832
  %2945 = vmatpush.bf16.msra.mxu0 %v2830
  %2946 = vmatmul.bf16.gmra.mxu0 %v2855
  %v2947 = vpop.f32.mrf.mxu0
  %v2948 = vadd.f32 0.0, %v2947
  %v2949 = vpop.f32.mrf.mxu0
  %v2950 = vadd.f32 0.0, %v2949
  %2951 = vmatmul.bf16.gmra.mxu0 %v2858
  %v2952 = vpop.f32.mrf.mxu0
  %v2953 = vadd.f32 0.0, %v2952
  %v2954 = vpop.f32.mrf.mxu0
  %v2955 = vadd.f32 0.0, %v2954
  %2956 = vmatmul.bf16.gmra.mxu0 %v2861
  %v2957 = vpop.f32.mrf.mxu0
  %v2958 = vadd.f32 0.0, %v2957
  %v2959 = vpop.f32.mrf.mxu0
  %v2960 = vadd.f32 0.0, %v2959
  %2961 = vmatmul.bf16.gmra.mxu0 %v2864
  %v2962 = vpop.f32.mrf.mxu0
  %v2963 = vadd.f32 0.0, %v2962
  %v2964 = vpop.f32.mrf.mxu0
  %v2965 = vadd.f32 0.0, %v2964
  %2966 = vmatmul.bf16.gmra.mxu0 %v2867
  %v2967 = vpop.f32.mrf.mxu0
  %v2968 = vadd.f32 0.0, %v2967
  %v2969 = vpop.f32.mrf.mxu0
  %v2970 = vadd.f32 0.0, %v2969
  %2971 = vmatmul.bf16.gmra.mxu0 %v2870
  %v2972 = vpop.f32.mrf.mxu0
  %v2973 = vadd.f32 0.0, %v2972
  %v2974 = vpop.f32.mrf.mxu0
  %v2975 = vadd.f32 0.0, %v2974
  %2976 = vmatmul.bf16.gmra.mxu0 %v2873
  %v2977 = vpop.f32.mrf.mxu0
  %v2978 = vadd.f32 0.0, %v2977
  %v2979 = vpop.f32.mrf.mxu0
  %v2980 = vadd.f32 0.0, %v2979
  %2981 = vmatmul.bf16.gmra.mxu0 %v2876
  %v2982 = vpop.f32.mrf.mxu0
  %v2983 = vadd.f32 0.0, %v2982
  %v2984 = vpop.f32.mrf.mxu0
  %v2985 = vadd.f32 0.0, %v2984
  %2986 = vmatmul.bf16.gmra.mxu0 %v2879
  %v2987 = vpop.f32.mrf.mxu0
  %v2988 = vadd.f32 0.0, %v2987
  %v2989 = vpop.f32.mrf.mxu0
  %v2990 = vadd.f32 0.0, %v2989
  %2991 = vmatmul.bf16.gmra.mxu0 %v2882
  %v2992 = vpop.f32.mrf.mxu0
  %v2993 = vadd.f32 0.0, %v2992
  %v2994 = vpop.f32.mrf.mxu0
  %v2995 = vadd.f32 0.0, %v2994
  %2996 = vmatmul.bf16.gmra.mxu0 %v2885
  %v2997 = vpop.f32.mrf.mxu0
  %v2998 = vadd.f32 0.0, %v2997
  %v2999 = vpop.f32.mrf.mxu0
  %v3000 = vadd.f32 0.0, %v2999
  %3001 = vmatmul.bf16.gmra.mxu0 %v2888
  %v3002 = vpop.f32.mrf.mxu0
  %v3003 = vadd.f32 0.0, %v3002
  %v3004 = vpop.f32.mrf.mxu0
  %v3005 = vadd.f32 0.0, %v3004
  %3006 = vmatmul.bf16.gmra.mxu0 %v2891
  %v3007 = vpop.f32.mrf.mxu0
  %v3008 = vadd.f32 0.0, %v3007
  %v3009 = vpop.f32.mrf.mxu0
  %v3010 = vadd.f32 0.0, %v3009
  %3011 = vmatmul.bf16.gmra.mxu0 %v2894
  %v3012 = vpop.f32.mrf.mxu0
  %v3013 = vadd.f32 0.0, %v3012
  %v3014 = vpop.f32.mrf.mxu0
  %v3015 = vadd.f32 0.0, %v3014
  %3016 = vmatmul.bf16.gmra.mxu0 %v2897
  %v3017 = vpop.f32.mrf.mxu0
  %v3018 = vadd.f32 0.0, %v3017
  %v3019 = vpop.f32.mrf.mxu0
  %v3020 = vadd.f32 0.0, %v3019
  %3021 = vmatmul.bf16.gmra.mxu0 %v2900
  %v3022 = vpop.f32.mrf.mxu0
  %v3023 = vadd.f32 0.0, %v3022
  %v3024 = vpop.f32.mrf.mxu0
  %v3025 = vadd.f32 0.0, %v3024
  %3026 = vmatmul.bf16.gmra.mxu0 %v2903
  %v3027 = vpop.f32.mrf.mxu0
  %v3028 = vadd.f32 0.0, %v3027
  %v3029 = vpop.f32.mrf.mxu0
  %v3030 = vadd.f32 0.0, %v3029
  %3031 = vmatmul.bf16.gmra.mxu0 %v2906
  %v3032 = vpop.f32.mrf.mxu0
  %v3033 = vadd.f32 0.0, %v3032
  %v3034 = vpop.f32.mrf.mxu0
  %v3035 = vadd.f32 0.0, %v3034
  %3036 = vmatmul.bf16.gmra.mxu0 %v2909
  %v3037 = vpop.f32.mrf.mxu0
  %v3038 = vadd.f32 0.0, %v3037
  %v3039 = vpop.f32.mrf.mxu0
  %v3040 = vadd.f32 0.0, %v3039
  %3041 = vmatmul.bf16.gmra.mxu0 %v2912
  %v3042 = vpop.f32.mrf.mxu0
  %v3043 = vadd.f32 0.0, %v3042
  %v3044 = vpop.f32.mrf.mxu0
  %v3045 = vadd.f32 0.0, %v3044
  %3046 = vmatmul.bf16.gmra.mxu0 %v2915
  %v3047 = vpop.f32.mrf.mxu0
  %v3048 = vadd.f32 0.0, %v3047
  %v3049 = vpop.f32.mrf.mxu0
  %v3050 = vadd.f32 0.0, %v3049
  %3051 = vmatmul.bf16.gmra.mxu0 %v2918
  %v3052 = vpop.f32.mrf.mxu0
  %v3053 = vadd.f32 0.0, %v3052
  %v3054 = vpop.f32.mrf.mxu0
  %v3055 = vadd.f32 0.0, %v3054
  %3056 = vmatmul.bf16.gmra.mxu0 %v2921
  %v3057 = vpop.f32.mrf.mxu0
  %v3058 = vadd.f32 0.0, %v3057
  %v3059 = vpop.f32.mrf.mxu0
  %v3060 = vadd.f32 0.0, %v3059
  %3061 = vmatmul.bf16.gmra.mxu0 %v2924
  %v3062 = vpop.f32.mrf.mxu0
  %v3063 = vadd.f32 0.0, %v3062
  %v3064 = vpop.f32.mrf.mxu0
  %v3065 = vadd.f32 0.0, %v3064
  %3066 = vmatmul.bf16.gmra.mxu0 %v2927
  %v3067 = vpop.f32.mrf.mxu0
  %v3068 = vadd.f32 0.0, %v3067
  %v3069 = vpop.f32.mrf.mxu0
  %v3070 = vadd.f32 0.0, %v3069
  %3071 = vmatmul.bf16.gmra.mxu0 %v2930
  %v3072 = vpop.f32.mrf.mxu0
  %v3073 = vadd.f32 0.0, %v3072
  %v3074 = vpop.f32.mrf.mxu0
  %v3075 = vadd.f32 0.0, %v3074
  %3076 = vmatmul.bf16.gmra.mxu0 %v2933
  %v3077 = vpop.f32.mrf.mxu0
  %v3078 = vadd.f32 0.0, %v3077
  %v3079 = vpop.f32.mrf.mxu0
  %v3080 = vadd.f32 0.0, %v3079
  %3081 = vmatmul.bf16.gmra.mxu0 %v2936
  %v3082 = vpop.f32.mrf.mxu0
  %v3083 = vadd.f32 0.0, %v3082
  %v3084 = vpop.f32.mrf.mxu0
  %v3085 = vadd.f32 0.0, %v3084
  %3086 = vdwg.mxu0
  %3087 = vmatpush.bf16.msra.mxu0 0
  %3088 = vmatpush.bf16.msra.mxu0 0
  %3089 = vmatpush.bf16.msra.mxu0 %v2841
  %3090 = vmatpush.bf16.msra.mxu0 %v2839
  %3091 = vmatpush.bf16.msra.mxu0 %v2837
  %3092 = vmatpush.bf16.msra.mxu0 %v2835
  %3093 = vmatpush.bf16.msra.mxu0 %v2833
  %3094 = vmatpush.bf16.msra.mxu0 %v2831
  %3095 = vmatmul.bf16.gmra.mxu0 %v2855
  %v3096 = vpop.f32.mrf.mxu0
  %v3097 = vadd.f32 0.0, %v3096
  %v3098 = vpop.f32.mrf.mxu0
  %v3099 = vadd.f32 0.0, %v3098
  %3100 = vmatmul.bf16.gmra.mxu0 %v2858
  %v3101 = vpop.f32.mrf.mxu0
  %v3102 = vadd.f32 0.0, %v3101
  %v3103 = vpop.f32.mrf.mxu0
  %v3104 = vadd.f32 0.0, %v3103
  %3105 = vmatmul.bf16.gmra.mxu0 %v2861
  %v3106 = vpop.f32.mrf.mxu0
  %v3107 = vadd.f32 0.0, %v3106
  %v3108 = vpop.f32.mrf.mxu0
  %v3109 = vadd.f32 0.0, %v3108
  %3110 = vmatmul.bf16.gmra.mxu0 %v2864
  %v3111 = vpop.f32.mrf.mxu0
  %v3112 = vadd.f32 0.0, %v3111
  %v3113 = vpop.f32.mrf.mxu0
  %v3114 = vadd.f32 0.0, %v3113
  %3115 = vmatmul.bf16.gmra.mxu0 %v2867
  %v3116 = vpop.f32.mrf.mxu0
  %v3117 = vadd.f32 0.0, %v3116
  %v3118 = vpop.f32.mrf.mxu0
  %v3119 = vadd.f32 0.0, %v3118
  %3120 = vmatmul.bf16.gmra.mxu0 %v2870
  %v3121 = vpop.f32.mrf.mxu0
  %v3122 = vadd.f32 0.0, %v3121
  %v3123 = vpop.f32.mrf.mxu0
  %v3124 = vadd.f32 0.0, %v3123
  %3125 = vmatmul.bf16.gmra.mxu0 %v2873
  %v3126 = vpop.f32.mrf.mxu0
  %v3127 = vadd.f32 0.0, %v3126
  %v3128 = vpop.f32.mrf.mxu0
  %v3129 = vadd.f32 0.0, %v3128
  %3130 = vmatmul.bf16.gmra.mxu0 %v2876
  %v3131 = vpop.f32.mrf.mxu0
  %v3132 = vadd.f32 0.0, %v3131
  %v3133 = vpop.f32.mrf.mxu0
  %v3134 = vadd.f32 0.0, %v3133
  %3135 = vmatmul.bf16.gmra.mxu0 %v2879
  %v3136 = vpop.f32.mrf.mxu0
  %v3137 = vadd.f32 0.0, %v3136
  %v3138 = vpop.f32.mrf.mxu0
  %v3139 = vadd.f32 0.0, %v3138
  %3140 = vmatmul.bf16.gmra.mxu0 %v2882
  %v3141 = vpop.f32.mrf.mxu0
  %v3142 = vadd.f32 0.0, %v3141
  %v3143 = vpop.f32.mrf.mxu0
  %v3144 = vadd.f32 0.0, %v3143
  %3145 = vmatmul.bf16.gmra.mxu0 %v2885
  %v3146 = vpop.f32.mrf.mxu0
  %v3147 = vadd.f32 0.0, %v3146
  %v3148 = vpop.f32.mrf.mxu0
  %v3149 = vadd.f32 0.0, %v3148
  %3150 = vmatmul.bf16.gmra.mxu0 %v2888
  %v3151 = vpop.f32.mrf.mxu0
  %v3152 = vadd.f32 0.0, %v3151
  %v3153 = vpop.f32.mrf.mxu0
  %v3154 = vadd.f32 0.0, %v3153
  %3155 = vmatmul.bf16.gmra.mxu0 %v2891
  %v3156 = vpop.f32.mrf.mxu0
  %v3157 = vadd.f32 0.0, %v3156
  %v3158 = vpop.f32.mrf.mxu0
  %v3159 = vadd.f32 0.0, %v3158
  %3160 = vmatmul.bf16.gmra.mxu0 %v2894
  %v3161 = vpop.f32.mrf.mxu0
  %v3162 = vadd.f32 0.0, %v3161
  %v3163 = vpop.f32.mrf.mxu0
  %v3164 = vadd.f32 0.0, %v3163
  %3165 = vmatmul.bf16.gmra.mxu0 %v2897
  %v3166 = vpop.f32.mrf.mxu0
  %v3167 = vadd.f32 0.0, %v3166
  %v3168 = vpop.f32.mrf.mxu0
  %v3169 = vadd.f32 0.0, %v3168
  %3170 = vmatmul.bf16.gmra.mxu0 %v2900
  %v3171 = vpop.f32.mrf.mxu0
  %v3172 = vadd.f32 0.0, %v3171
  %v3173 = vpop.f32.mrf.mxu0
  %v3174 = vadd.f32 0.0, %v3173
  %3175 = vmatmul.bf16.gmra.mxu0 %v2903
  %v3176 = vpop.f32.mrf.mxu0
  %v3177 = vadd.f32 0.0, %v3176
  %v3178 = vpop.f32.mrf.mxu0
  %v3179 = vadd.f32 0.0, %v3178
  %3180 = vmatmul.bf16.gmra.mxu0 %v2906
  %v3181 = vpop.f32.mrf.mxu0
  %v3182 = vadd.f32 0.0, %v3181
  %v3183 = vpop.f32.mrf.mxu0
  %v3184 = vadd.f32 0.0, %v3183
  %3185 = vmatmul.bf16.gmra.mxu0 %v2909
  %v3186 = vpop.f32.mrf.mxu0
  %v3187 = vadd.f32 0.0, %v3186
  %v3188 = vpop.f32.mrf.mxu0
  %v3189 = vadd.f32 0.0, %v3188
  %3190 = vmatmul.bf16.gmra.mxu0 %v2912
  %v3191 = vpop.f32.mrf.mxu0
  %v3192 = vadd.f32 0.0, %v3191
  %v3193 = vpop.f32.mrf.mxu0
  %v3194 = vadd.f32 0.0, %v3193
  %3195 = vmatmul.bf16.gmra.mxu0 %v2915
  %v3196 = vpop.f32.mrf.mxu0
  %v3197 = vadd.f32 0.0, %v3196
  %v3198 = vpop.f32.mrf.mxu0
  %v3199 = vadd.f32 0.0, %v3198
  %3200 = vmatmul.bf16.gmra.mxu0 %v2918
  %v3201 = vpop.f32.mrf.mxu0
  %v3202 = vadd.f32 0.0, %v3201
  %v3203 = vpop.f32.mrf.mxu0
  %v3204 = vadd.f32 0.0, %v3203
  %3205 = vmatmul.bf16.gmra.mxu0 %v2921
  %v3206 = vpop.f32.mrf.mxu0
  %v3207 = vadd.f32 0.0, %v3206
  %v3208 = vpop.f32.mrf.mxu0
  %v3209 = vadd.f32 0.0, %v3208
  %3210 = vmatmul.bf16.gmra.mxu0 %v2924
  %v3211 = vpop.f32.mrf.mxu0
  %v3212 = vadd.f32 0.0, %v3211
  %v3213 = vpop.f32.mrf.mxu0
  %v3214 = vadd.f32 0.0, %v3213
  %3215 = vmatmul.bf16.gmra.mxu0 %v2927
  %v3216 = vpop.f32.mrf.mxu0
  %v3217 = vadd.f32 0.0, %v3216
  %v3218 = vpop.f32.mrf.mxu0
  %v3219 = vadd.f32 0.0, %v3218
  %3220 = vmatmul.bf16.gmra.mxu0 %v2930
  %v3221 = vpop.f32.mrf.mxu0
  %v3222 = vadd.f32 0.0, %v3221
  %v3223 = vpop.f32.mrf.mxu0
  %v3224 = vadd.f32 0.0, %v3223
  %3225 = vmatmul.bf16.gmra.mxu0 %v2933
  %v3226 = vpop.f32.mrf.mxu0
  %v3227 = vadd.f32 0.0, %v3226
  %v3228 = vpop.f32.mrf.mxu0
  %v3229 = vadd.f32 0.0, %v3228
  %3230 = vmatmul.bf16.gmra.mxu0 %v2936
  %v3231 = vpop.f32.mrf.mxu0
  %v3232 = vadd.f32 0.0, %v3231
  %v3233 = vpop.f32.mrf.mxu0
  %v3234 = vadd.f32 0.0, %v3233
  %3235 = vdwg.mxu0
  %v3236 = vadd.f32 %v2473, %v2948
  %v3237 = vadd.f32 %v2474, %v3097
  %v3238 = vadd.f32 %v2475, %v2950
  %v3239 = vadd.f32 %v2476, %v3099
  %v3240 = vadd.f32 %v2477, %v2953
  %v3241 = vadd.f32 %v2478, %v3102
  %v3242 = vadd.f32 %v2479, %v2955
  %v3243 = vadd.f32 %v2480, %v3104
  %v3244 = vadd.f32 %v2481, %v2958
  %v3245 = vadd.f32 %v2482, %v3107
  %v3246 = vadd.f32 %v2483, %v2960
  %v3247 = vadd.f32 %v2484, %v3109
  %v3248 = vadd.f32 %v2485, %v2963
  %v3249 = vadd.f32 %v2486, %v3112
  %v3250 = vadd.f32 %v2487, %v2965
  %v3251 = vadd.f32 %v2488, %v3114
  %v3252 = vadd.f32 %v2489, %v2968
  %v3253 = vadd.f32 %v2490, %v3117
  %v3254 = vadd.f32 %v2491, %v2970
  %v3255 = vadd.f32 %v2492, %v3119
  %v3256 = vadd.f32 %v2493, %v2973
  %v3257 = vadd.f32 %v2494, %v3122
  %v3258 = vadd.f32 %v2495, %v2975
  %v3259 = vadd.f32 %v2496, %v3124
  %v3260 = vadd.f32 %v2497, %v2978
  %v3261 = vadd.f32 %v2498, %v3127
  %v3262 = vadd.f32 %v2499, %v2980
  %v3263 = vadd.f32 %v2500, %v3129
  %v3264 = vadd.f32 %v2501, %v2983
  %v3265 = vadd.f32 %v2502, %v3132
  %v3266 = vadd.f32 %v2503, %v2985
  %v3267 = vadd.f32 %v2504, %v3134
  %v3268 = vadd.f32 %v2505, %v2988
  %v3269 = vadd.f32 %v2506, %v3137
  %v3270 = vadd.f32 %v2507, %v2990
  %v3271 = vadd.f32 %v2508, %v3139
  %v3272 = vadd.f32 %v2509, %v2993
  %v3273 = vadd.f32 %v2510, %v3142
  %v3274 = vadd.f32 %v2511, %v2995
  %v3275 = vadd.f32 %v2512, %v3144
  %v3276 = vadd.f32 %v2513, %v2998
  %v3277 = vadd.f32 %v2514, %v3147
  %v3278 = vadd.f32 %v2515, %v3000
  %v3279 = vadd.f32 %v2516, %v3149
  %v3280 = vadd.f32 %v2517, %v3003
  %v3281 = vadd.f32 %v2518, %v3152
  %v3282 = vadd.f32 %v2519, %v3005
  %v3283 = vadd.f32 %v2520, %v3154
  %v3284 = vadd.f32 %v2521, %v3008
  %v3285 = vadd.f32 %v2522, %v3157
  %v3286 = vadd.f32 %v2523, %v3010
  %v3287 = vadd.f32 %v2524, %v3159
  %v3288 = vadd.f32 %v2525, %v3013
  %v3289 = vadd.f32 %v2526, %v3162
  %v3290 = vadd.f32 %v2527, %v3015
  %v3291 = vadd.f32 %v2528, %v3164
  %v3292 = vadd.f32 %v2529, %v3018
  %v3293 = vadd.f32 %v2530, %v3167
  %v3294 = vadd.f32 %v2531, %v3020
  %v3295 = vadd.f32 %v2532, %v3169
  %v3296 = vadd.f32 %v2533, %v3023
  %v3297 = vadd.f32 %v2534, %v3172
  %v3298 = vadd.f32 %v2535, %v3025
  %v3299 = vadd.f32 %v2536, %v3174
  %v3300 = vadd.f32 %v2537, %v3028
  %v3301 = vadd.f32 %v2538, %v3177
  %v3302 = vadd.f32 %v2539, %v3030
  %v3303 = vadd.f32 %v2540, %v3179
  %v3304 = vadd.f32 %v2541, %v3033
  %v3305 = vadd.f32 %v2542, %v3182
  %v3306 = vadd.f32 %v2543, %v3035
  %v3307 = vadd.f32 %v2544, %v3184
  %v3308 = vadd.f32 %v2545, %v3038
  %v3309 = vadd.f32 %v2546, %v3187
  %v3310 = vadd.f32 %v2547, %v3040
  %v3311 = vadd.f32 %v2548, %v3189
  %v3312 = vadd.f32 %v2549, %v3043
  %v3313 = vadd.f32 %v2550, %v3192
  %v3314 = vadd.f32 %v2551, %v3045
  %v3315 = vadd.f32 %v2552, %v3194
  %v3316 = vadd.f32 %v2553, %v3048
  %v3317 = vadd.f32 %v2554, %v3197
  %v3318 = vadd.f32 %v2555, %v3050
  %v3319 = vadd.f32 %v2556, %v3199
  %v3320 = vadd.f32 %v2557, %v3053
  %v3321 = vadd.f32 %v2558, %v3202
  %v3322 = vadd.f32 %v2559, %v3055
  %v3323 = vadd.f32 %v2560, %v3204
  %v3324 = vadd.f32 %v2561, %v3058
  %v3325 = vadd.f32 %v2562, %v3207
  %v3326 = vadd.f32 %v2563, %v3060
  %v3327 = vadd.f32 %v2564, %v3209
  %v3328 = vadd.f32 %v2565, %v3063
  %v3329 = vadd.f32 %v2566, %v3212
  %v3330 = vadd.f32 %v2567, %v3065
  %v3331 = vadd.f32 %v2568, %v3214
  %v3332 = vadd.f32 %v2569, %v3068
  %v3333 = vadd.f32 %v2570, %v3217
  %v3334 = vadd.f32 %v2571, %v3070
  %v3335 = vadd.f32 %v2572, %v3219
  %v3336 = vadd.f32 %v2573, %v3073
  %v3337 = vadd.f32 %v2574, %v3222
  %v3338 = vadd.f32 %v2575, %v3075
  %v3339 = vadd.f32 %v2576, %v3224
  %v3340 = vadd.f32 %v2577, %v3078
  %v3341 = vadd.f32 %v2578, %v3227
  %v3342 = vadd.f32 %v2579, %v3080
  %v3343 = vadd.f32 %v2580, %v3229
  %v3344 = vadd.f32 %v2581, %v3083
  %v3345 = vadd.f32 %v2582, %v3232
  %v3346 = vadd.f32 %v2583, %v3085
  %v3347 = vadd.f32 %v2584, %v3234
  %v3348 = vmax.f32 %v3236, %v3240
  %v3349 = vmax.f32 %v3237, %v3241
  %v3350 = vmax.f32 %v3238, %v3242
  %v3351 = vmax.f32 %v3239, %v3243
  %v3352 = vmax.f32 %v3244, %v3248
  %v3353 = vmax.f32 %v3245, %v3249
  %v3354 = vmax.f32 %v3246, %v3250
  %v3355 = vmax.f32 %v3247, %v3251
  %v3356 = vmax.f32 %v3252, %v3256
  %v3357 = vmax.f32 %v3253, %v3257
  %v3358 = vmax.f32 %v3254, %v3258
  %v3359 = vmax.f32 %v3255, %v3259
  %v3360 = vmax.f32 %v3260, %v3264
  %v3361 = vmax.f32 %v3261, %v3265
  %v3362 = vmax.f32 %v3262, %v3266
  %v3363 = vmax.f32 %v3263, %v3267
  %v3364 = vmax.f32 %v3268, %v3272
  %v3365 = vmax.f32 %v3269, %v3273
  %v3366 = vmax.f32 %v3270, %v3274
  %v3367 = vmax.f32 %v3271, %v3275
  %v3368 = vmax.f32 %v3276, %v3280
  %v3369 = vmax.f32 %v3277, %v3281
  %v3370 = vmax.f32 %v3278, %v3282
  %v3371 = vmax.f32 %v3279, %v3283
  %v3372 = vmax.f32 %v3284, %v3288
  %v3373 = vmax.f32 %v3285, %v3289
  %v3374 = vmax.f32 %v3286, %v3290
  %v3375 = vmax.f32 %v3287, %v3291
  %v3376 = vmax.f32 %v3292, %v3296
  %v3377 = vmax.f32 %v3293, %v3297
  %v3378 = vmax.f32 %v3294, %v3298
  %v3379 = vmax.f32 %v3295, %v3299
  %v3380 = vmax.f32 %v3300, %v3304
  %v3381 = vmax.f32 %v3301, %v3305
  %v3382 = vmax.f32 %v3302, %v3306
  %v3383 = vmax.f32 %v3303, %v3307
  %v3384 = vmax.f32 %v3308, %v3312
  %v3385 = vmax.f32 %v3309, %v3313
  %v3386 = vmax.f32 %v3310, %v3314
  %v3387 = vmax.f32 %v3311, %v3315
  %v3388 = vmax.f32 %v3316, %v3320
  %v3389 = vmax.f32 %v3317, %v3321
  %v3390 = vmax.f32 %v3318, %v3322
  %v3391 = vmax.f32 %v3319, %v3323
  %v3392 = vmax.f32 %v3324, %v3328
  %v3393 = vmax.f32 %v3325, %v3329
  %v3394 = vmax.f32 %v3326, %v3330
  %v3395 = vmax.f32 %v3327, %v3331
  %v3396 = vmax.f32 %v3332, %v3336
  %v3397 = vmax.f32 %v3333, %v3337
  %v3398 = vmax.f32 %v3334, %v3338
  %v3399 = vmax.f32 %v3335, %v3339
  %v3400 = vmax.f32 %v3340, %v3344
  %v3401 = vmax.f32 %v3341, %v3345
  %v3402 = vmax.f32 %v3342, %v3346
  %v3403 = vmax.f32 %v3343, %v3347
  %3460 = vrot.lane.b32.xlu0 %v3348, 122
  %v3461 = vpop.permute.xlu0 %3460
  %3462 = vrot.lane.b32.xlu0 %v3349, 122
  %v3463 = vpop.permute.xlu0 %3462
  %3464 = vrot.lane.b32.xlu0 %v3350, 122
  %v3465 = vpop.permute.xlu0 %3464
  %3466 = vrot.lane.b32.xlu0 %v3351, 122
  %v3467 = vpop.permute.xlu0 %3466
  %3468 = vrot.lane.b32.xlu0 %v3352, 122
  %v3469 = vpop.permute.xlu0 %3468
  %3470 = vrot.lane.b32.xlu0 %v3353, 122
  %v3471 = vpop.permute.xlu0 %3470
  %3472 = vrot.lane.b32.xlu0 %v3354, 122
  %v3473 = vpop.permute.xlu0 %3472
  %3474 = vrot.lane.b32.xlu0 %v3355, 122
  %v3475 = vpop.permute.xlu0 %3474
  %3476 = vrot.lane.b32.xlu0 %v3356, 122
  %v3477 = vpop.permute.xlu0 %3476
  %3478 = vrot.lane.b32.xlu0 %v3357, 122
  %v3479 = vpop.permute.xlu0 %3478
  %3480 = vrot.lane.b32.xlu0 %v3358, 122
  %v3481 = vpop.permute.xlu0 %3480
  %3482 = vrot.lane.b32.xlu0 %v3359, 122
  %v3483 = vpop.permute.xlu0 %3482
  %3484 = vrot.lane.b32.xlu0 %v3360, 122
  %v3485 = vpop.permute.xlu0 %3484
  %3486 = vrot.lane.b32.xlu0 %v3361, 122
  %v3487 = vpop.permute.xlu0 %3486
  %3488 = vrot.lane.b32.xlu0 %v3362, 122
  %v3489 = vpop.permute.xlu0 %3488
  %3490 = vrot.lane.b32.xlu0 %v3363, 122
  %v3491 = vpop.permute.xlu0 %3490
  %3492 = vrot.lane.b32.xlu0 %v3364, 122
  %v3493 = vpop.permute.xlu0 %3492
  %3494 = vrot.lane.b32.xlu0 %v3365, 122
  %v3495 = vpop.permute.xlu0 %3494
  %3496 = vrot.lane.b32.xlu0 %v3366, 122
  %v3497 = vpop.permute.xlu0 %3496
  %3498 = vrot.lane.b32.xlu0 %v3367, 122
  %v3499 = vpop.permute.xlu0 %3498
  %3500 = vrot.lane.b32.xlu0 %v3368, 122
  %v3501 = vpop.permute.xlu0 %3500
  %3502 = vrot.lane.b32.xlu0 %v3369, 122
  %v3503 = vpop.permute.xlu0 %3502
  %3504 = vrot.lane.b32.xlu0 %v3370, 122
  %v3505 = vpop.permute.xlu0 %3504
  %3506 = vrot.lane.b32.xlu0 %v3371, 122
  %v3507 = vpop.permute.xlu0 %3506
  %3508 = vrot.lane.b32.xlu0 %v3372, 122
  %v3509 = vpop.permute.xlu0 %3508
  %3510 = vrot.lane.b32.xlu0 %v3373, 122
  %v3511 = vpop.permute.xlu0 %3510
  %3512 = vrot.lane.b32.xlu0 %v3374, 122
  %v3513 = vpop.permute.xlu0 %3512
  %3514 = vrot.lane.b32.xlu0 %v3375, 122
  %v3515 = vpop.permute.xlu0 %3514
  %3516 = vrot.lane.b32.xlu0 %v3376, 122
  %v3517 = vpop.permute.xlu0 %3516
  %3518 = vrot.lane.b32.xlu0 %v3377, 122
  %v3519 = vpop.permute.xlu0 %3518
  %3520 = vrot.lane.b32.xlu0 %v3378, 122
  %v3521 = vpop.permute.xlu0 %3520
  %3522 = vrot.lane.b32.xlu0 %v3379, 122
  %v3523 = vpop.permute.xlu0 %3522
  %3524 = vrot.lane.b32.xlu0 %v3380, 122
  %v3525 = vpop.permute.xlu0 %3524
  %3526 = vrot.lane.b32.xlu0 %v3381, 122
  %v3527 = vpop.permute.xlu0 %3526
  %3528 = vrot.lane.b32.xlu0 %v3382, 122
  %v3529 = vpop.permute.xlu0 %3528
  %3530 = vrot.lane.b32.xlu0 %v3383, 122
  %v3531 = vpop.permute.xlu0 %3530
  %3532 = vrot.lane.b32.xlu0 %v3384, 122
  %v3533 = vpop.permute.xlu0 %3532
  %3534 = vrot.lane.b32.xlu0 %v3385, 122
  %v3535 = vpop.permute.xlu0 %3534
  %3536 = vrot.lane.b32.xlu0 %v3386, 122
  %v3537 = vpop.permute.xlu0 %3536
  %3538 = vrot.lane.b32.xlu0 %v3387, 122
  %v3539 = vpop.permute.xlu0 %3538
  %3540 = vrot.lane.b32.xlu0 %v3388, 122
  %v3541 = vpop.permute.xlu0 %3540
  %3542 = vrot.lane.b32.xlu0 %v3389, 122
  %v3543 = vpop.permute.xlu0 %3542
  %3544 = vrot.lane.b32.xlu0 %v3390, 122
  %v3545 = vpop.permute.xlu0 %3544
  %3546 = vrot.lane.b32.xlu0 %v3391, 122
  %v3547 = vpop.permute.xlu0 %3546
  %3548 = vrot.lane.b32.xlu0 %v3392, 122
  %v3549 = vpop.permute.xlu0 %3548
  %3550 = vrot.lane.b32.xlu0 %v3393, 122
  %v3551 = vpop.permute.xlu0 %3550
  %3552 = vrot.lane.b32.xlu0 %v3394, 122
  %v3553 = vpop.permute.xlu0 %3552
  %3554 = vrot.lane.b32.xlu0 %v3395, 122
  %v3555 = vpop.permute.xlu0 %3554
  %3556 = vrot.lane.b32.xlu0 %v3396, 122
  %v3557 = vpop.permute.xlu0 %3556
  %3558 = vrot.lane.b32.xlu0 %v3397, 122
  %v3559 = vpop.permute.xlu0 %3558
  %3560 = vrot.lane.b32.xlu0 %v3398, 122
  %v3561 = vpop.permute.xlu0 %3560
  %3562 = vrot.lane.b32.xlu0 %v3399, 122
  %v3563 = vpop.permute.xlu0 %3562
  %3564 = vrot.lane.b32.xlu0 %v3400, 122
  %v3565 = vpop.permute.xlu0 %3564
  %3566 = vrot.lane.b32.xlu0 %v3401, 122
  %v3567 = vpop.permute.xlu0 %3566
  %3568 = vrot.lane.b32.xlu0 %v3402, 122
  %v3569 = vpop.permute.xlu0 %3568
  %3570 = vrot.lane.b32.xlu0 %v3403, 122
  %v3571 = vpop.permute.xlu0 %3570
  %vm3572 = vcmask 998400
  %v3573 = vsel %vm3572, %v3461, %v3463
  %v3574 = vsel %vm3572, %v3465, %v3467
  %v3575 = vsel %vm3572, %v3469, %v3471
  %v3576 = vsel %vm3572, %v3473, %v3475
  %v3577 = vsel %vm3572, %v3477, %v3479
  %v3578 = vsel %vm3572, %v3481, %v3483
  %v3579 = vsel %vm3572, %v3485, %v3487
  %v3580 = vsel %vm3572, %v3489, %v3491
  %v3581 = vsel %vm3572, %v3493, %v3495
  %v3582 = vsel %vm3572, %v3497, %v3499
  %v3583 = vsel %vm3572, %v3501, %v3503
  %v3584 = vsel %vm3572, %v3505, %v3507
  %v3585 = vsel %vm3572, %v3509, %v3511
  %v3586 = vsel %vm3572, %v3513, %v3515
  %v3587 = vsel %vm3572, %v3517, %v3519
  %v3588 = vsel %vm3572, %v3521, %v3523
  %v3589 = vsel %vm3572, %v3525, %v3527
  %v3590 = vsel %vm3572, %v3529, %v3531
  %v3591 = vsel %vm3572, %v3533, %v3535
  %v3592 = vsel %vm3572, %v3537, %v3539
  %v3593 = vsel %vm3572, %v3541, %v3543
  %v3594 = vsel %vm3572, %v3545, %v3547
  %v3595 = vsel %vm3572, %v3549, %v3551
  %v3596 = vsel %vm3572, %v3553, %v3555
  %v3597 = vsel %vm3572, %v3557, %v3559
  %v3598 = vsel %vm3572, %v3561, %v3563
  %v3599 = vsel %vm3572, %v3565, %v3567
  %v3600 = vsel %vm3572, %v3569, %v3571
  %v3657 = vmax.f32 %v3348, %v3573
  %v3658 = vmax.f32 %v3349, %v3463
  %v3659 = vmax.f32 %v3350, %v3574
  %v3660 = vmax.f32 %v3351, %v3467
  %v3661 = vmax.f32 %v3352, %v3575
  %v3662 = vmax.f32 %v3353, %v3471
  %v3663 = vmax.f32 %v3354, %v3576
  %v3664 = vmax.f32 %v3355, %v3475
  %v3665 = vmax.f32 %v3356, %v3577
  %v3666 = vmax.f32 %v3357, %v3479
  %v3667 = vmax.f32 %v3358, %v3578
  %v3668 = vmax.f32 %v3359, %v3483
  %v3669 = vmax.f32 %v3360, %v3579
  %v3670 = vmax.f32 %v3361, %v3487
  %v3671 = vmax.f32 %v3362, %v3580
  %v3672 = vmax.f32 %v3363, %v3491
  %v3673 = vmax.f32 %v3364, %v3581
  %v3674 = vmax.f32 %v3365, %v3495
  %v3675 = vmax.f32 %v3366, %v3582
  %v3676 = vmax.f32 %v3367, %v3499
  %v3677 = vmax.f32 %v3368, %v3583
  %v3678 = vmax.f32 %v3369, %v3503
  %v3679 = vmax.f32 %v3370, %v3584
  %v3680 = vmax.f32 %v3371, %v3507
  %v3681 = vmax.f32 %v3372, %v3585
  %v3682 = vmax.f32 %v3373, %v3511
  %v3683 = vmax.f32 %v3374, %v3586
  %v3684 = vmax.f32 %v3375, %v3515
  %v3685 = vmax.f32 %v3376, %v3587
  %v3686 = vmax.f32 %v3377, %v3519
  %v3687 = vmax.f32 %v3378, %v3588
  %v3688 = vmax.f32 %v3379, %v3523
  %v3689 = vmax.f32 %v3380, %v3589
  %v3690 = vmax.f32 %v3381, %v3527
  %v3691 = vmax.f32 %v3382, %v3590
  %v3692 = vmax.f32 %v3383, %v3531
  %v3693 = vmax.f32 %v3384, %v3591
  %v3694 = vmax.f32 %v3385, %v3535
  %v3695 = vmax.f32 %v3386, %v3592
  %v3696 = vmax.f32 %v3387, %v3539
  %v3697 = vmax.f32 %v3388, %v3593
  %v3698 = vmax.f32 %v3389, %v3543
  %v3699 = vmax.f32 %v3390, %v3594
  %v3700 = vmax.f32 %v3391, %v3547
  %v3701 = vmax.f32 %v3392, %v3595
  %v3702 = vmax.f32 %v3393, %v3551
  %v3703 = vmax.f32 %v3394, %v3596
  %v3704 = vmax.f32 %v3395, %v3555
  %v3705 = vmax.f32 %v3396, %v3597
  %v3706 = vmax.f32 %v3397, %v3559
  %v3707 = vmax.f32 %v3398, %v3598
  %v3708 = vmax.f32 %v3399, %v3563
  %v3709 = vmax.f32 %v3400, %v3599
  %v3710 = vmax.f32 %v3401, %v3567
  %v3711 = vmax.f32 %v3402, %v3600
  %v3712 = vmax.f32 %v3403, %v3571
  %v3713 = vld [vmem:[%s2] sm:$0x3]
  %v3715 = vperm.slane %v3713, 0
  %v3716 = vperm.slane %v3713, 1
  %v3719 = vadd.f32 %v3657, %v3715
  %v3720 = vadd.f32 %v3658, %v3716
  %v3721 = vadd.f32 %v3659, %v3715
  %v3722 = vadd.f32 %v3660, %v3716
  %v3723 = vadd.f32 %v3661, %v3715
  %v3724 = vadd.f32 %v3662, %v3716
  %v3725 = vadd.f32 %v3663, %v3715
  %v3726 = vadd.f32 %v3664, %v3716
  %v3727 = vadd.f32 %v3665, %v3715
  %v3728 = vadd.f32 %v3666, %v3716
  %v3729 = vadd.f32 %v3667, %v3715
  %v3730 = vadd.f32 %v3668, %v3716
  %v3731 = vadd.f32 %v3669, %v3715
  %v3732 = vadd.f32 %v3670, %v3716
  %v3733 = vadd.f32 %v3671, %v3715
  %v3734 = vadd.f32 %v3672, %v3716
  %v3735 = vadd.f32 %v3673, %v3715
  %v3736 = vadd.f32 %v3674, %v3716
  %v3737 = vadd.f32 %v3675, %v3715
  %v3738 = vadd.f32 %v3676, %v3716
  %v3739 = vadd.f32 %v3677, %v3715
  %v3740 = vadd.f32 %v3678, %v3716
  %v3741 = vadd.f32 %v3679, %v3715
  %v3742 = vadd.f32 %v3680, %v3716
  %v3743 = vadd.f32 %v3681, %v3715
  %v3744 = vadd.f32 %v3682, %v3716
  %v3745 = vadd.f32 %v3683, %v3715
  %v3746 = vadd.f32 %v3684, %v3716
  %v3747 = vadd.f32 %v3685, %v3715
  %v3748 = vadd.f32 %v3686, %v3716
  %v3749 = vadd.f32 %v3687, %v3715
  %v3750 = vadd.f32 %v3688, %v3716
  %v3751 = vadd.f32 %v3689, %v3715
  %v3752 = vadd.f32 %v3690, %v3716
  %v3753 = vadd.f32 %v3691, %v3715
  %v3754 = vadd.f32 %v3692, %v3716
  %v3755 = vadd.f32 %v3693, %v3715
  %v3756 = vadd.f32 %v3694, %v3716
  %v3757 = vadd.f32 %v3695, %v3715
  %v3758 = vadd.f32 %v3696, %v3716
  %v3759 = vadd.f32 %v3697, %v3715
  %v3760 = vadd.f32 %v3698, %v3716
  %v3761 = vadd.f32 %v3699, %v3715
  %v3762 = vadd.f32 %v3700, %v3716
  %v3763 = vadd.f32 %v3701, %v3715
  %v3764 = vadd.f32 %v3702, %v3716
  %v3765 = vadd.f32 %v3703, %v3715
  %v3766 = vadd.f32 %v3704, %v3716
  %v3767 = vadd.f32 %v3705, %v3715
  %v3768 = vadd.f32 %v3706, %v3716
  %v3769 = vadd.f32 %v3707, %v3715
  %v3770 = vadd.f32 %v3708, %v3716
  %v3771 = vadd.f32 %v3709, %v3715
  %v3772 = vadd.f32 %v3710, %v3716
  %v3773 = vadd.f32 %v3711, %v3715
  %v3774 = vadd.f32 %v3712, %v3716
  %v3775 = vmax.f32 %v3719, 0.0
  %v3776 = vmax.f32 %v3720, 0.0
  %v3777 = vmax.f32 %v3721, 0.0
  %v3778 = vmax.f32 %v3722, 0.0
  %v3779 = vmax.f32 %v3723, 0.0
  %v3780 = vmax.f32 %v3724, 0.0
  %v3781 = vmax.f32 %v3725, 0.0
  %v3782 = vmax.f32 %v3726, 0.0
  %v3783 = vmax.f32 %v3727, 0.0
  %v3784 = vmax.f32 %v3728, 0.0
  %v3785 = vmax.f32 %v3729, 0.0
  %v3786 = vmax.f32 %v3730, 0.0
  %v3787 = vmax.f32 %v3731, 0.0
  %v3788 = vmax.f32 %v3732, 0.0
  %v3789 = vmax.f32 %v3733, 0.0
  %v3790 = vmax.f32 %v3734, 0.0
  %v3791 = vmax.f32 %v3735, 0.0
  %v3792 = vmax.f32 %v3736, 0.0
  %v3793 = vmax.f32 %v3737, 0.0
  %v3794 = vmax.f32 %v3738, 0.0
  %v3795 = vmax.f32 %v3739, 0.0
  %v3796 = vmax.f32 %v3740, 0.0
  %v3797 = vmax.f32 %v3741, 0.0
  %v3798 = vmax.f32 %v3742, 0.0
  %v3799 = vmax.f32 %v3743, 0.0
  %v3800 = vmax.f32 %v3744, 0.0
  %v3801 = vmax.f32 %v3745, 0.0
  %v3802 = vmax.f32 %v3746, 0.0
  %v3803 = vmax.f32 %v3747, 0.0
  %v3804 = vmax.f32 %v3748, 0.0
  %v3805 = vmax.f32 %v3749, 0.0
  %v3806 = vmax.f32 %v3750, 0.0
  %v3807 = vmax.f32 %v3751, 0.0
  %v3808 = vmax.f32 %v3752, 0.0
  %v3809 = vmax.f32 %v3753, 0.0
  %v3810 = vmax.f32 %v3754, 0.0
  %v3811 = vmax.f32 %v3755, 0.0
  %v3812 = vmax.f32 %v3756, 0.0
  %v3813 = vmax.f32 %v3757, 0.0
  %v3814 = vmax.f32 %v3758, 0.0
  %v3815 = vmax.f32 %v3759, 0.0
  %v3816 = vmax.f32 %v3760, 0.0
  %v3817 = vmax.f32 %v3761, 0.0
  %v3818 = vmax.f32 %v3762, 0.0
  %v3819 = vmax.f32 %v3763, 0.0
  %v3820 = vmax.f32 %v3764, 0.0
  %v3821 = vmax.f32 %v3765, 0.0
  %v3822 = vmax.f32 %v3766, 0.0
  %v3823 = vmax.f32 %v3767, 0.0
  %v3824 = vmax.f32 %v3768, 0.0
  %v3825 = vmax.f32 %v3769, 0.0
  %v3826 = vmax.f32 %v3770, 0.0
  %v3827 = vmax.f32 %v3771, 0.0
  %v3828 = vmax.f32 %v3772, 0.0
  %v3829 = vmax.f32 %v3773, 0.0
  %v3830 = vmax.f32 %v3774, 0.0
  %v3831 = vpack.c.bf16 %v3776, %v3775
  %v3832 = vpack.c.bf16 %v3778, %v3777
  %v3833 = vpack.c.bf16 %v3780, %v3779
  %v3834 = vpack.c.bf16 %v3782, %v3781
  %v3835 = vpack.c.bf16 %v3784, %v3783
  %v3836 = vpack.c.bf16 %v3786, %v3785
  %v3837 = vpack.c.bf16 %v3788, %v3787
  %v3838 = vpack.c.bf16 %v3790, %v3789
  %v3839 = vpack.c.bf16 %v3792, %v3791
  %v3840 = vpack.c.bf16 %v3794, %v3793
  %v3841 = vpack.c.bf16 %v3796, %v3795
  %v3842 = vpack.c.bf16 %v3798, %v3797
  %v3843 = vpack.c.bf16 %v3800, %v3799
  %v3844 = vpack.c.bf16 %v3802, %v3801
  %v3845 = vpack.c.bf16 %v3804, %v3803
  %v3846 = vpack.c.bf16 %v3806, %v3805
  %v3847 = vpack.c.bf16 %v3808, %v3807
  %v3848 = vpack.c.bf16 %v3810, %v3809
  %v3849 = vpack.c.bf16 %v3812, %v3811
  %v3850 = vpack.c.bf16 %v3814, %v3813
  %v3851 = vpack.c.bf16 %v3816, %v3815
  %v3852 = vpack.c.bf16 %v3818, %v3817
  %v3853 = vpack.c.bf16 %v3820, %v3819
  %v3854 = vpack.c.bf16 %v3822, %v3821
  %v3855 = vpack.c.bf16 %v3824, %v3823
  %v3856 = vpack.c.bf16 %v3826, %v3825
  %v3857 = vpack.c.bf16 %v3828, %v3827
  %v3858 = vpack.c.bf16 %v3830, %v3829
  %vm3859 = vcmask 1043456
  %vm3860 = vcmask 277508
  %vm3861 = vmor %vm3860, %vm3859
  %3862 = vst.msk [vmem:[#allocation2] sm:$0xff] %vm3861, %v3831
  %3863 = vst.msk [vmem:[#allocation2 + $0x8] sm:$0xff] %vm3861, %v3832
  %3864 = vst.msk [vmem:[#allocation2 + $0x10] sm:$0xff] %vm3861, %v3833
  %3865 = vst.msk [vmem:[#allocation2 + $0x18] sm:$0xff] %vm3861, %v3834
  %3866 = vst.msk [vmem:[#allocation2 + $0x20] sm:$0xff] %vm3861, %v3835
  %3867 = vst.msk [vmem:[#allocation2 + $0x28] sm:$0xff] %vm3861, %v3836
  %3868 = vst.msk [vmem:[#allocation2 + $0x30] sm:$0xff] %vm3861, %v3837
  %3869 = vst.msk [vmem:[#allocation2 + $0x38] sm:$0xff] %vm3861, %v3838
  %3870 = vst.msk [vmem:[#allocation2 + $0x40] sm:$0xff] %vm3861, %v3839
  %3871 = vst.msk [vmem:[#allocation2 + $0x48] sm:$0xff] %vm3861, %v3840
  %3872 = vst.msk [vmem:[#allocation2 + $0x50] sm:$0xff] %vm3861, %v3841
  %3873 = vst.msk [vmem:[#allocation2 + $0x58] sm:$0xff] %vm3861, %v3842
  %3874 = vst.msk [vmem:[#allocation2 + $0x60] sm:$0xff] %vm3861, %v3843
  %3875 = vst.msk [vmem:[#allocation2 + $0x68] sm:$0xff] %vm3861, %v3844
  %3876 = vst.msk [vmem:[#allocation2 + $0x70] sm:$0xff] %vm3861, %v3845
  %3877 = vst.msk [vmem:[#allocation2 + $0x78] sm:$0xff] %vm3861, %v3846
  %3878 = vst.msk [vmem:[#allocation2 + $0x80] sm:$0xff] %vm3861, %v3847
  %3879 = vst.msk [vmem:[#allocation2 + $0x88] sm:$0xff] %vm3861, %v3848
  %3880 = vst.msk [vmem:[#allocation2 + $0x90] sm:$0xff] %vm3861, %v3849
  %3881 = vst.msk [vmem:[#allocation2 + $0x98] sm:$0xff] %vm3861, %v3850
  %3882 = vst.msk [vmem:[#allocation2 + $0xa0] sm:$0xff] %vm3861, %v3851
  %3883 = vst.msk [vmem:[#allocation2 + $0xa8] sm:$0xff] %vm3861, %v3852
  %3884 = vst.msk [vmem:[#allocation2 + $0xb0] sm:$0xff] %vm3861, %v3853
  %3885 = vst.msk [vmem:[#allocation2 + $0xb8] sm:$0xff] %vm3861, %v3854
  %3886 = vst.msk [vmem:[#allocation2 + $0xc0] sm:$0xff] %vm3861, %v3855
  %3887 = vst.msk [vmem:[#allocation2 + $0xc8] sm:$0xff] %vm3861, %v3856
  %3888 = vst.msk [vmem:[#allocation2 + $0xd0] sm:$0xff] %vm3861, %v3857
  %3889 = vst.msk [vmem:[#allocation2 + $0xd8] sm:$0xff] %vm3861, %v3858
  %v3890 = vld [vmem:[#allocation2] sm:$0xff]
  %v3891 = vld [vmem:[#allocation2 + $0x8] sm:$0xff]
  %v3892 = vld [vmem:[#allocation2 + $0x10] sm:$0xff]
  %v3893 = vld [vmem:[#allocation2 + $0x18] sm:$0xff]
  %v3894 = vld [vmem:[#allocation2 + $0x20] sm:$0xff]
  %v3895 = vld [vmem:[#allocation2 + $0x28] sm:$0xff]
  %v3896 = vld [vmem:[#allocation2 + $0x30] sm:$0xff]
  %v3897 = vld [vmem:[#allocation2 + $0x38] sm:$0xff]
  %v3898 = vld [vmem:[#allocation2 + $0x40] sm:$0xff]
  %v3899 = vld [vmem:[#allocation2 + $0x48] sm:$0xff]
  %v3900 = vld [vmem:[#allocation2 + $0x50] sm:$0xff]
  %v3901 = vld [vmem:[#allocation2 + $0x58] sm:$0xff]
  %v3902 = vld [vmem:[#allocation2 + $0x60] sm:$0xff]
  %v3903 = vld [vmem:[#allocation2 + $0x68] sm:$0xff]
  %v3904 = vld [vmem:[#allocation2 + $0x70] sm:$0xff]
  %v3905 = vld [vmem:[#allocation2 + $0x78] sm:$0xff]
  %v3906 = vld [vmem:[#allocation2 + $0x80] sm:$0xff]
  %v3907 = vld [vmem:[#allocation2 + $0x88] sm:$0xff]
  %v3908 = vld [vmem:[#allocation2 + $0x90] sm:$0xff]
  %v3909 = vld [vmem:[#allocation2 + $0x98] sm:$0xff]
  %v3910 = vld [vmem:[%s3] sm:$0xff]
  %v3911 = vld [vmem:[%s3 + $0x8] sm:$0xff]
  %v3912 = vld [vmem:[%s3 + $0x10] sm:$0xff]
  %v3913 = vld [vmem:[%s3 + $0x18] sm:$0xff]
  %v3914 = vld [vmem:[%s3 + $0x20] sm:$0xff]
  %v3915 = vld [vmem:[%s3 + $0x28] sm:$0xff]
  %v3916 = vld [vmem:[%s3 + $0x30] sm:$0xff]
  %v3917 = vld [vmem:[%s3 + $0x38] sm:$0xff]
  %v3918 = vld [vmem:[%s3 + $0x40] sm:$0xff]
  %v3919 = vld [vmem:[%s3 + $0x48] sm:$0xff]
  %v3920 = vld [vmem:[%s3 + $0x50] sm:$0xff]
  %v3921 = vld [vmem:[%s3 + $0x58] sm:$0xff]
  %v3922 = vld [vmem:[%s3 + $0x60] sm:$0xff]
  %v3923 = vld [vmem:[%s3 + $0x68] sm:$0xff]
  %v3924 = vld [vmem:[%s3 + $0x70] sm:$0xff]
  %v3925 = vld [vmem:[%s3 + $0x78] sm:$0xff]
  %v3926 = vld [vmem:[%s3 + $0x80] sm:$0xff]
  %v3927 = vld [vmem:[%s3 + $0x88] sm:$0xff]
  %v3928 = vld [vmem:[%s3 + $0x90] sm:$0xff]
  %v3929 = vld [vmem:[%s3 + $0x98] sm:$0xff]
  %v3930 = vld [vmem:[%s3 + $0xa0] sm:$0x11]
  %v3931 = vld [vmem:[#allocation2 + $0xa0] sm:$0xff]
  %v3932 = vld [vmem:[#allocation2 + $0xa8] sm:$0xff]
  %s3933 = scalar_lea.vmem %s3, 168
  %v3934 = vld [vmem:[%s3933] sm:$0xff]
  %v3935 = vld [vmem:[%s3933 + $0x8] sm:$0xff]
  %v3936 = vld [vmem:[%s3933 + $0x10] sm:$0xff]
  %v3937 = vld [vmem:[%s3933 + $0x18] sm:$0xff]
  %v3938 = vld [vmem:[%s3933 + $0x20] sm:$0xff]
  %v3939 = vld [vmem:[%s3933 + $0x28] sm:$0xff]
  %v3940 = vld [vmem:[%s3933 + $0x30] sm:$0xff]
  %v3941 = vld [vmem:[%s3933 + $0x38] sm:$0xff]
  %v3942 = vld [vmem:[%s3933 + $0x40] sm:$0xff]
  %v3943 = vld [vmem:[%s3933 + $0x48] sm:$0xff]
  %v3944 = vld [vmem:[%s3933 + $0x50] sm:$0xff]
  %v3945 = vld [vmem:[%s3933 + $0x58] sm:$0xff]
  %v3946 = vld [vmem:[%s3933 + $0x60] sm:$0xff]
  %v3947 = vld [vmem:[%s3933 + $0x68] sm:$0xff]
  %v3948 = vld [vmem:[%s3933 + $0x70] sm:$0xff]
  %v3949 = vld [vmem:[%s3933 + $0x78] sm:$0xff]
  %v3950 = vld [vmem:[%s3933 + $0x80] sm:$0xff]
  %v3951 = vld [vmem:[%s3933 + $0x88] sm:$0xff]
  %v3952 = vld [vmem:[%s3933 + $0x90] sm:$0xff]
  %v3953 = vld [vmem:[%s3933 + $0x98] sm:$0xff]
  %v3954 = vld [vmem:[%s3933 + $0xa0] sm:$0x11]
  %v3975 = vunpack.c.l.b16 %v3892
  %v3976 = vunpack.c.h.b16 %v3892
  %v3977 = vunpack.c.l.b16 %v3893
  %v3978 = vunpack.c.h.b16 %v3893
  %v3979 = vunpack.c.l.b16 %v3894
  %v3980 = vunpack.c.h.b16 %v3894
  %v3981 = vunpack.c.l.b16 %v3895
  %v3982 = vunpack.c.h.b16 %v3895
  %v3983 = vunpack.c.l.b16 %v3896
  %v3984 = vunpack.c.h.b16 %v3896
  %v3985 = vunpack.c.l.b16 %v3897
  %v3986 = vunpack.c.h.b16 %v3897
  %v3987 = vunpack.c.l.b16 %v3898
  %v3988 = vunpack.c.h.b16 %v3898
  %v3989 = vunpack.c.l.b16 %v3899
  %v3990 = vunpack.c.h.b16 %v3899
  %v3991 = vunpack.c.l.b16 %v3900
  %v3992 = vunpack.c.h.b16 %v3900
  %v3993 = vunpack.c.l.b16 %v3901
  %v3994 = vunpack.c.h.b16 %v3901
  %v3995 = vunpack.c.l.b16 %v3902
  %v3996 = vunpack.c.h.b16 %v3902
  %v3997 = vunpack.c.l.b16 %v3903
  %v3998 = vunpack.c.h.b16 %v3903
  %v3999 = vunpack.c.l.b16 %v3904
  %v4000 = vunpack.c.h.b16 %v3904
  %v4001 = vunpack.c.l.b16 %v3905
  %v4002 = vunpack.c.h.b16 %v3905
  %v4003 = vunpack.c.l.b16 %v3906
  %v4004 = vunpack.c.h.b16 %v3906
  %v4005 = vunpack.c.l.b16 %v3907
  %v4006 = vunpack.c.h.b16 %v3907
  %v4007 = vunpack.c.l.b16 %v3908
  %v4008 = vunpack.c.h.b16 %v3908
  %v4009 = vunpack.c.l.b16 %v3909
  %v4010 = vunpack.c.h.b16 %v3909
  %v4011 = vunpack.c.l.b16 %v3931
  %v4012 = vunpack.c.h.b16 %v3931
  %v4013 = vunpack.c.l.b16 %v3932
  %v4014 = vunpack.c.h.b16 %v3932
  %v4015 = vpack.c.b16 %v3977, %v3975
  %v4016 = vpack.c.b16 %v3978, %v3976
  %v4017 = vpack.c.b16 %v3981, %v3979
  %v4018 = vpack.c.b16 %v3982, %v3980
  %v4019 = vpack.c.b16 %v3985, %v3983
  %v4020 = vpack.c.b16 %v3986, %v3984
  %v4021 = vpack.c.b16 %v3989, %v3987
  %v4022 = vpack.c.b16 %v3990, %v3988
  %v4023 = vpack.c.b16 %v3993, %v3991
  %v4024 = vpack.c.b16 %v3994, %v3992
  %v4025 = vpack.c.b16 %v3997, %v3995
  %v4026 = vpack.c.b16 %v3998, %v3996
  %v4027 = vpack.c.b16 %v4001, %v3999
  %v4028 = vpack.c.b16 %v4002, %v4000
  %v4029 = vpack.c.b16 %v4005, %v4003
  %v4030 = vpack.c.b16 %v4006, %v4004
  %v4031 = vpack.c.b16 %v4009, %v4007
  %v4032 = vpack.c.b16 %v4010, %v4008
  %v4033 = vpack.c.b16 %v4013, %v4011
  %v4034 = vpack.c.b16 %v4014, %v4012
  %v4066 = vunpack.c.l.b16 %v3934
  %v4067 = vunpack.c.h.b16 %v3934
  %v4068 = vunpack.c.l.b16 %v3935
  %v4069 = vunpack.c.h.b16 %v3935
  %v4070 = vunpack.c.l.b16 %v3936
  %v4071 = vunpack.c.h.b16 %v3936
  %v4072 = vunpack.c.l.b16 %v3937
  %v4073 = vunpack.c.h.b16 %v3937
  %v4074 = vunpack.c.l.b16 %v3938
  %v4075 = vunpack.c.h.b16 %v3938
  %v4076 = vunpack.c.l.b16 %v3939
  %v4077 = vunpack.c.h.b16 %v3939
  %v4078 = vunpack.c.l.b16 %v3940
  %v4079 = vunpack.c.h.b16 %v3940
  %v4080 = vunpack.c.l.b16 %v3941
  %v4081 = vunpack.c.h.b16 %v3941
  %v4082 = vunpack.c.l.b16 %v3942
  %v4083 = vunpack.c.h.b16 %v3942
  %v4084 = vunpack.c.l.b16 %v3943
  %v4085 = vunpack.c.h.b16 %v3943
  %v4086 = vunpack.c.l.b16 %v3944
  %v4087 = vunpack.c.h.b16 %v3944
  %v4088 = vunpack.c.l.b16 %v3945
  %v4089 = vunpack.c.h.b16 %v3945
  %v4090 = vunpack.c.l.b16 %v3946
  %v4091 = vunpack.c.h.b16 %v3946
  %v4092 = vunpack.c.l.b16 %v3947
  %v4093 = vunpack.c.h.b16 %v3947
  %v4094 = vunpack.c.l.b16 %v3948
  %v4095 = vunpack.c.h.b16 %v3948
  %v4096 = vunpack.c.l.b16 %v3949
  %v4097 = vunpack.c.h.b16 %v3949
  %v4098 = vunpack.c.l.b16 %v3950
  %v4099 = vunpack.c.h.b16 %v3950
  %v4100 = vunpack.c.l.b16 %v3951
  %v4101 = vunpack.c.h.b16 %v3951
  %v4102 = vunpack.c.l.b16 %v3952
  %v4103 = vunpack.c.h.b16 %v3952
  %v4104 = vunpack.c.l.b16 %v3953
  %v4105 = vunpack.c.h.b16 %v3953
  %v4106 = vunpack.c.l.b16 %v3954
  %v4107 = vunpack.c.h.b16 %v3954
  %v4108 = vpack.c.b16 %v4068, %v4066
  %v4109 = vpack.c.b16 %v4069, %v4067
  %v4110 = vpack.c.b16 %v4072, %v4070
  %v4111 = vpack.c.b16 %v4073, %v4071
  %v4112 = vpack.c.b16 %v4076, %v4074
  %v4113 = vpack.c.b16 %v4077, %v4075
  %v4114 = vpack.c.b16 %v4080, %v4078
  %v4115 = vpack.c.b16 %v4081, %v4079
  %v4116 = vpack.c.b16 %v4084, %v4082
  %v4117 = vpack.c.b16 %v4085, %v4083
  %v4118 = vpack.c.b16 %v4088, %v4086
  %v4119 = vpack.c.b16 %v4089, %v4087
  %v4120 = vpack.c.b16 %v4092, %v4090
  %v4121 = vpack.c.b16 %v4093, %v4091
  %v4122 = vpack.c.b16 %v4096, %v4094
  %v4123 = vpack.c.b16 %v4097, %v4095
  %v4124 = vpack.c.b16 %v4100, %v4098
  %v4125 = vpack.c.b16 %v4101, %v4099
  %v4126 = vpack.c.b16 %v4104, %v4102
  %v4127 = vpack.c.b16 %v4105, %v4103
  %v4128 = vpack.c.b16 %v4106, %v4106
  %v4129 = vpack.c.b16 %v4107, %v4107
  %vm4150 = vcmask 277504
  %v4152 = vsel %vm4150, %v4016, 0
  %v4155 = vsel %vm4150, %v4018, 0
  %v4158 = vsel %vm4150, %v4020, 0
  %v4161 = vsel %vm4150, %v4022, 0
  %v4164 = vsel %vm4150, %v4024, 0
  %v4167 = vsel %vm4150, %v4026, 0
  %v4170 = vsel %vm4150, %v4028, 0
  %v4173 = vsel %vm4150, %v4030, 0
  %v4176 = vsel %vm4150, %v4032, 0
  %v4179 = vsel %vm4150, %v4034, 0
  %vm4181 = vcmask 1040384
  %v4183 = vsel %vm4181, %v4128, 0
  %v4186 = vsel %vm4181, %v4129, 0
  %4188 = vmatpush.bf16.msra.mxu0 %v4122
  %4189 = vmatpush.bf16.msra.mxu0 %v4120
  %4190 = vmatpush.bf16.msra.mxu0 %v4118
  %4191 = vmatpush.bf16.msra.mxu0 %v4116
  %4192 = vmatpush.bf16.msra.mxu0 %v4114
  %4193 = vmatpush.bf16.msra.mxu0 %v4112
  %4194 = vmatpush.bf16.msra.mxu0 %v4110
  %4195 = vmatpush.bf16.msra.mxu0 %v4108
  %4196 = vmatmul.bf16.gmra.mxu0 %v4015
  %v4197 = vpop.f32.mrf.mxu0
  %v4198 = vadd.f32 0.0, %v4197
  %v4199 = vpop.f32.mrf.mxu0
  %v4200 = vadd.f32 0.0, %v4199
  %4201 = vmatmul.bf16.gmra.mxu0 %v4017
  %v4202 = vpop.f32.mrf.mxu0
  %v4203 = vadd.f32 0.0, %v4202
  %v4204 = vpop.f32.mrf.mxu0
  %v4205 = vadd.f32 0.0, %v4204
  %4206 = vmatmul.bf16.gmra.mxu0 %v4019
  %v4207 = vpop.f32.mrf.mxu0
  %v4208 = vadd.f32 0.0, %v4207
  %v4209 = vpop.f32.mrf.mxu0
  %v4210 = vadd.f32 0.0, %v4209
  %4211 = vmatmul.bf16.gmra.mxu0 %v4021
  %v4212 = vpop.f32.mrf.mxu0
  %v4213 = vadd.f32 0.0, %v4212
  %v4214 = vpop.f32.mrf.mxu0
  %v4215 = vadd.f32 0.0, %v4214
  %4216 = vmatmul.bf16.gmra.mxu0 %v4023
  %v4217 = vpop.f32.mrf.mxu0
  %v4218 = vadd.f32 0.0, %v4217
  %v4219 = vpop.f32.mrf.mxu0
  %v4220 = vadd.f32 0.0, %v4219
  %4221 = vmatmul.bf16.gmra.mxu0 %v4025
  %v4222 = vpop.f32.mrf.mxu0
  %v4223 = vadd.f32 0.0, %v4222
  %v4224 = vpop.f32.mrf.mxu0
  %v4225 = vadd.f32 0.0, %v4224
  %4226 = vmatmul.bf16.gmra.mxu0 %v4027
  %v4227 = vpop.f32.mrf.mxu0
  %v4228 = vadd.f32 0.0, %v4227
  %v4229 = vpop.f32.mrf.mxu0
  %v4230 = vadd.f32 0.0, %v4229
  %4231 = vmatmul.bf16.gmra.mxu0 %v4029
  %v4232 = vpop.f32.mrf.mxu0
  %v4233 = vadd.f32 0.0, %v4232
  %v4234 = vpop.f32.mrf.mxu0
  %v4235 = vadd.f32 0.0, %v4234
  %4236 = vmatmul.bf16.gmra.mxu0 %v4031
  %v4237 = vpop.f32.mrf.mxu0
  %v4238 = vadd.f32 0.0, %v4237
  %v4239 = vpop.f32.mrf.mxu0
  %v4240 = vadd.f32 0.0, %v4239
  %4241 = vmatmul.bf16.gmra.mxu0 %v4033
  %v4242 = vpop.f32.mrf.mxu0
  %v4243 = vadd.f32 0.0, %v4242
  %v4244 = vpop.f32.mrf.mxu0
  %v4245 = vadd.f32 0.0, %v4244
  %4246 = vdwg.mxu0
  %4247 = vmatpush.bf16.msra.mxu0 0
  %4248 = vmatpush.bf16.msra.mxu0 0
  %4249 = vmatpush.bf16.msra.mxu0 0
  %4250 = vmatpush.bf16.msra.mxu0 0
  %4251 = vmatpush.bf16.msra.mxu0 0
  %4252 = vmatpush.bf16.msra.mxu0 %v4183
  %4253 = vmatpush.bf16.msra.mxu0 %v4126
  %4254 = vmatpush.bf16.msra.mxu0 %v4124
  %4255 = vmatmul.bf16.gmra.mxu0 %v4152
  %v4256 = vpop.f32.mrf.mxu0
  %v4257 = vadd.f32 %v4198, %v4256
  %v4258 = vpop.f32.mrf.mxu0
  %v4259 = vadd.f32 %v4200, %v4258
  %4260 = vmatmul.bf16.gmra.mxu0 %v4155
  %v4261 = vpop.f32.mrf.mxu0
  %v4262 = vadd.f32 %v4203, %v4261
  %v4263 = vpop.f32.mrf.mxu0
  %v4264 = vadd.f32 %v4205, %v4263
  %4265 = vmatmul.bf16.gmra.mxu0 %v4158
  %v4266 = vpop.f32.mrf.mxu0
  %v4267 = vadd.f32 %v4208, %v4266
  %v4268 = vpop.f32.mrf.mxu0
  %v4269 = vadd.f32 %v4210, %v4268
  %4270 = vmatmul.bf16.gmra.mxu0 %v4161
  %v4271 = vpop.f32.mrf.mxu0
  %v4272 = vadd.f32 %v4213, %v4271
  %v4273 = vpop.f32.mrf.mxu0
  %v4274 = vadd.f32 %v4215, %v4273
  %4275 = vmatmul.bf16.gmra.mxu0 %v4164
  %v4276 = vpop.f32.mrf.mxu0
  %v4277 = vadd.f32 %v4218, %v4276
  %v4278 = vpop.f32.mrf.mxu0
  %v4279 = vadd.f32 %v4220, %v4278
  %4280 = vmatmul.bf16.gmra.mxu0 %v4167
  %v4281 = vpop.f32.mrf.mxu0
  %v4282 = vadd.f32 %v4223, %v4281
  %v4283 = vpop.f32.mrf.mxu0
  %v4284 = vadd.f32 %v4225, %v4283
  %4285 = vmatmul.bf16.gmra.mxu0 %v4170
  %v4286 = vpop.f32.mrf.mxu0
  %v4287 = vadd.f32 %v4228, %v4286
  %v4288 = vpop.f32.mrf.mxu0
  %v4289 = vadd.f32 %v4230, %v4288
  %4290 = vmatmul.bf16.gmra.mxu0 %v4173
  %v4291 = vpop.f32.mrf.mxu0
  %v4292 = vadd.f32 %v4233, %v4291
  %v4293 = vpop.f32.mrf.mxu0
  %v4294 = vadd.f32 %v4235, %v4293
  %4295 = vmatmul.bf16.gmra.mxu0 %v4176
  %v4296 = vpop.f32.mrf.mxu0
  %v4297 = vadd.f32 %v4238, %v4296
  %v4298 = vpop.f32.mrf.mxu0
  %v4299 = vadd.f32 %v4240, %v4298
  %4300 = vmatmul.bf16.gmra.mxu0 %v4179
  %v4301 = vpop.f32.mrf.mxu0
  %v4302 = vadd.f32 %v4243, %v4301
  %v4303 = vpop.f32.mrf.mxu0
  %v4304 = vadd.f32 %v4245, %v4303
  %4305 = vdwg.mxu0
  %4306 = vmatpush.bf16.msra.mxu0 %v4123
  %4307 = vmatpush.bf16.msra.mxu0 %v4121
  %4308 = vmatpush.bf16.msra.mxu0 %v4119
  %4309 = vmatpush.bf16.msra.mxu0 %v4117
  %4310 = vmatpush.bf16.msra.mxu0 %v4115
  %4311 = vmatpush.bf16.msra.mxu0 %v4113
  %4312 = vmatpush.bf16.msra.mxu0 %v4111
  %4313 = vmatpush.bf16.msra.mxu0 %v4109
  %4314 = vmatmul.bf16.gmra.mxu0 %v4015
  %v4315 = vpop.f32.mrf.mxu0
  %v4316 = vadd.f32 0.0, %v4315
  %v4317 = vpop.f32.mrf.mxu0
  %v4318 = vadd.f32 0.0, %v4317
  %4319 = vmatmul.bf16.gmra.mxu0 %v4017
  %v4320 = vpop.f32.mrf.mxu0
  %v4321 = vadd.f32 0.0, %v4320
  %v4322 = vpop.f32.mrf.mxu0
  %v4323 = vadd.f32 0.0, %v4322
  %4324 = vmatmul.bf16.gmra.mxu0 %v4019
  %v4325 = vpop.f32.mrf.mxu0
  %v4326 = vadd.f32 0.0, %v4325
  %v4327 = vpop.f32.mrf.mxu0
  %v4328 = vadd.f32 0.0, %v4327
  %4329 = vmatmul.bf16.gmra.mxu0 %v4021
  %v4330 = vpop.f32.mrf.mxu0
  %v4331 = vadd.f32 0.0, %v4330
  %v4332 = vpop.f32.mrf.mxu0
  %v4333 = vadd.f32 0.0, %v4332
  %4334 = vmatmul.bf16.gmra.mxu0 %v4023
  %v4335 = vpop.f32.mrf.mxu0
  %v4336 = vadd.f32 0.0, %v4335
  %v4337 = vpop.f32.mrf.mxu0
  %v4338 = vadd.f32 0.0, %v4337
  %4339 = vmatmul.bf16.gmra.mxu0 %v4025
  %v4340 = vpop.f32.mrf.mxu0
  %v4341 = vadd.f32 0.0, %v4340
  %v4342 = vpop.f32.mrf.mxu0
  %v4343 = vadd.f32 0.0, %v4342
  %4344 = vmatmul.bf16.gmra.mxu0 %v4027
  %v4345 = vpop.f32.mrf.mxu0
  %v4346 = vadd.f32 0.0, %v4345
  %v4347 = vpop.f32.mrf.mxu0
  %v4348 = vadd.f32 0.0, %v4347
  %4349 = vmatmul.bf16.gmra.mxu0 %v4029
  %v4350 = vpop.f32.mrf.mxu0
  %v4351 = vadd.f32 0.0, %v4350
  %v4352 = vpop.f32.mrf.mxu0
  %v4353 = vadd.f32 0.0, %v4352
  %4354 = vmatmul.bf16.gmra.mxu0 %v4031
  %v4355 = vpop.f32.mrf.mxu0
  %v4356 = vadd.f32 0.0, %v4355
  %v4357 = vpop.f32.mrf.mxu0
  %v4358 = vadd.f32 0.0, %v4357
  %4359 = vmatmul.bf16.gmra.mxu0 %v4033
  %v4360 = vpop.f32.mrf.mxu0
  %v4361 = vadd.f32 0.0, %v4360
  %v4362 = vpop.f32.mrf.mxu0
  %v4363 = vadd.f32 0.0, %v4362
  %4364 = vdwg.mxu0
  %4365 = vmatpush.bf16.msra.mxu0 0
  %4366 = vmatpush.bf16.msra.mxu0 0
  %4367 = vmatpush.bf16.msra.mxu0 0
  %4368 = vmatpush.bf16.msra.mxu0 0
  %4369 = vmatpush.bf16.msra.mxu0 0
  %4370 = vmatpush.bf16.msra.mxu0 %v4186
  %4371 = vmatpush.bf16.msra.mxu0 %v4127
  %4372 = vmatpush.bf16.msra.mxu0 %v4125
  %4373 = vmatmul.bf16.gmra.mxu0 %v4152
  %v4374 = vpop.f32.mrf.mxu0
  %v4375 = vadd.f32 %v4316, %v4374
  %v4376 = vpop.f32.mrf.mxu0
  %v4377 = vadd.f32 %v4318, %v4376
  %4378 = vmatmul.bf16.gmra.mxu0 %v4155
  %v4379 = vpop.f32.mrf.mxu0
  %v4380 = vadd.f32 %v4321, %v4379
  %v4381 = vpop.f32.mrf.mxu0
  %v4382 = vadd.f32 %v4323, %v4381
  %4383 = vmatmul.bf16.gmra.mxu0 %v4158
  %v4384 = vpop.f32.mrf.mxu0
  %v4385 = vadd.f32 %v4326, %v4384
  %v4386 = vpop.f32.mrf.mxu0
  %v4387 = vadd.f32 %v4328, %v4386
  %4388 = vmatmul.bf16.gmra.mxu0 %v4161
  %v4389 = vpop.f32.mrf.mxu0
  %v4390 = vadd.f32 %v4331, %v4389
  %v4391 = vpop.f32.mrf.mxu0
  %v4392 = vadd.f32 %v4333, %v4391
  %4393 = vmatmul.bf16.gmra.mxu0 %v4164
  %v4394 = vpop.f32.mrf.mxu0
  %v4395 = vadd.f32 %v4336, %v4394
  %v4396 = vpop.f32.mrf.mxu0
  %v4397 = vadd.f32 %v4338, %v4396
  %4398 = vmatmul.bf16.gmra.mxu0 %v4167
  %v4399 = vpop.f32.mrf.mxu0
  %v4400 = vadd.f32 %v4341, %v4399
  %v4401 = vpop.f32.mrf.mxu0
  %v4402 = vadd.f32 %v4343, %v4401
  %4403 = vmatmul.bf16.gmra.mxu0 %v4170
  %v4404 = vpop.f32.mrf.mxu0
  %v4405 = vadd.f32 %v4346, %v4404
  %v4406 = vpop.f32.mrf.mxu0
  %v4407 = vadd.f32 %v4348, %v4406
  %4408 = vmatmul.bf16.gmra.mxu0 %v4173
  %v4409 = vpop.f32.mrf.mxu0
  %v4410 = vadd.f32 %v4351, %v4409
  %v4411 = vpop.f32.mrf.mxu0
  %v4412 = vadd.f32 %v4353, %v4411
  %4413 = vmatmul.bf16.gmra.mxu0 %v4176
  %v4414 = vpop.f32.mrf.mxu0
  %v4415 = vadd.f32 %v4356, %v4414
  %v4416 = vpop.f32.mrf.mxu0
  %v4417 = vadd.f32 %v4358, %v4416
  %4418 = vmatmul.bf16.gmra.mxu0 %v4179
  %v4419 = vpop.f32.mrf.mxu0
  %v4420 = vadd.f32 %v4361, %v4419
  %v4421 = vpop.f32.mrf.mxu0
  %v4422 = vadd.f32 %v4363, %v4421
  %4423 = vdwg.mxu0
  %v4426 = vunpack.c.l.b16 %v3890
  %v4427 = vunpack.c.h.b16 %v3890
  %v4428 = vunpack.c.l.b16 %v3891
  %v4429 = vunpack.c.h.b16 %v3891
  %v4430 = vpack.c.b16 %v4428, %v4426
  %v4431 = vpack.c.b16 %v4429, %v4427
  %v4454 = vunpack.c.l.b16 %v3910
  %v4455 = vunpack.c.h.b16 %v3910
  %v4456 = vunpack.c.l.b16 %v3911
  %v4457 = vunpack.c.h.b16 %v3911
  %v4458 = vunpack.c.l.b16 %v3912
  %v4459 = vunpack.c.h.b16 %v3912
  %v4460 = vunpack.c.l.b16 %v3913
  %v4461 = vunpack.c.h.b16 %v3913
  %v4462 = vunpack.c.l.b16 %v3914
  %v4463 = vunpack.c.h.b16 %v3914
  %v4464 = vunpack.c.l.b16 %v3915
  %v4465 = vunpack.c.h.b16 %v3915
  %v4466 = vunpack.c.l.b16 %v3916
  %v4467 = vunpack.c.h.b16 %v3916
  %v4468 = vunpack.c.l.b16 %v3917
  %v4469 = vunpack.c.h.b16 %v3917
  %v4470 = vunpack.c.l.b16 %v3918
  %v4471 = vunpack.c.h.b16 %v3918
  %v4472 = vunpack.c.l.b16 %v3919
  %v4473 = vunpack.c.h.b16 %v3919
  %v4474 = vunpack.c.l.b16 %v3920
  %v4475 = vunpack.c.h.b16 %v3920
  %v4476 = vunpack.c.l.b16 %v3921
  %v4477 = vunpack.c.h.b16 %v3921
  %v4478 = vunpack.c.l.b16 %v3922
  %v4479 = vunpack.c.h.b16 %v3922
  %v4480 = vunpack.c.l.b16 %v3923
  %v4481 = vunpack.c.h.b16 %v3923
  %v4482 = vunpack.c.l.b16 %v3924
  %v4483 = vunpack.c.h.b16 %v3924
  %v4484 = vunpack.c.l.b16 %v3925
  %v4485 = vunpack.c.h.b16 %v3925
  %v4486 = vunpack.c.l.b16 %v3926
  %v4487 = vunpack.c.h.b16 %v3926
  %v4488 = vunpack.c.l.b16 %v3927
  %v4489 = vunpack.c.h.b16 %v3927
  %v4490 = vunpack.c.l.b16 %v3928
  %v4491 = vunpack.c.h.b16 %v3928
  %v4492 = vunpack.c.l.b16 %v3929
  %v4493 = vunpack.c.h.b16 %v3929
  %v4494 = vunpack.c.l.b16 %v3930
  %v4495 = vunpack.c.h.b16 %v3930
  %v4496 = vpack.c.b16 %v4456, %v4454
  %v4497 = vpack.c.b16 %v4457, %v4455
  %v4498 = vpack.c.b16 %v4460, %v4458
  %v4499 = vpack.c.b16 %v4461, %v4459
  %v4500 = vpack.c.b16 %v4464, %v4462
  %v4501 = vpack.c.b16 %v4465, %v4463
  %v4502 = vpack.c.b16 %v4468, %v4466
  %v4503 = vpack.c.b16 %v4469, %v4467
  %v4504 = vpack.c.b16 %v4472, %v4470
  %v4505 = vpack.c.b16 %v4473, %v4471
  %v4506 = vpack.c.b16 %v4476, %v4474
  %v4507 = vpack.c.b16 %v4477, %v4475
  %v4508 = vpack.c.b16 %v4480, %v4478
  %v4509 = vpack.c.b16 %v4481, %v4479
  %v4510 = vpack.c.b16 %v4484, %v4482
  %v4511 = vpack.c.b16 %v4485, %v4483
  %v4512 = vpack.c.b16 %v4488, %v4486
  %v4513 = vpack.c.b16 %v4489, %v4487
  %v4514 = vpack.c.b16 %v4492, %v4490
  %v4515 = vpack.c.b16 %v4493, %v4491
  %v4516 = vpack.c.b16 %v4494, %v4494
  %v4517 = vpack.c.b16 %v4495, %v4495
  %v4539 = vsel %vm4150, %v4431, 0
  %v4542 = vsel %vm4181, %v4516, 0
  %v4545 = vsel %vm4181, %v4517, 0
  %4547 = vmatpush.bf16.msra.mxu0 %v4510
  %4548 = vmatpush.bf16.msra.mxu0 %v4508
  %4549 = vmatpush.bf16.msra.mxu0 %v4506
  %4550 = vmatpush.bf16.msra.mxu0 %v4504
  %4551 = vmatpush.bf16.msra.mxu0 %v4502
  %4552 = vmatpush.bf16.msra.mxu0 %v4500
  %4553 = vmatpush.bf16.msra.mxu0 %v4498
  %4554 = vmatpush.bf16.msra.mxu0 %v4496
  %4555 = vmatmul.bf16.gmra.mxu0 %v4430
  %v4556 = vpop.f32.mrf.mxu0
  %v4557 = vadd.f32 %v4257, %v4556
  %v4558 = vpop.f32.mrf.mxu0
  %v4559 = vadd.f32 %v4259, %v4558
  %4560 = vmatmul.bf16.gmra.mxu0 %v4015
  %v4561 = vpop.f32.mrf.mxu0
  %v4562 = vadd.f32 %v4262, %v4561
  %v4563 = vpop.f32.mrf.mxu0
  %v4564 = vadd.f32 %v4264, %v4563
  %4565 = vmatmul.bf16.gmra.mxu0 %v4017
  %v4566 = vpop.f32.mrf.mxu0
  %v4567 = vadd.f32 %v4267, %v4566
  %v4568 = vpop.f32.mrf.mxu0
  %v4569 = vadd.f32 %v4269, %v4568
  %4570 = vmatmul.bf16.gmra.mxu0 %v4019
  %v4571 = vpop.f32.mrf.mxu0
  %v4572 = vadd.f32 %v4272, %v4571
  %v4573 = vpop.f32.mrf.mxu0
  %v4574 = vadd.f32 %v4274, %v4573
  %4575 = vmatmul.bf16.gmra.mxu0 %v4021
  %v4576 = vpop.f32.mrf.mxu0
  %v4577 = vadd.f32 %v4277, %v4576
  %v4578 = vpop.f32.mrf.mxu0
  %v4579 = vadd.f32 %v4279, %v4578
  %4580 = vmatmul.bf16.gmra.mxu0 %v4023
  %v4581 = vpop.f32.mrf.mxu0
  %v4582 = vadd.f32 %v4282, %v4581
  %v4583 = vpop.f32.mrf.mxu0
  %v4584 = vadd.f32 %v4284, %v4583
  %4585 = vmatmul.bf16.gmra.mxu0 %v4025
  %v4586 = vpop.f32.mrf.mxu0
  %v4587 = vadd.f32 %v4287, %v4586
  %v4588 = vpop.f32.mrf.mxu0
  %v4589 = vadd.f32 %v4289, %v4588
  %4590 = vmatmul.bf16.gmra.mxu0 %v4027
  %v4591 = vpop.f32.mrf.mxu0
  %v4592 = vadd.f32 %v4292, %v4591
  %v4593 = vpop.f32.mrf.mxu0
  %v4594 = vadd.f32 %v4294, %v4593
  %4595 = vmatmul.bf16.gmra.mxu0 %v4029
  %v4596 = vpop.f32.mrf.mxu0
  %v4597 = vadd.f32 %v4297, %v4596
  %v4598 = vpop.f32.mrf.mxu0
  %v4599 = vadd.f32 %v4299, %v4598
  %4600 = vmatmul.bf16.gmra.mxu0 %v4031
  %v4601 = vpop.f32.mrf.mxu0
  %v4602 = vadd.f32 %v4302, %v4601
  %v4603 = vpop.f32.mrf.mxu0
  %v4604 = vadd.f32 %v4304, %v4603
  %4605 = vdwg.mxu0
  %4606 = vmatpush.bf16.msra.mxu0 0
  %4607 = vmatpush.bf16.msra.mxu0 0
  %4608 = vmatpush.bf16.msra.mxu0 0
  %4609 = vmatpush.bf16.msra.mxu0 0
  %4610 = vmatpush.bf16.msra.mxu0 0
  %4611 = vmatpush.bf16.msra.mxu0 %v4542
  %4612 = vmatpush.bf16.msra.mxu0 %v4514
  %4613 = vmatpush.bf16.msra.mxu0 %v4512
  %4614 = vmatmul.bf16.gmra.mxu0 %v4539
  %v4615 = vpop.f32.mrf.mxu0
  %v4616 = vadd.f32 %v4557, %v4615
  %v4617 = vpop.f32.mrf.mxu0
  %v4618 = vadd.f32 %v4559, %v4617
  %4619 = vmatmul.bf16.gmra.mxu0 %v4152
  %v4620 = vpop.f32.mrf.mxu0
  %v4621 = vadd.f32 %v4562, %v4620
  %v4622 = vpop.f32.mrf.mxu0
  %v4623 = vadd.f32 %v4564, %v4622
  %4624 = vmatmul.bf16.gmra.mxu0 %v4155
  %v4625 = vpop.f32.mrf.mxu0
  %v4626 = vadd.f32 %v4567, %v4625
  %v4627 = vpop.f32.mrf.mxu0
  %v4628 = vadd.f32 %v4569, %v4627
  %4629 = vmatmul.bf16.gmra.mxu0 %v4158
  %v4630 = vpop.f32.mrf.mxu0
  %v4631 = vadd.f32 %v4572, %v4630
  %v4632 = vpop.f32.mrf.mxu0
  %v4633 = vadd.f32 %v4574, %v4632
  %4634 = vmatmul.bf16.gmra.mxu0 %v4161
  %v4635 = vpop.f32.mrf.mxu0
  %v4636 = vadd.f32 %v4577, %v4635
  %v4637 = vpop.f32.mrf.mxu0
  %v4638 = vadd.f32 %v4579, %v4637
  %4639 = vmatmul.bf16.gmra.mxu0 %v4164
  %v4640 = vpop.f32.mrf.mxu0
  %v4641 = vadd.f32 %v4582, %v4640
  %v4642 = vpop.f32.mrf.mxu0
  %v4643 = vadd.f32 %v4584, %v4642
  %4644 = vmatmul.bf16.gmra.mxu0 %v4167
  %v4645 = vpop.f32.mrf.mxu0
  %v4646 = vadd.f32 %v4587, %v4645
  %v4647 = vpop.f32.mrf.mxu0
  %v4648 = vadd.f32 %v4589, %v4647
  %4649 = vmatmul.bf16.gmra.mxu0 %v4170
  %v4650 = vpop.f32.mrf.mxu0
  %v4651 = vadd.f32 %v4592, %v4650
  %v4652 = vpop.f32.mrf.mxu0
  %v4653 = vadd.f32 %v4594, %v4652
  %4654 = vmatmul.bf16.gmra.mxu0 %v4173
  %v4655 = vpop.f32.mrf.mxu0
  %v4656 = vadd.f32 %v4597, %v4655
  %v4657 = vpop.f32.mrf.mxu0
  %v4658 = vadd.f32 %v4599, %v4657
  %4659 = vmatmul.bf16.gmra.mxu0 %v4176
  %v4660 = vpop.f32.mrf.mxu0
  %v4661 = vadd.f32 %v4602, %v4660
  %v4662 = vpop.f32.mrf.mxu0
  %v4663 = vadd.f32 %v4604, %v4662
  %4664 = vdwg.mxu0
  %4665 = vmatpush.bf16.msra.mxu0 %v4511
  %4666 = vmatpush.bf16.msra.mxu0 %v4509
  %4667 = vmatpush.bf16.msra.mxu0 %v4507
  %4668 = vmatpush.bf16.msra.mxu0 %v4505
  %4669 = vmatpush.bf16.msra.mxu0 %v4503
  %4670 = vmatpush.bf16.msra.mxu0 %v4501
  %4671 = vmatpush.bf16.msra.mxu0 %v4499
  %4672 = vmatpush.bf16.msra.mxu0 %v4497
  %4673 = vmatmul.bf16.gmra.mxu0 %v4430
  %v4674 = vpop.f32.mrf.mxu0
  %v4675 = vadd.f32 %v4375, %v4674
  %v4676 = vpop.f32.mrf.mxu0
  %v4677 = vadd.f32 %v4377, %v4676
  %4678 = vmatmul.bf16.gmra.mxu0 %v4015
  %v4679 = vpop.f32.mrf.mxu0
  %v4680 = vadd.f32 %v4380, %v4679
  %v4681 = vpop.f32.mrf.mxu0
  %v4682 = vadd.f32 %v4382, %v4681
  %4683 = vmatmul.bf16.gmra.mxu0 %v4017
  %v4684 = vpop.f32.mrf.mxu0
  %v4685 = vadd.f32 %v4385, %v4684
  %v4686 = vpop.f32.mrf.mxu0
  %v4687 = vadd.f32 %v4387, %v4686
  %4688 = vmatmul.bf16.gmra.mxu0 %v4019
  %v4689 = vpop.f32.mrf.mxu0
  %v4690 = vadd.f32 %v4390, %v4689
  %v4691 = vpop.f32.mrf.mxu0
  %v4692 = vadd.f32 %v4392, %v4691
  %4693 = vmatmul.bf16.gmra.mxu0 %v4021
  %v4694 = vpop.f32.mrf.mxu0
  %v4695 = vadd.f32 %v4395, %v4694
  %v4696 = vpop.f32.mrf.mxu0
  %v4697 = vadd.f32 %v4397, %v4696
  %4698 = vmatmul.bf16.gmra.mxu0 %v4023
  %v4699 = vpop.f32.mrf.mxu0
  %v4700 = vadd.f32 %v4400, %v4699
  %v4701 = vpop.f32.mrf.mxu0
  %v4702 = vadd.f32 %v4402, %v4701
  %4703 = vmatmul.bf16.gmra.mxu0 %v4025
  %v4704 = vpop.f32.mrf.mxu0
  %v4705 = vadd.f32 %v4405, %v4704
  %v4706 = vpop.f32.mrf.mxu0
  %v4707 = vadd.f32 %v4407, %v4706
  %4708 = vmatmul.bf16.gmra.mxu0 %v4027
  %v4709 = vpop.f32.mrf.mxu0
  %v4710 = vadd.f32 %v4410, %v4709
  %v4711 = vpop.f32.mrf.mxu0
  %v4712 = vadd.f32 %v4412, %v4711
  %4713 = vmatmul.bf16.gmra.mxu0 %v4029
  %v4714 = vpop.f32.mrf.mxu0
  %v4715 = vadd.f32 %v4415, %v4714
  %v4716 = vpop.f32.mrf.mxu0
  %v4717 = vadd.f32 %v4417, %v4716
  %4718 = vmatmul.bf16.gmra.mxu0 %v4031
  %v4719 = vpop.f32.mrf.mxu0
  %v4720 = vadd.f32 %v4420, %v4719
  %v4721 = vpop.f32.mrf.mxu0
  %v4722 = vadd.f32 %v4422, %v4721
  %4723 = vdwg.mxu0
  %4724 = vmatpush.bf16.msra.mxu0 0
  %4725 = vmatpush.bf16.msra.mxu0 0
  %4726 = vmatpush.bf16.msra.mxu0 0
  %4727 = vmatpush.bf16.msra.mxu0 0
  %4728 = vmatpush.bf16.msra.mxu0 0
  %4729 = vmatpush.bf16.msra.mxu0 %v4545
  %4730 = vmatpush.bf16.msra.mxu0 %v4515
  %4731 = vmatpush.bf16.msra.mxu0 %v4513
  %4732 = vmatmul.bf16.gmra.mxu0 %v4539
  %v4733 = vpop.f32.mrf.mxu0
  %v4734 = vadd.f32 %v4675, %v4733
  %v4735 = vpop.f32.mrf.mxu0
  %v4736 = vadd.f32 %v4677, %v4735
  %4737 = vmatmul.bf16.gmra.mxu0 %v4152
  %v4738 = vpop.f32.mrf.mxu0
  %v4739 = vadd.f32 %v4680, %v4738
  %v4740 = vpop.f32.mrf.mxu0
  %v4741 = vadd.f32 %v4682, %v4740
  %4742 = vmatmul.bf16.gmra.mxu0 %v4155
  %v4743 = vpop.f32.mrf.mxu0
  %v4744 = vadd.f32 %v4685, %v4743
  %v4745 = vpop.f32.mrf.mxu0
  %v4746 = vadd.f32 %v4687, %v4745
  %4747 = vmatmul.bf16.gmra.mxu0 %v4158
  %v4748 = vpop.f32.mrf.mxu0
  %v4749 = vadd.f32 %v4690, %v4748
  %v4750 = vpop.f32.mrf.mxu0
  %v4751 = vadd.f32 %v4692, %v4750
  %4752 = vmatmul.bf16.gmra.mxu0 %v4161
  %v4753 = vpop.f32.mrf.mxu0
  %v4754 = vadd.f32 %v4695, %v4753
  %v4755 = vpop.f32.mrf.mxu0
  %v4756 = vadd.f32 %v4697, %v4755
  %4757 = vmatmul.bf16.gmra.mxu0 %v4164
  %v4758 = vpop.f32.mrf.mxu0
  %v4759 = vadd.f32 %v4700, %v4758
  %v4760 = vpop.f32.mrf.mxu0
  %v4761 = vadd.f32 %v4702, %v4760
  %4762 = vmatmul.bf16.gmra.mxu0 %v4167
  %v4763 = vpop.f32.mrf.mxu0
  %v4764 = vadd.f32 %v4705, %v4763
  %v4765 = vpop.f32.mrf.mxu0
  %v4766 = vadd.f32 %v4707, %v4765
  %4767 = vmatmul.bf16.gmra.mxu0 %v4170
  %v4768 = vpop.f32.mrf.mxu0
  %v4769 = vadd.f32 %v4710, %v4768
  %v4770 = vpop.f32.mrf.mxu0
  %v4771 = vadd.f32 %v4712, %v4770
  %4772 = vmatmul.bf16.gmra.mxu0 %v4173
  %v4773 = vpop.f32.mrf.mxu0
  %v4774 = vadd.f32 %v4715, %v4773
  %v4775 = vpop.f32.mrf.mxu0
  %v4776 = vadd.f32 %v4717, %v4775
  %4777 = vmatmul.bf16.gmra.mxu0 %v4176
  %v4778 = vpop.f32.mrf.mxu0
  %v4779 = vadd.f32 %v4720, %v4778
  %v4780 = vpop.f32.mrf.mxu0
  %v4781 = vadd.f32 %v4722, %v4780
  %4782 = vdwg.mxu0
  %v4783 = vld [vmem:[#allocation2 + $0x20] sm:$0xff]
  %v4784 = vld [vmem:[#allocation2 + $0x28] sm:$0xff]
  %v4785 = vld [vmem:[#allocation2 + $0x30] sm:$0xff]
  %v4786 = vld [vmem:[#allocation2 + $0x38] sm:$0xff]
  %v4787 = vld [vmem:[#allocation2 + $0x40] sm:$0xff]
  %v4788 = vld [vmem:[#allocation2 + $0x48] sm:$0xff]
  %v4789 = vld [vmem:[#allocation2 + $0x50] sm:$0xff]
  %v4790 = vld [vmem:[#allocation2 + $0x58] sm:$0xff]
  %v4791 = vld [vmem:[#allocation2 + $0x60] sm:$0xff]
  %v4792 = vld [vmem:[#allocation2 + $0x68] sm:$0xff]
  %v4793 = vld [vmem:[#allocation2 + $0x70] sm:$0xff]
  %v4794 = vld [vmem:[#allocation2 + $0x78] sm:$0xff]
  %v4795 = vld [vmem:[#allocation2 + $0x80] sm:$0xff]
  %v4796 = vld [vmem:[#allocation2 + $0x88] sm:$0xff]
  %v4797 = vld [vmem:[#allocation2 + $0x90] sm:$0xff]
  %v4798 = vld [vmem:[#allocation2 + $0x98] sm:$0xff]
  %v4799 = vld [vmem:[#allocation2 + $0xa0] sm:$0xff]
  %v4800 = vld [vmem:[#allocation2 + $0xa8] sm:$0xff]
  %v4801 = vld [vmem:[#allocation2 + $0xb0] sm:$0xff]
  %v4802 = vld [vmem:[#allocation2 + $0xb8] sm:$0xff]
  %s4803 = scalar_lea.vmem %s3, 336
  %v4804 = vld [vmem:[%s4803] sm:$0xff]
  %v4805 = vld [vmem:[%s4803 + $0x8] sm:$0xff]
  %v4806 = vld [vmem:[%s4803 + $0x10] sm:$0xff]
  %v4807 = vld [vmem:[%s4803 + $0x18] sm:$0xff]
  %v4808 = vld [vmem:[%s4803 + $0x20] sm:$0xff]
  %v4809 = vld [vmem:[%s4803 + $0x28] sm:$0xff]
  %v4810 = vld [vmem:[%s4803 + $0x30] sm:$0xff]
  %v4811 = vld [vmem:[%s4803 + $0x38] sm:$0xff]
  %v4812 = vld [vmem:[%s4803 + $0x40] sm:$0xff]
  %v4813 = vld [vmem:[%s4803 + $0x48] sm:$0xff]
  %v4814 = vld [vmem:[%s4803 + $0x50] sm:$0xff]
  %v4815 = vld [vmem:[%s4803 + $0x58] sm:$0xff]
  %v4816 = vld [vmem:[%s4803 + $0x60] sm:$0xff]
  %v4817 = vld [vmem:[%s4803 + $0x68] sm:$0xff]
  %v4818 = vld [vmem:[%s4803 + $0x70] sm:$0xff]
  %v4819 = vld [vmem:[%s4803 + $0x78] sm:$0xff]
  %v4820 = vld [vmem:[%s4803 + $0x80] sm:$0xff]
  %v4821 = vld [vmem:[%s4803 + $0x88] sm:$0xff]
  %v4822 = vld [vmem:[%s4803 + $0x90] sm:$0xff]
  %v4823 = vld [vmem:[%s4803 + $0x98] sm:$0xff]
  %v4824 = vld [vmem:[%s4803 + $0xa0] sm:$0x11]
  %v4845 = vunpack.c.l.b16 %v4783
  %v4846 = vunpack.c.h.b16 %v4783
  %v4847 = vunpack.c.l.b16 %v4784
  %v4848 = vunpack.c.h.b16 %v4784
  %v4849 = vunpack.c.l.b16 %v4785
  %v4850 = vunpack.c.h.b16 %v4785
  %v4851 = vunpack.c.l.b16 %v4786
  %v4852 = vunpack.c.h.b16 %v4786
  %v4853 = vunpack.c.l.b16 %v4787
  %v4854 = vunpack.c.h.b16 %v4787
  %v4855 = vunpack.c.l.b16 %v4788
  %v4856 = vunpack.c.h.b16 %v4788
  %v4857 = vunpack.c.l.b16 %v4789
  %v4858 = vunpack.c.h.b16 %v4789
  %v4859 = vunpack.c.l.b16 %v4790
  %v4860 = vunpack.c.h.b16 %v4790
  %v4861 = vunpack.c.l.b16 %v4791
  %v4862 = vunpack.c.h.b16 %v4791
  %v4863 = vunpack.c.l.b16 %v4792
  %v4864 = vunpack.c.h.b16 %v4792
  %v4865 = vunpack.c.l.b16 %v4793
  %v4866 = vunpack.c.h.b16 %v4793
  %v4867 = vunpack.c.l.b16 %v4794
  %v4868 = vunpack.c.h.b16 %v4794
  %v4869 = vunpack.c.l.b16 %v4795
  %v4870 = vunpack.c.h.b16 %v4795
  %v4871 = vunpack.c.l.b16 %v4796
  %v4872 = vunpack.c.h.b16 %v4796
  %v4873 = vunpack.c.l.b16 %v4797
  %v4874 = vunpack.c.h.b16 %v4797
  %v4875 = vunpack.c.l.b16 %v4798
  %v4876 = vunpack.c.h.b16 %v4798
  %v4877 = vunpack.c.l.b16 %v4799
  %v4878 = vunpack.c.h.b16 %v4799
  %v4879 = vunpack.c.l.b16 %v4800
  %v4880 = vunpack.c.h.b16 %v4800
  %v4881 = vunpack.c.l.b16 %v4801
  %v4882 = vunpack.c.h.b16 %v4801
  %v4883 = vunpack.c.l.b16 %v4802
  %v4884 = vunpack.c.h.b16 %v4802
  %v4885 = vpack.c.b16 %v4847, %v4845
  %v4886 = vpack.c.b16 %v4848, %v4846
  %v4887 = vpack.c.b16 %v4851, %v4849
  %v4888 = vpack.c.b16 %v4852, %v4850
  %v4889 = vpack.c.b16 %v4855, %v4853
  %v4890 = vpack.c.b16 %v4856, %v4854
  %v4891 = vpack.c.b16 %v4859, %v4857
  %v4892 = vpack.c.b16 %v4860, %v4858
  %v4893 = vpack.c.b16 %v4863, %v4861
  %v4894 = vpack.c.b16 %v4864, %v4862
  %v4895 = vpack.c.b16 %v4867, %v4865
  %v4896 = vpack.c.b16 %v4868, %v4866
  %v4897 = vpack.c.b16 %v4871, %v4869
  %v4898 = vpack.c.b16 %v4872, %v4870
  %v4899 = vpack.c.b16 %v4875, %v4873
  %v4900 = vpack.c.b16 %v4876, %v4874
  %v4901 = vpack.c.b16 %v4879, %v4877
  %v4902 = vpack.c.b16 %v4880, %v4878
  %v4903 = vpack.c.b16 %v4883, %v4881
  %v4904 = vpack.c.b16 %v4884, %v4882
  %v4936 = vunpack.c.l.b16 %v4804
  %v4937 = vunpack.c.h.b16 %v4804
  %v4938 = vunpack.c.l.b16 %v4805
  %v4939 = vunpack.c.h.b16 %v4805
  %v4940 = vunpack.c.l.b16 %v4806
  %v4941 = vunpack.c.h.b16 %v4806
  %v4942 = vunpack.c.l.b16 %v4807
  %v4943 = vunpack.c.h.b16 %v4807
  %v4944 = vunpack.c.l.b16 %v4808
  %v4945 = vunpack.c.h.b16 %v4808
  %v4946 = vunpack.c.l.b16 %v4809
  %v4947 = vunpack.c.h.b16 %v4809
  %v4948 = vunpack.c.l.b16 %v4810
  %v4949 = vunpack.c.h.b16 %v4810
  %v4950 = vunpack.c.l.b16 %v4811
  %v4951 = vunpack.c.h.b16 %v4811
  %v4952 = vunpack.c.l.b16 %v4812
  %v4953 = vunpack.c.h.b16 %v4812
  %v4954 = vunpack.c.l.b16 %v4813
  %v4955 = vunpack.c.h.b16 %v4813
  %v4956 = vunpack.c.l.b16 %v4814
  %v4957 = vunpack.c.h.b16 %v4814
  %v4958 = vunpack.c.l.b16 %v4815
  %v4959 = vunpack.c.h.b16 %v4815
  %v4960 = vunpack.c.l.b16 %v4816
  %v4961 = vunpack.c.h.b16 %v4816
  %v4962 = vunpack.c.l.b16 %v4817
  %v4963 = vunpack.c.h.b16 %v4817
  %v4964 = vunpack.c.l.b16 %v4818
  %v4965 = vunpack.c.h.b16 %v4818
  %v4966 = vunpack.c.l.b16 %v4819
  %v4967 = vunpack.c.h.b16 %v4819
  %v4968 = vunpack.c.l.b16 %v4820
  %v4969 = vunpack.c.h.b16 %v4820
  %v4970 = vunpack.c.l.b16 %v4821
  %v4971 = vunpack.c.h.b16 %v4821
  %v4972 = vunpack.c.l.b16 %v4822
  %v4973 = vunpack.c.h.b16 %v4822
  %v4974 = vunpack.c.l.b16 %v4823
  %v4975 = vunpack.c.h.b16 %v4823
  %v4976 = vunpack.c.l.b16 %v4824
  %v4977 = vunpack.c.h.b16 %v4824
  %v4978 = vpack.c.b16 %v4938, %v4936
  %v4979 = vpack.c.b16 %v4939, %v4937
  %v4980 = vpack.c.b16 %v4942, %v4940
  %v4981 = vpack.c.b16 %v4943, %v4941
  %v4982 = vpack.c.b16 %v4946, %v4944
  %v4983 = vpack.c.b16 %v4947, %v4945
  %v4984 = vpack.c.b16 %v4950, %v4948
  %v4985 = vpack.c.b16 %v4951, %v4949
  %v4986 = vpack.c.b16 %v4954, %v4952
  %v4987 = vpack.c.b16 %v4955, %v4953
  %v4988 = vpack.c.b16 %v4958, %v4956
  %v4989 = vpack.c.b16 %v4959, %v4957
  %v4990 = vpack.c.b16 %v4962, %v4960
  %v4991 = vpack.c.b16 %v4963, %v4961
  %v4992 = vpack.c.b16 %v4966, %v4964
  %v4993 = vpack.c.b16 %v4967, %v4965
  %v4994 = vpack.c.b16 %v4970, %v4968
  %v4995 = vpack.c.b16 %v4971, %v4969
  %v4996 = vpack.c.b16 %v4974, %v4972
  %v4997 = vpack.c.b16 %v4975, %v4973
  %v4998 = vpack.c.b16 %v4976, %v4976
  %v4999 = vpack.c.b16 %v4977, %v4977
  %v5021 = vsel %vm4150, %v4886, 0
  %v5024 = vsel %vm4150, %v4888, 0
  %v5027 = vsel %vm4150, %v4890, 0
  %v5030 = vsel %vm4150, %v4892, 0
  %v5033 = vsel %vm4150, %v4894, 0
  %v5036 = vsel %vm4150, %v4896, 0
  %v5039 = vsel %vm4150, %v4898, 0
  %v5042 = vsel %vm4150, %v4900, 0
  %v5045 = vsel %vm4150, %v4902, 0
  %v5048 = vsel %vm4150, %v4904, 0
  %v5051 = vsel %vm4181, %v4998, 0
  %v5054 = vsel %vm4181, %v4999, 0
  %5056 = vmatpush.bf16.msra.mxu0 %v4992
  %5057 = vmatpush.bf16.msra.mxu0 %v4990
  %5058 = vmatpush.bf16.msra.mxu0 %v4988
  %5059 = vmatpush.bf16.msra.mxu0 %v4986
  %5060 = vmatpush.bf16.msra.mxu0 %v4984
  %5061 = vmatpush.bf16.msra.mxu0 %v4982
  %5062 = vmatpush.bf16.msra.mxu0 %v4980
  %5063 = vmatpush.bf16.msra.mxu0 %v4978
  %5064 = vmatmul.bf16.gmra.mxu0 %v4885
  %v5065 = vpop.f32.mrf.mxu0
  %v5066 = vadd.f32 0.0, %v5065
  %v5067 = vpop.f32.mrf.mxu0
  %v5068 = vadd.f32 0.0, %v5067
  %5069 = vmatmul.bf16.gmra.mxu0 %v4887
  %v5070 = vpop.f32.mrf.mxu0
  %v5071 = vadd.f32 0.0, %v5070
  %v5072 = vpop.f32.mrf.mxu0
  %v5073 = vadd.f32 0.0, %v5072
  %5074 = vmatmul.bf16.gmra.mxu0 %v4889
  %v5075 = vpop.f32.mrf.mxu0
  %v5076 = vadd.f32 0.0, %v5075
  %v5077 = vpop.f32.mrf.mxu0
  %v5078 = vadd.f32 0.0, %v5077
  %5079 = vmatmul.bf16.gmra.mxu0 %v4891
  %v5080 = vpop.f32.mrf.mxu0
  %v5081 = vadd.f32 0.0, %v5080
  %v5082 = vpop.f32.mrf.mxu0
  %v5083 = vadd.f32 0.0, %v5082
  %5084 = vmatmul.bf16.gmra.mxu0 %v4893
  %v5085 = vpop.f32.mrf.mxu0
  %v5086 = vadd.f32 0.0, %v5085
  %v5087 = vpop.f32.mrf.mxu0
  %v5088 = vadd.f32 0.0, %v5087
  %5089 = vmatmul.bf16.gmra.mxu0 %v4895
  %v5090 = vpop.f32.mrf.mxu0
  %v5091 = vadd.f32 0.0, %v5090
  %v5092 = vpop.f32.mrf.mxu0
  %v5093 = vadd.f32 0.0, %v5092
  %5094 = vmatmul.bf16.gmra.mxu0 %v4897
  %v5095 = vpop.f32.mrf.mxu0
  %v5096 = vadd.f32 0.0, %v5095
  %v5097 = vpop.f32.mrf.mxu0
  %v5098 = vadd.f32 0.0, %v5097
  %5099 = vmatmul.bf16.gmra.mxu0 %v4899
  %v5100 = vpop.f32.mrf.mxu0
  %v5101 = vadd.f32 0.0, %v5100
  %v5102 = vpop.f32.mrf.mxu0
  %v5103 = vadd.f32 0.0, %v5102
  %5104 = vmatmul.bf16.gmra.mxu0 %v4901
  %v5105 = vpop.f32.mrf.mxu0
  %v5106 = vadd.f32 0.0, %v5105
  %v5107 = vpop.f32.mrf.mxu0
  %v5108 = vadd.f32 0.0, %v5107
  %5109 = vmatmul.bf16.gmra.mxu0 %v4903
  %v5110 = vpop.f32.mrf.mxu0
  %v5111 = vadd.f32 0.0, %v5110
  %v5112 = vpop.f32.mrf.mxu0
  %v5113 = vadd.f32 0.0, %v5112
  %5114 = vdwg.mxu0
  %5115 = vmatpush.bf16.msra.mxu0 0
  %5116 = vmatpush.bf16.msra.mxu0 0
  %5117 = vmatpush.bf16.msra.mxu0 0
  %5118 = vmatpush.bf16.msra.mxu0 0
  %5119 = vmatpush.bf16.msra.mxu0 0
  %5120 = vmatpush.bf16.msra.mxu0 %v5051
  %5121 = vmatpush.bf16.msra.mxu0 %v4996
  %5122 = vmatpush.bf16.msra.mxu0 %v4994
  %5123 = vmatmul.bf16.gmra.mxu0 %v5021
  %v5124 = vpop.f32.mrf.mxu0
  %v5125 = vadd.f32 %v5066, %v5124
  %v5126 = vpop.f32.mrf.mxu0
  %v5127 = vadd.f32 %v5068, %v5126
  %5128 = vmatmul.bf16.gmra.mxu0 %v5024
  %v5129 = vpop.f32.mrf.mxu0
  %v5130 = vadd.f32 %v5071, %v5129
  %v5131 = vpop.f32.mrf.mxu0
  %v5132 = vadd.f32 %v5073, %v5131
  %5133 = vmatmul.bf16.gmra.mxu0 %v5027
  %v5134 = vpop.f32.mrf.mxu0
  %v5135 = vadd.f32 %v5076, %v5134
  %v5136 = vpop.f32.mrf.mxu0
  %v5137 = vadd.f32 %v5078, %v5136
  %5138 = vmatmul.bf16.gmra.mxu0 %v5030
  %v5139 = vpop.f32.mrf.mxu0
  %v5140 = vadd.f32 %v5081, %v5139
  %v5141 = vpop.f32.mrf.mxu0
  %v5142 = vadd.f32 %v5083, %v5141
  %5143 = vmatmul.bf16.gmra.mxu0 %v5033
  %v5144 = vpop.f32.mrf.mxu0
  %v5145 = vadd.f32 %v5086, %v5144
  %v5146 = vpop.f32.mrf.mxu0
  %v5147 = vadd.f32 %v5088, %v5146
  %5148 = vmatmul.bf16.gmra.mxu0 %v5036
  %v5149 = vpop.f32.mrf.mxu0
  %v5150 = vadd.f32 %v5091, %v5149
  %v5151 = vpop.f32.mrf.mxu0
  %v5152 = vadd.f32 %v5093, %v5151
  %5153 = vmatmul.bf16.gmra.mxu0 %v5039
  %v5154 = vpop.f32.mrf.mxu0
  %v5155 = vadd.f32 %v5096, %v5154
  %v5156 = vpop.f32.mrf.mxu0
  %v5157 = vadd.f32 %v5098, %v5156
  %5158 = vmatmul.bf16.gmra.mxu0 %v5042
  %v5159 = vpop.f32.mrf.mxu0
  %v5160 = vadd.f32 %v5101, %v5159
  %v5161 = vpop.f32.mrf.mxu0
  %v5162 = vadd.f32 %v5103, %v5161
  %5163 = vmatmul.bf16.gmra.mxu0 %v5045
  %v5164 = vpop.f32.mrf.mxu0
  %v5165 = vadd.f32 %v5106, %v5164
  %v5166 = vpop.f32.mrf.mxu0
  %v5167 = vadd.f32 %v5108, %v5166
  %5168 = vmatmul.bf16.gmra.mxu0 %v5048
  %v5169 = vpop.f32.mrf.mxu0
  %v5170 = vadd.f32 %v5111, %v5169
  %v5171 = vpop.f32.mrf.mxu0
  %v5172 = vadd.f32 %v5113, %v5171
  %5173 = vdwg.mxu0
  %5174 = vmatpush.bf16.msra.mxu0 %v4993
  %5175 = vmatpush.bf16.msra.mxu0 %v4991
  %5176 = vmatpush.bf16.msra.mxu0 %v4989
  %5177 = vmatpush.bf16.msra.mxu0 %v4987
  %5178 = vmatpush.bf16.msra.mxu0 %v4985
  %5179 = vmatpush.bf16.msra.mxu0 %v4983
  %5180 = vmatpush.bf16.msra.mxu0 %v4981
  %5181 = vmatpush.bf16.msra.mxu0 %v4979
  %5182 = vmatmul.bf16.gmra.mxu0 %v4885
  %v5183 = vpop.f32.mrf.mxu0
  %v5184 = vadd.f32 0.0, %v5183
  %v5185 = vpop.f32.mrf.mxu0
  %v5186 = vadd.f32 0.0, %v5185
  %5187 = vmatmul.bf16.gmra.mxu0 %v4887
  %v5188 = vpop.f32.mrf.mxu0
  %v5189 = vadd.f32 0.0, %v5188
  %v5190 = vpop.f32.mrf.mxu0
  %v5191 = vadd.f32 0.0, %v5190
  %5192 = vmatmul.bf16.gmra.mxu0 %v4889
  %v5193 = vpop.f32.mrf.mxu0
  %v5194 = vadd.f32 0.0, %v5193
  %v5195 = vpop.f32.mrf.mxu0
  %v5196 = vadd.f32 0.0, %v5195
  %5197 = vmatmul.bf16.gmra.mxu0 %v4891
  %v5198 = vpop.f32.mrf.mxu0
  %v5199 = vadd.f32 0.0, %v5198
  %v5200 = vpop.f32.mrf.mxu0
  %v5201 = vadd.f32 0.0, %v5200
  %5202 = vmatmul.bf16.gmra.mxu0 %v4893
  %v5203 = vpop.f32.mrf.mxu0
  %v5204 = vadd.f32 0.0, %v5203
  %v5205 = vpop.f32.mrf.mxu0
  %v5206 = vadd.f32 0.0, %v5205
  %5207 = vmatmul.bf16.gmra.mxu0 %v4895
  %v5208 = vpop.f32.mrf.mxu0
  %v5209 = vadd.f32 0.0, %v5208
  %v5210 = vpop.f32.mrf.mxu0
  %v5211 = vadd.f32 0.0, %v5210
  %5212 = vmatmul.bf16.gmra.mxu0 %v4897
  %v5213 = vpop.f32.mrf.mxu0
  %v5214 = vadd.f32 0.0, %v5213
  %v5215 = vpop.f32.mrf.mxu0
  %v5216 = vadd.f32 0.0, %v5215
  %5217 = vmatmul.bf16.gmra.mxu0 %v4899
  %v5218 = vpop.f32.mrf.mxu0
  %v5219 = vadd.f32 0.0, %v5218
  %v5220 = vpop.f32.mrf.mxu0
  %v5221 = vadd.f32 0.0, %v5220
  %5222 = vmatmul.bf16.gmra.mxu0 %v4901
  %v5223 = vpop.f32.mrf.mxu0
  %v5224 = vadd.f32 0.0, %v5223
  %v5225 = vpop.f32.mrf.mxu0
  %v5226 = vadd.f32 0.0, %v5225
  %5227 = vmatmul.bf16.gmra.mxu0 %v4903
  %v5228 = vpop.f32.mrf.mxu0
  %v5229 = vadd.f32 0.0, %v5228
  %v5230 = vpop.f32.mrf.mxu0
  %v5231 = vadd.f32 0.0, %v5230
  %5232 = vdwg.mxu0
  %5233 = vmatpush.bf16.msra.mxu0 0
  %5234 = vmatpush.bf16.msra.mxu0 0
  %5235 = vmatpush.bf16.msra.mxu0 0
  %5236 = vmatpush.bf16.msra.mxu0 0
  %5237 = vmatpush.bf16.msra.mxu0 0
  %5238 = vmatpush.bf16.msra.mxu0 %v5054
  %5239 = vmatpush.bf16.msra.mxu0 %v4997
  %5240 = vmatpush.bf16.msra.mxu0 %v4995
  %5241 = vmatmul.bf16.gmra.mxu0 %v5021
  %v5242 = vpop.f32.mrf.mxu0
  %v5243 = vadd.f32 %v5184, %v5242
  %v5244 = vpop.f32.mrf.mxu0
  %v5245 = vadd.f32 %v5186, %v5244
  %5246 = vmatmul.bf16.gmra.mxu0 %v5024
  %v5247 = vpop.f32.mrf.mxu0
  %v5248 = vadd.f32 %v5189, %v5247
  %v5249 = vpop.f32.mrf.mxu0
  %v5250 = vadd.f32 %v5191, %v5249
  %5251 = vmatmul.bf16.gmra.mxu0 %v5027
  %v5252 = vpop.f32.mrf.mxu0
  %v5253 = vadd.f32 %v5194, %v5252
  %v5254 = vpop.f32.mrf.mxu0
  %v5255 = vadd.f32 %v5196, %v5254
  %5256 = vmatmul.bf16.gmra.mxu0 %v5030
  %v5257 = vpop.f32.mrf.mxu0
  %v5258 = vadd.f32 %v5199, %v5257
  %v5259 = vpop.f32.mrf.mxu0
  %v5260 = vadd.f32 %v5201, %v5259
  %5261 = vmatmul.bf16.gmra.mxu0 %v5033
  %v5262 = vpop.f32.mrf.mxu0
  %v5263 = vadd.f32 %v5204, %v5262
  %v5264 = vpop.f32.mrf.mxu0
  %v5265 = vadd.f32 %v5206, %v5264
  %5266 = vmatmul.bf16.gmra.mxu0 %v5036
  %v5267 = vpop.f32.mrf.mxu0
  %v5268 = vadd.f32 %v5209, %v5267
  %v5269 = vpop.f32.mrf.mxu0
  %v5270 = vadd.f32 %v5211, %v5269
  %5271 = vmatmul.bf16.gmra.mxu0 %v5039
  %v5272 = vpop.f32.mrf.mxu0
  %v5273 = vadd.f32 %v5214, %v5272
  %v5274 = vpop.f32.mrf.mxu0
  %v5275 = vadd.f32 %v5216, %v5274
  %5276 = vmatmul.bf16.gmra.mxu0 %v5042
  %v5277 = vpop.f32.mrf.mxu0
  %v5278 = vadd.f32 %v5219, %v5277
  %v5279 = vpop.f32.mrf.mxu0
  %v5280 = vadd.f32 %v5221, %v5279
  %5281 = vmatmul.bf16.gmra.mxu0 %v5045
  %v5282 = vpop.f32.mrf.mxu0
  %v5283 = vadd.f32 %v5224, %v5282
  %v5284 = vpop.f32.mrf.mxu0
  %v5285 = vadd.f32 %v5226, %v5284
  %5286 = vmatmul.bf16.gmra.mxu0 %v5048
  %v5287 = vpop.f32.mrf.mxu0
  %v5288 = vadd.f32 %v5229, %v5287
  %v5289 = vpop.f32.mrf.mxu0
  %v5290 = vadd.f32 %v5231, %v5289
  %5291 = vdwg.mxu0
  %v5292 = vadd.f32 %v4616, %v5125
  %v5293 = vadd.f32 %v4734, %v5243
  %v5294 = vadd.f32 %v4618, %v5127
  %v5295 = vadd.f32 %v4736, %v5245
  %v5296 = vadd.f32 %v4621, %v5130
  %v5297 = vadd.f32 %v4739, %v5248
  %v5298 = vadd.f32 %v4623, %v5132
  %v5299 = vadd.f32 %v4741, %v5250
  %v5300 = vadd.f32 %v4626, %v5135
  %v5301 = vadd.f32 %v4744, %v5253
  %v5302 = vadd.f32 %v4628, %v5137
  %v5303 = vadd.f32 %v4746, %v5255
  %v5304 = vadd.f32 %v4631, %v5140
  %v5305 = vadd.f32 %v4749, %v5258
  %v5306 = vadd.f32 %v4633, %v5142
  %v5307 = vadd.f32 %v4751, %v5260
  %v5308 = vadd.f32 %v4636, %v5145
  %v5309 = vadd.f32 %v4754, %v5263
  %v5310 = vadd.f32 %v4638, %v5147
  %v5311 = vadd.f32 %v4756, %v5265
  %v5312 = vadd.f32 %v4641, %v5150
  %v5313 = vadd.f32 %v4759, %v5268
  %v5314 = vadd.f32 %v4643, %v5152
  %v5315 = vadd.f32 %v4761, %v5270
  %v5316 = vadd.f32 %v4646, %v5155
  %v5317 = vadd.f32 %v4764, %v5273
  %v5318 = vadd.f32 %v4648, %v5157
  %v5319 = vadd.f32 %v4766, %v5275
  %v5320 = vadd.f32 %v4651, %v5160
  %v5321 = vadd.f32 %v4769, %v5278
  %v5322 = vadd.f32 %v4653, %v5162
  %v5323 = vadd.f32 %v4771, %v5280
  %v5324 = vadd.f32 %v4656, %v5165
  %v5325 = vadd.f32 %v4774, %v5283
  %v5326 = vadd.f32 %v4658, %v5167
  %v5327 = vadd.f32 %v4776, %v5285
  %v5328 = vadd.f32 %v4661, %v5170
  %v5329 = vadd.f32 %v4779, %v5288
  %v5330 = vadd.f32 %v4663, %v5172
  %v5331 = vadd.f32 %v4781, %v5290
  %v5332 = vld [vmem:[#allocation2 + $0x30] sm:$0xff]
  %v5333 = vld [vmem:[#allocation2 + $0x38] sm:$0xff]
  %v5334 = vld [vmem:[#allocation2 + $0x40] sm:$0xff]
  %v5335 = vld [vmem:[#allocation2 + $0x48] sm:$0xff]
  %v5336 = vld [vmem:[#allocation2 + $0x50] sm:$0xff]
  %v5337 = vld [vmem:[#allocation2 + $0x58] sm:$0xff]
  %v5338 = vld [vmem:[#allocation2 + $0x60] sm:$0xff]
  %v5339 = vld [vmem:[#allocation2 + $0x68] sm:$0xff]
  %v5340 = vld [vmem:[#allocation2 + $0x70] sm:$0xff]
  %v5341 = vld [vmem:[#allocation2 + $0x78] sm:$0xff]
  %v5342 = vld [vmem:[#allocation2 + $0x80] sm:$0xff]
  %v5343 = vld [vmem:[#allocation2 + $0x88] sm:$0xff]
  %v5344 = vld [vmem:[#allocation2 + $0x90] sm:$0xff]
  %v5345 = vld [vmem:[#allocation2 + $0x98] sm:$0xff]
  %v5346 = vld [vmem:[#allocation2 + $0xa0] sm:$0xff]
  %v5347 = vld [vmem:[#allocation2 + $0xa8] sm:$0xff]
  %v5348 = vld [vmem:[#allocation2 + $0xb0] sm:$0xff]
  %v5349 = vld [vmem:[#allocation2 + $0xb8] sm:$0xff]
  %v5350 = vld [vmem:[#allocation2 + $0xc0] sm:$0xff]
  %v5351 = vld [vmem:[#allocation2 + $0xc8] sm:$0xff]
  %s5352 = scalar_lea.vmem %s3, 504
  %v5353 = vld [vmem:[%s5352] sm:$0xff]
  %v5354 = vld [vmem:[%s5352 + $0x8] sm:$0xff]
  %v5355 = vld [vmem:[%s5352 + $0x10] sm:$0xff]
  %v5356 = vld [vmem:[%s5352 + $0x18] sm:$0xff]
  %v5357 = vld [vmem:[%s5352 + $0x20] sm:$0xff]
  %v5358 = vld [vmem:[%s5352 + $0x28] sm:$0xff]
  %v5359 = vld [vmem:[%s5352 + $0x30] sm:$0xff]
  %v5360 = vld [vmem:[%s5352 + $0x38] sm:$0xff]
  %v5361 = vld [vmem:[%s5352 + $0x40] sm:$0xff]
  %v5362 = vld [vmem:[%s5352 + $0x48] sm:$0xff]
  %v5363 = vld [vmem:[%s5352 + $0x50] sm:$0xff]
  %v5364 = vld [vmem:[%s5352 + $0x58] sm:$0xff]
  %v5365 = vld [vmem:[%s5352 + $0x60] sm:$0xff]
  %v5366 = vld [vmem:[%s5352 + $0x68] sm:$0xff]
  %v5367 = vld [vmem:[%s5352 + $0x70] sm:$0xff]
  %v5368 = vld [vmem:[%s5352 + $0x78] sm:$0xff]
  %v5369 = vld [vmem:[%s5352 + $0x80] sm:$0xff]
  %v5370 = vld [vmem:[%s5352 + $0x88] sm:$0xff]
  %v5371 = vld [vmem:[%s5352 + $0x90] sm:$0xff]
  %v5372 = vld [vmem:[%s5352 + $0x98] sm:$0xff]
  %v5373 = vld [vmem:[%s5352 + $0xa0] sm:$0x11]
  %v5394 = vunpack.c.l.b16 %v5332
  %v5395 = vunpack.c.h.b16 %v5332
  %v5396 = vunpack.c.l.b16 %v5333
  %v5397 = vunpack.c.h.b16 %v5333
  %v5398 = vunpack.c.l.b16 %v5334
  %v5399 = vunpack.c.h.b16 %v5334
  %v5400 = vunpack.c.l.b16 %v5335
  %v5401 = vunpack.c.h.b16 %v5335
  %v5402 = vunpack.c.l.b16 %v5336
  %v5403 = vunpack.c.h.b16 %v5336
  %v5404 = vunpack.c.l.b16 %v5337
  %v5405 = vunpack.c.h.b16 %v5337
  %v5406 = vunpack.c.l.b16 %v5338
  %v5407 = vunpack.c.h.b16 %v5338
  %v5408 = vunpack.c.l.b16 %v5339
  %v5409 = vunpack.c.h.b16 %v5339
  %v5410 = vunpack.c.l.b16 %v5340
  %v5411 = vunpack.c.h.b16 %v5340
  %v5412 = vunpack.c.l.b16 %v5341
  %v5413 = vunpack.c.h.b16 %v5341
  %v5414 = vunpack.c.l.b16 %v5342
  %v5415 = vunpack.c.h.b16 %v5342
  %v5416 = vunpack.c.l.b16 %v5343
  %v5417 = vunpack.c.h.b16 %v5343
  %v5418 = vunpack.c.l.b16 %v5344
  %v5419 = vunpack.c.h.b16 %v5344
  %v5420 = vunpack.c.l.b16 %v5345
  %v5421 = vunpack.c.h.b16 %v5345
  %v5422 = vunpack.c.l.b16 %v5346
  %v5423 = vunpack.c.h.b16 %v5346
  %v5424 = vunpack.c.l.b16 %v5347
  %v5425 = vunpack.c.h.b16 %v5347
  %v5426 = vunpack.c.l.b16 %v5348
  %v5427 = vunpack.c.h.b16 %v5348
  %v5428 = vunpack.c.l.b16 %v5349
  %v5429 = vunpack.c.h.b16 %v5349
  %v5430 = vunpack.c.l.b16 %v5350
  %v5431 = vunpack.c.h.b16 %v5350
  %v5432 = vunpack.c.l.b16 %v5351
  %v5433 = vunpack.c.h.b16 %v5351
  %v5434 = vpack.c.b16 %v5396, %v5394
  %v5435 = vpack.c.b16 %v5397, %v5395
  %v5436 = vpack.c.b16 %v5400, %v5398
  %v5437 = vpack.c.b16 %v5401, %v5399
  %v5438 = vpack.c.b16 %v5404, %v5402
  %v5439 = vpack.c.b16 %v5405, %v5403
  %v5440 = vpack.c.b16 %v5408, %v5406
  %v5441 = vpack.c.b16 %v5409, %v5407
  %v5442 = vpack.c.b16 %v5412, %v5410
  %v5443 = vpack.c.b16 %v5413, %v5411
  %v5444 = vpack.c.b16 %v5416, %v5414
  %v5445 = vpack.c.b16 %v5417, %v5415
  %v5446 = vpack.c.b16 %v5420, %v5418
  %v5447 = vpack.c.b16 %v5421, %v5419
  %v5448 = vpack.c.b16 %v5424, %v5422
  %v5449 = vpack.c.b16 %v5425, %v5423
  %v5450 = vpack.c.b16 %v5428, %v5426
  %v5451 = vpack.c.b16 %v5429, %v5427
  %v5452 = vpack.c.b16 %v5432, %v5430
  %v5453 = vpack.c.b16 %v5433, %v5431
  %v5485 = vunpack.c.l.b16 %v5353
  %v5486 = vunpack.c.h.b16 %v5353
  %v5487 = vunpack.c.l.b16 %v5354
  %v5488 = vunpack.c.h.b16 %v5354
  %v5489 = vunpack.c.l.b16 %v5355
  %v5490 = vunpack.c.h.b16 %v5355
  %v5491 = vunpack.c.l.b16 %v5356
  %v5492 = vunpack.c.h.b16 %v5356
  %v5493 = vunpack.c.l.b16 %v5357
  %v5494 = vunpack.c.h.b16 %v5357
  %v5495 = vunpack.c.l.b16 %v5358
  %v5496 = vunpack.c.h.b16 %v5358
  %v5497 = vunpack.c.l.b16 %v5359
  %v5498 = vunpack.c.h.b16 %v5359
  %v5499 = vunpack.c.l.b16 %v5360
  %v5500 = vunpack.c.h.b16 %v5360
  %v5501 = vunpack.c.l.b16 %v5361
  %v5502 = vunpack.c.h.b16 %v5361
  %v5503 = vunpack.c.l.b16 %v5362
  %v5504 = vunpack.c.h.b16 %v5362
  %v5505 = vunpack.c.l.b16 %v5363
  %v5506 = vunpack.c.h.b16 %v5363
  %v5507 = vunpack.c.l.b16 %v5364
  %v5508 = vunpack.c.h.b16 %v5364
  %v5509 = vunpack.c.l.b16 %v5365
  %v5510 = vunpack.c.h.b16 %v5365
  %v5511 = vunpack.c.l.b16 %v5366
  %v5512 = vunpack.c.h.b16 %v5366
  %v5513 = vunpack.c.l.b16 %v5367
  %v5514 = vunpack.c.h.b16 %v5367
  %v5515 = vunpack.c.l.b16 %v5368
  %v5516 = vunpack.c.h.b16 %v5368
  %v5517 = vunpack.c.l.b16 %v5369
  %v5518 = vunpack.c.h.b16 %v5369
  %v5519 = vunpack.c.l.b16 %v5370
  %v5520 = vunpack.c.h.b16 %v5370
  %v5521 = vunpack.c.l.b16 %v5371
  %v5522 = vunpack.c.h.b16 %v5371
  %v5523 = vunpack.c.l.b16 %v5372
  %v5524 = vunpack.c.h.b16 %v5372
  %v5525 = vunpack.c.l.b16 %v5373
  %v5526 = vunpack.c.h.b16 %v5373
  %v5527 = vpack.c.b16 %v5487, %v5485
  %v5528 = vpack.c.b16 %v5488, %v5486
  %v5529 = vpack.c.b16 %v5491, %v5489
  %v5530 = vpack.c.b16 %v5492, %v5490
  %v5531 = vpack.c.b16 %v5495, %v5493
  %v5532 = vpack.c.b16 %v5496, %v5494
  %v5533 = vpack.c.b16 %v5499, %v5497
  %v5534 = vpack.c.b16 %v5500, %v5498
  %v5535 = vpack.c.b16 %v5503, %v5501
  %v5536 = vpack.c.b16 %v5504, %v5502
  %v5537 = vpack.c.b16 %v5507, %v5505
  %v5538 = vpack.c.b16 %v5508, %v5506
  %v5539 = vpack.c.b16 %v5511, %v5509
  %v5540 = vpack.c.b16 %v5512, %v5510
  %v5541 = vpack.c.b16 %v5515, %v5513
  %v5542 = vpack.c.b16 %v5516, %v5514
  %v5543 = vpack.c.b16 %v5519, %v5517
  %v5544 = vpack.c.b16 %v5520, %v5518
  %v5545 = vpack.c.b16 %v5523, %v5521
  %v5546 = vpack.c.b16 %v5524, %v5522
  %v5547 = vpack.c.b16 %v5525, %v5525
  %v5548 = vpack.c.b16 %v5526, %v5526
  %v5570 = vsel %vm4150, %v5435, 0
  %v5573 = vsel %vm4150, %v5437, 0
  %v5576 = vsel %vm4150, %v5439, 0
  %v5579 = vsel %vm4150, %v5441, 0
  %v5582 = vsel %vm4150, %v5443, 0
  %v5585 = vsel %vm4150, %v5445, 0
  %v5588 = vsel %vm4150, %v5447, 0
  %v5591 = vsel %vm4150, %v5449, 0
  %v5594 = vsel %vm4150, %v5451, 0
  %v5597 = vsel %vm4150, %v5453, 0
  %v5600 = vsel %vm4181, %v5547, 0
  %v5603 = vsel %vm4181, %v5548, 0
  %5605 = vmatpush.bf16.msra.mxu0 %v5541
  %5606 = vmatpush.bf16.msra.mxu0 %v5539
  %5607 = vmatpush.bf16.msra.mxu0 %v5537
  %5608 = vmatpush.bf16.msra.mxu0 %v5535
  %5609 = vmatpush.bf16.msra.mxu0 %v5533
  %5610 = vmatpush.bf16.msra.mxu0 %v5531
  %5611 = vmatpush.bf16.msra.mxu0 %v5529
  %5612 = vmatpush.bf16.msra.mxu0 %v5527
  %5613 = vmatmul.bf16.gmra.mxu0 %v5434
  %v5614 = vpop.f32.mrf.mxu0
  %v5615 = vadd.f32 0.0, %v5614
  %v5616 = vpop.f32.mrf.mxu0
  %v5617 = vadd.f32 0.0, %v5616
  %5618 = vmatmul.bf16.gmra.mxu0 %v5436
  %v5619 = vpop.f32.mrf.mxu0
  %v5620 = vadd.f32 0.0, %v5619
  %v5621 = vpop.f32.mrf.mxu0
  %v5622 = vadd.f32 0.0, %v5621
  %5623 = vmatmul.bf16.gmra.mxu0 %v5438
  %v5624 = vpop.f32.mrf.mxu0
  %v5625 = vadd.f32 0.0, %v5624
  %v5626 = vpop.f32.mrf.mxu0
  %v5627 = vadd.f32 0.0, %v5626
  %5628 = vmatmul.bf16.gmra.mxu0 %v5440
  %v5629 = vpop.f32.mrf.mxu0
  %v5630 = vadd.f32 0.0, %v5629
  %v5631 = vpop.f32.mrf.mxu0
  %v5632 = vadd.f32 0.0, %v5631
  %5633 = vmatmul.bf16.gmra.mxu0 %v5442
  %v5634 = vpop.f32.mrf.mxu0
  %v5635 = vadd.f32 0.0, %v5634
  %v5636 = vpop.f32.mrf.mxu0
  %v5637 = vadd.f32 0.0, %v5636
  %5638 = vmatmul.bf16.gmra.mxu0 %v5444
  %v5639 = vpop.f32.mrf.mxu0
  %v5640 = vadd.f32 0.0, %v5639
  %v5641 = vpop.f32.mrf.mxu0
  %v5642 = vadd.f32 0.0, %v5641
  %5643 = vmatmul.bf16.gmra.mxu0 %v5446
  %v5644 = vpop.f32.mrf.mxu0
  %v5645 = vadd.f32 0.0, %v5644
  %v5646 = vpop.f32.mrf.mxu0
  %v5647 = vadd.f32 0.0, %v5646
  %5648 = vmatmul.bf16.gmra.mxu0 %v5448
  %v5649 = vpop.f32.mrf.mxu0
  %v5650 = vadd.f32 0.0, %v5649
  %v5651 = vpop.f32.mrf.mxu0
  %v5652 = vadd.f32 0.0, %v5651
  %5653 = vmatmul.bf16.gmra.mxu0 %v5450
  %v5654 = vpop.f32.mrf.mxu0
  %v5655 = vadd.f32 0.0, %v5654
  %v5656 = vpop.f32.mrf.mxu0
  %v5657 = vadd.f32 0.0, %v5656
  %5658 = vmatmul.bf16.gmra.mxu0 %v5452
  %v5659 = vpop.f32.mrf.mxu0
  %v5660 = vadd.f32 0.0, %v5659
  %v5661 = vpop.f32.mrf.mxu0
  %v5662 = vadd.f32 0.0, %v5661
  %5663 = vdwg.mxu0
  %5664 = vmatpush.bf16.msra.mxu0 0
  %5665 = vmatpush.bf16.msra.mxu0 0
  %5666 = vmatpush.bf16.msra.mxu0 0
  %5667 = vmatpush.bf16.msra.mxu0 0
  %5668 = vmatpush.bf16.msra.mxu0 0
  %5669 = vmatpush.bf16.msra.mxu0 %v5600
  %5670 = vmatpush.bf16.msra.mxu0 %v5545
  %5671 = vmatpush.bf16.msra.mxu0 %v5543
  %5672 = vmatmul.bf16.gmra.mxu0 %v5570
  %v5673 = vpop.f32.mrf.mxu0
  %v5674 = vadd.f32 %v5615, %v5673
  %v5675 = vpop.f32.mrf.mxu0
  %v5676 = vadd.f32 %v5617, %v5675
  %5677 = vmatmul.bf16.gmra.mxu0 %v5573
  %v5678 = vpop.f32.mrf.mxu0
  %v5679 = vadd.f32 %v5620, %v5678
  %v5680 = vpop.f32.mrf.mxu0
  %v5681 = vadd.f32 %v5622, %v5680
  %5682 = vmatmul.bf16.gmra.mxu0 %v5576
  %v5683 = vpop.f32.mrf.mxu0
  %v5684 = vadd.f32 %v5625, %v5683
  %v5685 = vpop.f32.mrf.mxu0
  %v5686 = vadd.f32 %v5627, %v5685
  %5687 = vmatmul.bf16.gmra.mxu0 %v5579
  %v5688 = vpop.f32.mrf.mxu0
  %v5689 = vadd.f32 %v5630, %v5688
  %v5690 = vpop.f32.mrf.mxu0
  %v5691 = vadd.f32 %v5632, %v5690
  %5692 = vmatmul.bf16.gmra.mxu0 %v5582
  %v5693 = vpop.f32.mrf.mxu0
  %v5694 = vadd.f32 %v5635, %v5693
  %v5695 = vpop.f32.mrf.mxu0
  %v5696 = vadd.f32 %v5637, %v5695
  %5697 = vmatmul.bf16.gmra.mxu0 %v5585
  %v5698 = vpop.f32.mrf.mxu0
  %v5699 = vadd.f32 %v5640, %v5698
  %v5700 = vpop.f32.mrf.mxu0
  %v5701 = vadd.f32 %v5642, %v5700
  %5702 = vmatmul.bf16.gmra.mxu0 %v5588
  %v5703 = vpop.f32.mrf.mxu0
  %v5704 = vadd.f32 %v5645, %v5703
  %v5705 = vpop.f32.mrf.mxu0
  %v5706 = vadd.f32 %v5647, %v5705
  %5707 = vmatmul.bf16.gmra.mxu0 %v5591
  %v5708 = vpop.f32.mrf.mxu0
  %v5709 = vadd.f32 %v5650, %v5708
  %v5710 = vpop.f32.mrf.mxu0
  %v5711 = vadd.f32 %v5652, %v5710
  %5712 = vmatmul.bf16.gmra.mxu0 %v5594
  %v5713 = vpop.f32.mrf.mxu0
  %v5714 = vadd.f32 %v5655, %v5713
  %v5715 = vpop.f32.mrf.mxu0
  %v5716 = vadd.f32 %v5657, %v5715
  %5717 = vmatmul.bf16.gmra.mxu0 %v5597
  %v5718 = vpop.f32.mrf.mxu0
  %v5719 = vadd.f32 %v5660, %v5718
  %v5720 = vpop.f32.mrf.mxu0
  %v5721 = vadd.f32 %v5662, %v5720
  %5722 = vdwg.mxu0
  %5723 = vmatpush.bf16.msra.mxu0 %v5542
  %5724 = vmatpush.bf16.msra.mxu0 %v5540
  %5725 = vmatpush.bf16.msra.mxu0 %v5538
  %5726 = vmatpush.bf16.msra.mxu0 %v5536
  %5727 = vmatpush.bf16.msra.mxu0 %v5534
  %5728 = vmatpush.bf16.msra.mxu0 %v5532
  %5729 = vmatpush.bf16.msra.mxu0 %v5530
  %5730 = vmatpush.bf16.msra.mxu0 %v5528
  %5731 = vmatmul.bf16.gmra.mxu0 %v5434
  %v5732 = vpop.f32.mrf.mxu0
  %v5733 = vadd.f32 0.0, %v5732
  %v5734 = vpop.f32.mrf.mxu0
  %v5735 = vadd.f32 0.0, %v5734
  %5736 = vmatmul.bf16.gmra.mxu0 %v5436
  %v5737 = vpop.f32.mrf.mxu0
  %v5738 = vadd.f32 0.0, %v5737
  %v5739 = vpop.f32.mrf.mxu0
  %v5740 = vadd.f32 0.0, %v5739
  %5741 = vmatmul.bf16.gmra.mxu0 %v5438
  %v5742 = vpop.f32.mrf.mxu0
  %v5743 = vadd.f32 0.0, %v5742
  %v5744 = vpop.f32.mrf.mxu0
  %v5745 = vadd.f32 0.0, %v5744
  %5746 = vmatmul.bf16.gmra.mxu0 %v5440
  %v5747 = vpop.f32.mrf.mxu0
  %v5748 = vadd.f32 0.0, %v5747
  %v5749 = vpop.f32.mrf.mxu0
  %v5750 = vadd.f32 0.0, %v5749
  %5751 = vmatmul.bf16.gmra.mxu0 %v5442
  %v5752 = vpop.f32.mrf.mxu0
  %v5753 = vadd.f32 0.0, %v5752
  %v5754 = vpop.f32.mrf.mxu0
  %v5755 = vadd.f32 0.0, %v5754
  %5756 = vmatmul.bf16.gmra.mxu0 %v5444
  %v5757 = vpop.f32.mrf.mxu0
  %v5758 = vadd.f32 0.0, %v5757
  %v5759 = vpop.f32.mrf.mxu0
  %v5760 = vadd.f32 0.0, %v5759
  %5761 = vmatmul.bf16.gmra.mxu0 %v5446
  %v5762 = vpop.f32.mrf.mxu0
  %v5763 = vadd.f32 0.0, %v5762
  %v5764 = vpop.f32.mrf.mxu0
  %v5765 = vadd.f32 0.0, %v5764
  %5766 = vmatmul.bf16.gmra.mxu0 %v5448
  %v5767 = vpop.f32.mrf.mxu0
  %v5768 = vadd.f32 0.0, %v5767
  %v5769 = vpop.f32.mrf.mxu0
  %v5770 = vadd.f32 0.0, %v5769
  %5771 = vmatmul.bf16.gmra.mxu0 %v5450
  %v5772 = vpop.f32.mrf.mxu0
  %v5773 = vadd.f32 0.0, %v5772
  %v5774 = vpop.f32.mrf.mxu0
  %v5775 = vadd.f32 0.0, %v5774
  %5776 = vmatmul.bf16.gmra.mxu0 %v5452
  %v5777 = vpop.f32.mrf.mxu0
  %v5778 = vadd.f32 0.0, %v5777
  %v5779 = vpop.f32.mrf.mxu0
  %v5780 = vadd.f32 0.0, %v5779
  %5781 = vdwg.mxu0
  %5782 = vmatpush.bf16.msra.mxu0 0
  %5783 = vmatpush.bf16.msra.mxu0 0
  %5784 = vmatpush.bf16.msra.mxu0 0
  %5785 = vmatpush.bf16.msra.mxu0 0
  %5786 = vmatpush.bf16.msra.mxu0 0
  %5787 = vmatpush.bf16.msra.mxu0 %v5603
  %5788 = vmatpush.bf16.msra.mxu0 %v5546
  %5789 = vmatpush.bf16.msra.mxu0 %v5544
  %5790 = vmatmul.bf16.gmra.mxu0 %v5570
  %v5791 = vpop.f32.mrf.mxu0
  %v5792 = vadd.f32 %v5733, %v5791
  %v5793 = vpop.f32.mrf.mxu0
  %v5794 = vadd.f32 %v5735, %v5793
  %5795 = vmatmul.bf16.gmra.mxu0 %v5573
  %v5796 = vpop.f32.mrf.mxu0
  %v5797 = vadd.f32 %v5738, %v5796
  %v5798 = vpop.f32.mrf.mxu0
  %v5799 = vadd.f32 %v5740, %v5798
  %5800 = vmatmul.bf16.gmra.mxu0 %v5576
  %v5801 = vpop.f32.mrf.mxu0
  %v5802 = vadd.f32 %v5743, %v5801
  %v5803 = vpop.f32.mrf.mxu0
  %v5804 = vadd.f32 %v5745, %v5803
  %5805 = vmatmul.bf16.gmra.mxu0 %v5579
  %v5806 = vpop.f32.mrf.mxu0
  %v5807 = vadd.f32 %v5748, %v5806
  %v5808 = vpop.f32.mrf.mxu0
  %v5809 = vadd.f32 %v5750, %v5808
  %5810 = vmatmul.bf16.gmra.mxu0 %v5582
  %v5811 = vpop.f32.mrf.mxu0
  %v5812 = vadd.f32 %v5753, %v5811
  %v5813 = vpop.f32.mrf.mxu0
  %v5814 = vadd.f32 %v5755, %v5813
  %5815 = vmatmul.bf16.gmra.mxu0 %v5585
  %v5816 = vpop.f32.mrf.mxu0
  %v5817 = vadd.f32 %v5758, %v5816
  %v5818 = vpop.f32.mrf.mxu0
  %v5819 = vadd.f32 %v5760, %v5818
  %5820 = vmatmul.bf16.gmra.mxu0 %v5588
  %v5821 = vpop.f32.mrf.mxu0
  %v5822 = vadd.f32 %v5763, %v5821
  %v5823 = vpop.f32.mrf.mxu0
  %v5824 = vadd.f32 %v5765, %v5823
  %5825 = vmatmul.bf16.gmra.mxu0 %v5591
  %v5826 = vpop.f32.mrf.mxu0
  %v5827 = vadd.f32 %v5768, %v5826
  %v5828 = vpop.f32.mrf.mxu0
  %v5829 = vadd.f32 %v5770, %v5828
  %5830 = vmatmul.bf16.gmra.mxu0 %v5594
  %v5831 = vpop.f32.mrf.mxu0
  %v5832 = vadd.f32 %v5773, %v5831
  %v5833 = vpop.f32.mrf.mxu0
  %v5834 = vadd.f32 %v5775, %v5833
  %5835 = vmatmul.bf16.gmra.mxu0 %v5597
  %v5836 = vpop.f32.mrf.mxu0
  %v5837 = vadd.f32 %v5778, %v5836
  %v5838 = vpop.f32.mrf.mxu0
  %v5839 = vadd.f32 %v5780, %v5838
  %5840 = vdwg.mxu0
  %v5841 = vadd.f32 %v5292, %v5674
  %v5842 = vadd.f32 %v5293, %v5792
  %v5843 = vadd.f32 %v5294, %v5676
  %v5844 = vadd.f32 %v5295, %v5794
  %v5845 = vadd.f32 %v5296, %v5679
  %v5846 = vadd.f32 %v5297, %v5797
  %v5847 = vadd.f32 %v5298, %v5681
  %v5848 = vadd.f32 %v5299, %v5799
  %v5849 = vadd.f32 %v5300, %v5684
  %v5850 = vadd.f32 %v5301, %v5802
  %v5851 = vadd.f32 %v5302, %v5686
  %v5852 = vadd.f32 %v5303, %v5804
  %v5853 = vadd.f32 %v5304, %v5689
  %v5854 = vadd.f32 %v5305, %v5807
  %v5855 = vadd.f32 %v5306, %v5691
  %v5856 = vadd.f32 %v5307, %v5809
  %v5857 = vadd.f32 %v5308, %v5694
  %v5858 = vadd.f32 %v5309, %v5812
  %v5859 = vadd.f32 %v5310, %v5696
  %v5860 = vadd.f32 %v5311, %v5814
  %v5861 = vadd.f32 %v5312, %v5699
  %v5862 = vadd.f32 %v5313, %v5817
  %v5863 = vadd.f32 %v5314, %v5701
  %v5864 = vadd.f32 %v5315, %v5819
  %v5865 = vadd.f32 %v5316, %v5704
  %v5866 = vadd.f32 %v5317, %v5822
  %v5867 = vadd.f32 %v5318, %v5706
  %v5868 = vadd.f32 %v5319, %v5824
  %v5869 = vadd.f32 %v5320, %v5709
  %v5870 = vadd.f32 %v5321, %v5827
  %v5871 = vadd.f32 %v5322, %v5711
  %v5872 = vadd.f32 %v5323, %v5829
  %v5873 = vadd.f32 %v5324, %v5714
  %v5874 = vadd.f32 %v5325, %v5832
  %v5875 = vadd.f32 %v5326, %v5716
  %v5876 = vadd.f32 %v5327, %v5834
  %v5877 = vadd.f32 %v5328, %v5719
  %v5878 = vadd.f32 %v5329, %v5837
  %v5879 = vadd.f32 %v5330, %v5721
  %v5880 = vadd.f32 %v5331, %v5839
  %v5881 = vld [vmem:[#allocation2 + $0x40] sm:$0xff]
  %v5882 = vld [vmem:[#allocation2 + $0x48] sm:$0xff]
  %v5883 = vld [vmem:[#allocation2 + $0x50] sm:$0xff]
  %v5884 = vld [vmem:[#allocation2 + $0x58] sm:$0xff]
  %v5885 = vld [vmem:[#allocation2 + $0x60] sm:$0xff]
  %v5886 = vld [vmem:[#allocation2 + $0x68] sm:$0xff]
  %v5887 = vld [vmem:[#allocation2 + $0x70] sm:$0xff]
  %v5888 = vld [vmem:[#allocation2 + $0x78] sm:$0xff]
  %v5889 = vld [vmem:[#allocation2 + $0x80] sm:$0xff]
  %v5890 = vld [vmem:[#allocation2 + $0x88] sm:$0xff]
  %v5891 = vld [vmem:[#allocation2 + $0x90] sm:$0xff]
  %v5892 = vld [vmem:[#allocation2 + $0x98] sm:$0xff]
  %v5893 = vld [vmem:[#allocation2 + $0xa0] sm:$0xff]
  %v5894 = vld [vmem:[#allocation2 + $0xa8] sm:$0xff]
  %v5895 = vld [vmem:[#allocation2 + $0xb0] sm:$0xff]
  %v5896 = vld [vmem:[#allocation2 + $0xb8] sm:$0xff]
  %v5897 = vld [vmem:[#allocation2 + $0xc0] sm:$0xff]
  %v5898 = vld [vmem:[#allocation2 + $0xc8] sm:$0xff]
  %v5899 = vld [vmem:[#allocation2 + $0xd0] sm:$0xff]
  %v5900 = vld [vmem:[#allocation2 + $0xd8] sm:$0xff]
  %s5901 = scalar_lea.vmem %s3, 672
  %v5902 = vld [vmem:[%s5901] sm:$0xff]
  %v5903 = vld [vmem:[%s5901 + $0x8] sm:$0xff]
  %v5904 = vld [vmem:[%s5901 + $0x10] sm:$0xff]
  %v5905 = vld [vmem:[%s5901 + $0x18] sm:$0xff]
  %v5906 = vld [vmem:[%s5901 + $0x20] sm:$0xff]
  %v5907 = vld [vmem:[%s5901 + $0x28] sm:$0xff]
  %v5908 = vld [vmem:[%s5901 + $0x30] sm:$0xff]
  %v5909 = vld [vmem:[%s5901 + $0x38] sm:$0xff]
  %v5910 = vld [vmem:[%s5901 + $0x40] sm:$0xff]
  %v5911 = vld [vmem:[%s5901 + $0x48] sm:$0xff]
  %v5912 = vld [vmem:[%s5901 + $0x50] sm:$0xff]
  %v5913 = vld [vmem:[%s5901 + $0x58] sm:$0xff]
  %v5914 = vld [vmem:[%s5901 + $0x60] sm:$0xff]
  %v5915 = vld [vmem:[%s5901 + $0x68] sm:$0xff]
  %v5916 = vld [vmem:[%s5901 + $0x70] sm:$0xff]
  %v5917 = vld [vmem:[%s5901 + $0x78] sm:$0xff]
  %v5918 = vld [vmem:[%s5901 + $0x80] sm:$0xff]
  %v5919 = vld [vmem:[%s5901 + $0x88] sm:$0xff]
  %v5920 = vld [vmem:[%s5901 + $0x90] sm:$0xff]
  %v5921 = vld [vmem:[%s5901 + $0x98] sm:$0xff]
  %v5922 = vld [vmem:[%s5901 + $0xa0] sm:$0x11]
  %v5943 = vunpack.c.l.b16 %v5881
  %v5944 = vunpack.c.h.b16 %v5881
  %v5945 = vunpack.c.l.b16 %v5882
  %v5946 = vunpack.c.h.b16 %v5882
  %v5947 = vunpack.c.l.b16 %v5883
  %v5948 = vunpack.c.h.b16 %v5883
  %v5949 = vunpack.c.l.b16 %v5884
  %v5950 = vunpack.c.h.b16 %v5884
  %v5951 = vunpack.c.l.b16 %v5885
  %v5952 = vunpack.c.h.b16 %v5885
  %v5953 = vunpack.c.l.b16 %v5886
  %v5954 = vunpack.c.h.b16 %v5886
  %v5955 = vunpack.c.l.b16 %v5887
  %v5956 = vunpack.c.h.b16 %v5887
  %v5957 = vunpack.c.l.b16 %v5888
  %v5958 = vunpack.c.h.b16 %v5888
  %v5959 = vunpack.c.l.b16 %v5889
  %v5960 = vunpack.c.h.b16 %v5889
  %v5961 = vunpack.c.l.b16 %v5890
  %v5962 = vunpack.c.h.b16 %v5890
  %v5963 = vunpack.c.l.b16 %v5891
  %v5964 = vunpack.c.h.b16 %v5891
  %v5965 = vunpack.c.l.b16 %v5892
  %v5966 = vunpack.c.h.b16 %v5892
  %v5967 = vunpack.c.l.b16 %v5893
  %v5968 = vunpack.c.h.b16 %v5893
  %v5969 = vunpack.c.l.b16 %v5894
  %v5970 = vunpack.c.h.b16 %v5894
  %v5971 = vunpack.c.l.b16 %v5895
  %v5972 = vunpack.c.h.b16 %v5895
  %v5973 = vunpack.c.l.b16 %v5896
  %v5974 = vunpack.c.h.b16 %v5896
  %v5975 = vunpack.c.l.b16 %v5897
  %v5976 = vunpack.c.h.b16 %v5897
  %v5977 = vunpack.c.l.b16 %v5898
  %v5978 = vunpack.c.h.b16 %v5898
  %v5979 = vunpack.c.l.b16 %v5899
  %v5980 = vunpack.c.h.b16 %v5899
  %v5981 = vunpack.c.l.b16 %v5900
  %v5982 = vunpack.c.h.b16 %v5900
  %v5983 = vpack.c.b16 %v5945, %v5943
  %v5984 = vpack.c.b16 %v5946, %v5944
  %v5985 = vpack.c.b16 %v5949, %v5947
  %v5986 = vpack.c.b16 %v5950, %v5948
  %v5987 = vpack.c.b16 %v5953, %v5951
  %v5988 = vpack.c.b16 %v5954, %v5952
  %v5989 = vpack.c.b16 %v5957, %v5955
  %v5990 = vpack.c.b16 %v5958, %v5956
  %v5991 = vpack.c.b16 %v5961, %v5959
  %v5992 = vpack.c.b16 %v5962, %v5960
  %v5993 = vpack.c.b16 %v5965, %v5963
  %v5994 = vpack.c.b16 %v5966, %v5964
  %v5995 = vpack.c.b16 %v5969, %v5967
  %v5996 = vpack.c.b16 %v5970, %v5968
  %v5997 = vpack.c.b16 %v5973, %v5971
  %v5998 = vpack.c.b16 %v5974, %v5972
  %v5999 = vpack.c.b16 %v5977, %v5975
  %v6000 = vpack.c.b16 %v5978, %v5976
  %v6001 = vpack.c.b16 %v5981, %v5979
  %v6002 = vpack.c.b16 %v5982, %v5980
  %v6034 = vunpack.c.l.b16 %v5902
  %v6035 = vunpack.c.h.b16 %v5902
  %v6036 = vunpack.c.l.b16 %v5903
  %v6037 = vunpack.c.h.b16 %v5903
  %v6038 = vunpack.c.l.b16 %v5904
  %v6039 = vunpack.c.h.b16 %v5904
  %v6040 = vunpack.c.l.b16 %v5905
  %v6041 = vunpack.c.h.b16 %v5905
  %v6042 = vunpack.c.l.b16 %v5906
  %v6043 = vunpack.c.h.b16 %v5906
  %v6044 = vunpack.c.l.b16 %v5907
  %v6045 = vunpack.c.h.b16 %v5907
  %v6046 = vunpack.c.l.b16 %v5908
  %v6047 = vunpack.c.h.b16 %v5908
  %v6048 = vunpack.c.l.b16 %v5909
  %v6049 = vunpack.c.h.b16 %v5909
  %v6050 = vunpack.c.l.b16 %v5910
  %v6051 = vunpack.c.h.b16 %v5910
  %v6052 = vunpack.c.l.b16 %v5911
  %v6053 = vunpack.c.h.b16 %v5911
  %v6054 = vunpack.c.l.b16 %v5912
  %v6055 = vunpack.c.h.b16 %v5912
  %v6056 = vunpack.c.l.b16 %v5913
  %v6057 = vunpack.c.h.b16 %v5913
  %v6058 = vunpack.c.l.b16 %v5914
  %v6059 = vunpack.c.h.b16 %v5914
  %v6060 = vunpack.c.l.b16 %v5915
  %v6061 = vunpack.c.h.b16 %v5915
  %v6062 = vunpack.c.l.b16 %v5916
  %v6063 = vunpack.c.h.b16 %v5916
  %v6064 = vunpack.c.l.b16 %v5917
  %v6065 = vunpack.c.h.b16 %v5917
  %v6066 = vunpack.c.l.b16 %v5918
  %v6067 = vunpack.c.h.b16 %v5918
  %v6068 = vunpack.c.l.b16 %v5919
  %v6069 = vunpack.c.h.b16 %v5919
  %v6070 = vunpack.c.l.b16 %v5920
  %v6071 = vunpack.c.h.b16 %v5920
  %v6072 = vunpack.c.l.b16 %v5921
  %v6073 = vunpack.c.h.b16 %v5921
  %v6074 = vunpack.c.l.b16 %v5922
  %v6075 = vunpack.c.h.b16 %v5922
  %v6076 = vpack.c.b16 %v6036, %v6034
  %v6077 = vpack.c.b16 %v6037, %v6035
  %v6078 = vpack.c.b16 %v6040, %v6038
  %v6079 = vpack.c.b16 %v6041, %v6039
  %v6080 = vpack.c.b16 %v6044, %v6042
  %v6081 = vpack.c.b16 %v6045, %v6043
  %v6082 = vpack.c.b16 %v6048, %v6046
  %v6083 = vpack.c.b16 %v6049, %v6047
  %v6084 = vpack.c.b16 %v6052, %v6050
  %v6085 = vpack.c.b16 %v6053, %v6051
  %v6086 = vpack.c.b16 %v6056, %v6054
  %v6087 = vpack.c.b16 %v6057, %v6055
  %v6088 = vpack.c.b16 %v6060, %v6058
  %v6089 = vpack.c.b16 %v6061, %v6059
  %v6090 = vpack.c.b16 %v6064, %v6062
  %v6091 = vpack.c.b16 %v6065, %v6063
  %v6092 = vpack.c.b16 %v6068, %v6066
  %v6093 = vpack.c.b16 %v6069, %v6067
  %v6094 = vpack.c.b16 %v6072, %v6070
  %v6095 = vpack.c.b16 %v6073, %v6071
  %v6096 = vpack.c.b16 %v6074, %v6074
  %v6097 = vpack.c.b16 %v6075, %v6075
  %v6119 = vsel %vm4150, %v5984, 0
  %v6122 = vsel %vm4150, %v5986, 0
  %v6125 = vsel %vm4150, %v5988, 0
  %v6128 = vsel %vm4150, %v5990, 0
  %v6131 = vsel %vm4150, %v5992, 0
  %v6134 = vsel %vm4150, %v5994, 0
  %v6137 = vsel %vm4150, %v5996, 0
  %v6140 = vsel %vm4150, %v5998, 0
  %v6143 = vsel %vm4150, %v6000, 0
  %v6146 = vsel %vm4150, %v6002, 0
  %v6149 = vsel %vm4181, %v6096, 0
  %v6152 = vsel %vm4181, %v6097, 0
  %6154 = vmatpush.bf16.msra.mxu0 %v6090
  %6155 = vmatpush.bf16.msra.mxu0 %v6088
  %6156 = vmatpush.bf16.msra.mxu0 %v6086
  %6157 = vmatpush.bf16.msra.mxu0 %v6084
  %6158 = vmatpush.bf16.msra.mxu0 %v6082
  %6159 = vmatpush.bf16.msra.mxu0 %v6080
  %6160 = vmatpush.bf16.msra.mxu0 %v6078
  %6161 = vmatpush.bf16.msra.mxu0 %v6076
  %6162 = vmatmul.bf16.gmra.mxu0 %v5983
  %v6163 = vpop.f32.mrf.mxu0
  %v6164 = vadd.f32 0.0, %v6163
  %v6165 = vpop.f32.mrf.mxu0
  %v6166 = vadd.f32 0.0, %v6165
  %6167 = vmatmul.bf16.gmra.mxu0 %v5985
  %v6168 = vpop.f32.mrf.mxu0
  %v6169 = vadd.f32 0.0, %v6168
  %v6170 = vpop.f32.mrf.mxu0
  %v6171 = vadd.f32 0.0, %v6170
  %6172 = vmatmul.bf16.gmra.mxu0 %v5987
  %v6173 = vpop.f32.mrf.mxu0
  %v6174 = vadd.f32 0.0, %v6173
  %v6175 = vpop.f32.mrf.mxu0
  %v6176 = vadd.f32 0.0, %v6175
  %6177 = vmatmul.bf16.gmra.mxu0 %v5989
  %v6178 = vpop.f32.mrf.mxu0
  %v6179 = vadd.f32 0.0, %v6178
  %v6180 = vpop.f32.mrf.mxu0
  %v6181 = vadd.f32 0.0, %v6180
  %6182 = vmatmul.bf16.gmra.mxu0 %v5991
  %v6183 = vpop.f32.mrf.mxu0
  %v6184 = vadd.f32 0.0, %v6183
  %v6185 = vpop.f32.mrf.mxu0
  %v6186 = vadd.f32 0.0, %v6185
  %6187 = vmatmul.bf16.gmra.mxu0 %v5993
  %v6188 = vpop.f32.mrf.mxu0
  %v6189 = vadd.f32 0.0, %v6188
  %v6190 = vpop.f32.mrf.mxu0
  %v6191 = vadd.f32 0.0, %v6190
  %6192 = vmatmul.bf16.gmra.mxu0 %v5995
  %v6193 = vpop.f32.mrf.mxu0
  %v6194 = vadd.f32 0.0, %v6193
  %v6195 = vpop.f32.mrf.mxu0
  %v6196 = vadd.f32 0.0, %v6195
  %6197 = vmatmul.bf16.gmra.mxu0 %v5997
  %v6198 = vpop.f32.mrf.mxu0
  %v6199 = vadd.f32 0.0, %v6198
  %v6200 = vpop.f32.mrf.mxu0
  %v6201 = vadd.f32 0.0, %v6200
  %6202 = vmatmul.bf16.gmra.mxu0 %v5999
  %v6203 = vpop.f32.mrf.mxu0
  %v6204 = vadd.f32 0.0, %v6203
  %v6205 = vpop.f32.mrf.mxu0
  %v6206 = vadd.f32 0.0, %v6205
  %6207 = vmatmul.bf16.gmra.mxu0 %v6001
  %v6208 = vpop.f32.mrf.mxu0
  %v6209 = vadd.f32 0.0, %v6208
  %v6210 = vpop.f32.mrf.mxu0
  %v6211 = vadd.f32 0.0, %v6210
  %6212 = vdwg.mxu0
  %6213 = vmatpush.bf16.msra.mxu0 0
  %6214 = vmatpush.bf16.msra.mxu0 0
  %6215 = vmatpush.bf16.msra.mxu0 0
  %6216 = vmatpush.bf16.msra.mxu0 0
  %6217 = vmatpush.bf16.msra.mxu0 0
  %6218 = vmatpush.bf16.msra.mxu0 %v6149
  %6219 = vmatpush.bf16.msra.mxu0 %v6094
  %6220 = vmatpush.bf16.msra.mxu0 %v6092
  %6221 = vmatmul.bf16.gmra.mxu0 %v6119
  %v6222 = vpop.f32.mrf.mxu0
  %v6223 = vadd.f32 %v6164, %v6222
  %v6224 = vpop.f32.mrf.mxu0
  %v6225 = vadd.f32 %v6166, %v6224
  %6226 = vmatmul.bf16.gmra.mxu0 %v6122
  %v6227 = vpop.f32.mrf.mxu0
  %v6228 = vadd.f32 %v6169, %v6227
  %v6229 = vpop.f32.mrf.mxu0
  %v6230 = vadd.f32 %v6171, %v6229
  %6231 = vmatmul.bf16.gmra.mxu0 %v6125
  %v6232 = vpop.f32.mrf.mxu0
  %v6233 = vadd.f32 %v6174, %v6232
  %v6234 = vpop.f32.mrf.mxu0
  %v6235 = vadd.f32 %v6176, %v6234
  %6236 = vmatmul.bf16.gmra.mxu0 %v6128
  %v6237 = vpop.f32.mrf.mxu0
  %v6238 = vadd.f32 %v6179, %v6237
  %v6239 = vpop.f32.mrf.mxu0
  %v6240 = vadd.f32 %v6181, %v6239
  %6241 = vmatmul.bf16.gmra.mxu0 %v6131
  %v6242 = vpop.f32.mrf.mxu0
  %v6243 = vadd.f32 %v6184, %v6242
  %v6244 = vpop.f32.mrf.mxu0
  %v6245 = vadd.f32 %v6186, %v6244
  %6246 = vmatmul.bf16.gmra.mxu0 %v6134
  %v6247 = vpop.f32.mrf.mxu0
  %v6248 = vadd.f32 %v6189, %v6247
  %v6249 = vpop.f32.mrf.mxu0
  %v6250 = vadd.f32 %v6191, %v6249
  %6251 = vmatmul.bf16.gmra.mxu0 %v6137
  %v6252 = vpop.f32.mrf.mxu0
  %v6253 = vadd.f32 %v6194, %v6252
  %v6254 = vpop.f32.mrf.mxu0
  %v6255 = vadd.f32 %v6196, %v6254
  %6256 = vmatmul.bf16.gmra.mxu0 %v6140
  %v6257 = vpop.f32.mrf.mxu0
  %v6258 = vadd.f32 %v6199, %v6257
  %v6259 = vpop.f32.mrf.mxu0
  %v6260 = vadd.f32 %v6201, %v6259
  %6261 = vmatmul.bf16.gmra.mxu0 %v6143
  %v6262 = vpop.f32.mrf.mxu0
  %v6263 = vadd.f32 %v6204, %v6262
  %v6264 = vpop.f32.mrf.mxu0
  %v6265 = vadd.f32 %v6206, %v6264
  %6266 = vmatmul.bf16.gmra.mxu0 %v6146
  %v6267 = vpop.f32.mrf.mxu0
  %v6268 = vadd.f32 %v6209, %v6267
  %v6269 = vpop.f32.mrf.mxu0
  %v6270 = vadd.f32 %v6211, %v6269
  %6271 = vdwg.mxu0
  %6272 = vmatpush.bf16.msra.mxu0 %v6091
  %6273 = vmatpush.bf16.msra.mxu0 %v6089
  %6274 = vmatpush.bf16.msra.mxu0 %v6087
  %6275 = vmatpush.bf16.msra.mxu0 %v6085
  %6276 = vmatpush.bf16.msra.mxu0 %v6083
  %6277 = vmatpush.bf16.msra.mxu0 %v6081
  %6278 = vmatpush.bf16.msra.mxu0 %v6079
  %6279 = vmatpush.bf16.msra.mxu0 %v6077
  %6280 = vmatmul.bf16.gmra.mxu0 %v5983
  %v6281 = vpop.f32.mrf.mxu0
  %v6282 = vadd.f32 0.0, %v6281
  %v6283 = vpop.f32.mrf.mxu0
  %v6284 = vadd.f32 0.0, %v6283
  %6285 = vmatmul.bf16.gmra.mxu0 %v5985
  %v6286 = vpop.f32.mrf.mxu0
  %v6287 = vadd.f32 0.0, %v6286
  %v6288 = vpop.f32.mrf.mxu0
  %v6289 = vadd.f32 0.0, %v6288
  %6290 = vmatmul.bf16.gmra.mxu0 %v5987
  %v6291 = vpop.f32.mrf.mxu0
  %v6292 = vadd.f32 0.0, %v6291
  %v6293 = vpop.f32.mrf.mxu0
  %v6294 = vadd.f32 0.0, %v6293
  %6295 = vmatmul.bf16.gmra.mxu0 %v5989
  %v6296 = vpop.f32.mrf.mxu0
  %v6297 = vadd.f32 0.0, %v6296
  %v6298 = vpop.f32.mrf.mxu0
  %v6299 = vadd.f32 0.0, %v6298
  %6300 = vmatmul.bf16.gmra.mxu0 %v5991
  %v6301 = vpop.f32.mrf.mxu0
  %v6302 = vadd.f32 0.0, %v6301
  %v6303 = vpop.f32.mrf.mxu0
  %v6304 = vadd.f32 0.0, %v6303
  %6305 = vmatmul.bf16.gmra.mxu0 %v5993
  %v6306 = vpop.f32.mrf.mxu0
  %v6307 = vadd.f32 0.0, %v6306
  %v6308 = vpop.f32.mrf.mxu0
  %v6309 = vadd.f32 0.0, %v6308
  %6310 = vmatmul.bf16.gmra.mxu0 %v5995
  %v6311 = vpop.f32.mrf.mxu0
  %v6312 = vadd.f32 0.0, %v6311
  %v6313 = vpop.f32.mrf.mxu0
  %v6314 = vadd.f32 0.0, %v6313
  %6315 = vmatmul.bf16.gmra.mxu0 %v5997
  %v6316 = vpop.f32.mrf.mxu0
  %v6317 = vadd.f32 0.0, %v6316
  %v6318 = vpop.f32.mrf.mxu0
  %v6319 = vadd.f32 0.0, %v6318
  %6320 = vmatmul.bf16.gmra.mxu0 %v5999
  %v6321 = vpop.f32.mrf.mxu0
  %v6322 = vadd.f32 0.0, %v6321
  %v6323 = vpop.f32.mrf.mxu0
  %v6324 = vadd.f32 0.0, %v6323
  %6325 = vmatmul.bf16.gmra.mxu0 %v6001
  %v6326 = vpop.f32.mrf.mxu0
  %v6327 = vadd.f32 0.0, %v6326
  %v6328 = vpop.f32.mrf.mxu0
  %v6329 = vadd.f32 0.0, %v6328
  %6330 = vdwg.mxu0
  %6331 = vmatpush.bf16.msra.mxu0 0
  %6332 = vmatpush.bf16.msra.mxu0 0
  %6333 = vmatpush.bf16.msra.mxu0 0
  %6334 = vmatpush.bf16.msra.mxu0 0
  %6335 = vmatpush.bf16.msra.mxu0 0
  %6336 = vmatpush.bf16.msra.mxu0 %v6152
  %6337 = vmatpush.bf16.msra.mxu0 %v6095
  %6338 = vmatpush.bf16.msra.mxu0 %v6093
  %6339 = vmatmul.bf16.gmra.mxu0 %v6119
  %v6340 = vpop.f32.mrf.mxu0
  %v6341 = vadd.f32 %v6282, %v6340
  %v6342 = vpop.f32.mrf.mxu0
  %v6343 = vadd.f32 %v6284, %v6342
  %6344 = vmatmul.bf16.gmra.mxu0 %v6122
  %v6345 = vpop.f32.mrf.mxu0
  %v6346 = vadd.f32 %v6287, %v6345
  %v6347 = vpop.f32.mrf.mxu0
  %v6348 = vadd.f32 %v6289, %v6347
  %6349 = vmatmul.bf16.gmra.mxu0 %v6125
  %v6350 = vpop.f32.mrf.mxu0
  %v6351 = vadd.f32 %v6292, %v6350
  %v6352 = vpop.f32.mrf.mxu0
  %v6353 = vadd.f32 %v6294, %v6352
  %6354 = vmatmul.bf16.gmra.mxu0 %v6128
  %v6355 = vpop.f32.mrf.mxu0
  %v6356 = vadd.f32 %v6297, %v6355
  %v6357 = vpop.f32.mrf.mxu0
  %v6358 = vadd.f32 %v6299, %v6357
  %6359 = vmatmul.bf16.gmra.mxu0 %v6131
  %v6360 = vpop.f32.mrf.mxu0
  %v6361 = vadd.f32 %v6302, %v6360
  %v6362 = vpop.f32.mrf.mxu0
  %v6363 = vadd.f32 %v6304, %v6362
  %6364 = vmatmul.bf16.gmra.mxu0 %v6134
  %v6365 = vpop.f32.mrf.mxu0
  %v6366 = vadd.f32 %v6307, %v6365
  %v6367 = vpop.f32.mrf.mxu0
  %v6368 = vadd.f32 %v6309, %v6367
  %6369 = vmatmul.bf16.gmra.mxu0 %v6137
  %v6370 = vpop.f32.mrf.mxu0
  %v6371 = vadd.f32 %v6312, %v6370
  %v6372 = vpop.f32.mrf.mxu0
  %v6373 = vadd.f32 %v6314, %v6372
  %6374 = vmatmul.bf16.gmra.mxu0 %v6140
  %v6375 = vpop.f32.mrf.mxu0
  %v6376 = vadd.f32 %v6317, %v6375
  %v6377 = vpop.f32.mrf.mxu0
  %v6378 = vadd.f32 %v6319, %v6377
  %6379 = vmatmul.bf16.gmra.mxu0 %v6143
  %v6380 = vpop.f32.mrf.mxu0
  %v6381 = vadd.f32 %v6322, %v6380
  %v6382 = vpop.f32.mrf.mxu0
  %v6383 = vadd.f32 %v6324, %v6382
  %6384 = vmatmul.bf16.gmra.mxu0 %v6146
  %v6385 = vpop.f32.mrf.mxu0
  %v6386 = vadd.f32 %v6327, %v6385
  %v6387 = vpop.f32.mrf.mxu0
  %v6388 = vadd.f32 %v6329, %v6387
  %6389 = vdwg.mxu0
  %v6390 = vadd.f32 %v5841, %v6223
  %v6391 = vadd.f32 %v5842, %v6341
  %v6392 = vadd.f32 %v5843, %v6225
  %v6393 = vadd.f32 %v5844, %v6343
  %v6394 = vadd.f32 %v5845, %v6228
  %v6395 = vadd.f32 %v5846, %v6346
  %v6396 = vadd.f32 %v5847, %v6230
  %v6397 = vadd.f32 %v5848, %v6348
  %v6398 = vadd.f32 %v5849, %v6233
  %v6399 = vadd.f32 %v5850, %v6351
  %v6400 = vadd.f32 %v5851, %v6235
  %v6401 = vadd.f32 %v5852, %v6353
  %v6402 = vadd.f32 %v5853, %v6238
  %v6403 = vadd.f32 %v5854, %v6356
  %v6404 = vadd.f32 %v5855, %v6240
  %v6405 = vadd.f32 %v5856, %v6358
  %v6406 = vadd.f32 %v5857, %v6243
  %v6407 = vadd.f32 %v5858, %v6361
  %v6408 = vadd.f32 %v5859, %v6245
  %v6409 = vadd.f32 %v5860, %v6363
  %v6410 = vadd.f32 %v5861, %v6248
  %v6411 = vadd.f32 %v5862, %v6366
  %v6412 = vadd.f32 %v5863, %v6250
  %v6413 = vadd.f32 %v5864, %v6368
  %v6414 = vadd.f32 %v5865, %v6253
  %v6415 = vadd.f32 %v5866, %v6371
  %v6416 = vadd.f32 %v5867, %v6255
  %v6417 = vadd.f32 %v5868, %v6373
  %v6418 = vadd.f32 %v5869, %v6258
  %v6419 = vadd.f32 %v5870, %v6376
  %v6420 = vadd.f32 %v5871, %v6260
  %v6421 = vadd.f32 %v5872, %v6378
  %v6422 = vadd.f32 %v5873, %v6263
  %v6423 = vadd.f32 %v5874, %v6381
  %v6424 = vadd.f32 %v5875, %v6265
  %v6425 = vadd.f32 %v5876, %v6383
  %v6426 = vadd.f32 %v5877, %v6268
  %v6427 = vadd.f32 %v5878, %v6386
  %v6428 = vadd.f32 %v5879, %v6270
  %v6429 = vadd.f32 %v5880, %v6388
  %v6430 = vmax.f32 %v6390, %v6394
  %v6431 = vmax.f32 %v6391, %v6395
  %v6432 = vmax.f32 %v6392, %v6396
  %v6433 = vmax.f32 %v6393, %v6397
  %v6434 = vmax.f32 %v6398, %v6402
  %v6435 = vmax.f32 %v6399, %v6403
  %v6436 = vmax.f32 %v6400, %v6404
  %v6437 = vmax.f32 %v6401, %v6405
  %v6438 = vmax.f32 %v6406, %v6410
  %v6439 = vmax.f32 %v6407, %v6411
  %v6440 = vmax.f32 %v6408, %v6412
  %v6441 = vmax.f32 %v6409, %v6413
  %v6442 = vmax.f32 %v6414, %v6418
  %v6443 = vmax.f32 %v6415, %v6419
  %v6444 = vmax.f32 %v6416, %v6420
  %v6445 = vmax.f32 %v6417, %v6421
  %v6446 = vmax.f32 %v6422, %v6426
  %v6447 = vmax.f32 %v6423, %v6427
  %v6448 = vmax.f32 %v6424, %v6428
  %v6449 = vmax.f32 %v6425, %v6429
  %6470 = vrot.lane.b32.xlu0 %v6430, 112
  %v6471 = vpop.permute.xlu0 %6470
  %6472 = vrot.lane.b32.xlu0 %v6431, 112
  %v6473 = vpop.permute.xlu0 %6472
  %6474 = vrot.lane.b32.xlu0 %v6432, 112
  %v6475 = vpop.permute.xlu0 %6474
  %6476 = vrot.lane.b32.xlu0 %v6433, 112
  %v6477 = vpop.permute.xlu0 %6476
  %6478 = vrot.lane.b32.xlu0 %v6434, 112
  %v6479 = vpop.permute.xlu0 %6478
  %6480 = vrot.lane.b32.xlu0 %v6435, 112
  %v6481 = vpop.permute.xlu0 %6480
  %6482 = vrot.lane.b32.xlu0 %v6436, 112
  %v6483 = vpop.permute.xlu0 %6482
  %6484 = vrot.lane.b32.xlu0 %v6437, 112
  %v6485 = vpop.permute.xlu0 %6484
  %6486 = vrot.lane.b32.xlu0 %v6438, 112
  %v6487 = vpop.permute.xlu0 %6486
  %6488 = vrot.lane.b32.xlu0 %v6439, 112
  %v6489 = vpop.permute.xlu0 %6488
  %6490 = vrot.lane.b32.xlu0 %v6440, 112
  %v6491 = vpop.permute.xlu0 %6490
  %6492 = vrot.lane.b32.xlu0 %v6441, 112
  %v6493 = vpop.permute.xlu0 %6492
  %6494 = vrot.lane.b32.xlu0 %v6442, 112
  %v6495 = vpop.permute.xlu0 %6494
  %6496 = vrot.lane.b32.xlu0 %v6443, 112
  %v6497 = vpop.permute.xlu0 %6496
  %6498 = vrot.lane.b32.xlu0 %v6444, 112
  %v6499 = vpop.permute.xlu0 %6498
  %6500 = vrot.lane.b32.xlu0 %v6445, 112
  %v6501 = vpop.permute.xlu0 %6500
  %6502 = vrot.lane.b32.xlu0 %v6446, 112
  %v6503 = vpop.permute.xlu0 %6502
  %6504 = vrot.lane.b32.xlu0 %v6447, 112
  %v6505 = vpop.permute.xlu0 %6504
  %6506 = vrot.lane.b32.xlu0 %v6448, 112
  %v6507 = vpop.permute.xlu0 %6506
  %6508 = vrot.lane.b32.xlu0 %v6449, 112
  %v6509 = vpop.permute.xlu0 %6508
  %vm6510 = vcmask 916480
  %v6511 = vsel %vm6510, %v6471, %v6473
  %v6512 = vsel %vm6510, %v6475, %v6477
  %v6513 = vsel %vm6510, %v6479, %v6481
  %v6514 = vsel %vm6510, %v6483, %v6485
  %v6515 = vsel %vm6510, %v6487, %v6489
  %v6516 = vsel %vm6510, %v6491, %v6493
  %v6517 = vsel %vm6510, %v6495, %v6497
  %v6518 = vsel %vm6510, %v6499, %v6501
  %v6519 = vsel %vm6510, %v6503, %v6505
  %v6520 = vsel %vm6510, %v6507, %v6509
  %v6541 = vmax.f32 %v6430, %v6511
  %v6542 = vmax.f32 %v6431, %v6473
  %v6543 = vmax.f32 %v6432, %v6512
  %v6544 = vmax.f32 %v6433, %v6477
  %v6545 = vmax.f32 %v6434, %v6513
  %v6546 = vmax.f32 %v6435, %v6481
  %v6547 = vmax.f32 %v6436, %v6514
  %v6548 = vmax.f32 %v6437, %v6485
  %v6549 = vmax.f32 %v6438, %v6515
  %v6550 = vmax.f32 %v6439, %v6489
  %v6551 = vmax.f32 %v6440, %v6516
  %v6552 = vmax.f32 %v6441, %v6493
  %v6553 = vmax.f32 %v6442, %v6517
  %v6554 = vmax.f32 %v6443, %v6497
  %v6555 = vmax.f32 %v6444, %v6518
  %v6556 = vmax.f32 %v6445, %v6501
  %v6557 = vmax.f32 %v6446, %v6519
  %v6558 = vmax.f32 %v6447, %v6505
  %v6559 = vmax.f32 %v6448, %v6520
  %v6560 = vmax.f32 %v6449, %v6509
  %v6561 = vld [vmem:[%s4] sm:$0x3]
  %v6563 = vperm.slane %v6561, 0
  %v6564 = vperm.slane %v6561, 1
  %v6567 = vadd.f32 %v6541, %v6563
  %v6568 = vadd.f32 %v6542, %v6564
  %v6569 = vadd.f32 %v6543, %v6563
  %v6570 = vadd.f32 %v6544, %v6564
  %v6571 = vadd.f32 %v6545, %v6563
  %v6572 = vadd.f32 %v6546, %v6564
  %v6573 = vadd.f32 %v6547, %v6563
  %v6574 = vadd.f32 %v6548, %v6564
  %v6575 = vadd.f32 %v6549, %v6563
  %v6576 = vadd.f32 %v6550, %v6564
  %v6577 = vadd.f32 %v6551, %v6563
  %v6578 = vadd.f32 %v6552, %v6564
  %v6579 = vadd.f32 %v6553, %v6563
  %v6580 = vadd.f32 %v6554, %v6564
  %v6581 = vadd.f32 %v6555, %v6563
  %v6582 = vadd.f32 %v6556, %v6564
  %v6583 = vadd.f32 %v6557, %v6563
  %v6584 = vadd.f32 %v6558, %v6564
  %v6585 = vadd.f32 %v6559, %v6563
  %v6586 = vadd.f32 %v6560, %v6564
  %v6587 = vmax.f32 %v6567, 0.0
  %v6588 = vmax.f32 %v6568, 0.0
  %v6589 = vmax.f32 %v6569, 0.0
  %v6590 = vmax.f32 %v6570, 0.0
  %v6591 = vmax.f32 %v6571, 0.0
  %v6592 = vmax.f32 %v6572, 0.0
  %v6593 = vmax.f32 %v6573, 0.0
  %v6594 = vmax.f32 %v6574, 0.0
  %v6595 = vmax.f32 %v6575, 0.0
  %v6596 = vmax.f32 %v6576, 0.0
  %v6597 = vmax.f32 %v6577, 0.0
  %v6598 = vmax.f32 %v6578, 0.0
  %v6599 = vmax.f32 %v6579, 0.0
  %v6600 = vmax.f32 %v6580, 0.0
  %v6601 = vmax.f32 %v6581, 0.0
  %v6602 = vmax.f32 %v6582, 0.0
  %v6603 = vmax.f32 %v6583, 0.0
  %v6604 = vmax.f32 %v6584, 0.0
  %v6605 = vmax.f32 %v6585, 0.0
  %v6606 = vmax.f32 %v6586, 0.0
  %v6607 = vpack.c.bf16 %v6589, %v6587
  %v6608 = vpack.c.bf16 %v6590, %v6588
  %v6609 = vld [vmem:[%s5] sm:$0xf]
  %v6610 = vld [vmem:[%s5 + $0x4] sm:$0xf]
  %v6611 = vld [vmem:[%s5 + $0x8] sm:$0xf]
  %v6612 = vld [vmem:[%s5 + $0xc] sm:$0xf]
  %v6613 = vld [vmem:[%s5 + $0x10] sm:$0xf]
  %v6614 = vld [vmem:[%s5 + $0x14] sm:$0xf]
  %v6615 = vld [vmem:[%s5 + $0x18] sm:$0xf]
  %v6616 = vld [vmem:[%s5 + $0x1c] sm:$0xf]
  %v6617 = vld [vmem:[%s5 + $0x20] sm:$0xf]
  %v6618 = vld [vmem:[%s5 + $0x24] sm:$0xf]
  %v6619 = vld [vmem:[%s5 + $0x28] sm:$0xf]
  %v6620 = vld [vmem:[%s5 + $0x2c] sm:$0xf]
  %v6621 = vld [vmem:[%s5 + $0x30] sm:$0xf]
  %v6622 = vld [vmem:[%s5 + $0x34] sm:$0xf]
  %v6623 = vld [vmem:[%s5 + $0x38] sm:$0xf]
  %v6624 = vld [vmem:[%s5 + $0x3c] sm:$0xf]
  %v6625 = vld [vmem:[%s5 + $0x40] sm:$0xf]
  %v6626 = vld [vmem:[%s5 + $0x44] sm:$0xf]
  %v6627 = vpack.c.bf16 %v6593, %v6591
  %v6628 = vpack.c.bf16 %v6594, %v6592
  %s6629 = scalar_lea.vmem %s5, 72
  %v6630 = vld [vmem:[%s6629] sm:$0xf]
  %v6631 = vld [vmem:[%s6629 + $0x4] sm:$0xf]
  %v6632 = vld [vmem:[%s6629 + $0x8] sm:$0xf]
  %v6633 = vld [vmem:[%s6629 + $0xc] sm:$0xf]
  %v6634 = vld [vmem:[%s6629 + $0x10] sm:$0xf]
  %v6635 = vld [vmem:[%s6629 + $0x14] sm:$0xf]
  %v6636 = vld [vmem:[%s6629 + $0x18] sm:$0xf]
  %v6637 = vld [vmem:[%s6629 + $0x1c] sm:$0xf]
  %v6638 = vld [vmem:[%s6629 + $0x20] sm:$0xf]
  %v6639 = vld [vmem:[%s6629 + $0x24] sm:$0xf]
  %v6640 = vld [vmem:[%s6629 + $0x28] sm:$0xf]
  %v6641 = vld [vmem:[%s6629 + $0x2c] sm:$0xf]
  %v6642 = vld [vmem:[%s6629 + $0x30] sm:$0xf]
  %v6643 = vld [vmem:[%s6629 + $0x34] sm:$0xf]
  %v6644 = vld [vmem:[%s6629 + $0x38] sm:$0xf]
  %v6645 = vld [vmem:[%s6629 + $0x3c] sm:$0xf]
  %v6646 = vld [vmem:[%s6629 + $0x40] sm:$0xf]
  %v6647 = vld [vmem:[%s6629 + $0x44] sm:$0xf]
  %v6666 = vunpack.c.l.b16 %v6630
  %v6667 = vunpack.c.l.b16 %v6631
  %v6668 = vunpack.c.l.b16 %v6632
  %v6669 = vunpack.c.l.b16 %v6633
  %v6670 = vunpack.c.l.b16 %v6634
  %v6671 = vunpack.c.l.b16 %v6635
  %v6672 = vunpack.c.l.b16 %v6636
  %v6673 = vunpack.c.l.b16 %v6637
  %v6674 = vunpack.c.l.b16 %v6638
  %v6675 = vunpack.c.l.b16 %v6639
  %v6676 = vunpack.c.l.b16 %v6640
  %v6677 = vunpack.c.l.b16 %v6641
  %v6678 = vunpack.c.l.b16 %v6642
  %v6679 = vunpack.c.l.b16 %v6643
  %v6680 = vunpack.c.l.b16 %v6644
  %v6681 = vunpack.c.l.b16 %v6645
  %v6682 = vunpack.c.l.b16 %v6646
  %v6683 = vunpack.c.l.b16 %v6647
  %v6684 = vpack.c.b16 %v6667, %v6666
  %v6685 = vpack.c.b16 %v6669, %v6668
  %v6686 = vpack.c.b16 %v6671, %v6670
  %v6687 = vpack.c.b16 %v6673, %v6672
  %v6688 = vpack.c.b16 %v6675, %v6674
  %v6689 = vpack.c.b16 %v6677, %v6676
  %v6690 = vpack.c.b16 %v6679, %v6678
  %v6691 = vpack.c.b16 %v6681, %v6680
  %v6692 = vpack.c.b16 %v6683, %v6682
  %vm6702 = vcmask 130048
  %v6704 = vsel %vm6702, %v6628, 0
  %6706 = vmatpush.bf16.msra.mxu0 %v6691
  %6707 = vmatpush.bf16.msra.mxu0 %v6690
  %6708 = vmatpush.bf16.msra.mxu0 %v6689
  %6709 = vmatpush.bf16.msra.mxu0 %v6688
  %6710 = vmatpush.bf16.msra.mxu0 %v6687
  %6711 = vmatpush.bf16.msra.mxu0 %v6686
  %6712 = vmatpush.bf16.msra.mxu0 %v6685
  %6713 = vmatpush.bf16.msra.mxu0 %v6684
  %6714 = vmatmul.bf16.gmra.mxu0 %v6627
  %v6715 = vpop.f32.mrf.mxu0
  %v6716 = vadd.f32 0.0, %v6715
  %v6717 = vpop.f32.mrf.mxu0
  %v6718 = vadd.f32 0.0, %v6717
  %6719 = vdwg.mxu0
  %6720 = vmatpush.bf16.msra.mxu0 0
  %6721 = vmatpush.bf16.msra.mxu0 0
  %6722 = vmatpush.bf16.msra.mxu0 0
  %6723 = vmatpush.bf16.msra.mxu0 0
  %6724 = vmatpush.bf16.msra.mxu0 0
  %6725 = vmatpush.bf16.msra.mxu0 0
  %6726 = vmatpush.bf16.msra.mxu0 0
  %6727 = vmatpush.bf16.msra.mxu0 %v6692
  %6728 = vmatmul.bf16.gmra.mxu0 %v6704
  %v6729 = vpop.f32.mrf.mxu0
  %v6730 = vadd.f32 %v6716, %v6729
  %v6731 = vpop.f32.mrf.mxu0
  %v6732 = vadd.f32 %v6718, %v6731
  %6733 = vdwg.mxu0
  %v6752 = vunpack.c.l.b16 %v6609
  %v6753 = vunpack.c.l.b16 %v6610
  %v6754 = vunpack.c.l.b16 %v6611
  %v6755 = vunpack.c.l.b16 %v6612
  %v6756 = vunpack.c.l.b16 %v6613
  %v6757 = vunpack.c.l.b16 %v6614
  %v6758 = vunpack.c.l.b16 %v6615
  %v6759 = vunpack.c.l.b16 %v6616
  %v6760 = vunpack.c.l.b16 %v6617
  %v6761 = vunpack.c.l.b16 %v6618
  %v6762 = vunpack.c.l.b16 %v6619
  %v6763 = vunpack.c.l.b16 %v6620
  %v6764 = vunpack.c.l.b16 %v6621
  %v6765 = vunpack.c.l.b16 %v6622
  %v6766 = vunpack.c.l.b16 %v6623
  %v6767 = vunpack.c.l.b16 %v6624
  %v6768 = vunpack.c.l.b16 %v6625
  %v6769 = vunpack.c.l.b16 %v6626
  %v6770 = vpack.c.b16 %v6753, %v6752
  %v6771 = vpack.c.b16 %v6755, %v6754
  %v6772 = vpack.c.b16 %v6757, %v6756
  %v6773 = vpack.c.b16 %v6759, %v6758
  %v6774 = vpack.c.b16 %v6761, %v6760
  %v6775 = vpack.c.b16 %v6763, %v6762
  %v6776 = vpack.c.b16 %v6765, %v6764
  %v6777 = vpack.c.b16 %v6767, %v6766
  %v6778 = vpack.c.b16 %v6769, %v6768
  %v6789 = vsel %vm6702, %v6608, 0
  %6791 = vmatpush.bf16.msra.mxu0 %v6777
  %6792 = vmatpush.bf16.msra.mxu0 %v6776
  %6793 = vmatpush.bf16.msra.mxu0 %v6775
  %6794 = vmatpush.bf16.msra.mxu0 %v6774
  %6795 = vmatpush.bf16.msra.mxu0 %v6773
  %6796 = vmatpush.bf16.msra.mxu0 %v6772
  %6797 = vmatpush.bf16.msra.mxu0 %v6771
  %6798 = vmatpush.bf16.msra.mxu0 %v6770
  %6799 = vmatmul.bf16.gmra.mxu0 %v6607
  %v6800 = vpop.f32.mrf.mxu0
  %v6801 = vadd.f32 %v6730, %v6800
  %v6802 = vpop.f32.mrf.mxu0
  %v6803 = vadd.f32 %v6732, %v6802
  %6804 = vdwg.mxu0
  %6805 = vmatpush.bf16.msra.mxu0 0
  %6806 = vmatpush.bf16.msra.mxu0 0
  %6807 = vmatpush.bf16.msra.mxu0 0
  %6808 = vmatpush.bf16.msra.mxu0 0
  %6809 = vmatpush.bf16.msra.mxu0 0
  %6810 = vmatpush.bf16.msra.mxu0 0
  %6811 = vmatpush.bf16.msra.mxu0 0
  %6812 = vmatpush.bf16.msra.mxu0 %v6778
  %6813 = vmatmul.bf16.gmra.mxu0 %v6789
  %v6814 = vpop.f32.mrf.mxu0
  %v6815 = vadd.f32 %v6801, %v6814
  %v6816 = vpop.f32.mrf.mxu0
  %v6817 = vadd.f32 %v6803, %v6816
  %6818 = vdwg.mxu0
  %v6819 = vpack.c.bf16 %v6597, %v6595
  %v6820 = vpack.c.bf16 %v6598, %v6596
  %s6821 = scalar_lea.vmem %s5, 144
  %v6822 = vld [vmem:[%s6821] sm:$0xf]
  %v6823 = vld [vmem:[%s6821 + $0x4] sm:$0xf]
  %v6824 = vld [vmem:[%s6821 + $0x8] sm:$0xf]
  %v6825 = vld [vmem:[%s6821 + $0xc] sm:$0xf]
  %v6826 = vld [vmem:[%s6821 + $0x10] sm:$0xf]
  %v6827 = vld [vmem:[%s6821 + $0x14] sm:$0xf]
  %v6828 = vld [vmem:[%s6821 + $0x18] sm:$0xf]
  %v6829 = vld [vmem:[%s6821 + $0x1c] sm:$0xf]
  %v6830 = vld [vmem:[%s6821 + $0x20] sm:$0xf]
  %v6831 = vld [vmem:[%s6821 + $0x24] sm:$0xf]
  %v6832 = vld [vmem:[%s6821 + $0x28] sm:$0xf]
  %v6833 = vld [vmem:[%s6821 + $0x2c] sm:$0xf]
  %v6834 = vld [vmem:[%s6821 + $0x30] sm:$0xf]
  %v6835 = vld [vmem:[%s6821 + $0x34] sm:$0xf]
  %v6836 = vld [vmem:[%s6821 + $0x38] sm:$0xf]
  %v6837 = vld [vmem:[%s6821 + $0x3c] sm:$0xf]
  %v6838 = vld [vmem:[%s6821 + $0x40] sm:$0xf]
  %v6839 = vld [vmem:[%s6821 + $0x44] sm:$0xf]
  %v6858 = vunpack.c.l.b16 %v6822
  %v6859 = vunpack.c.l.b16 %v6823
  %v6860 = vunpack.c.l.b16 %v6824
  %v6861 = vunpack.c.l.b16 %v6825
  %v6862 = vunpack.c.l.b16 %v6826
  %v6863 = vunpack.c.l.b16 %v6827
  %v6864 = vunpack.c.l.b16 %v6828
  %v6865 = vunpack.c.l.b16 %v6829
  %v6866 = vunpack.c.l.b16 %v6830
  %v6867 = vunpack.c.l.b16 %v6831
  %v6868 = vunpack.c.l.b16 %v6832
  %v6869 = vunpack.c.l.b16 %v6833
  %v6870 = vunpack.c.l.b16 %v6834
  %v6871 = vunpack.c.l.b16 %v6835
  %v6872 = vunpack.c.l.b16 %v6836
  %v6873 = vunpack.c.l.b16 %v6837
  %v6874 = vunpack.c.l.b16 %v6838
  %v6875 = vunpack.c.l.b16 %v6839
  %v6876 = vpack.c.b16 %v6859, %v6858
  %v6877 = vpack.c.b16 %v6861, %v6860
  %v6878 = vpack.c.b16 %v6863, %v6862
  %v6879 = vpack.c.b16 %v6865, %v6864
  %v6880 = vpack.c.b16 %v6867, %v6866
  %v6881 = vpack.c.b16 %v6869, %v6868
  %v6882 = vpack.c.b16 %v6871, %v6870
  %v6883 = vpack.c.b16 %v6873, %v6872
  %v6884 = vpack.c.b16 %v6875, %v6874
  %v6895 = vsel %vm6702, %v6820, 0
  %6897 = vmatpush.bf16.msra.mxu0 %v6883
  %6898 = vmatpush.bf16.msra.mxu0 %v6882
  %6899 = vmatpush.bf16.msra.mxu0 %v6881
  %6900 = vmatpush.bf16.msra.mxu0 %v6880
  %6901 = vmatpush.bf16.msra.mxu0 %v6879
  %6902 = vmatpush.bf16.msra.mxu0 %v6878
  %6903 = vmatpush.bf16.msra.mxu0 %v6877
  %6904 = vmatpush.bf16.msra.mxu0 %v6876
  %6905 = vmatmul.bf16.gmra.mxu0 %v6819
  %v6906 = vpop.f32.mrf.mxu0
  %v6907 = vadd.f32 0.0, %v6906
  %v6908 = vpop.f32.mrf.mxu0
  %v6909 = vadd.f32 0.0, %v6908
  %6910 = vdwg.mxu0
  %6911 = vmatpush.bf16.msra.mxu0 0
  %6912 = vmatpush.bf16.msra.mxu0 0
  %6913 = vmatpush.bf16.msra.mxu0 0
  %6914 = vmatpush.bf16.msra.mxu0 0
  %6915 = vmatpush.bf16.msra.mxu0 0
  %6916 = vmatpush.bf16.msra.mxu0 0
  %6917 = vmatpush.bf16.msra.mxu0 0
  %6918 = vmatpush.bf16.msra.mxu0 %v6884
  %6919 = vmatmul.bf16.gmra.mxu0 %v6895
  %v6920 = vpop.f32.mrf.mxu0
  %v6921 = vadd.f32 %v6907, %v6920
  %v6922 = vpop.f32.mrf.mxu0
  %v6923 = vadd.f32 %v6909, %v6922
  %6924 = vdwg.mxu0
  %v6925 = vadd.f32 %v6815, %v6921
  %v6926 = vadd.f32 %v6817, %v6923
  %v6927 = vpack.c.bf16 %v6601, %v6599
  %v6928 = vpack.c.bf16 %v6602, %v6600
  %s6929 = scalar_lea.vmem %s5, 216
  %v6930 = vld [vmem:[%s6929] sm:$0xf]
  %v6931 = vld [vmem:[%s6929 + $0x4] sm:$0xf]
  %v6932 = vld [vmem:[%s6929 + $0x8] sm:$0xf]
  %v6933 = vld [vmem:[%s6929 + $0xc] sm:$0xf]
  %v6934 = vld [vmem:[%s6929 + $0x10] sm:$0xf]
  %v6935 = vld [vmem:[%s6929 + $0x14] sm:$0xf]
  %v6936 = vld [vmem:[%s6929 + $0x18] sm:$0xf]
  %v6937 = vld [vmem:[%s6929 + $0x1c] sm:$0xf]
  %v6938 = vld [vmem:[%s6929 + $0x20] sm:$0xf]
  %v6939 = vld [vmem:[%s6929 + $0x24] sm:$0xf]
  %v6940 = vld [vmem:[%s6929 + $0x28] sm:$0xf]
  %v6941 = vld [vmem:[%s6929 + $0x2c] sm:$0xf]
  %v6942 = vld [vmem:[%s6929 + $0x30] sm:$0xf]
  %v6943 = vld [vmem:[%s6929 + $0x34] sm:$0xf]
  %v6944 = vld [vmem:[%s6929 + $0x38] sm:$0xf]
  %v6945 = vld [vmem:[%s6929 + $0x3c] sm:$0xf]
  %v6946 = vld [vmem:[%s6929 + $0x40] sm:$0xf]
  %v6947 = vld [vmem:[%s6929 + $0x44] sm:$0xf]
  %v6966 = vunpack.c.l.b16 %v6930
  %v6967 = vunpack.c.l.b16 %v6931
  %v6968 = vunpack.c.l.b16 %v6932
  %v6969 = vunpack.c.l.b16 %v6933
  %v6970 = vunpack.c.l.b16 %v6934
  %v6971 = vunpack.c.l.b16 %v6935
  %v6972 = vunpack.c.l.b16 %v6936
  %v6973 = vunpack.c.l.b16 %v6937
  %v6974 = vunpack.c.l.b16 %v6938
  %v6975 = vunpack.c.l.b16 %v6939
  %v6976 = vunpack.c.l.b16 %v6940
  %v6977 = vunpack.c.l.b16 %v6941
  %v6978 = vunpack.c.l.b16 %v6942
  %v6979 = vunpack.c.l.b16 %v6943
  %v6980 = vunpack.c.l.b16 %v6944
  %v6981 = vunpack.c.l.b16 %v6945
  %v6982 = vunpack.c.l.b16 %v6946
  %v6983 = vunpack.c.l.b16 %v6947
  %v6984 = vpack.c.b16 %v6967, %v6966
  %v6985 = vpack.c.b16 %v6969, %v6968
  %v6986 = vpack.c.b16 %v6971, %v6970
  %v6987 = vpack.c.b16 %v6973, %v6972
  %v6988 = vpack.c.b16 %v6975, %v6974
  %v6989 = vpack.c.b16 %v6977, %v6976
  %v6990 = vpack.c.b16 %v6979, %v6978
  %v6991 = vpack.c.b16 %v6981, %v6980
  %v6992 = vpack.c.b16 %v6983, %v6982
  %v7003 = vsel %vm6702, %v6928, 0
  %7005 = vmatpush.bf16.msra.mxu0 %v6991
  %7006 = vmatpush.bf16.msra.mxu0 %v6990
  %7007 = vmatpush.bf16.msra.mxu0 %v6989
  %7008 = vmatpush.bf16.msra.mxu0 %v6988
  %7009 = vmatpush.bf16.msra.mxu0 %v6987
  %7010 = vmatpush.bf16.msra.mxu0 %v6986
  %7011 = vmatpush.bf16.msra.mxu0 %v6985
  %7012 = vmatpush.bf16.msra.mxu0 %v6984
  %7013 = vmatmul.bf16.gmra.mxu0 %v6927
  %v7014 = vpop.f32.mrf.mxu0
  %v7015 = vadd.f32 0.0, %v7014
  %v7016 = vpop.f32.mrf.mxu0
  %v7017 = vadd.f32 0.0, %v7016
  %7018 = vdwg.mxu0
  %7019 = vmatpush.bf16.msra.mxu0 0
  %7020 = vmatpush.bf16.msra.mxu0 0
  %7021 = vmatpush.bf16.msra.mxu0 0
  %7022 = vmatpush.bf16.msra.mxu0 0
  %7023 = vmatpush.bf16.msra.mxu0 0
  %7024 = vmatpush.bf16.msra.mxu0 0
  %7025 = vmatpush.bf16.msra.mxu0 0
  %7026 = vmatpush.bf16.msra.mxu0 %v6992
  %7027 = vmatmul.bf16.gmra.mxu0 %v7003
  %v7028 = vpop.f32.mrf.mxu0
  %v7029 = vadd.f32 %v7015, %v7028
  %v7030 = vpop.f32.mrf.mxu0
  %v7031 = vadd.f32 %v7017, %v7030
  %7032 = vdwg.mxu0
  %v7033 = vadd.f32 %v6925, %v7029
  %v7034 = vadd.f32 %v6926, %v7031
  %v7035 = vpack.c.bf16 %v6605, %v6603
  %v7036 = vpack.c.bf16 %v6606, %v6604
  %s7037 = scalar_lea.vmem %s5, 288
  %v7038 = vld [vmem:[%s7037] sm:$0xf]
  %v7039 = vld [vmem:[%s7037 + $0x4] sm:$0xf]
  %v7040 = vld [vmem:[%s7037 + $0x8] sm:$0xf]
  %v7041 = vld [vmem:[%s7037 + $0xc] sm:$0xf]
  %v7042 = vld [vmem:[%s7037 + $0x10] sm:$0xf]
  %v7043 = vld [vmem:[%s7037 + $0x14] sm:$0xf]
  %v7044 = vld [vmem:[%s7037 + $0x18] sm:$0xf]
  %v7045 = vld [vmem:[%s7037 + $0x1c] sm:$0xf]
  %v7046 = vld [vmem:[%s7037 + $0x20] sm:$0xf]
  %v7047 = vld [vmem:[%s7037 + $0x24] sm:$0xf]
  %v7048 = vld [vmem:[%s7037 + $0x28] sm:$0xf]
  %v7049 = vld [vmem:[%s7037 + $0x2c] sm:$0xf]
  %v7050 = vld [vmem:[%s7037 + $0x30] sm:$0xf]
  %v7051 = vld [vmem:[%s7037 + $0x34] sm:$0xf]
  %v7052 = vld [vmem:[%s7037 + $0x38] sm:$0xf]
  %v7053 = vld [vmem:[%s7037 + $0x3c] sm:$0xf]
  %v7054 = vld [vmem:[%s7037 + $0x40] sm:$0xf]
  %v7055 = vld [vmem:[%s7037 + $0x44] sm:$0xf]
  %v7074 = vunpack.c.l.b16 %v7038
  %v7075 = vunpack.c.l.b16 %v7039
  %v7076 = vunpack.c.l.b16 %v7040
  %v7077 = vunpack.c.l.b16 %v7041
  %v7078 = vunpack.c.l.b16 %v7042
  %v7079 = vunpack.c.l.b16 %v7043
  %v7080 = vunpack.c.l.b16 %v7044
  %v7081 = vunpack.c.l.b16 %v7045
  %v7082 = vunpack.c.l.b16 %v7046
  %v7083 = vunpack.c.l.b16 %v7047
  %v7084 = vunpack.c.l.b16 %v7048
  %v7085 = vunpack.c.l.b16 %v7049
  %v7086 = vunpack.c.l.b16 %v7050
  %v7087 = vunpack.c.l.b16 %v7051
  %v7088 = vunpack.c.l.b16 %v7052
  %v7089 = vunpack.c.l.b16 %v7053
  %v7090 = vunpack.c.l.b16 %v7054
  %v7091 = vunpack.c.l.b16 %v7055
  %v7092 = vpack.c.b16 %v7075, %v7074
  %v7093 = vpack.c.b16 %v7077, %v7076
  %v7094 = vpack.c.b16 %v7079, %v7078
  %v7095 = vpack.c.b16 %v7081, %v7080
  %v7096 = vpack.c.b16 %v7083, %v7082
  %v7097 = vpack.c.b16 %v7085, %v7084
  %v7098 = vpack.c.b16 %v7087, %v7086
  %v7099 = vpack.c.b16 %v7089, %v7088
  %v7100 = vpack.c.b16 %v7091, %v7090
  %v7111 = vsel %vm6702, %v7036, 0
  %7113 = vmatpush.bf16.msra.mxu0 %v7099
  %7114 = vmatpush.bf16.msra.mxu0 %v7098
  %7115 = vmatpush.bf16.msra.mxu0 %v7097
  %7116 = vmatpush.bf16.msra.mxu0 %v7096
  %7117 = vmatpush.bf16.msra.mxu0 %v7095
  %7118 = vmatpush.bf16.msra.mxu0 %v7094
  %7119 = vmatpush.bf16.msra.mxu0 %v7093
  %7120 = vmatpush.bf16.msra.mxu0 %v7092
  %7121 = vmatmul.bf16.gmra.mxu0 %v7035
  %v7122 = vpop.f32.mrf.mxu0
  %v7123 = vadd.f32 0.0, %v7122
  %v7124 = vpop.f32.mrf.mxu0
  %v7125 = vadd.f32 0.0, %v7124
  %7126 = vdwg.mxu0
  %7127 = vmatpush.bf16.msra.mxu0 0
  %7128 = vmatpush.bf16.msra.mxu0 0
  %7129 = vmatpush.bf16.msra.mxu0 0
  %7130 = vmatpush.bf16.msra.mxu0 0
  %7131 = vmatpush.bf16.msra.mxu0 0
  %7132 = vmatpush.bf16.msra.mxu0 0
  %7133 = vmatpush.bf16.msra.mxu0 0
  %7134 = vmatpush.bf16.msra.mxu0 %v7100
  %7135 = vmatmul.bf16.gmra.mxu0 %v7111
  %v7136 = vpop.f32.mrf.mxu0
  %v7137 = vadd.f32 %v7123, %v7136
  %v7138 = vpop.f32.mrf.mxu0
  %v7139 = vadd.f32 %v7125, %v7138
  %7140 = vdwg.mxu0
  %v7141 = vadd.f32 %v7033, %v7137
  %v7142 = vadd.f32 %v7034, %v7139
  %v7143 = vld [vmem:[%s6] sm:$0x1]
  %v7145 = vperm.slane %v7143, 0
  %v7147 = vadd.f32 %v7141, %v7145
  %v7148 = vadd.f32 %v7142, %v7145
  %v7149 = vmax.f32 %v7147, 0.0
  %v7150 = vmax.f32 %v7148, 0.0
  %7151 = vst [vmem:[%s7] sm:$0xff] %v7149
  %7152 = vst [vmem:[%s7 + $0x8] sm:$0xff] %v7150
  // Predicated region
  $region30: #{dual_model_cnn_forward.2} parent=0 // pred_check
    _
  $region31: #{dual_model_cnn_forward.2} parent=0 // pred_check_branch
    %7154 = sbr.rel (0) target = $region33
  $region32: #{dual_model_cnn_forward.2} parent=0 // pred_region
    _
  $region33: #{dual_model_cnn_forward.2} parent=0 // pred_fallthru
    _
  // Predicated region
  $region34: #{dual_model_cnn_forward.2} parent=0 // pred_check
    _
  $region35: #{dual_model_cnn_forward.2} parent=0 // pred_check_branch
    %7156 = sbr.rel (0) target = $region37
  $region36: #{dual_model_cnn_forward.2} parent=0 // pred_region
    _
  $region37: #{dual_model_cnn_forward.2} parent=0 // pred_fallthru
    _

</llo_original>
